<compile_context>
chip_gen: v6e
topology: v6e:2x2x1
jax: 0.10.0
libtpu: 0.0.40
codegen_flags: <defaults>
</compile_context>

<pallas_src>
import numpy as np
import jax
import jax.numpy as jnp
from jax.experimental import pallas as pl
from jax.experimental.pallas import tpu as pltpu


LANE = 128                      # TPU lane width; channels are padded to this
MATMUL_DTYPE = jnp.bfloat16     # MXU input dtype (f32 accumulation kept); test tol relaxed


def _round_up(v, m):
    return (v + m - 1) // m * m


# ----------------------------- in-kernel helpers -----------------------------

def _silu(x):
    # exp and approx reciprocal both go to the EUP slot (no VPU divide sequence).
    return x * pl.reciprocal(1.0 + jnp.exp(-x), approx=True)


def _group_norm(x, gamma, beta, gmat, mean_row, eps=1e-5):
    # x: (HW, Cp) f32.  Spatial stats as two ones-row MXU matmuls (no (HW, 2Cp) concat,
    # no XLU sublane reduction), then the group-averaging matmul for group moments.
    s1 = jnp.dot(mean_row, x, preferred_element_type=jnp.float32)        # (1, Cp) E[x]
    s2 = jnp.dot(mean_row, x * x, preferred_element_type=jnp.float32)    # (1, Cp) E[x^2]
    gm = jnp.dot(s1, gmat, preferred_element_type=jnp.float32)           # (1, Cp) group mean
    gs2 = jnp.dot(s2, gmat, preferred_element_type=jnp.float32)          # (1, Cp) group E[x^2]
    inv = jax.lax.rsqrt(gs2 - gm * gm + eps)                             # EUP rsqrt
    return (x - gm) * inv * gamma + beta


def _conv3x3(h, w_flat, row, col, H, W):
    # h: (HW, Cp) f32; w_flat: (9*Cp, Cp) MATMUL_DTYPE with rows ordered (ky, kx, cin).
    # im2col via XLU rolls + iota validity masks (zero outside the image = implicit pad=1),
    # then a single K = 9*Cp MXU matmul.  No (H+2, W+2) padded copy, no per-tap concats.
    HW, Cp = h.shape
    taps = []
    for dy in (-1, 0, 1):
        for dx in (-1, 0, 1):
            off = dy * W + dx                       # want out[i] = h[i + off] (when valid)
            t = h if off == 0 else pltpu.roll(h, shift=(-off) % HW, axis=0)
            conds = []
            if dy == -1:
                conds.append(row >= 1)
            elif dy == 1:
                conds.append(row < H - 1)
            if dx == -1:
                conds.append(col >= 1)
            elif dx == 1:
                conds.append(col < W - 1)
            if conds:
                m = conds[0]
                for c in conds[1:]:
                    m = m & c
                t = jnp.where(m, t, 0.0)
            taps.append(t.astype(MATMUL_DTYPE))
    patches = jnp.concatenate(taps, axis=-1)        # (HW, 9*Cp) bf16, lane-aligned
    return jnp.dot(patches, w_flat, preferred_element_type=jnp.float32)


# --------------------------------- the kernel --------------------------------

def _make_kernel(H, W, B_tile, has_skip_conv):
    HW = H * W

    def kernel(x_ref, evec_ref,
               gn1_g_ref, gn1_b_ref, w1_ref,
               gn2_g_ref, gn2_b_ref, w2_ref, b2_ref,
               gmat1_ref, gmat2_ref, *rest):
        if has_skip_conv:
            skip_w_ref, skip_b_ref, out_ref = rest
        else:
            (out_ref,) = rest

        Cp = x_ref.shape[-1]

        # Hoisted per-step constants (reused for every image and both convs).
        mean_row = jnp.full((1, HW), np.float32(1.0 / HW), jnp.float32)
        row = jax.lax.broadcasted_iota(jnp.int32, (H, W, Cp), 0).reshape(HW, Cp)
        col = jax.lax.broadcasted_iota(jnp.int32, (H, W, Cp), 1).reshape(HW, Cp)

        gn1_g, gn1_b = gn1_g_ref[...], gn1_b_ref[...]
        gn2_g, gn2_b = gn2_g_ref[...], gn2_b_ref[...]
        gmat1, gmat2 = gmat1_ref[...], gmat2_ref[...]
        w1, w2, b2 = w1_ref[...], w2_ref[...], b2_ref[...]

        for b in range(B_tile):                     # static unroll over images in the block
            x = x_ref[b]                            # (HW, Cp) f32

            # in_layers: GroupNorm -> SiLU -> Conv3x3(pad=1)
            h = _group_norm(x, gn1_g, gn1_b, gmat1, mean_row)
            h = _conv3x3(_silu(h), w1, row, col, H, W)

            # emb_layers (SiLU -> Linear + be + b1) precomputed outside the kernel.
            h = h + evec_ref[b]                     # (1, Cp) broadcast over HW

            # out_layers: GroupNorm -> SiLU -> Dropout(p=0.0, no-op) -> Conv3x3(pad=1)
            # TODO(synk): dropout with p > 0 needs pltpu.prng_seed + stateful_bernoulli
            #             (seed must be per-image / per-step).
            h = _group_norm(h, gn2_g, gn2_b, gmat2, mean_row)
            h = _conv3x3(_silu(h), w2, row, col, H, W)

            # skip connection (identity when out_channels == channels); final conv bias
            # folded into the residual add.
            if has_skip_conv:
                skip = jnp.dot(x.astype(MATMUL_DTYPE), skip_w_ref[...],
                               preferred_element_type=jnp.float32) + skip_b_ref[...]
            else:
                skip = x

            out_ref[b] = (skip + h + b2).astype(out_ref.dtype)

    return kernel


# ------------------------- one-time parameter preparation ---------------------

def prepare_resblock_params(params, C, Cout, E, num_groups):
    """Load-time layout: pad channels to the 128-lane width, flatten conv weights to
    (9*Cp, Cp) im2col form in MATMUL_DTYPE, build group-averaging matrices."""
    Cp = _round_up(max(C, Cout), LANE)

    def pad_vec(v, n):
        return jnp.pad(v.astype(jnp.float32), (0, n - v.shape[0])).reshape(1, n)

    def conv_w(w):                                   # (Cout, Cin, 3, 3) -> (9*Cp, Cp) bf16
        co, ci = w.shape[0], w.shape[1]
        w = jnp.transpose(w, (2, 3, 1, 0))           # (ky, kx, cin, cout)
        w = jnp.pad(w.astype(jnp.float32), ((0, 0), (0, 0), (0, Cp - ci), (0, Cp - co)))
        return w.reshape(9 * Cp, Cp).astype(MATMUL_DTYPE)

    def group_avg(nc):                               # (Cp, Cp) group-averaging matrix (f32)
        gsize = nc // num_groups
        ids = np.arange(Cp) // gsize
        m = (ids[:, None] == ids[None, :]).astype(np.float32) / float(gsize)
        m[nc:, :] = 0.0
        m[:, nc:] = 0.0
        return jnp.asarray(m)

    prepped = {
        "C": C, "Cout": Cout, "Cp": Cp,
        "gn1_g": pad_vec(params["gn1_g"], Cp), "gn1_b": pad_vec(params["gn1_b"], Cp),
        "w1": conv_w(params["w1"]),
        # emb branch runs outside the kernel as one batched XLA matmul: keep raw f32,
        # and fold the conv1 bias into the emb bias.
        "we": params["we"].astype(jnp.float32),
        "be_b1": (params["be"] + params["b1"]).astype(jnp.float32),
        "gn2_g": pad_vec(params["gn2_g"], Cp), "gn2_b": pad_vec(params["gn2_b"], Cp),
        "w2": conv_w(params["w2"]), "b2": pad_vec(params["b2"], Cp),
        "gmat1": group_avg(C), "gmat2": group_avg(Cout),
    }
    if Cout != C:
        sw = jnp.transpose(params["skip_w"][:, :, 0, 0], (1, 0))        # (Cin, Cout)
        prepped["skip_w"] = jnp.pad(sw.astype(jnp.float32),
                                    ((0, Cp - C), (0, Cp - Cout))).astype(MATMUL_DTYPE)
        prepped["skip_b"] = pad_vec(params["skip_b"], Cp)
    return prepped


# --------------------------------- forward ------------------------------------

def _pick_batch_tile(N, HW, Cp):
    # Per-image in-kernel working set (f32 temps, bf16 im2col patches, int32 masks),
    # kept generous because the unrolled image loop does not bound live ranges.
    per_img = 4 * HW * Cp * 8 + 2 * HW * 9 * Cp
    budget = 8 << 20
    bt = max(1, min(N, 8, budget // max(per_img, 1)))
    while N % bt:                                    # keep the grid evenly divided
        bt -= 1
    return bt


def resblock_forward(x_nchw, emb, prepped):
    N, C, H, W = x_nchw.shape
    Cp, Cout = prepped["Cp"], prepped["Cout"]
    HW = H * W
    has_skip_conv = Cout != prepped["C"]

    # Layout plumbing (in a channels-last pipeline these live at the model boundary):
    # NCHW -> NHWC, pad C to 128 lanes, flatten spatial.
    x = jnp.transpose(x_nchw, (0, 2, 3, 1))
    x = jnp.pad(x, ((0, 0), (0, 0), (0, 0), (0, Cp - C))).reshape(N, HW, Cp)

    # emb branch hoisted out of the kernel: one batched matmul, conv1 bias folded in.
    e = emb.astype(jnp.float32)
    e = e * (1.0 / (1.0 + jnp.exp(-e)))                                   # SiLU
    evec = e @ prepped["we"] + prepped["be_b1"]                           # (N, Cout)
    evec = jnp.pad(evec, ((0, 0), (0, Cp - Cout))).reshape(N, 1, Cp)

    B_tile = _pick_batch_tile(N, HW, Cp)
    grid = (N // B_tile,)

    args = [x, evec,
            prepped["gn1_g"], prepped["gn1_b"], prepped["w1"],
            prepped["gn2_g"], prepped["gn2_b"], prepped["w2"], prepped["b2"],
            prepped["gmat1"], prepped["gmat2"]]
    if has_skip_conv:
        args += [prepped["skip_w"], prepped["skip_b"]]

    def full(a):   # weights / params: whole array VMEM-resident, same block every step
        return pl.BlockSpec(a.shape, lambda n, _nd=a.ndim: (0,) * _nd)

    in_specs = ([pl.BlockSpec((B_tile, HW, Cp), lambda n: (n, 0, 0)),
                 pl.BlockSpec((B_tile, 1, Cp), lambda n: (n, 0, 0))]
                + [full(a) for a in args[2:]])

    # VMEM budget from the actual footprint (double-buffered blocks + resident weights +
    # in-kernel intermediates), floored at the default scoped limit and capped at 56 MiB
    # to leave headroom under v7x's 64 MiB physical VMEM.
    weight_bytes = sum(int(np.prod(a.shape)) * a.dtype.itemsize for a in args[2:])
    block_bytes = 2 * (B_tile * HW * Cp * 4) * 2 + 2 * (B_tile * Cp * 4)
    interm_bytes = B_tile * (4 * HW * Cp * 8 + 2 * HW * 9 * Cp)
    vmem_limit = int(min(56 << 20, max(32 << 20,
                                       2 * (weight_bytes + block_bytes + interm_bytes))))

    flops = int(N * (4 * HW * (9 * Cp) * Cp + 8 * HW * Cp + 8 * Cp * Cp
                     + (2 * HW * Cp * Cp if has_skip_conv else 0)))
    transcendentals = int(N * (4 * HW * Cp + 4 * Cp))
    bytes_accessed = int(4 * (2 * N * HW * Cp + N * Cp) + weight_bytes)

    out = pl.pallas_call(
        _make_kernel(H, W, B_tile, has_skip_conv),
        out_shape=jax.ShapeDtypeStruct((N, HW, Cp), jnp.float32),
        grid_spec=pltpu.PrefetchScalarGridSpec(
            num_scalar_prefetch=0,
            grid=grid,
            in_specs=in_specs,
            out_specs=pl.BlockSpec((B_tile, HW, Cp), lambda n: (n, 0, 0)),
        ),
        compiler_params=pltpu.CompilerParams(
            dimension_semantics=("parallel",),       # shard batch blocks across TCs
            vmem_limit_bytes=vmem_limit,
        ),
        cost_estimate=pl.CostEstimate(
            flops=flops, transcendentals=transcendentals, bytes_accessed=bytes_accessed),
    )(*args)

    out = out.reshape(N, H, W, Cp)[..., :Cout]       # drop channel padding
    return jnp.transpose(out, (0, 3, 1, 2))          # back to NCHW for the caller


# ----------------------------- pure-JAX reference ------------------------------

def ref_forward(x, emb, params, num_groups):
    def gn(h, gamma, beta):
        Nn, Cc, Hh, Ww = h.shape
        hg = h.reshape(Nn, num_groups, -1)
        m = hg.mean(axis=2, keepdims=True)
        v = ((hg - m) ** 2).mean(axis=2, keepdims=True)
        hn = ((hg - m) / jnp.sqrt(v + 1e-5)).reshape(Nn, Cc, Hh, Ww)
        return hn * gamma[None, :, None, None] + beta[None, :, None, None]

    def silu(v):
        return v * (1.0 / (1.0 + jnp.exp(-v)))

    def conv3(h, w, b):
        y = jax.lax.conv_general_dilated(h, w, (1, 1), ((1, 1), (1, 1)),
                                         dimension_numbers=("NCHW", "OIHW", "NCHW"))
        return y + b[None, :, None, None]

    h = conv3(silu(gn(x, params["gn1_g"], params["gn1_b"])), params["w1"], params["b1"])
    e = silu(emb) @ params["we"] + params["be"]
    h = h + e[:, :, None, None]
    h = conv3(silu(gn(h, params["gn2_g"], params["gn2_b"])), params["w2"], params["b2"])
    if params["w1"].shape[0] == x.shape[1]:
        skip = x
    else:
        skip = jax.lax.conv_general_dilated(x, params["skip_w"], (1, 1), ((0, 0), (0, 0)),
                                            dimension_numbers=("NCHW", "OIHW", "NCHW"))
        skip = skip + params["skip_b"][None, :, None, None]
    return skip + h


# ----------------------------------- main --------------------------------------

if __name__ == "__main__":
    # ResBlock(channels=32, emb_channels=16, out_channels=None, dropout=0.0, group_size=8)
    N, C, H, W = 2, 32, 16, 16
    E = 16
    num_groups = 8
    Cout = C          # out_channels=None -> channels -> skip is nn.Identity()

    key = jax.random.PRNGKey(0)
    ks = jax.random.split(key, 8)

    x = jax.random.normal(ks[0], (N, C, H, W), jnp.float32)
    emb = jax.random.normal(ks[1], (N, E), jnp.float32)

    params = {
        "gn1_g": jnp.ones((C,), jnp.float32),
        "gn1_b": jnp.zeros((C,), jnp.float32),
        "w1": 0.1 * jax.random.normal(ks[2], (Cout, C, 3, 3), jnp.float32),
        "b1": 0.1 * jax.random.normal(ks[3], (Cout,), jnp.float32),
        "we": 0.1 * jax.random.normal(ks[4], (E, Cout), jnp.float32),   # Linear: emb @ we + be
        "be": 0.1 * jax.random.normal(ks[5], (Cout,), jnp.float32),
        "gn2_g": jnp.ones((Cout,), jnp.float32),
        "gn2_b": jnp.zeros((Cout,), jnp.float32),
        # zero_module() would zero these; non-zero here to exercise the full path.
        "w2": 0.1 * jax.random.normal(ks[6], (Cout, Cout, 3, 3), jnp.float32),
        "b2": 0.1 * jax.random.normal(ks[7], (Cout,), jnp.float32),
    }

    prepped = prepare_resblock_params(params, C, Cout, E, num_groups)

    out = jax.block_until_ready(resblock_forward(x, emb, prepped))
    ref = jax.block_until_ready(ref_forward(x, emb, params, num_groups))

    assert out.shape == (N, Cout, H, W)
    # bf16 MXU inputs (f32 accumulation): tolerance relaxed vs. the f32 reference.
    assert np.allclose(np.asarray(out), np.asarray(ref), rtol=5e-2, atol=5e-2), (
        "mismatch vs pure-JAX reference")

    print("KERNEL_OK")
</pallas_src>

<mosaic_0001>
module attributes {stable_mosaic.version = 11 : i64} {
  func.func @kernel(%arg0: i32, %arg1: memref<2x256x128xf32, #tpu.memory_space<vmem>>, %arg2: memref<2x1x128xf32, #tpu.memory_space<vmem>>, %arg3: memref<1x128xf32, #tpu.memory_space<vmem>>, %arg4: memref<1x128xf32, #tpu.memory_space<vmem>>, %arg5: memref<1152x128xbf16, #tpu.memory_space<vmem>>, %arg6: memref<1x128xf32, #tpu.memory_space<vmem>>, %arg7: memref<1x128xf32, #tpu.memory_space<vmem>>, %arg8: memref<1152x128xbf16, #tpu.memory_space<vmem>>, %arg9: memref<1x128xf32, #tpu.memory_space<vmem>>, %arg10: memref<128x128xf32, #tpu.memory_space<vmem>>, %arg11: memref<128x128xf32, #tpu.memory_space<vmem>>, %arg12: memref<2x256x128xf32, #tpu.memory_space<vmem>>) attributes {dimension_semantics = [#tpu.dimension_semantics<parallel>], iteration_bounds = array<i64: 1>, scalar_prefetch = 0 : i64, scratch_operands = 0 : i64, tpu.core_type = #tpu.core_type<tc>, window_params = [{transform_indices = @transform_0, window_bounds = array<i64: 2, 256, 128>}, {transform_indices = @transform_1, window_bounds = array<i64: 2, 1, 128>}, {pipeline_mode = #tpu.pipeline_mode<synchronous>, transform_indices = @transform_2, window_bounds = array<i64: 1, 128>}, {pipeline_mode = #tpu.pipeline_mode<synchronous>, transform_indices = @transform_3, window_bounds = array<i64: 1, 128>}, {pipeline_mode = #tpu.pipeline_mode<synchronous>, transform_indices = @transform_4, window_bounds = array<i64: 1152, 128>}, {pipeline_mode = #tpu.pipeline_mode<synchronous>, transform_indices = @transform_5, window_bounds = array<i64: 1, 128>}, {pipeline_mode = #tpu.pipeline_mode<synchronous>, transform_indices = @transform_6, window_bounds = array<i64: 1, 128>}, {pipeline_mode = #tpu.pipeline_mode<synchronous>, transform_indices = @transform_7, window_bounds = array<i64: 1152, 128>}, {pipeline_mode = #tpu.pipeline_mode<synchronous>, transform_indices = @transform_8, window_bounds = array<i64: 1, 128>}, {pipeline_mode = #tpu.pipeline_mode<synchronous>, transform_indices = @transform_9, window_bounds = array<i64: 128, 128>}, {pipeline_mode = #tpu.pipeline_mode<synchronous>, transform_indices = @transform_10, window_bounds = array<i64: 128, 128>}, {transform_indices = @transform_11, window_bounds = array<i64: 2, 256, 128>}]} {
    %cst = arith.constant 3.906250e-03 : f32
    %0 = vector.broadcast %cst : f32 to vector<1x256xf32>
    %1 = tpu.iota {dimensions = array<i32: 0>} : vector<16x16x128xi32>
    %2 = vector.shape_cast %1 : vector<16x16x128xi32> to vector<256x128xi32>
    %3 = tpu.iota {dimensions = array<i32: 1>} : vector<16x16x128xi32>
    %4 = vector.shape_cast %3 : vector<16x16x128xi32> to vector<256x128xi32>
    %c0 = arith.constant 0 : index
    %c0_0 = arith.constant 0 : index
    %5 = vector.load %arg3[%c0, %c0_0] : memref<1x128xf32, #tpu.memory_space<vmem>>, vector<1x128xf32>
    %c0_1 = arith.constant 0 : index
    %c0_2 = arith.constant 0 : index
    %6 = vector.load %arg4[%c0_1, %c0_2] : memref<1x128xf32, #tpu.memory_space<vmem>>, vector<1x128xf32>
    %c0_3 = arith.constant 0 : index
    %c0_4 = arith.constant 0 : index
    %7 = vector.load %arg6[%c0_3, %c0_4] : memref<1x128xf32, #tpu.memory_space<vmem>>, vector<1x128xf32>
    %c0_5 = arith.constant 0 : index
    %c0_6 = arith.constant 0 : index
    %8 = vector.load %arg7[%c0_5, %c0_6] : memref<1x128xf32, #tpu.memory_space<vmem>>, vector<1x128xf32>
    %c0_7 = arith.constant 0 : index
    %c0_8 = arith.constant 0 : index
    %9 = vector.load %arg10[%c0_7, %c0_8] : memref<128x128xf32, #tpu.memory_space<vmem>>, vector<128x128xf32>
    %c0_9 = arith.constant 0 : index
    %c0_10 = arith.constant 0 : index
    %10 = vector.load %arg11[%c0_9, %c0_10] : memref<128x128xf32, #tpu.memory_space<vmem>>, vector<128x128xf32>
    %c0_11 = arith.constant 0 : index
    %c0_12 = arith.constant 0 : index
    %11 = vector.load %arg5[%c0_11, %c0_12] : memref<1152x128xbf16, #tpu.memory_space<vmem>>, vector<1152x128xbf16>
    %c0_13 = arith.constant 0 : index
    %c0_14 = arith.constant 0 : index
    %12 = vector.load %arg8[%c0_13, %c0_14] : memref<1152x128xbf16, #tpu.memory_space<vmem>>, vector<1152x128xbf16>
    %c0_15 = arith.constant 0 : index
    %c0_16 = arith.constant 0 : index
    %13 = vector.load %arg9[%c0_15, %c0_16] : memref<1x128xf32, #tpu.memory_space<vmem>>, vector<1x128xf32>
    %c0_17 = arith.constant 0 : index
    %c0_18 = arith.constant 0 : index
    %c0_19 = arith.constant 0 : index
    %14 = vector.load %arg1[%c0_17, %c0_18, %c0_19] : memref<2x256x128xf32, #tpu.memory_space<vmem>>, vector<1x256x128xf32>
    %15 = vector.shape_cast %14 : vector<1x256x128xf32> to vector<256x128xf32>
    %cst_20 = arith.constant dense<0.000000e+00> : vector<1x128xf32>
    %16 = tpu.matmul %0, %15, %cst_20 {dimension_numbers = #tpu.dot_dimension_numbers<[1], [0], [0], [1], [0, 0, 1, 1], [], []>} : vector<1x256xf32>, vector<256x128xf32>, vector<1x128xf32> -> vector<1x128xf32>
    %17 = arith.mulf %15, %15 : vector<256x128xf32>
    %cst_21 = arith.constant dense<0.000000e+00> : vector<1x128xf32>
    %18 = tpu.matmul %0, %17, %cst_21 {dimension_numbers = #tpu.dot_dimension_numbers<[1], [0], [0], [1], [0, 0, 1, 1], [], []>} : vector<1x256xf32>, vector<256x128xf32>, vector<1x128xf32> -> vector<1x128xf32>
    %cst_22 = arith.constant dense<0.000000e+00> : vector<1x128xf32>
    %19 = tpu.matmul %16, %9, %cst_22 {dimension_numbers = #tpu.dot_dimension_numbers<[1], [0], [0], [1], [0, 0, 1, 1], [], []>} : vector<1x128xf32>, vector<128x128xf32>, vector<1x128xf32> -> vector<1x128xf32>
    %cst_23 = arith.constant dense<0.000000e+00> : vector<1x128xf32>
    %20 = tpu.matmul %18, %9, %cst_23 {dimension_numbers = #tpu.dot_dimension_numbers<[1], [0], [0], [1], [0, 0, 1, 1], [], []>} : vector<1x128xf32>, vector<128x128xf32>, vector<1x128xf32> -> vector<1x128xf32>
    %21 = arith.mulf %19, %19 : vector<1x128xf32>
    %22 = arith.subf %20, %21 : vector<1x128xf32>
    %cst_24 = arith.constant 9.99999974E-6 : f32
    %23 = vector.broadcast %cst_24 : f32 to vector<1x128xf32>
    %24 = arith.addf %22, %23 : vector<1x128xf32>
    %25 = math.rsqrt %24 : vector<1x128xf32>
    %26 = vector.broadcast %19 : vector<1x128xf32> to vector<256x128xf32>
    %27 = arith.subf %15, %26 : vector<256x128xf32>
    %28 = vector.broadcast %25 : vector<1x128xf32> to vector<256x128xf32>
    %29 = arith.mulf %27, %28 : vector<256x128xf32>
    %30 = vector.broadcast %5 : vector<1x128xf32> to vector<256x128xf32>
    %31 = arith.mulf %29, %30 : vector<256x128xf32>
    %32 = vector.broadcast %6 : vector<1x128xf32> to vector<256x128xf32>
    %33 = arith.addf %31, %32 : vector<256x128xf32>
    %cst_25 = arith.constant 0.000000e+00 : f32
    %34 = vector.broadcast %cst_25 : f32 to vector<256x128xf32>
    %35 = arith.subf %34, %33 : vector<256x128xf32>
    %36 = math.exp %35 : vector<256x128xf32>
    %cst_26 = arith.constant 1.000000e+00 : f32
    %37 = vector.broadcast %cst_26 : f32 to vector<256x128xf32>
    %38 = arith.addf %37, %36 : vector<256x128xf32>
    %39 = tpu.reciprocal %38 {approx = true} : vector<256x128xf32> -> vector<256x128xf32>
    %40 = arith.mulf %33, %39 : vector<256x128xf32>
    %c17_i32 = arith.constant 17 : i32
    %41 = tpu.dynamic_rotate %40 by %c17_i32 dim 0 : vector<256x128xf32>, i32 -> vector<256x128xf32>
    %c1_i32 = arith.constant 1 : i32
    %42 = vector.broadcast %c1_i32 : i32 to vector<256x128xi32>
    %43 = arith.cmpi sge, %2, %42 : vector<256x128xi32>
    %c1_i32_27 = arith.constant 1 : i32
    %44 = vector.broadcast %c1_i32_27 : i32 to vector<256x128xi32>
    %45 = arith.cmpi sge, %4, %44 : vector<256x128xi32>
    %46 = arith.andi %43, %45 : vector<256x128xi1>
    %cst_28 = arith.constant 0.000000e+00 : f32
    %47 = vector.broadcast %cst_28 : f32 to vector<256x128xf32>
    %48 = arith.select %46, %41, %47 : vector<256x128xi1>, vector<256x128xf32>
    %49 = arith.truncf %48 : vector<256x128xf32> to vector<256x128xbf16>
    %c16_i32 = arith.constant 16 : i32
    %50 = tpu.dynamic_rotate %40 by %c16_i32 dim 0 : vector<256x128xf32>, i32 -> vector<256x128xf32>
    %c1_i32_29 = arith.constant 1 : i32
    %51 = vector.broadcast %c1_i32_29 : i32 to vector<256x128xi32>
    %52 = arith.cmpi sge, %2, %51 : vector<256x128xi32>
    %cst_30 = arith.constant 0.000000e+00 : f32
    %53 = vector.broadcast %cst_30 : f32 to vector<256x128xf32>
    %54 = arith.select %52, %50, %53 : vector<256x128xi1>, vector<256x128xf32>
    %55 = arith.truncf %54 : vector<256x128xf32> to vector<256x128xbf16>
    %c15_i32 = arith.constant 15 : i32
    %56 = tpu.dynamic_rotate %40 by %c15_i32 dim 0 : vector<256x128xf32>, i32 -> vector<256x128xf32>
    %c1_i32_31 = arith.constant 1 : i32
    %57 = vector.broadcast %c1_i32_31 : i32 to vector<256x128xi32>
    %58 = arith.cmpi sge, %2, %57 : vector<256x128xi32>
    %c15_i32_32 = arith.constant 15 : i32
    %59 = vector.broadcast %c15_i32_32 : i32 to vector<256x128xi32>
    %60 = arith.cmpi slt, %4, %59 : vector<256x128xi32>
    %61 = arith.andi %58, %60 : vector<256x128xi1>
    %cst_33 = arith.constant 0.000000e+00 : f32
    %62 = vector.broadcast %cst_33 : f32 to vector<256x128xf32>
    %63 = arith.select %61, %56, %62 : vector<256x128xi1>, vector<256x128xf32>
    %64 = arith.truncf %63 : vector<256x128xf32> to vector<256x128xbf16>
    %c1_i32_34 = arith.constant 1 : i32
    %65 = tpu.dynamic_rotate %40 by %c1_i32_34 dim 0 : vector<256x128xf32>, i32 -> vector<256x128xf32>
    %c1_i32_35 = arith.constant 1 : i32
    %66 = vector.broadcast %c1_i32_35 : i32 to vector<256x128xi32>
    %67 = arith.cmpi sge, %4, %66 : vector<256x128xi32>
    %cst_36 = arith.constant 0.000000e+00 : f32
    %68 = vector.broadcast %cst_36 : f32 to vector<256x128xf32>
    %69 = arith.select %67, %65, %68 : vector<256x128xi1>, vector<256x128xf32>
    %70 = arith.truncf %69 : vector<256x128xf32> to vector<256x128xbf16>
    %71 = arith.truncf %40 : vector<256x128xf32> to vector<256x128xbf16>
    %c255_i32 = arith.constant 255 : i32
    %72 = tpu.dynamic_rotate %40 by %c255_i32 dim 0 : vector<256x128xf32>, i32 -> vector<256x128xf32>
    %c15_i32_37 = arith.constant 15 : i32
    %73 = vector.broadcast %c15_i32_37 : i32 to vector<256x128xi32>
    %74 = arith.cmpi slt, %4, %73 : vector<256x128xi32>
    %cst_38 = arith.constant 0.000000e+00 : f32
    %75 = vector.broadcast %cst_38 : f32 to vector<256x128xf32>
    %76 = arith.select %74, %72, %75 : vector<256x128xi1>, vector<256x128xf32>
    %77 = arith.truncf %76 : vector<256x128xf32> to vector<256x128xbf16>
    %c241_i32 = arith.constant 241 : i32
    %78 = tpu.dynamic_rotate %40 by %c241_i32 dim 0 : vector<256x128xf32>, i32 -> vector<256x128xf32>
    %c15_i32_39 = arith.constant 15 : i32
    %79 = vector.broadcast %c15_i32_39 : i32 to vector<256x128xi32>
    %80 = arith.cmpi slt, %2, %79 : vector<256x128xi32>
    %c1_i32_40 = arith.constant 1 : i32
    %81 = vector.broadcast %c1_i32_40 : i32 to vector<256x128xi32>
    %82 = arith.cmpi sge, %4, %81 : vector<256x128xi32>
    %83 = arith.andi %80, %82 : vector<256x128xi1>
    %cst_41 = arith.constant 0.000000e+00 : f32
    %84 = vector.broadcast %cst_41 : f32 to vector<256x128xf32>
    %85 = arith.select %83, %78, %84 : vector<256x128xi1>, vector<256x128xf32>
    %86 = arith.truncf %85 : vector<256x128xf32> to vector<256x128xbf16>
    %c240_i32 = arith.constant 240 : i32
    %87 = tpu.dynamic_rotate %40 by %c240_i32 dim 0 : vector<256x128xf32>, i32 -> vector<256x128xf32>
    %c15_i32_42 = arith.constant 15 : i32
    %88 = vector.broadcast %c15_i32_42 : i32 to vector<256x128xi32>
    %89 = arith.cmpi slt, %2, %88 : vector<256x128xi32>
    %cst_43 = arith.constant 0.000000e+00 : f32
    %90 = vector.broadcast %cst_43 : f32 to vector<256x128xf32>
    %91 = arith.select %89, %87, %90 : vector<256x128xi1>, vector<256x128xf32>
    %92 = arith.truncf %91 : vector<256x128xf32> to vector<256x128xbf16>
    %c239_i32 = arith.constant 239 : i32
    %93 = tpu.dynamic_rotate %40 by %c239_i32 dim 0 : vector<256x128xf32>, i32 -> vector<256x128xf32>
    %c15_i32_44 = arith.constant 15 : i32
    %94 = vector.broadcast %c15_i32_44 : i32 to vector<256x128xi32>
    %95 = arith.cmpi slt, %2, %94 : vector<256x128xi32>
    %c15_i32_45 = arith.constant 15 : i32
    %96 = vector.broadcast %c15_i32_45 : i32 to vector<256x128xi32>
    %97 = arith.cmpi slt, %4, %96 : vector<256x128xi32>
    %98 = arith.andi %95, %97 : vector<256x128xi1>
    %cst_46 = arith.constant 0.000000e+00 : f32
    %99 = vector.broadcast %cst_46 : f32 to vector<256x128xf32>
    %100 = arith.select %98, %93, %99 : vector<256x128xi1>, vector<256x128xf32>
    %101 = arith.truncf %100 : vector<256x128xf32> to vector<256x128xbf16>
    %102 = tpu.concatenate %49, %55, %64, %70, %71, %77, %86, %92, %101 in 1 : vector<256x128xbf16>, vector<256x128xbf16>, vector<256x128xbf16>, vector<256x128xbf16>, vector<256x128xbf16>, vector<256x128xbf16>, vector<256x128xbf16>, vector<256x128xbf16>, vector<256x128xbf16> -> vector<256x1152xbf16>
    %cst_47 = arith.constant dense<0.000000e+00> : vector<256x128xf32>
    %103 = tpu.matmul %102, %11, %cst_47 {dimension_numbers = #tpu.dot_dimension_numbers<[1], [0], [0], [1], [0, 0, 1, 1], [], []>} : vector<256x1152xbf16>, vector<1152x128xbf16>, vector<256x128xf32> -> vector<256x128xf32>
    %c0_48 = arith.constant 0 : index
    %c0_49 = arith.constant 0 : index
    %c0_50 = arith.constant 0 : index
    %104 = vector.load %arg2[%c0_48, %c0_49, %c0_50] : memref<2x1x128xf32, #tpu.memory_space<vmem>>, vector<1x1x128xf32>
    %105 = vector.shape_cast %104 : vector<1x1x128xf32> to vector<1x128xf32>
    %106 = vector.broadcast %105 : vector<1x128xf32> to vector<256x128xf32>
    %107 = arith.addf %103, %106 : vector<256x128xf32>
    %cst_51 = arith.constant dense<0.000000e+00> : vector<1x128xf32>
    %108 = tpu.matmul %0, %107, %cst_51 {dimension_numbers = #tpu.dot_dimension_numbers<[1], [0], [0], [1], [0, 0, 1, 1], [], []>} : vector<1x256xf32>, vector<256x128xf32>, vector<1x128xf32> -> vector<1x128xf32>
    %109 = arith.mulf %107, %107 : vector<256x128xf32>
    %cst_52 = arith.constant dense<0.000000e+00> : vector<1x128xf32>
    %110 = tpu.matmul %0, %109, %cst_52 {dimension_numbers = #tpu.dot_dimension_numbers<[1], [0], [0], [1], [0, 0, 1, 1], [], []>} : vector<1x256xf32>, vector<256x128xf32>, vector<1x128xf32> -> vector<1x128xf32>
    %cst_53 = arith.constant dense<0.000000e+00> : vector<1x128xf32>
    %111 = tpu.matmul %108, %10, %cst_53 {dimension_numbers = #tpu.dot_dimension_numbers<[1], [0], [0], [1], [0, 0, 1, 1], [], []>} : vector<1x128xf32>, vector<128x128xf32>, vector<1x128xf32> -> vector<1x128xf32>
    %cst_54 = arith.constant dense<0.000000e+00> : vector<1x128xf32>
    %112 = tpu.matmul %110, %10, %cst_54 {dimension_numbers = #tpu.dot_dimension_numbers<[1], [0], [0], [1], [0, 0, 1, 1], [], []>} : vector<1x128xf32>, vector<128x128xf32>, vector<1x128xf32> -> vector<1x128xf32>
    %113 = arith.mulf %111, %111 : vector<1x128xf32>
    %114 = arith.subf %112, %113 : vector<1x128xf32>
    %cst_55 = arith.constant 9.99999974E-6 : f32
    %115 = vector.broadcast %cst_55 : f32 to vector<1x128xf32>
    %116 = arith.addf %114, %115 : vector<1x128xf32>
    %117 = math.rsqrt %116 : vector<1x128xf32>
    %118 = vector.broadcast %111 : vector<1x128xf32> to vector<256x128xf32>
    %119 = arith.subf %107, %118 : vector<256x128xf32>
    %120 = vector.broadcast %117 : vector<1x128xf32> to vector<256x128xf32>
    %121 = arith.mulf %119, %120 : vector<256x128xf32>
    %122 = vector.broadcast %7 : vector<1x128xf32> to vector<256x128xf32>
    %123 = arith.mulf %121, %122 : vector<256x128xf32>
    %124 = vector.broadcast %8 : vector<1x128xf32> to vector<256x128xf32>
    %125 = arith.addf %123, %124 : vector<256x128xf32>
    %cst_56 = arith.constant 0.000000e+00 : f32
    %126 = vector.broadcast %cst_56 : f32 to vector<256x128xf32>
    %127 = arith.subf %126, %125 : vector<256x128xf32>
    %128 = math.exp %127 : vector<256x128xf32>
    %cst_57 = arith.constant 1.000000e+00 : f32
    %129 = vector.broadcast %cst_57 : f32 to vector<256x128xf32>
    %130 = arith.addf %129, %128 : vector<256x128xf32>
    %131 = tpu.reciprocal %130 {approx = true} : vector<256x128xf32> -> vector<256x128xf32>
    %132 = arith.mulf %125, %131 : vector<256x128xf32>
    %c17_i32_58 = arith.constant 17 : i32
    %133 = tpu.dynamic_rotate %132 by %c17_i32_58 dim 0 : vector<256x128xf32>, i32 -> vector<256x128xf32>
    %c1_i32_59 = arith.constant 1 : i32
    %134 = vector.broadcast %c1_i32_59 : i32 to vector<256x128xi32>
    %135 = arith.cmpi sge, %2, %134 : vector<256x128xi32>
    %c1_i32_60 = arith.constant 1 : i32
    %136 = vector.broadcast %c1_i32_60 : i32 to vector<256x128xi32>
    %137 = arith.cmpi sge, %4, %136 : vector<256x128xi32>
    %138 = arith.andi %135, %137 : vector<256x128xi1>
    %cst_61 = arith.constant 0.000000e+00 : f32
    %139 = vector.broadcast %cst_61 : f32 to vector<256x128xf32>
    %140 = arith.select %138, %133, %139 : vector<256x128xi1>, vector<256x128xf32>
    %141 = arith.truncf %140 : vector<256x128xf32> to vector<256x128xbf16>
    %c16_i32_62 = arith.constant 16 : i32
    %142 = tpu.dynamic_rotate %132 by %c16_i32_62 dim 0 : vector<256x128xf32>, i32 -> vector<256x128xf32>
    %c1_i32_63 = arith.constant 1 : i32
    %143 = vector.broadcast %c1_i32_63 : i32 to vector<256x128xi32>
    %144 = arith.cmpi sge, %2, %143 : vector<256x128xi32>
    %cst_64 = arith.constant 0.000000e+00 : f32
    %145 = vector.broadcast %cst_64 : f32 to vector<256x128xf32>
    %146 = arith.select %144, %142, %145 : vector<256x128xi1>, vector<256x128xf32>
    %147 = arith.truncf %146 : vector<256x128xf32> to vector<256x128xbf16>
    %c15_i32_65 = arith.constant 15 : i32
    %148 = tpu.dynamic_rotate %132 by %c15_i32_65 dim 0 : vector<256x128xf32>, i32 -> vector<256x128xf32>
    %c1_i32_66 = arith.constant 1 : i32
    %149 = vector.broadcast %c1_i32_66 : i32 to vector<256x128xi32>
    %150 = arith.cmpi sge, %2, %149 : vector<256x128xi32>
    %c15_i32_67 = arith.constant 15 : i32
    %151 = vector.broadcast %c15_i32_67 : i32 to vector<256x128xi32>
    %152 = arith.cmpi slt, %4, %151 : vector<256x128xi32>
    %153 = arith.andi %150, %152 : vector<256x128xi1>
    %cst_68 = arith.constant 0.000000e+00 : f32
    %154 = vector.broadcast %cst_68 : f32 to vector<256x128xf32>
    %155 = arith.select %153, %148, %154 : vector<256x128xi1>, vector<256x128xf32>
    %156 = arith.truncf %155 : vector<256x128xf32> to vector<256x128xbf16>
    %c1_i32_69 = arith.constant 1 : i32
    %157 = tpu.dynamic_rotate %132 by %c1_i32_69 dim 0 : vector<256x128xf32>, i32 -> vector<256x128xf32>
    %c1_i32_70 = arith.constant 1 : i32
    %158 = vector.broadcast %c1_i32_70 : i32 to vector<256x128xi32>
    %159 = arith.cmpi sge, %4, %158 : vector<256x128xi32>
    %cst_71 = arith.constant 0.000000e+00 : f32
    %160 = vector.broadcast %cst_71 : f32 to vector<256x128xf32>
    %161 = arith.select %159, %157, %160 : vector<256x128xi1>, vector<256x128xf32>
    %162 = arith.truncf %161 : vector<256x128xf32> to vector<256x128xbf16>
    %163 = arith.truncf %132 : vector<256x128xf32> to vector<256x128xbf16>
    %c255_i32_72 = arith.constant 255 : i32
    %164 = tpu.dynamic_rotate %132 by %c255_i32_72 dim 0 : vector<256x128xf32>, i32 -> vector<256x128xf32>
    %c15_i32_73 = arith.constant 15 : i32
    %165 = vector.broadcast %c15_i32_73 : i32 to vector<256x128xi32>
    %166 = arith.cmpi slt, %4, %165 : vector<256x128xi32>
    %cst_74 = arith.constant 0.000000e+00 : f32
    %167 = vector.broadcast %cst_74 : f32 to vector<256x128xf32>
    %168 = arith.select %166, %164, %167 : vector<256x128xi1>, vector<256x128xf32>
    %169 = arith.truncf %168 : vector<256x128xf32> to vector<256x128xbf16>
    %c241_i32_75 = arith.constant 241 : i32
    %170 = tpu.dynamic_rotate %132 by %c241_i32_75 dim 0 : vector<256x128xf32>, i32 -> vector<256x128xf32>
    %c15_i32_76 = arith.constant 15 : i32
    %171 = vector.broadcast %c15_i32_76 : i32 to vector<256x128xi32>
    %172 = arith.cmpi slt, %2, %171 : vector<256x128xi32>
    %c1_i32_77 = arith.constant 1 : i32
    %173 = vector.broadcast %c1_i32_77 : i32 to vector<256x128xi32>
    %174 = arith.cmpi sge, %4, %173 : vector<256x128xi32>
    %175 = arith.andi %172, %174 : vector<256x128xi1>
    %cst_78 = arith.constant 0.000000e+00 : f32
    %176 = vector.broadcast %cst_78 : f32 to vector<256x128xf32>
    %177 = arith.select %175, %170, %176 : vector<256x128xi1>, vector<256x128xf32>
    %178 = arith.truncf %177 : vector<256x128xf32> to vector<256x128xbf16>
    %c240_i32_79 = arith.constant 240 : i32
    %179 = tpu.dynamic_rotate %132 by %c240_i32_79 dim 0 : vector<256x128xf32>, i32 -> vector<256x128xf32>
    %c15_i32_80 = arith.constant 15 : i32
    %180 = vector.broadcast %c15_i32_80 : i32 to vector<256x128xi32>
    %181 = arith.cmpi slt, %2, %180 : vector<256x128xi32>
    %cst_81 = arith.constant 0.000000e+00 : f32
    %182 = vector.broadcast %cst_81 : f32 to vector<256x128xf32>
    %183 = arith.select %181, %179, %182 : vector<256x128xi1>, vector<256x128xf32>
    %184 = arith.truncf %183 : vector<256x128xf32> to vector<256x128xbf16>
    %c239_i32_82 = arith.constant 239 : i32
    %185 = tpu.dynamic_rotate %132 by %c239_i32_82 dim 0 : vector<256x128xf32>, i32 -> vector<256x128xf32>
    %c15_i32_83 = arith.constant 15 : i32
    %186 = vector.broadcast %c15_i32_83 : i32 to vector<256x128xi32>
    %187 = arith.cmpi slt, %2, %186 : vector<256x128xi32>
    %c15_i32_84 = arith.constant 15 : i32
    %188 = vector.broadcast %c15_i32_84 : i32 to vector<256x128xi32>
    %189 = arith.cmpi slt, %4, %188 : vector<256x128xi32>
    %190 = arith.andi %187, %189 : vector<256x128xi1>
    %cst_85 = arith.constant 0.000000e+00 : f32
    %191 = vector.broadcast %cst_85 : f32 to vector<256x128xf32>
    %192 = arith.select %190, %185, %191 : vector<256x128xi1>, vector<256x128xf32>
    %193 = arith.truncf %192 : vector<256x128xf32> to vector<256x128xbf16>
    %194 = tpu.concatenate %141, %147, %156, %162, %163, %169, %178, %184, %193 in 1 : vector<256x128xbf16>, vector<256x128xbf16>, vector<256x128xbf16>, vector<256x128xbf16>, vector<256x128xbf16>, vector<256x128xbf16>, vector<256x128xbf16>, vector<256x128xbf16>, vector<256x128xbf16> -> vector<256x1152xbf16>
    %cst_86 = arith.constant dense<0.000000e+00> : vector<256x128xf32>
    %195 = tpu.matmul %194, %12, %cst_86 {dimension_numbers = #tpu.dot_dimension_numbers<[1], [0], [0], [1], [0, 0, 1, 1], [], []>} : vector<256x1152xbf16>, vector<1152x128xbf16>, vector<256x128xf32> -> vector<256x128xf32>
    %196 = arith.addf %15, %195 : vector<256x128xf32>
    %197 = vector.broadcast %13 : vector<1x128xf32> to vector<256x128xf32>
    %198 = arith.addf %196, %197 : vector<256x128xf32>
    %c0_87 = arith.constant 0 : index
    %c0_88 = arith.constant 0 : index
    %c0_89 = arith.constant 0 : index
    %199 = vector.load %arg12[%c0_87, %c0_88, %c0_89] : memref<2x256x128xf32, #tpu.memory_space<vmem>>, vector<1x256x128xf32>
    %200 = vector.shape_cast %199 : vector<1x256x128xf32> to vector<256x128xf32>
    %201 = vector.shape_cast %198 : vector<256x128xf32> to vector<1x256x128xf32>
    tpu.vector_store %arg12[%c0_87, %c0_88, %c0_89], %201 {strides = array<i32>} : memref<2x256x128xf32, #tpu.memory_space<vmem>>, vector<1x256x128xf32>,
    %c1 = arith.constant 1 : index
    %c0_90 = arith.constant 0 : index
    %c0_91 = arith.constant 0 : index
    %202 = vector.load %arg1[%c1, %c0_90, %c0_91] : memref<2x256x128xf32, #tpu.memory_space<vmem>>, vector<1x256x128xf32>
    %203 = vector.shape_cast %202 : vector<1x256x128xf32> to vector<256x128xf32>
    %cst_92 = arith.constant dense<0.000000e+00> : vector<1x128xf32>
    %204 = tpu.matmul %0, %203, %cst_92 {dimension_numbers = #tpu.dot_dimension_numbers<[1], [0], [0], [1], [0, 0, 1, 1], [], []>} : vector<1x256xf32>, vector<256x128xf32>, vector<1x128xf32> -> vector<1x128xf32>
    %205 = arith.mulf %203, %203 : vector<256x128xf32>
    %cst_93 = arith.constant dense<0.000000e+00> : vector<1x128xf32>
    %206 = tpu.matmul %0, %205, %cst_93 {dimension_numbers = #tpu.dot_dimension_numbers<[1], [0], [0], [1], [0, 0, 1, 1], [], []>} : vector<1x256xf32>, vector<256x128xf32>, vector<1x128xf32> -> vector<1x128xf32>
    %cst_94 = arith.constant dense<0.000000e+00> : vector<1x128xf32>
    %207 = tpu.matmul %204, %9, %cst_94 {dimension_numbers = #tpu.dot_dimension_numbers<[1], [0], [0], [1], [0, 0, 1, 1], [], []>} : vector<1x128xf32>, vector<128x128xf32>, vector<1x128xf32> -> vector<1x128xf32>
    %cst_95 = arith.constant dense<0.000000e+00> : vector<1x128xf32>
    %208 = tpu.matmul %206, %9, %cst_95 {dimension_numbers = #tpu.dot_dimension_numbers<[1], [0], [0], [1], [0, 0, 1, 1], [], []>} : vector<1x128xf32>, vector<128x128xf32>, vector<1x128xf32> -> vector<1x128xf32>
    %209 = arith.mulf %207, %207 : vector<1x128xf32>
    %210 = arith.subf %208, %209 : vector<1x128xf32>
    %cst_96 = arith.constant 9.99999974E-6 : f32
    %211 = vector.broadcast %cst_96 : f32 to vector<1x128xf32>
    %212 = arith.addf %210, %211 : vector<1x128xf32>
    %213 = math.rsqrt %212 : vector<1x128xf32>
    %214 = vector.broadcast %207 : vector<1x128xf32> to vector<256x128xf32>
    %215 = arith.subf %203, %214 : vector<256x128xf32>
    %216 = vector.broadcast %213 : vector<1x128xf32> to vector<256x128xf32>
    %217 = arith.mulf %215, %216 : vector<256x128xf32>
    %218 = vector.broadcast %5 : vector<1x128xf32> to vector<256x128xf32>
    %219 = arith.mulf %217, %218 : vector<256x128xf32>
    %220 = vector.broadcast %6 : vector<1x128xf32> to vector<256x128xf32>
    %221 = arith.addf %219, %220 : vector<256x128xf32>
    %cst_97 = arith.constant 0.000000e+00 : f32
    %222 = vector.broadcast %cst_97 : f32 to vector<256x128xf32>
    %223 = arith.subf %222, %221 : vector<256x128xf32>
    %224 = math.exp %223 : vector<256x128xf32>
    %cst_98 = arith.constant 1.000000e+00 : f32
    %225 = vector.broadcast %cst_98 : f32 to vector<256x128xf32>
    %226 = arith.addf %225, %224 : vector<256x128xf32>
    %227 = tpu.reciprocal %226 {approx = true} : vector<256x128xf32> -> vector<256x128xf32>
    %228 = arith.mulf %221, %227 : vector<256x128xf32>
    %c17_i32_99 = arith.constant 17 : i32
    %229 = tpu.dynamic_rotate %228 by %c17_i32_99 dim 0 : vector<256x128xf32>, i32 -> vector<256x128xf32>
    %c1_i32_100 = arith.constant 1 : i32
    %230 = vector.broadcast %c1_i32_100 : i32 to vector<256x128xi32>
    %231 = arith.cmpi sge, %2, %230 : vector<256x128xi32>
    %c1_i32_101 = arith.constant 1 : i32
    %232 = vector.broadcast %c1_i32_101 : i32 to vector<256x128xi32>
    %233 = arith.cmpi sge, %4, %232 : vector<256x128xi32>
    %234 = arith.andi %231, %233 : vector<256x128xi1>
    %cst_102 = arith.constant 0.000000e+00 : f32
    %235 = vector.broadcast %cst_102 : f32 to vector<256x128xf32>
    %236 = arith.select %234, %229, %235 : vector<256x128xi1>, vector<256x128xf32>
    %237 = arith.truncf %236 : vector<256x128xf32> to vector<256x128xbf16>
    %c16_i32_103 = arith.constant 16 : i32
    %238 = tpu.dynamic_rotate %228 by %c16_i32_103 dim 0 : vector<256x128xf32>, i32 -> vector<256x128xf32>
    %c1_i32_104 = arith.constant 1 : i32
    %239 = vector.broadcast %c1_i32_104 : i32 to vector<256x128xi32>
    %240 = arith.cmpi sge, %2, %239 : vector<256x128xi32>
    %cst_105 = arith.constant 0.000000e+00 : f32
    %241 = vector.broadcast %cst_105 : f32 to vector<256x128xf32>
    %242 = arith.select %240, %238, %241 : vector<256x128xi1>, vector<256x128xf32>
    %243 = arith.truncf %242 : vector<256x128xf32> to vector<256x128xbf16>
    %c15_i32_106 = arith.constant 15 : i32
    %244 = tpu.dynamic_rotate %228 by %c15_i32_106 dim 0 : vector<256x128xf32>, i32 -> vector<256x128xf32>
    %c1_i32_107 = arith.constant 1 : i32
    %245 = vector.broadcast %c1_i32_107 : i32 to vector<256x128xi32>
    %246 = arith.cmpi sge, %2, %245 : vector<256x128xi32>
    %c15_i32_108 = arith.constant 15 : i32
    %247 = vector.broadcast %c15_i32_108 : i32 to vector<256x128xi32>
    %248 = arith.cmpi slt, %4, %247 : vector<256x128xi32>
    %249 = arith.andi %246, %248 : vector<256x128xi1>
    %cst_109 = arith.constant 0.000000e+00 : f32
    %250 = vector.broadcast %cst_109 : f32 to vector<256x128xf32>
    %251 = arith.select %249, %244, %250 : vector<256x128xi1>, vector<256x128xf32>
    %252 = arith.truncf %251 : vector<256x128xf32> to vector<256x128xbf16>
    %c1_i32_110 = arith.constant 1 : i32
    %253 = tpu.dynamic_rotate %228 by %c1_i32_110 dim 0 : vector<256x128xf32>, i32 -> vector<256x128xf32>
    %c1_i32_111 = arith.constant 1 : i32
    %254 = vector.broadcast %c1_i32_111 : i32 to vector<256x128xi32>
    %255 = arith.cmpi sge, %4, %254 : vector<256x128xi32>
    %cst_112 = arith.constant 0.000000e+00 : f32
    %256 = vector.broadcast %cst_112 : f32 to vector<256x128xf32>
    %257 = arith.select %255, %253, %256 : vector<256x128xi1>, vector<256x128xf32>
    %258 = arith.truncf %257 : vector<256x128xf32> to vector<256x128xbf16>
    %259 = arith.truncf %228 : vector<256x128xf32> to vector<256x128xbf16>
    %c255_i32_113 = arith.constant 255 : i32
    %260 = tpu.dynamic_rotate %228 by %c255_i32_113 dim 0 : vector<256x128xf32>, i32 -> vector<256x128xf32>
    %c15_i32_114 = arith.constant 15 : i32
    %261 = vector.broadcast %c15_i32_114 : i32 to vector<256x128xi32>
    %262 = arith.cmpi slt, %4, %261 : vector<256x128xi32>
    %cst_115 = arith.constant 0.000000e+00 : f32
    %263 = vector.broadcast %cst_115 : f32 to vector<256x128xf32>
    %264 = arith.select %262, %260, %263 : vector<256x128xi1>, vector<256x128xf32>
    %265 = arith.truncf %264 : vector<256x128xf32> to vector<256x128xbf16>
    %c241_i32_116 = arith.constant 241 : i32
    %266 = tpu.dynamic_rotate %228 by %c241_i32_116 dim 0 : vector<256x128xf32>, i32 -> vector<256x128xf32>
    %c15_i32_117 = arith.constant 15 : i32
    %267 = vector.broadcast %c15_i32_117 : i32 to vector<256x128xi32>
    %268 = arith.cmpi slt, %2, %267 : vector<256x128xi32>
    %c1_i32_118 = arith.constant 1 : i32
    %269 = vector.broadcast %c1_i32_118 : i32 to vector<256x128xi32>
    %270 = arith.cmpi sge, %4, %269 : vector<256x128xi32>
    %271 = arith.andi %268, %270 : vector<256x128xi1>
    %cst_119 = arith.constant 0.000000e+00 : f32
    %272 = vector.broadcast %cst_119 : f32 to vector<256x128xf32>
    %273 = arith.select %271, %266, %272 : vector<256x128xi1>, vector<256x128xf32>
    %274 = arith.truncf %273 : vector<256x128xf32> to vector<256x128xbf16>
    %c240_i32_120 = arith.constant 240 : i32
    %275 = tpu.dynamic_rotate %228 by %c240_i32_120 dim 0 : vector<256x128xf32>, i32 -> vector<256x128xf32>
    %c15_i32_121 = arith.constant 15 : i32
    %276 = vector.broadcast %c15_i32_121 : i32 to vector<256x128xi32>
    %277 = arith.cmpi slt, %2, %276 : vector<256x128xi32>
    %cst_122 = arith.constant 0.000000e+00 : f32
    %278 = vector.broadcast %cst_122 : f32 to vector<256x128xf32>
    %279 = arith.select %277, %275, %278 : vector<256x128xi1>, vector<256x128xf32>
    %280 = arith.truncf %279 : vector<256x128xf32> to vector<256x128xbf16>
    %c239_i32_123 = arith.constant 239 : i32
    %281 = tpu.dynamic_rotate %228 by %c239_i32_123 dim 0 : vector<256x128xf32>, i32 -> vector<256x128xf32>
    %c15_i32_124 = arith.constant 15 : i32
    %282 = vector.broadcast %c15_i32_124 : i32 to vector<256x128xi32>
    %283 = arith.cmpi slt, %2, %282 : vector<256x128xi32>
    %c15_i32_125 = arith.constant 15 : i32
    %284 = vector.broadcast %c15_i32_125 : i32 to vector<256x128xi32>
    %285 = arith.cmpi slt, %4, %284 : vector<256x128xi32>
    %286 = arith.andi %283, %285 : vector<256x128xi1>
    %cst_126 = arith.constant 0.000000e+00 : f32
    %287 = vector.broadcast %cst_126 : f32 to vector<256x128xf32>
    %288 = arith.select %286, %281, %287 : vector<256x128xi1>, vector<256x128xf32>
    %289 = arith.truncf %288 : vector<256x128xf32> to vector<256x128xbf16>
    %290 = tpu.concatenate %237, %243, %252, %258, %259, %265, %274, %280, %289 in 1 : vector<256x128xbf16>, vector<256x128xbf16>, vector<256x128xbf16>, vector<256x128xbf16>, vector<256x128xbf16>, vector<256x128xbf16>, vector<256x128xbf16>, vector<256x128xbf16>, vector<256x128xbf16> -> vector<256x1152xbf16>
    %cst_127 = arith.constant dense<0.000000e+00> : vector<256x128xf32>
    %291 = tpu.matmul %290, %11, %cst_127 {dimension_numbers = #tpu.dot_dimension_numbers<[1], [0], [0], [1], [0, 0, 1, 1], [], []>} : vector<256x1152xbf16>, vector<1152x128xbf16>, vector<256x128xf32> -> vector<256x128xf32>
    %c1_128 = arith.constant 1 : index
    %c0_129 = arith.constant 0 : index
    %c0_130 = arith.constant 0 : index
    %292 = vector.load %arg2[%c1_128, %c0_129, %c0_130] : memref<2x1x128xf32, #tpu.memory_space<vmem>>, vector<1x1x128xf32>
    %293 = vector.shape_cast %292 : vector<1x1x128xf32> to vector<1x128xf32>
    %294 = vector.broadcast %293 : vector<1x128xf32> to vector<256x128xf32>
    %295 = arith.addf %291, %294 : vector<256x128xf32>
    %cst_131 = arith.constant dense<0.000000e+00> : vector<1x128xf32>
    %296 = tpu.matmul %0, %295, %cst_131 {dimension_numbers = #tpu.dot_dimension_numbers<[1], [0], [0], [1], [0, 0, 1, 1], [], []>} : vector<1x256xf32>, vector<256x128xf32>, vector<1x128xf32> -> vector<1x128xf32>
    %297 = arith.mulf %295, %295 : vector<256x128xf32>
    %cst_132 = arith.constant dense<0.000000e+00> : vector<1x128xf32>
    %298 = tpu.matmul %0, %297, %cst_132 {dimension_numbers = #tpu.dot_dimension_numbers<[1], [0], [0], [1], [0, 0, 1, 1], [], []>} : vector<1x256xf32>, vector<256x128xf32>, vector<1x128xf32> -> vector<1x128xf32>
    %cst_133 = arith.constant dense<0.000000e+00> : vector<1x128xf32>
    %299 = tpu.matmul %296, %10, %cst_133 {dimension_numbers = #tpu.dot_dimension_numbers<[1], [0], [0], [1], [0, 0, 1, 1], [], []>} : vector<1x128xf32>, vector<128x128xf32>, vector<1x128xf32> -> vector<1x128xf32>
    %cst_134 = arith.constant dense<0.000000e+00> : vector<1x128xf32>
    %300 = tpu.matmul %298, %10, %cst_134 {dimension_numbers = #tpu.dot_dimension_numbers<[1], [0], [0], [1], [0, 0, 1, 1], [], []>} : vector<1x128xf32>, vector<128x128xf32>, vector<1x128xf32> -> vector<1x128xf32>
    %301 = arith.mulf %299, %299 : vector<1x128xf32>
    %302 = arith.subf %300, %301 : vector<1x128xf32>
    %cst_135 = arith.constant 9.99999974E-6 : f32
    %303 = vector.broadcast %cst_135 : f32 to vector<1x128xf32>
    %304 = arith.addf %302, %303 : vector<1x128xf32>
    %305 = math.rsqrt %304 : vector<1x128xf32>
    %306 = vector.broadcast %299 : vector<1x128xf32> to vector<256x128xf32>
    %307 = arith.subf %295, %306 : vector<256x128xf32>
    %308 = vector.broadcast %305 : vector<1x128xf32> to vector<256x128xf32>
    %309 = arith.mulf %307, %308 : vector<256x128xf32>
    %310 = vector.broadcast %7 : vector<1x128xf32> to vector<256x128xf32>
    %311 = arith.mulf %309, %310 : vector<256x128xf32>
    %312 = vector.broadcast %8 : vector<1x128xf32> to vector<256x128xf32>
    %313 = arith.addf %311, %312 : vector<256x128xf32>
    %cst_136 = arith.constant 0.000000e+00 : f32
    %314 = vector.broadcast %cst_136 : f32 to vector<256x128xf32>
    %315 = arith.subf %314, %313 : vector<256x128xf32>
    %316 = math.exp %315 : vector<256x128xf32>
    %cst_137 = arith.constant 1.000000e+00 : f32
    %317 = vector.broadcast %cst_137 : f32 to vector<256x128xf32>
    %318 = arith.addf %317, %316 : vector<256x128xf32>
    %319 = tpu.reciprocal %318 {approx = true} : vector<256x128xf32> -> vector<256x128xf32>
    %320 = arith.mulf %313, %319 : vector<256x128xf32>
    %c17_i32_138 = arith.constant 17 : i32
    %321 = tpu.dynamic_rotate %320 by %c17_i32_138 dim 0 : vector<256x128xf32>, i32 -> vector<256x128xf32>
    %c1_i32_139 = arith.constant 1 : i32
    %322 = vector.broadcast %c1_i32_139 : i32 to vector<256x128xi32>
    %323 = arith.cmpi sge, %2, %322 : vector<256x128xi32>
    %c1_i32_140 = arith.constant 1 : i32
    %324 = vector.broadcast %c1_i32_140 : i32 to vector<256x128xi32>
    %325 = arith.cmpi sge, %4, %324 : vector<256x128xi32>
    %326 = arith.andi %323, %325 : vector<256x128xi1>
    %cst_141 = arith.constant 0.000000e+00 : f32
    %327 = vector.broadcast %cst_141 : f32 to vector<256x128xf32>
    %328 = arith.select %326, %321, %327 : vector<256x128xi1>, vector<256x128xf32>
    %329 = arith.truncf %328 : vector<256x128xf32> to vector<256x128xbf16>
    %c16_i32_142 = arith.constant 16 : i32
    %330 = tpu.dynamic_rotate %320 by %c16_i32_142 dim 0 : vector<256x128xf32>, i32 -> vector<256x128xf32>
    %c1_i32_143 = arith.constant 1 : i32
    %331 = vector.broadcast %c1_i32_143 : i32 to vector<256x128xi32>
    %332 = arith.cmpi sge, %2, %331 : vector<256x128xi32>
    %cst_144 = arith.constant 0.000000e+00 : f32
    %333 = vector.broadcast %cst_144 : f32 to vector<256x128xf32>
    %334 = arith.select %332, %330, %333 : vector<256x128xi1>, vector<256x128xf32>
    %335 = arith.truncf %334 : vector<256x128xf32> to vector<256x128xbf16>
    %c15_i32_145 = arith.constant 15 : i32
    %336 = tpu.dynamic_rotate %320 by %c15_i32_145 dim 0 : vector<256x128xf32>, i32 -> vector<256x128xf32>
    %c1_i32_146 = arith.constant 1 : i32
    %337 = vector.broadcast %c1_i32_146 : i32 to vector<256x128xi32>
    %338 = arith.cmpi sge, %2, %337 : vector<256x128xi32>
    %c15_i32_147 = arith.constant 15 : i32
    %339 = vector.broadcast %c15_i32_147 : i32 to vector<256x128xi32>
    %340 = arith.cmpi slt, %4, %339 : vector<256x128xi32>
    %341 = arith.andi %338, %340 : vector<256x128xi1>
    %cst_148 = arith.constant 0.000000e+00 : f32
    %342 = vector.broadcast %cst_148 : f32 to vector<256x128xf32>
    %343 = arith.select %341, %336, %342 : vector<256x128xi1>, vector<256x128xf32>
    %344 = arith.truncf %343 : vector<256x128xf32> to vector<256x128xbf16>
    %c1_i32_149 = arith.constant 1 : i32
    %345 = tpu.dynamic_rotate %320 by %c1_i32_149 dim 0 : vector<256x128xf32>, i32 -> vector<256x128xf32>
    %c1_i32_150 = arith.constant 1 : i32
    %346 = vector.broadcast %c1_i32_150 : i32 to vector<256x128xi32>
    %347 = arith.cmpi sge, %4, %346 : vector<256x128xi32>
    %cst_151 = arith.constant 0.000000e+00 : f32
    %348 = vector.broadcast %cst_151 : f32 to vector<256x128xf32>
    %349 = arith.select %347, %345, %348 : vector<256x128xi1>, vector<256x128xf32>
    %350 = arith.truncf %349 : vector<256x128xf32> to vector<256x128xbf16>
    %351 = arith.truncf %320 : vector<256x128xf32> to vector<256x128xbf16>
    %c255_i32_152 = arith.constant 255 : i32
    %352 = tpu.dynamic_rotate %320 by %c255_i32_152 dim 0 : vector<256x128xf32>, i32 -> vector<256x128xf32>
    %c15_i32_153 = arith.constant 15 : i32
    %353 = vector.broadcast %c15_i32_153 : i32 to vector<256x128xi32>
    %354 = arith.cmpi slt, %4, %353 : vector<256x128xi32>
    %cst_154 = arith.constant 0.000000e+00 : f32
    %355 = vector.broadcast %cst_154 : f32 to vector<256x128xf32>
    %356 = arith.select %354, %352, %355 : vector<256x128xi1>, vector<256x128xf32>
    %357 = arith.truncf %356 : vector<256x128xf32> to vector<256x128xbf16>
    %c241_i32_155 = arith.constant 241 : i32
    %358 = tpu.dynamic_rotate %320 by %c241_i32_155 dim 0 : vector<256x128xf32>, i32 -> vector<256x128xf32>
    %c15_i32_156 = arith.constant 15 : i32
    %359 = vector.broadcast %c15_i32_156 : i32 to vector<256x128xi32>
    %360 = arith.cmpi slt, %2, %359 : vector<256x128xi32>
    %c1_i32_157 = arith.constant 1 : i32
    %361 = vector.broadcast %c1_i32_157 : i32 to vector<256x128xi32>
    %362 = arith.cmpi sge, %4, %361 : vector<256x128xi32>
    %363 = arith.andi %360, %362 : vector<256x128xi1>
    %cst_158 = arith.constant 0.000000e+00 : f32
    %364 = vector.broadcast %cst_158 : f32 to vector<256x128xf32>
    %365 = arith.select %363, %358, %364 : vector<256x128xi1>, vector<256x128xf32>
    %366 = arith.truncf %365 : vector<256x128xf32> to vector<256x128xbf16>
    %c240_i32_159 = arith.constant 240 : i32
    %367 = tpu.dynamic_rotate %320 by %c240_i32_159 dim 0 : vector<256x128xf32>, i32 -> vector<256x128xf32>
    %c15_i32_160 = arith.constant 15 : i32
    %368 = vector.broadcast %c15_i32_160 : i32 to vector<256x128xi32>
    %369 = arith.cmpi slt, %2, %368 : vector<256x128xi32>
    %cst_161 = arith.constant 0.000000e+00 : f32
    %370 = vector.broadcast %cst_161 : f32 to vector<256x128xf32>
    %371 = arith.select %369, %367, %370 : vector<256x128xi1>, vector<256x128xf32>
    %372 = arith.truncf %371 : vector<256x128xf32> to vector<256x128xbf16>
    %c239_i32_162 = arith.constant 239 : i32
    %373 = tpu.dynamic_rotate %320 by %c239_i32_162 dim 0 : vector<256x128xf32>, i32 -> vector<256x128xf32>
    %c15_i32_163 = arith.constant 15 : i32
    %374 = vector.broadcast %c15_i32_163 : i32 to vector<256x128xi32>
    %375 = arith.cmpi slt, %2, %374 : vector<256x128xi32>
    %c15_i32_164 = arith.constant 15 : i32
    %376 = vector.broadcast %c15_i32_164 : i32 to vector<256x128xi32>
    %377 = arith.cmpi slt, %4, %376 : vector<256x128xi32>
    %378 = arith.andi %375, %377 : vector<256x128xi1>
    %cst_165 = arith.constant 0.000000e+00 : f32
    %379 = vector.broadcast %cst_165 : f32 to vector<256x128xf32>
    %380 = arith.select %378, %373, %379 : vector<256x128xi1>, vector<256x128xf32>
    %381 = arith.truncf %380 : vector<256x128xf32> to vector<256x128xbf16>
    %382 = tpu.concatenate %329, %335, %344, %350, %351, %357, %366, %372, %381 in 1 : vector<256x128xbf16>, vector<256x128xbf16>, vector<256x128xbf16>, vector<256x128xbf16>, vector<256x128xbf16>, vector<256x128xbf16>, vector<256x128xbf16>, vector<256x128xbf16>, vector<256x128xbf16> -> vector<256x1152xbf16>
    %cst_166 = arith.constant dense<0.000000e+00> : vector<256x128xf32>
    %383 = tpu.matmul %382, %12, %cst_166 {dimension_numbers = #tpu.dot_dimension_numbers<[1], [0], [0], [1], [0, 0, 1, 1], [], []>} : vector<256x1152xbf16>, vector<1152x128xbf16>, vector<256x128xf32> -> vector<256x128xf32>
    %384 = arith.addf %203, %383 : vector<256x128xf32>
    %385 = vector.broadcast %13 : vector<1x128xf32> to vector<256x128xf32>
    %386 = arith.addf %384, %385 : vector<256x128xf32>
    %c1_167 = arith.constant 1 : index
    %c0_168 = arith.constant 0 : index
    %c0_169 = arith.constant 0 : index
    %387 = vector.load %arg12[%c1_167, %c0_168, %c0_169] : memref<2x256x128xf32, #tpu.memory_space<vmem>>, vector<1x256x128xf32>
    %388 = vector.shape_cast %387 : vector<1x256x128xf32> to vector<256x128xf32>
    %389 = vector.shape_cast %386 : vector<256x128xf32> to vector<1x256x128xf32>
    tpu.vector_store %arg12[%c1_167, %c0_168, %c0_169], %389 {strides = array<i32>} : memref<2x256x128xf32, #tpu.memory_space<vmem>>, vector<1x256x128xf32>,
    return
  }
  func.func @transform_0(%arg0: i32) -> (i32, i32, i32) {
    %c0_i32 = arith.constant 0 : i32
    %c0_i32_0 = arith.constant 0 : i32
    %c0_i32_1 = arith.constant 0 : i32
    return %arg0, %c0_i32, %c0_i32_0 : i32, i32, i32
  }
  func.func @transform_1(%arg0: i32) -> (i32, i32, i32) {
    %c0_i32 = arith.constant 0 : i32
    %c0_i32_0 = arith.constant 0 : i32
    %c0_i32_1 = arith.constant 0 : i32
    return %arg0, %c0_i32, %c0_i32_0 : i32, i32, i32
  }
  func.func @transform_2(%arg0: i32) -> (i32, i32) {
    %c0_i32 = arith.constant 0 : i32
    %c0_i32_0 = arith.constant 0 : i32
    %c0_i32_1 = arith.constant 0 : i32
    return %c0_i32, %c0_i32_0 : i32, i32
  }
  func.func @transform_3(%arg0: i32) -> (i32, i32) {
    %c0_i32 = arith.constant 0 : i32
    %c0_i32_0 = arith.constant 0 : i32
    %c0_i32_1 = arith.constant 0 : i32
    return %c0_i32, %c0_i32_0 : i32, i32
  }
  func.func @transform_4(%arg0: i32) -> (i32, i32) {
    %c0_i32 = arith.constant 0 : i32
    %c0_i32_0 = arith.constant 0 : i32
    %c0_i32_1 = arith.constant 0 : i32
    return %c0_i32, %c0_i32_0 : i32, i32
  }
  func.func @transform_5(%arg0: i32) -> (i32, i32) {
    %c0_i32 = arith.constant 0 : i32
    %c0_i32_0 = arith.constant 0 : i32
    %c0_i32_1 = arith.constant 0 : i32
    return %c0_i32, %c0_i32_0 : i32, i32
  }
  func.func @transform_6(%arg0: i32) -> (i32, i32) {
    %c0_i32 = arith.constant 0 : i32
    %c0_i32_0 = arith.constant 0 : i32
    %c0_i32_1 = arith.constant 0 : i32
    return %c0_i32, %c0_i32_0 : i32, i32
  }
  func.func @transform_7(%arg0: i32) -> (i32, i32) {
    %c0_i32 = arith.constant 0 : i32
    %c0_i32_0 = arith.constant 0 : i32
    %c0_i32_1 = arith.constant 0 : i32
    return %c0_i32, %c0_i32_0 : i32, i32
  }
  func.func @transform_8(%arg0: i32) -> (i32, i32) {
    %c0_i32 = arith.constant 0 : i32
    %c0_i32_0 = arith.constant 0 : i32
    %c0_i32_1 = arith.constant 0 : i32
    return %c0_i32, %c0_i32_0 : i32, i32
  }
  func.func @transform_9(%arg0: i32) -> (i32, i32) {
    %c0_i32 = arith.constant 0 : i32
    %c0_i32_0 = arith.constant 0 : i32
    %c0_i32_1 = arith.constant 0 : i32
    return %c0_i32, %c0_i32_0 : i32, i32
  }
  func.func @transform_10(%arg0: i32) -> (i32, i32) {
    %c0_i32 = arith.constant 0 : i32
    %c0_i32_0 = arith.constant 0 : i32
    %c0_i32_1 = arith.constant 0 : i32
    return %c0_i32, %c0_i32_0 : i32, i32
  }
  func.func @transform_11(%arg0: i32) -> (i32, i32, i32) {
    %c0_i32 = arith.constant 0 : i32
    %c0_i32_0 = arith.constant 0 : i32
    %c0_i32_1 = arith.constant 0 : i32
    return %arg0, %c0_i32, %c0_i32_0 : i32, i32, i32
  }
}

</mosaic_0001>

<llo_original>
// kernel: tpu_custom_call.1
$region0: #{tpu_custom_call.1}
  #allocation0 [shape = 'u32[]', space=smem, size = 0x4, offset = 0x4, fixed_abs, tag = 'smem constant byte address 0x4 - core index']
  #allocation1 [shape = 'u32[144,128]{1,0:T(1,128)}', space=vmem, size = 0x12000, scoped, tag = 'internal scratch']
  %s0 = inlined_call_operand.hbm [shape: f32[2,256,128], index: 0, kind: input, shape index: {}]
  %s1 = inlined_call_operand.hbm [shape: f32[2,1,128], index: 1, kind: input, shape index: {}]
  %s2 = inlined_call_operand.vmem [shape: f32[1,128], index: 2, kind: input, shape index: {}]
  %s3 = inlined_call_operand.vmem [shape: f32[1,128], index: 3, kind: input, shape index: {}]
  %s4 = inlined_call_operand.hbm [shape: bf16[1152,128], index: 4, kind: input, shape index: {}]
  %s5 = inlined_call_operand.vmem [shape: f32[1,128], index: 5, kind: input, shape index: {}]
  %s6 = inlined_call_operand.vmem [shape: f32[1,128], index: 6, kind: input, shape index: {}]
  %s7 = inlined_call_operand.hbm [shape: bf16[1152,128], index: 7, kind: input, shape index: {}]
  %s8 = inlined_call_operand.vmem [shape: f32[1,128], index: 8, kind: input, shape index: {}]
  %s9 = inlined_call_operand.hbm [shape: f32[128,128], index: 9, kind: input, shape index: {}]
  %s10 = inlined_call_operand.hbm [shape: f32[128,128], index: 10, kind: input, shape index: {}]
  %s11 = inlined_call_operand.hbm [shape: f32[2,256,128], index: 11, kind: output, shape index: {}]
  %s12 = sld [smem:[#allocation0]]
  $region78: #{tpu_custom_call.1} parent=0
    _
  %s14 = ssub.s32 1, %s12
  %s15 = scalar_select 0, %s14, %s12
  $region1: #{tpu_custom_call.1} parent=0
    #allocation2 [shape = 'u8[262144]{0}', space=vmem, size = 0x40000, scoped, tag = 'input window, operand 0, single buffered']
    #allocation3 [shape = 's32[1]{0}', space=sflag, size = 0x4, scoped, tag = 'scoped memory for tpu_custom_call.1']
    #allocation4 [shape = 's32[1]{0}', space=sflag, size = 0x4, scoped, tag = 'scoped memory for tpu_custom_call.1']
    #allocation5 [shape = 'u8[1024]{0}', space=vmem, size = 0x400, scoped, tag = 'input window, operand 1, single buffered']
    #allocation6 [shape = 's32[1]{0}', space=sflag, size = 0x4, scoped, tag = 'scoped memory for tpu_custom_call.1']
    #allocation7 [shape = 'u8[294912]{0}', space=vmem, size = 0x48000, scoped, tag = 'input window, operand 4, single buffered']
    #allocation8 [shape = 'u8[294912]{0}', space=vmem, size = 0x48000, scoped, tag = 'input window, operand 7, single buffered']
    #allocation9 [shape = 's32[1]{0}', space=sflag, size = 0x4, scoped, tag = 'scoped memory for tpu_custom_call.1']
    #allocation10 [shape = 'u8[65536]{0}', space=vmem, size = 0x10000, scoped, tag = 'input window, operand 9, single buffered']
    #allocation11 [shape = 'u8[65536]{0}', space=vmem, size = 0x10000, scoped, tag = 'input window, operand 10, single buffered']
    #allocation12 [shape = 's32[1]{0}', space=sflag, size = 0x4, scoped, tag = 'scoped memory for tpu_custom_call.1']
    #allocation13 [shape = 'u8[262144]{0}', space=vmem, size = 0x40000, scoped, tag = 'output window, operand 0, single buffered']
    %16 = vsyncpa [#allocation3], 0
    %17 = vsyncpa [#allocation6], 0
    %18 = vsyncpa [#allocation9], 0
    %19 = vsyncpa [#allocation12], 0
    %20 = vsyncpa [#allocation4], 0
    // Predicated region
    $region2: #{tpu_custom_call.1} parent=1 // pred_check
      _
    $region3: #{tpu_custom_call.1} parent=1 // pred_check_branch
      %22 = sbr.rel (0) target = $region5
    $region4: #{tpu_custom_call.1} parent=1 // pred_region
      %s24 = ssub.s32 8192, 8192
      %25 = vsyncadd [#allocation3], %s24
      %s26 = sshll.u32 [#allocation2], 4
      %s27 = int_to_ptr.vmem [resolvable:$true] %s26
      %32 = dma.hbm_to_vmem [thread:$0]  %s0, 8192, %s27, [#allocation3], 128, 128, 8
    $region5: #{tpu_custom_call.1} parent=1 // pred_fallthru
      _
    // Predicated region
    $region6: #{tpu_custom_call.1} parent=1 // pred_check
      _
    $region7: #{tpu_custom_call.1} parent=1 // pred_check_branch
      %34 = sbr.rel (0) target = $region9
    $region8: #{tpu_custom_call.1} parent=1 // pred_region
      %s36 = ssub.s32 32, 32
      %37 = vsyncadd [#allocation6], %s36
      %s38 = sshll.u32 [#allocation5], 4
      %s39 = int_to_ptr.vmem [resolvable:$true] %s38
      %44 = dma.hbm_to_vmem [thread:$0]  %s1, 32, %s39, [#allocation6], 16, 16, 1
    $region9: #{tpu_custom_call.1} parent=1 // pred_fallthru
      _
    // Predicated region
    $region10: #{tpu_custom_call.1} parent=1 // pred_check
      _
    $region11: #{tpu_custom_call.1} parent=1 // pred_check_branch
      %46 = sbr.rel (0) target = $region13
    $region12: #{tpu_custom_call.1} parent=1 // pred_region
      _
    $region13: #{tpu_custom_call.1} parent=1 // pred_fallthru
      _
    // Predicated region
    $region14: #{tpu_custom_call.1} parent=1 // pred_check
      _
    $region15: #{tpu_custom_call.1} parent=1 // pred_check_branch
      %48 = sbr.rel (0) target = $region17
    $region16: #{tpu_custom_call.1} parent=1 // pred_region
      _
    $region17: #{tpu_custom_call.1} parent=1 // pred_fallthru
      _
    // Predicated region
    $region18: #{tpu_custom_call.1} parent=1 // pred_check
      _
    $region19: #{tpu_custom_call.1} parent=1 // pred_check_branch
      %50 = sbr.rel (0) target = $region21
    $region20: #{tpu_custom_call.1} parent=1 // pred_region
      %s52 = ssub.s32 9216, 9216
      %53 = vsyncadd [#allocation6], %s52
      %s54 = sshll.u32 [#allocation7], 4
      %s55 = int_to_ptr.vmem [resolvable:$true] %s54
      %60 = dma.hbm_to_vmem [thread:$0]  %s4, 9216, %s55, [#allocation6], 64, 64, 4
    $region21: #{tpu_custom_call.1} parent=1 // pred_fallthru
      _
    // Predicated region
    $region22: #{tpu_custom_call.1} parent=1 // pred_check
      _
    $region23: #{tpu_custom_call.1} parent=1 // pred_check_branch
      %62 = sbr.rel (0) target = $region25
    $region24: #{tpu_custom_call.1} parent=1 // pred_region
      _
    $region25: #{tpu_custom_call.1} parent=1 // pred_fallthru
      _
    // Predicated region
    $region26: #{tpu_custom_call.1} parent=1 // pred_check
      _
    $region27: #{tpu_custom_call.1} parent=1 // pred_check_branch
      %64 = sbr.rel (0) target = $region29
    $region28: #{tpu_custom_call.1} parent=1 // pred_region
      _
    $region29: #{tpu_custom_call.1} parent=1 // pred_fallthru
      _
    // Predicated region
    $region30: #{tpu_custom_call.1} parent=1 // pred_check
      _
    $region31: #{tpu_custom_call.1} parent=1 // pred_check_branch
      %66 = sbr.rel (0) target = $region33
    $region32: #{tpu_custom_call.1} parent=1 // pred_region
      %s68 = ssub.s32 9216, 9216
      %69 = vsyncadd [#allocation9], %s68
      %s70 = sshll.u32 [#allocation8], 4
      %s71 = int_to_ptr.vmem [resolvable:$true] %s70
      %76 = dma.hbm_to_vmem [thread:$0]  %s7, 9216, %s71, [#allocation9], 64, 64, 4
    $region33: #{tpu_custom_call.1} parent=1 // pred_fallthru
      _
    // Predicated region
    $region34: #{tpu_custom_call.1} parent=1 // pred_check
      _
    $region35: #{tpu_custom_call.1} parent=1 // pred_check_branch
      %78 = sbr.rel (0) target = $region37
    $region36: #{tpu_custom_call.1} parent=1 // pred_region
      _
    $region37: #{tpu_custom_call.1} parent=1 // pred_fallthru
      _
    // Predicated region
    $region38: #{tpu_custom_call.1} parent=1 // pred_check
      _
    $region39: #{tpu_custom_call.1} parent=1 // pred_check_branch
      %80 = sbr.rel (0) target = $region41
    $region40: #{tpu_custom_call.1} parent=1 // pred_region
      %s82 = ssub.s32 2048, 2048
      %83 = vsyncadd [#allocation9], %s82
      %s84 = sshll.u32 [#allocation10], 4
      %s85 = int_to_ptr.vmem [resolvable:$true] %s84
      %90 = dma.hbm_to_vmem [thread:$0]  %s9, 2048, %s85, [#allocation9], 128, 128, 8
    $region41: #{tpu_custom_call.1} parent=1 // pred_fallthru
      _
    // Predicated region
    $region42: #{tpu_custom_call.1} parent=1 // pred_check
      _
    $region43: #{tpu_custom_call.1} parent=1 // pred_check_branch
      %92 = sbr.rel (0) target = $region45
    $region44: #{tpu_custom_call.1} parent=1 // pred_region
      %s94 = ssub.s32 2048, 2048
      %95 = vsyncadd [#allocation12], %s94
      %s96 = sshll.u32 [#allocation11], 4
      %s97 = int_to_ptr.vmem [resolvable:$true] %s96
      %102 = dma.hbm_to_vmem [thread:$0]  %s10, 2048, %s97, [#allocation12], 128, 128, 8
    $region45: #{tpu_custom_call.1} parent=1 // pred_fallthru
      _
    // Predicated region
    $region46: #{tpu_custom_call.1} parent=1 // pred_check
      _
    $region47: #{tpu_custom_call.1} parent=1 // pred_check_branch
      %104 = sbr.rel (0) target = $region49
    $region48: #{tpu_custom_call.1} parent=1 // pred_region
      %105 = dma.done [#allocation3], 8192
    $region49: #{tpu_custom_call.1} parent=1 // pred_fallthru
      _
    // Predicated region
    $region50: #{tpu_custom_call.1} parent=1 // pred_check
      _
    $region51: #{tpu_custom_call.1} parent=1 // pred_check_branch
      %107 = sbr.rel (0) target = $region53
    $region52: #{tpu_custom_call.1} parent=1 // pred_region
      %108 = dma.done [#allocation6], 32
    $region53: #{tpu_custom_call.1} parent=1 // pred_fallthru
      _
    // Predicated region
    $region54: #{tpu_custom_call.1} parent=1 // pred_check
      _
    $region55: #{tpu_custom_call.1} parent=1 // pred_check_branch
      %110 = sbr.rel (0) target = $region57
    $region56: #{tpu_custom_call.1} parent=1 // pred_region
      %111 = dma.done [#allocation6], 9216
    $region57: #{tpu_custom_call.1} parent=1 // pred_fallthru
      _
    // Predicated region
    $region58: #{tpu_custom_call.1} parent=1 // pred_check
      _
    $region59: #{tpu_custom_call.1} parent=1 // pred_check_branch
      %113 = sbr.rel (0) target = $region61
    $region60: #{tpu_custom_call.1} parent=1 // pred_region
      %114 = dma.done [#allocation9], 9216
    $region61: #{tpu_custom_call.1} parent=1 // pred_fallthru
      _
    // Predicated region
    $region62: #{tpu_custom_call.1} parent=1 // pred_check
      _
    $region63: #{tpu_custom_call.1} parent=1 // pred_check_branch
      %116 = sbr.rel (0) target = $region65
    $region64: #{tpu_custom_call.1} parent=1 // pred_region
      %117 = dma.done [#allocation9], 2048
    $region65: #{tpu_custom_call.1} parent=1 // pred_fallthru
      _
    // Predicated region
    $region66: #{tpu_custom_call.1} parent=1 // pred_check
      _
    $region67: #{tpu_custom_call.1} parent=1 // pred_check_branch
      %119 = sbr.rel (0) target = $region69
    $region68: #{tpu_custom_call.1} parent=1 // pred_region
      %120 = dma.done [#allocation12], 2048
    $region69: #{tpu_custom_call.1} parent=1 // pred_fallthru
      _
    %v122 = vlaneseq
    %v123 = vshrl.u32 %v122, 7
    %v124 = vadd.s32 %v123, 8
    %v125 = vld [vmem:[%s2] sm:$0x1]
    %v126 = vld [vmem:[%s3] sm:$0x1]
    %v127 = vld [vmem:[%s5] sm:$0x1]
    %v128 = vld [vmem:[%s6] sm:$0x1]
    %v129 = vld [vmem:[#allocation10] sm:$0xff]
    %v130 = vld [vmem:[#allocation10 + $0x8] sm:$0xff]
    %v131 = vld [vmem:[#allocation10 + $0x10] sm:$0xff]
    %v132 = vld [vmem:[#allocation10 + $0x18] sm:$0xff]
    %v133 = vld [vmem:[#allocation10 + $0x20] sm:$0xff]
    %v134 = vld [vmem:[#allocation10 + $0x28] sm:$0xff]
    %v135 = vld [vmem:[#allocation10 + $0x30] sm:$0xff]
    %v136 = vld [vmem:[#allocation10 + $0x38] sm:$0xff]
    %v137 = vld [vmem:[#allocation10 + $0x40] sm:$0xff]
    %v138 = vld [vmem:[#allocation10 + $0x48] sm:$0xff]
    %v139 = vld [vmem:[#allocation10 + $0x50] sm:$0xff]
    %v140 = vld [vmem:[#allocation10 + $0x58] sm:$0xff]
    %v141 = vld [vmem:[#allocation10 + $0x60] sm:$0xff]
    %v142 = vld [vmem:[#allocation10 + $0x68] sm:$0xff]
    %v143 = vld [vmem:[#allocation10 + $0x70] sm:$0xff]
    %v144 = vld [vmem:[#allocation10 + $0x78] sm:$0xff]
    %v145 = vld [vmem:[#allocation11] sm:$0xff]
    %v146 = vld [vmem:[#allocation11 + $0x8] sm:$0xff]
    %v147 = vld [vmem:[#allocation11 + $0x10] sm:$0xff]
    %v148 = vld [vmem:[#allocation11 + $0x18] sm:$0xff]
    %v149 = vld [vmem:[#allocation11 + $0x20] sm:$0xff]
    %v150 = vld [vmem:[#allocation11 + $0x28] sm:$0xff]
    %v151 = vld [vmem:[#allocation11 + $0x30] sm:$0xff]
    %v152 = vld [vmem:[#allocation11 + $0x38] sm:$0xff]
    %v153 = vld [vmem:[#allocation11 + $0x40] sm:$0xff]
    %v154 = vld [vmem:[#allocation11 + $0x48] sm:$0xff]
    %v155 = vld [vmem:[#allocation11 + $0x50] sm:$0xff]
    %v156 = vld [vmem:[#allocation11 + $0x58] sm:$0xff]
    %v157 = vld [vmem:[#allocation11 + $0x60] sm:$0xff]
    %v158 = vld [vmem:[#allocation11 + $0x68] sm:$0xff]
    %v159 = vld [vmem:[#allocation11 + $0x70] sm:$0xff]
    %v160 = vld [vmem:[#allocation11 + $0x78] sm:$0xff]
    %v161 = vld [vmem:[#allocation7] sm:$0xf]
    %v162 = vld [vmem:[#allocation7 + $0x4] sm:$0xf]
    %v163 = vld [vmem:[#allocation7 + $0x8] sm:$0xf]
    %v164 = vld [vmem:[#allocation7 + $0xc] sm:$0xf]
    %v165 = vld [vmem:[#allocation7 + $0x10] sm:$0xf]
    %v166 = vld [vmem:[#allocation7 + $0x14] sm:$0xf]
    %v167 = vld [vmem:[#allocation7 + $0x18] sm:$0xf]
    %v168 = vld [vmem:[#allocation7 + $0x1c] sm:$0xf]
    %v169 = vld [vmem:[#allocation7 + $0x20] sm:$0xf]
    %v170 = vld [vmem:[#allocation7 + $0x24] sm:$0xf]
    %v171 = vld [vmem:[#allocation7 + $0x28] sm:$0xf]
    %v172 = vld [vmem:[#allocation7 + $0x2c] sm:$0xf]
    %v173 = vld [vmem:[#allocation7 + $0x30] sm:$0xf]
    %v174 = vld [vmem:[#allocation7 + $0x34] sm:$0xf]
    %v175 = vld [vmem:[#allocation7 + $0x38] sm:$0xf]
    %v176 = vld [vmem:[#allocation7 + $0x3c] sm:$0xf]
    %v177 = vld [vmem:[#allocation7 + $0x40] sm:$0xf]
    %v178 = vld [vmem:[#allocation7 + $0x44] sm:$0xf]
    %v179 = vld [vmem:[#allocation7 + $0x48] sm:$0xf]
    %v180 = vld [vmem:[#allocation7 + $0x4c] sm:$0xf]
    %v181 = vld [vmem:[#allocation7 + $0x50] sm:$0xf]
    %v182 = vld [vmem:[#allocation7 + $0x54] sm:$0xf]
    %v183 = vld [vmem:[#allocation7 + $0x58] sm:$0xf]
    %v184 = vld [vmem:[#allocation7 + $0x5c] sm:$0xf]
    %v185 = vld [vmem:[#allocation7 + $0x60] sm:$0xf]
    %v186 = vld [vmem:[#allocation7 + $0x64] sm:$0xf]
    %v187 = vld [vmem:[#allocation7 + $0x68] sm:$0xf]
    %v188 = vld [vmem:[#allocation7 + $0x6c] sm:$0xf]
    %v189 = vld [vmem:[#allocation7 + $0x70] sm:$0xf]
    %v190 = vld [vmem:[#allocation7 + $0x74] sm:$0xf]
    %v191 = vld [vmem:[#allocation7 + $0x78] sm:$0xf]
    %v192 = vld [vmem:[#allocation7 + $0x7c] sm:$0xf]
    %v193 = vld [vmem:[#allocation7 + $0x80] sm:$0xf]
    %v194 = vld [vmem:[#allocation7 + $0x84] sm:$0xf]
    %v195 = vld [vmem:[#allocation7 + $0x88] sm:$0xf]
    %v196 = vld [vmem:[#allocation7 + $0x8c] sm:$0xf]
    %v197 = vld [vmem:[#allocation7 + $0x90] sm:$0xf]
    %v198 = vld [vmem:[#allocation7 + $0x94] sm:$0xf]
    %v199 = vld [vmem:[#allocation7 + $0x98] sm:$0xf]
    %v200 = vld [vmem:[#allocation7 + $0x9c] sm:$0xf]
    %v201 = vld [vmem:[#allocation7 + $0xa0] sm:$0xf]
    %v202 = vld [vmem:[#allocation7 + $0xa4] sm:$0xf]
    %v203 = vld [vmem:[#allocation7 + $0xa8] sm:$0xf]
    %v204 = vld [vmem:[#allocation7 + $0xac] sm:$0xf]
    %v205 = vld [vmem:[#allocation7 + $0xb0] sm:$0xf]
    %v206 = vld [vmem:[#allocation7 + $0xb4] sm:$0xf]
    %v207 = vld [vmem:[#allocation7 + $0xb8] sm:$0xf]
    %v208 = vld [vmem:[#allocation7 + $0xbc] sm:$0xf]
    %v209 = vld [vmem:[#allocation7 + $0xc0] sm:$0xf]
    %v210 = vld [vmem:[#allocation7 + $0xc4] sm:$0xf]
    %v211 = vld [vmem:[#allocation7 + $0xc8] sm:$0xf]
    %v212 = vld [vmem:[#allocation7 + $0xcc] sm:$0xf]
    %v213 = vld [vmem:[#allocation7 + $0xd0] sm:$0xf]
    %v214 = vld [vmem:[#allocation7 + $0xd4] sm:$0xf]
    %v215 = vld [vmem:[#allocation7 + $0xd8] sm:$0xf]
    %v216 = vld [vmem:[#allocation7 + $0xdc] sm:$0xf]
    %v217 = vld [vmem:[#allocation7 + $0xe0] sm:$0xf]
    %v218 = vld [vmem:[#allocation7 + $0xe4] sm:$0xf]
    %v219 = vld [vmem:[#allocation7 + $0xe8] sm:$0xf]
    %v220 = vld [vmem:[#allocation7 + $0xec] sm:$0xf]
    %v221 = vld [vmem:[#allocation7 + $0xf0] sm:$0xf]
    %v222 = vld [vmem:[#allocation7 + $0xf4] sm:$0xf]
    %v223 = vld [vmem:[#allocation7 + $0xf8] sm:$0xf]
    %v224 = vld [vmem:[#allocation7 + $0xfc] sm:$0xf]
    %v225 = vld [vmem:[#allocation7 + $0x100] sm:$0xf]
    %v226 = vld [vmem:[#allocation7 + $0x104] sm:$0xf]
    %v227 = vld [vmem:[#allocation7 + $0x108] sm:$0xf]
    %v228 = vld [vmem:[#allocation7 + $0x10c] sm:$0xf]
    %v229 = vld [vmem:[#allocation7 + $0x110] sm:$0xf]
    %v230 = vld [vmem:[#allocation7 + $0x114] sm:$0xf]
    %v231 = vld [vmem:[#allocation7 + $0x118] sm:$0xf]
    %v232 = vld [vmem:[#allocation7 + $0x11c] sm:$0xf]
    %v233 = vld [vmem:[#allocation7 + $0x120] sm:$0xf]
    %v234 = vld [vmem:[#allocation7 + $0x124] sm:$0xf]
    %v235 = vld [vmem:[#allocation7 + $0x128] sm:$0xf]
    %v236 = vld [vmem:[#allocation7 + $0x12c] sm:$0xf]
    %v237 = vld [vmem:[#allocation7 + $0x130] sm:$0xf]
    %v238 = vld [vmem:[#allocation7 + $0x134] sm:$0xf]
    %v239 = vld [vmem:[#allocation7 + $0x138] sm:$0xf]
    %v240 = vld [vmem:[#allocation7 + $0x13c] sm:$0xf]
    %v241 = vld [vmem:[#allocation7 + $0x140] sm:$0xf]
    %v242 = vld [vmem:[#allocation7 + $0x144] sm:$0xf]
    %v243 = vld [vmem:[#allocation7 + $0x148] sm:$0xf]
    %v244 = vld [vmem:[#allocation7 + $0x14c] sm:$0xf]
    %v245 = vld [vmem:[#allocation7 + $0x150] sm:$0xf]
    %v246 = vld [vmem:[#allocation7 + $0x154] sm:$0xf]
    %v247 = vld [vmem:[#allocation7 + $0x158] sm:$0xf]
    %v248 = vld [vmem:[#allocation7 + $0x15c] sm:$0xf]
    %v249 = vld [vmem:[#allocation7 + $0x160] sm:$0xf]
    %v250 = vld [vmem:[#allocation7 + $0x164] sm:$0xf]
    %v251 = vld [vmem:[#allocation7 + $0x168] sm:$0xf]
    %v252 = vld [vmem:[#allocation7 + $0x16c] sm:$0xf]
    %v253 = vld [vmem:[#allocation7 + $0x170] sm:$0xf]
    %v254 = vld [vmem:[#allocation7 + $0x174] sm:$0xf]
    %v255 = vld [vmem:[#allocation7 + $0x178] sm:$0xf]
    %v256 = vld [vmem:[#allocation7 + $0x17c] sm:$0xf]
    %v257 = vld [vmem:[#allocation7 + $0x180] sm:$0xf]
    %v258 = vld [vmem:[#allocation7 + $0x184] sm:$0xf]
    %v259 = vld [vmem:[#allocation7 + $0x188] sm:$0xf]
    %v260 = vld [vmem:[#allocation7 + $0x18c] sm:$0xf]
    %v261 = vld [vmem:[#allocation7 + $0x190] sm:$0xf]
    %v262 = vld [vmem:[#allocation7 + $0x194] sm:$0xf]
    %v263 = vld [vmem:[#allocation7 + $0x198] sm:$0xf]
    %v264 = vld [vmem:[#allocation7 + $0x19c] sm:$0xf]
    %v265 = vld [vmem:[#allocation7 + $0x1a0] sm:$0xf]
    %v266 = vld [vmem:[#allocation7 + $0x1a4] sm:$0xf]
    %v267 = vld [vmem:[#allocation7 + $0x1a8] sm:$0xf]
    %v268 = vld [vmem:[#allocation7 + $0x1ac] sm:$0xf]
    %v269 = vld [vmem:[#allocation7 + $0x1b0] sm:$0xf]
    %v270 = vld [vmem:[#allocation7 + $0x1b4] sm:$0xf]
    %v271 = vld [vmem:[#allocation7 + $0x1b8] sm:$0xf]
    %v272 = vld [vmem:[#allocation7 + $0x1bc] sm:$0xf]
    %v273 = vld [vmem:[#allocation7 + $0x1c0] sm:$0xf]
    %v274 = vld [vmem:[#allocation7 + $0x1c4] sm:$0xf]
    %v275 = vld [vmem:[#allocation7 + $0x1c8] sm:$0xf]
    %v276 = vld [vmem:[#allocation7 + $0x1cc] sm:$0xf]
    %v277 = vld [vmem:[#allocation7 + $0x1d0] sm:$0xf]
    %v278 = vld [vmem:[#allocation7 + $0x1d4] sm:$0xf]
    %v279 = vld [vmem:[#allocation7 + $0x1d8] sm:$0xf]
    %v280 = vld [vmem:[#allocation7 + $0x1dc] sm:$0xf]
    %v281 = vld [vmem:[#allocation7 + $0x1e0] sm:$0xf]
    %v282 = vld [vmem:[#allocation7 + $0x1e4] sm:$0xf]
    %v283 = vld [vmem:[#allocation7 + $0x1e8] sm:$0xf]
    %v284 = vld [vmem:[#allocation7 + $0x1ec] sm:$0xf]
    %v285 = vld [vmem:[#allocation7 + $0x1f0] sm:$0xf]
    %v286 = vld [vmem:[#allocation7 + $0x1f4] sm:$0xf]
    %v287 = vld [vmem:[#allocation7 + $0x1f8] sm:$0xf]
    %v288 = vld [vmem:[#allocation7 + $0x1fc] sm:$0xf]
    %v289 = vld [vmem:[#allocation7 + $0x200] sm:$0xf]
    %v290 = vld [vmem:[#allocation7 + $0x204] sm:$0xf]
    %v291 = vld [vmem:[#allocation7 + $0x208] sm:$0xf]
    %v292 = vld [vmem:[#allocation7 + $0x20c] sm:$0xf]
    %v293 = vld [vmem:[#allocation7 + $0x210] sm:$0xf]
    %v294 = vld [vmem:[#allocation7 + $0x214] sm:$0xf]
    %v295 = vld [vmem:[#allocation7 + $0x218] sm:$0xf]
    %v296 = vld [vmem:[#allocation7 + $0x21c] sm:$0xf]
    %v297 = vld [vmem:[#allocation7 + $0x220] sm:$0xf]
    %v298 = vld [vmem:[#allocation7 + $0x224] sm:$0xf]
    %v299 = vld [vmem:[#allocation7 + $0x228] sm:$0xf]
    %v300 = vld [vmem:[#allocation7 + $0x22c] sm:$0xf]
    %v301 = vld [vmem:[#allocation7 + $0x230] sm:$0xf]
    %v302 = vld [vmem:[#allocation7 + $0x234] sm:$0xf]
    %v303 = vld [vmem:[#allocation7 + $0x238] sm:$0xf]
    %v304 = vld [vmem:[#allocation7 + $0x23c] sm:$0xf]
    %v305 = vld [vmem:[#allocation8] sm:$0xf]
    %v306 = vld [vmem:[#allocation8 + $0x4] sm:$0xf]
    %v307 = vld [vmem:[#allocation8 + $0x8] sm:$0xf]
    %v308 = vld [vmem:[#allocation8 + $0xc] sm:$0xf]
    %v309 = vld [vmem:[#allocation8 + $0x10] sm:$0xf]
    %v310 = vld [vmem:[#allocation8 + $0x14] sm:$0xf]
    %v311 = vld [vmem:[#allocation8 + $0x18] sm:$0xf]
    %v312 = vld [vmem:[#allocation8 + $0x1c] sm:$0xf]
    %v313 = vld [vmem:[#allocation8 + $0x20] sm:$0xf]
    %v314 = vld [vmem:[#allocation8 + $0x24] sm:$0xf]
    %v315 = vld [vmem:[#allocation8 + $0x28] sm:$0xf]
    %v316 = vld [vmem:[#allocation8 + $0x2c] sm:$0xf]
    %v317 = vld [vmem:[#allocation8 + $0x30] sm:$0xf]
    %v318 = vld [vmem:[#allocation8 + $0x34] sm:$0xf]
    %v319 = vld [vmem:[#allocation8 + $0x38] sm:$0xf]
    %v320 = vld [vmem:[#allocation8 + $0x3c] sm:$0xf]
    %v321 = vld [vmem:[#allocation8 + $0x40] sm:$0xf]
    %v322 = vld [vmem:[#allocation8 + $0x44] sm:$0xf]
    %v323 = vld [vmem:[#allocation8 + $0x48] sm:$0xf]
    %v324 = vld [vmem:[#allocation8 + $0x4c] sm:$0xf]
    %v325 = vld [vmem:[#allocation8 + $0x50] sm:$0xf]
    %v326 = vld [vmem:[#allocation8 + $0x54] sm:$0xf]
    %v327 = vld [vmem:[#allocation8 + $0x58] sm:$0xf]
    %v328 = vld [vmem:[#allocation8 + $0x5c] sm:$0xf]
    %v329 = vld [vmem:[#allocation8 + $0x60] sm:$0xf]
    %v330 = vld [vmem:[#allocation8 + $0x64] sm:$0xf]
    %v331 = vld [vmem:[#allocation8 + $0x68] sm:$0xf]
    %v332 = vld [vmem:[#allocation8 + $0x6c] sm:$0xf]
    %v333 = vld [vmem:[#allocation8 + $0x70] sm:$0xf]
    %v334 = vld [vmem:[#allocation8 + $0x74] sm:$0xf]
    %v335 = vld [vmem:[#allocation8 + $0x78] sm:$0xf]
    %v336 = vld [vmem:[#allocation8 + $0x7c] sm:$0xf]
    %v337 = vld [vmem:[#allocation8 + $0x80] sm:$0xf]
    %v338 = vld [vmem:[#allocation8 + $0x84] sm:$0xf]
    %v339 = vld [vmem:[#allocation8 + $0x88] sm:$0xf]
    %v340 = vld [vmem:[#allocation8 + $0x8c] sm:$0xf]
    %v341 = vld [vmem:[#allocation8 + $0x90] sm:$0xf]
    %v342 = vld [vmem:[#allocation8 + $0x94] sm:$0xf]
    %v343 = vld [vmem:[#allocation8 + $0x98] sm:$0xf]
    %v344 = vld [vmem:[#allocation8 + $0x9c] sm:$0xf]
    %v345 = vld [vmem:[#allocation8 + $0xa0] sm:$0xf]
    %v346 = vld [vmem:[#allocation8 + $0xa4] sm:$0xf]
    %v347 = vld [vmem:[#allocation8 + $0xa8] sm:$0xf]
    %v348 = vld [vmem:[#allocation8 + $0xac] sm:$0xf]
    %v349 = vld [vmem:[#allocation8 + $0xb0] sm:$0xf]
    %v350 = vld [vmem:[#allocation8 + $0xb4] sm:$0xf]
    %v351 = vld [vmem:[#allocation8 + $0xb8] sm:$0xf]
    %v352 = vld [vmem:[#allocation8 + $0xbc] sm:$0xf]
    %v353 = vld [vmem:[#allocation8 + $0xc0] sm:$0xf]
    %v354 = vld [vmem:[#allocation8 + $0xc4] sm:$0xf]
    %v355 = vld [vmem:[#allocation8 + $0xc8] sm:$0xf]
    %v356 = vld [vmem:[#allocation8 + $0xcc] sm:$0xf]
    %v357 = vld [vmem:[#allocation8 + $0xd0] sm:$0xf]
    %v358 = vld [vmem:[#allocation8 + $0xd4] sm:$0xf]
    %v359 = vld [vmem:[#allocation8 + $0xd8] sm:$0xf]
    %v360 = vld [vmem:[#allocation8 + $0xdc] sm:$0xf]
    %v361 = vld [vmem:[#allocation8 + $0xe0] sm:$0xf]
    %v362 = vld [vmem:[#allocation8 + $0xe4] sm:$0xf]
    %v363 = vld [vmem:[#allocation8 + $0xe8] sm:$0xf]
    %v364 = vld [vmem:[#allocation8 + $0xec] sm:$0xf]
    %v365 = vld [vmem:[#allocation8 + $0xf0] sm:$0xf]
    %v366 = vld [vmem:[#allocation8 + $0xf4] sm:$0xf]
    %v367 = vld [vmem:[#allocation8 + $0xf8] sm:$0xf]
    %v368 = vld [vmem:[#allocation8 + $0xfc] sm:$0xf]
    %v369 = vld [vmem:[#allocation8 + $0x100] sm:$0xf]
    %v370 = vld [vmem:[#allocation8 + $0x104] sm:$0xf]
    %v371 = vld [vmem:[#allocation8 + $0x108] sm:$0xf]
    %v372 = vld [vmem:[#allocation8 + $0x10c] sm:$0xf]
    %v373 = vld [vmem:[#allocation8 + $0x110] sm:$0xf]
    %v374 = vld [vmem:[#allocation8 + $0x114] sm:$0xf]
    %v375 = vld [vmem:[#allocation8 + $0x118] sm:$0xf]
    %v376 = vld [vmem:[#allocation8 + $0x11c] sm:$0xf]
    %v377 = vld [vmem:[#allocation8 + $0x120] sm:$0xf]
    %v378 = vld [vmem:[#allocation8 + $0x124] sm:$0xf]
    %v379 = vld [vmem:[#allocation8 + $0x128] sm:$0xf]
    %v380 = vld [vmem:[#allocation8 + $0x12c] sm:$0xf]
    %v381 = vld [vmem:[#allocation8 + $0x130] sm:$0xf]
    %v382 = vld [vmem:[#allocation8 + $0x134] sm:$0xf]
    %v383 = vld [vmem:[#allocation8 + $0x138] sm:$0xf]
    %v384 = vld [vmem:[#allocation8 + $0x13c] sm:$0xf]
    %v385 = vld [vmem:[#allocation8 + $0x140] sm:$0xf]
    %v386 = vld [vmem:[#allocation8 + $0x144] sm:$0xf]
    %v387 = vld [vmem:[#allocation8 + $0x148] sm:$0xf]
    %v388 = vld [vmem:[#allocation8 + $0x14c] sm:$0xf]
    %v389 = vld [vmem:[#allocation8 + $0x150] sm:$0xf]
    %v390 = vld [vmem:[#allocation8 + $0x154] sm:$0xf]
    %v391 = vld [vmem:[#allocation8 + $0x158] sm:$0xf]
    %v392 = vld [vmem:[#allocation8 + $0x15c] sm:$0xf]
    %v393 = vld [vmem:[#allocation8 + $0x160] sm:$0xf]
    %v394 = vld [vmem:[#allocation8 + $0x164] sm:$0xf]
    %v395 = vld [vmem:[#allocation8 + $0x168] sm:$0xf]
    %v396 = vld [vmem:[#allocation8 + $0x16c] sm:$0xf]
    %v397 = vld [vmem:[#allocation8 + $0x170] sm:$0xf]
    %v398 = vld [vmem:[#allocation8 + $0x174] sm:$0xf]
    %v399 = vld [vmem:[#allocation8 + $0x178] sm:$0xf]
    %v400 = vld [vmem:[#allocation8 + $0x17c] sm:$0xf]
    %v401 = vld [vmem:[#allocation8 + $0x180] sm:$0xf]
    %v402 = vld [vmem:[#allocation8 + $0x184] sm:$0xf]
    %v403 = vld [vmem:[#allocation8 + $0x188] sm:$0xf]
    %v404 = vld [vmem:[#allocation8 + $0x18c] sm:$0xf]
    %v405 = vld [vmem:[#allocation8 + $0x190] sm:$0xf]
    %v406 = vld [vmem:[#allocation8 + $0x194] sm:$0xf]
    %v407 = vld [vmem:[#allocation8 + $0x198] sm:$0xf]
    %v408 = vld [vmem:[#allocation8 + $0x19c] sm:$0xf]
    %v409 = vld [vmem:[#allocation8 + $0x1a0] sm:$0xf]
    %v410 = vld [vmem:[#allocation8 + $0x1a4] sm:$0xf]
    %v411 = vld [vmem:[#allocation8 + $0x1a8] sm:$0xf]
    %v412 = vld [vmem:[#allocation8 + $0x1ac] sm:$0xf]
    %v413 = vld [vmem:[#allocation8 + $0x1b0] sm:$0xf]
    %v414 = vld [vmem:[#allocation8 + $0x1b4] sm:$0xf]
    %v415 = vld [vmem:[#allocation8 + $0x1b8] sm:$0xf]
    %v416 = vld [vmem:[#allocation8 + $0x1bc] sm:$0xf]
    %v417 = vld [vmem:[#allocation8 + $0x1c0] sm:$0xf]
    %v418 = vld [vmem:[#allocation8 + $0x1c4] sm:$0xf]
    %v419 = vld [vmem:[#allocation8 + $0x1c8] sm:$0xf]
    %v420 = vld [vmem:[#allocation8 + $0x1cc] sm:$0xf]
    %v421 = vld [vmem:[#allocation8 + $0x1d0] sm:$0xf]
    %v422 = vld [vmem:[#allocation8 + $0x1d4] sm:$0xf]
    %v423 = vld [vmem:[#allocation8 + $0x1d8] sm:$0xf]
    %v424 = vld [vmem:[#allocation8 + $0x1dc] sm:$0xf]
    %v425 = vld [vmem:[#allocation8 + $0x1e0] sm:$0xf]
    %v426 = vld [vmem:[#allocation8 + $0x1e4] sm:$0xf]
    %v427 = vld [vmem:[#allocation8 + $0x1e8] sm:$0xf]
    %v428 = vld [vmem:[#allocation8 + $0x1ec] sm:$0xf]
    %v429 = vld [vmem:[#allocation8 + $0x1f0] sm:$0xf]
    %v430 = vld [vmem:[#allocation8 + $0x1f4] sm:$0xf]
    %v431 = vld [vmem:[#allocation8 + $0x1f8] sm:$0xf]
    %v432 = vld [vmem:[#allocation8 + $0x1fc] sm:$0xf]
    %v433 = vld [vmem:[#allocation8 + $0x200] sm:$0xf]
    %v434 = vld [vmem:[#allocation8 + $0x204] sm:$0xf]
    %v435 = vld [vmem:[#allocation8 + $0x208] sm:$0xf]
    %v436 = vld [vmem:[#allocation8 + $0x20c] sm:$0xf]
    %v437 = vld [vmem:[#allocation8 + $0x210] sm:$0xf]
    %v438 = vld [vmem:[#allocation8 + $0x214] sm:$0xf]
    %v439 = vld [vmem:[#allocation8 + $0x218] sm:$0xf]
    %v440 = vld [vmem:[#allocation8 + $0x21c] sm:$0xf]
    %v441 = vld [vmem:[#allocation8 + $0x220] sm:$0xf]
    %v442 = vld [vmem:[#allocation8 + $0x224] sm:$0xf]
    %v443 = vld [vmem:[#allocation8 + $0x228] sm:$0xf]
    %v444 = vld [vmem:[#allocation8 + $0x22c] sm:$0xf]
    %v445 = vld [vmem:[#allocation8 + $0x230] sm:$0xf]
    %v446 = vld [vmem:[#allocation8 + $0x234] sm:$0xf]
    %v447 = vld [vmem:[#allocation8 + $0x238] sm:$0xf]
    %v448 = vld [vmem:[#allocation8 + $0x23c] sm:$0xf]
    %v449 = vld [vmem:[%s8] sm:$0x1]
    %v450 = vld [vmem:[#allocation2] sm:$0xff]
    %v451 = vld [vmem:[#allocation2 + $0x8] sm:$0xff]
    %v452 = vld [vmem:[#allocation2 + $0x10] sm:$0xff]
    %v453 = vld [vmem:[#allocation2 + $0x18] sm:$0xff]
    %v454 = vld [vmem:[#allocation2 + $0x20] sm:$0xff]
    %v455 = vld [vmem:[#allocation2 + $0x28] sm:$0xff]
    %v456 = vld [vmem:[#allocation2 + $0x30] sm:$0xff]
    %v457 = vld [vmem:[#allocation2 + $0x38] sm:$0xff]
    %v458 = vld [vmem:[#allocation2 + $0x40] sm:$0xff]
    %v459 = vld [vmem:[#allocation2 + $0x48] sm:$0xff]
    %v460 = vld [vmem:[#allocation2 + $0x50] sm:$0xff]
    %v461 = vld [vmem:[#allocation2 + $0x58] sm:$0xff]
    %v462 = vld [vmem:[#allocation2 + $0x60] sm:$0xff]
    %v463 = vld [vmem:[#allocation2 + $0x68] sm:$0xff]
    %v464 = vld [vmem:[#allocation2 + $0x70] sm:$0xff]
    %v465 = vld [vmem:[#allocation2 + $0x78] sm:$0xff]
    %v466 = vld [vmem:[#allocation2 + $0x80] sm:$0xff]
    %v467 = vld [vmem:[#allocation2 + $0x88] sm:$0xff]
    %v468 = vld [vmem:[#allocation2 + $0x90] sm:$0xff]
    %v469 = vld [vmem:[#allocation2 + $0x98] sm:$0xff]
    %v470 = vld [vmem:[#allocation2 + $0xa0] sm:$0xff]
    %v471 = vld [vmem:[#allocation2 + $0xa8] sm:$0xff]
    %v472 = vld [vmem:[#allocation2 + $0xb0] sm:$0xff]
    %v473 = vld [vmem:[#allocation2 + $0xb8] sm:$0xff]
    %v474 = vld [vmem:[#allocation2 + $0xc0] sm:$0xff]
    %v475 = vld [vmem:[#allocation2 + $0xc8] sm:$0xff]
    %v476 = vld [vmem:[#allocation2 + $0xd0] sm:$0xff]
    %v477 = vld [vmem:[#allocation2 + $0xd8] sm:$0xff]
    %v478 = vld [vmem:[#allocation2 + $0xe0] sm:$0xff]
    %v479 = vld [vmem:[#allocation2 + $0xe8] sm:$0xff]
    %v480 = vld [vmem:[#allocation2 + $0xf0] sm:$0xff]
    %v481 = vld [vmem:[#allocation2 + $0xf8] sm:$0xff]
    %482 = vmatprep.subr.mxu0 0.0
    %483 = vmatpush1.msra.mxu0 %v465
    %484 = vmatprep.subr.mxu0 0.0
    %485 = vmatpush1.msra.mxu0 %v464
    %486 = vmatprep.subr.mxu0 0.0
    %487 = vmatpush1.msra.mxu0 %v463
    %488 = vmatprep.subr.mxu0 0.0
    %489 = vmatpush1.msra.mxu0 %v462
    %490 = vmatprep.subr.mxu0 0.0
    %491 = vmatpush1.msra.mxu0 %v461
    %492 = vmatprep.subr.mxu0 0.0
    %493 = vmatpush1.msra.mxu0 %v460
    %494 = vmatprep.subr.mxu0 0.0
    %495 = vmatpush1.msra.mxu0 %v459
    %496 = vmatprep.subr.mxu0 0.0
    %497 = vmatpush1.msra.mxu0 %v458
    %498 = vmatprep.subr.mxu0 0.0
    %499 = vmatpush1.msra.mxu0 %v457
    %500 = vmatprep.subr.mxu0 0.0
    %501 = vmatpush1.msra.mxu0 %v456
    %502 = vmatprep.subr.mxu0 0.0
    %503 = vmatpush1.msra.mxu0 %v455
    %504 = vmatprep.subr.mxu0 0.0
    %505 = vmatpush1.msra.mxu0 %v454
    %506 = vmatprep.subr.mxu0 0.0
    %507 = vmatpush1.msra.mxu0 %v453
    %508 = vmatprep.subr.mxu0 0.0
    %509 = vmatpush1.msra.mxu0 %v452
    %510 = vmatprep.subr.mxu0 0.0
    %511 = vmatpush1.msra.mxu0 %v451
    %512 = vmatprep.subr.mxu0 0.0
    %513 = vmatpush1.msra.mxu0 %v450
    %514 = vmatprep.subr.mxu0 0.0
    %515 = vmatpush2.msra.mxu0 %v481
    %516 = vmatprep.subr.mxu0 0.0
    %517 = vmatpush2.msra.mxu0 %v480
    %518 = vmatprep.subr.mxu0 0.0
    %519 = vmatpush2.msra.mxu0 %v479
    %520 = vmatprep.subr.mxu0 0.0
    %521 = vmatpush2.msra.mxu0 %v478
    %522 = vmatprep.subr.mxu0 0.0
    %523 = vmatpush2.msra.mxu0 %v477
    %524 = vmatprep.subr.mxu0 0.0
    %525 = vmatpush2.msra.mxu0 %v476
    %526 = vmatprep.subr.mxu0 0.0
    %527 = vmatpush2.msra.mxu0 %v475
    %528 = vmatprep.subr.mxu0 0.0
    %529 = vmatpush2.msra.mxu0 %v474
    %530 = vmatprep.subr.mxu0 0.0
    %531 = vmatpush2.msra.mxu0 %v473
    %532 = vmatprep.subr.mxu0 0.0
    %533 = vmatpush2.msra.mxu0 %v472
    %534 = vmatprep.subr.mxu0 0.0
    %535 = vmatpush2.msra.mxu0 %v471
    %536 = vmatprep.subr.mxu0 0.0
    %537 = vmatpush2.msra.mxu0 %v470
    %538 = vmatprep.subr.mxu0 0.0
    %539 = vmatpush2.msra.mxu0 %v469
    %540 = vmatprep.subr.mxu0 0.0
    %541 = vmatpush2.msra.mxu0 %v468
    %542 = vmatprep.subr.mxu0 0.0
    %543 = vmatpush2.msra.mxu0 %v467
    %544 = vmatprep.subr.mxu0 0.0
    %545 = vmatpush2.msra.mxu0 %v466
    %546 = vmatprep.mubr.f32.mxu0 0.00390625
    %547 = vmatmul.mubr.f32.gmra.mxu0 0.00390625
    %v548 = vpop.f32.mrf.mxu0
    %v549 = vadd.f32 0.0, %v548
    %v550 = vpop.f32.mrf.mxu0
    %551 = vdwg.mxu0
    %v552 = vmul.f32 %v450, %v450
    %v553 = vmul.f32 %v451, %v451
    %v554 = vmul.f32 %v452, %v452
    %v555 = vmul.f32 %v453, %v453
    %v556 = vmul.f32 %v454, %v454
    %v557 = vmul.f32 %v455, %v455
    %v558 = vmul.f32 %v456, %v456
    %v559 = vmul.f32 %v457, %v457
    %v560 = vmul.f32 %v458, %v458
    %v561 = vmul.f32 %v459, %v459
    %v562 = vmul.f32 %v460, %v460
    %v563 = vmul.f32 %v461, %v461
    %v564 = vmul.f32 %v462, %v462
    %v565 = vmul.f32 %v463, %v463
    %v566 = vmul.f32 %v464, %v464
    %v567 = vmul.f32 %v465, %v465
    %v568 = vmul.f32 %v466, %v466
    %v569 = vmul.f32 %v467, %v467
    %v570 = vmul.f32 %v468, %v468
    %v571 = vmul.f32 %v469, %v469
    %v572 = vmul.f32 %v470, %v470
    %v573 = vmul.f32 %v471, %v471
    %v574 = vmul.f32 %v472, %v472
    %v575 = vmul.f32 %v473, %v473
    %v576 = vmul.f32 %v474, %v474
    %v577 = vmul.f32 %v475, %v475
    %v578 = vmul.f32 %v476, %v476
    %v579 = vmul.f32 %v477, %v477
    %v580 = vmul.f32 %v478, %v478
    %v581 = vmul.f32 %v479, %v479
    %v582 = vmul.f32 %v480, %v480
    %v583 = vmul.f32 %v481, %v481
    %584 = vmatprep.subr.mxu0 0.0
    %585 = vmatpush1.msra.mxu0 %v567
    %586 = vmatprep.subr.mxu0 0.0
    %587 = vmatpush1.msra.mxu0 %v566
    %588 = vmatprep.subr.mxu0 0.0
    %589 = vmatpush1.msra.mxu0 %v565
    %590 = vmatprep.subr.mxu0 0.0
    %591 = vmatpush1.msra.mxu0 %v564
    %592 = vmatprep.subr.mxu0 0.0
    %593 = vmatpush1.msra.mxu0 %v563
    %594 = vmatprep.subr.mxu0 0.0
    %595 = vmatpush1.msra.mxu0 %v562
    %596 = vmatprep.subr.mxu0 0.0
    %597 = vmatpush1.msra.mxu0 %v561
    %598 = vmatprep.subr.mxu0 0.0
    %599 = vmatpush1.msra.mxu0 %v560
    %600 = vmatprep.subr.mxu0 0.0
    %601 = vmatpush1.msra.mxu0 %v559
    %602 = vmatprep.subr.mxu0 0.0
    %603 = vmatpush1.msra.mxu0 %v558
    %604 = vmatprep.subr.mxu0 0.0
    %605 = vmatpush1.msra.mxu0 %v557
    %606 = vmatprep.subr.mxu0 0.0
    %607 = vmatpush1.msra.mxu0 %v556
    %608 = vmatprep.subr.mxu0 0.0
    %609 = vmatpush1.msra.mxu0 %v555
    %610 = vmatprep.subr.mxu0 0.0
    %611 = vmatpush1.msra.mxu0 %v554
    %612 = vmatprep.subr.mxu0 0.0
    %613 = vmatpush1.msra.mxu0 %v553
    %614 = vmatprep.subr.mxu0 0.0
    %615 = vmatpush1.msra.mxu0 %v552
    %616 = vmatprep.subr.mxu0 0.0
    %617 = vmatpush2.msra.mxu0 %v583
    %618 = vmatprep.subr.mxu0 0.0
    %619 = vmatpush2.msra.mxu0 %v582
    %620 = vmatprep.subr.mxu0 0.0
    %621 = vmatpush2.msra.mxu0 %v581
    %622 = vmatprep.subr.mxu0 0.0
    %623 = vmatpush2.msra.mxu0 %v580
    %624 = vmatprep.subr.mxu0 0.0
    %625 = vmatpush2.msra.mxu0 %v579
    %626 = vmatprep.subr.mxu0 0.0
    %627 = vmatpush2.msra.mxu0 %v578
    %628 = vmatprep.subr.mxu0 0.0
    %629 = vmatpush2.msra.mxu0 %v577
    %630 = vmatprep.subr.mxu0 0.0
    %631 = vmatpush2.msra.mxu0 %v576
    %632 = vmatprep.subr.mxu0 0.0
    %633 = vmatpush2.msra.mxu0 %v575
    %634 = vmatprep.subr.mxu0 0.0
    %635 = vmatpush2.msra.mxu0 %v574
    %636 = vmatprep.subr.mxu0 0.0
    %637 = vmatpush2.msra.mxu0 %v573
    %638 = vmatprep.subr.mxu0 0.0
    %639 = vmatpush2.msra.mxu0 %v572
    %640 = vmatprep.subr.mxu0 0.0
    %641 = vmatpush2.msra.mxu0 %v571
    %642 = vmatprep.subr.mxu0 0.0
    %643 = vmatpush2.msra.mxu0 %v570
    %644 = vmatprep.subr.mxu0 0.0
    %645 = vmatpush2.msra.mxu0 %v569
    %646 = vmatprep.subr.mxu0 0.0
    %647 = vmatpush2.msra.mxu0 %v568
    %648 = vmatprep.mubr.f32.mxu0 0.00390625
    %649 = vmatmul.mubr.f32.gmra.mxu0 0.00390625
    %v650 = vpop.f32.mrf.mxu0
    %v651 = vadd.f32 0.0, %v650
    %v652 = vpop.f32.mrf.mxu0
    %653 = vdwg.mxu0
    %654 = vmatprep.subr.mxu0 0.0
    %655 = vmatpush1.msra.mxu0 %v144
    %656 = vmatprep.subr.mxu0 0.0
    %657 = vmatpush1.msra.mxu0 %v143
    %658 = vmatprep.subr.mxu0 0.0
    %659 = vmatpush1.msra.mxu0 %v142
    %660 = vmatprep.subr.mxu0 0.0
    %661 = vmatpush1.msra.mxu0 %v141
    %662 = vmatprep.subr.mxu0 0.0
    %663 = vmatpush1.msra.mxu0 %v140
    %664 = vmatprep.subr.mxu0 0.0
    %665 = vmatpush1.msra.mxu0 %v139
    %666 = vmatprep.subr.mxu0 0.0
    %667 = vmatpush1.msra.mxu0 %v138
    %668 = vmatprep.subr.mxu0 0.0
    %669 = vmatpush1.msra.mxu0 %v137
    %670 = vmatprep.subr.mxu0 0.0
    %671 = vmatpush1.msra.mxu0 %v136
    %672 = vmatprep.subr.mxu0 0.0
    %673 = vmatpush1.msra.mxu0 %v135
    %674 = vmatprep.subr.mxu0 0.0
    %675 = vmatpush1.msra.mxu0 %v134
    %676 = vmatprep.subr.mxu0 0.0
    %677 = vmatpush1.msra.mxu0 %v133
    %678 = vmatprep.subr.mxu0 0.0
    %679 = vmatpush1.msra.mxu0 %v132
    %680 = vmatprep.subr.mxu0 0.0
    %681 = vmatpush1.msra.mxu0 %v131
    %682 = vmatprep.subr.mxu0 0.0
    %683 = vmatpush1.msra.mxu0 %v130
    %684 = vmatprep.subr.mxu0 0.0
    %685 = vmatpush1.msra.mxu0 %v129
    %686 = vmatprep.subr.mxu0 0.0
    %687 = vmatpush2.msra.mxu0 0.0
    %688 = vmatprep.subr.mxu0 0.0
    %689 = vmatpush2.msra.mxu0 0.0
    %690 = vmatprep.subr.mxu0 0.0
    %691 = vmatpush2.msra.mxu0 0.0
    %692 = vmatprep.subr.mxu0 0.0
    %693 = vmatpush2.msra.mxu0 0.0
    %694 = vmatprep.subr.mxu0 0.0
    %695 = vmatpush2.msra.mxu0 0.0
    %696 = vmatprep.subr.mxu0 0.0
    %697 = vmatpush2.msra.mxu0 0.0
    %698 = vmatprep.subr.mxu0 0.0
    %699 = vmatpush2.msra.mxu0 0.0
    %700 = vmatprep.subr.mxu0 0.0
    %701 = vmatpush2.msra.mxu0 0.0
    %702 = vmatprep.subr.mxu0 0.0
    %703 = vmatpush2.msra.mxu0 0.0
    %704 = vmatprep.subr.mxu0 0.0
    %705 = vmatpush2.msra.mxu0 0.0
    %706 = vmatprep.subr.mxu0 0.0
    %707 = vmatpush2.msra.mxu0 0.0
    %708 = vmatprep.subr.mxu0 0.0
    %709 = vmatpush2.msra.mxu0 0.0
    %710 = vmatprep.subr.mxu0 0.0
    %711 = vmatpush2.msra.mxu0 0.0
    %712 = vmatprep.subr.mxu0 0.0
    %713 = vmatpush2.msra.mxu0 0.0
    %714 = vmatprep.subr.mxu0 0.0
    %715 = vmatpush2.msra.mxu0 0.0
    %716 = vmatprep.subr.mxu0 0.0
    %717 = vmatpush2.msra.mxu0 0.0
    %718 = vmatprep.mubr.f32.mxu0 0.0
    %719 = vmatmul.mubr.f32.gmra.mxu0 %v549
    %v720 = vpop.f32.mrf.mxu0
    %v721 = vadd.f32 0.0, %v720
    %v722 = vpop.f32.mrf.mxu0
    %723 = vdwg.mxu0
    %724 = vmatprep.subr.mxu0 0.0
    %725 = vmatpush1.msra.mxu0 %v144
    %726 = vmatprep.subr.mxu0 0.0
    %727 = vmatpush1.msra.mxu0 %v143
    %728 = vmatprep.subr.mxu0 0.0
    %729 = vmatpush1.msra.mxu0 %v142
    %730 = vmatprep.subr.mxu0 0.0
    %731 = vmatpush1.msra.mxu0 %v141
    %732 = vmatprep.subr.mxu0 0.0
    %733 = vmatpush1.msra.mxu0 %v140
    %734 = vmatprep.subr.mxu0 0.0
    %735 = vmatpush1.msra.mxu0 %v139
    %736 = vmatprep.subr.mxu0 0.0
    %737 = vmatpush1.msra.mxu0 %v138
    %738 = vmatprep.subr.mxu0 0.0
    %739 = vmatpush1.msra.mxu0 %v137
    %740 = vmatprep.subr.mxu0 0.0
    %741 = vmatpush1.msra.mxu0 %v136
    %742 = vmatprep.subr.mxu0 0.0
    %743 = vmatpush1.msra.mxu0 %v135
    %744 = vmatprep.subr.mxu0 0.0
    %745 = vmatpush1.msra.mxu0 %v134
    %746 = vmatprep.subr.mxu0 0.0
    %747 = vmatpush1.msra.mxu0 %v133
    %748 = vmatprep.subr.mxu0 0.0
    %749 = vmatpush1.msra.mxu0 %v132
    %750 = vmatprep.subr.mxu0 0.0
    %751 = vmatpush1.msra.mxu0 %v131
    %752 = vmatprep.subr.mxu0 0.0
    %753 = vmatpush1.msra.mxu0 %v130
    %754 = vmatprep.subr.mxu0 0.0
    %755 = vmatpush1.msra.mxu0 %v129
    %756 = vmatprep.subr.mxu0 0.0
    %757 = vmatpush2.msra.mxu0 0.0
    %758 = vmatprep.subr.mxu0 0.0
    %759 = vmatpush2.msra.mxu0 0.0
    %760 = vmatprep.subr.mxu0 0.0
    %761 = vmatpush2.msra.mxu0 0.0
    %762 = vmatprep.subr.mxu0 0.0
    %763 = vmatpush2.msra.mxu0 0.0
    %764 = vmatprep.subr.mxu0 0.0
    %765 = vmatpush2.msra.mxu0 0.0
    %766 = vmatprep.subr.mxu0 0.0
    %767 = vmatpush2.msra.mxu0 0.0
    %768 = vmatprep.subr.mxu0 0.0
    %769 = vmatpush2.msra.mxu0 0.0
    %770 = vmatprep.subr.mxu0 0.0
    %771 = vmatpush2.msra.mxu0 0.0
    %772 = vmatprep.subr.mxu0 0.0
    %773 = vmatpush2.msra.mxu0 0.0
    %774 = vmatprep.subr.mxu0 0.0
    %775 = vmatpush2.msra.mxu0 0.0
    %776 = vmatprep.subr.mxu0 0.0
    %777 = vmatpush2.msra.mxu0 0.0
    %778 = vmatprep.subr.mxu0 0.0
    %779 = vmatpush2.msra.mxu0 0.0
    %780 = vmatprep.subr.mxu0 0.0
    %781 = vmatpush2.msra.mxu0 0.0
    %782 = vmatprep.subr.mxu0 0.0
    %783 = vmatpush2.msra.mxu0 0.0
    %784 = vmatprep.subr.mxu0 0.0
    %785 = vmatpush2.msra.mxu0 0.0
    %786 = vmatprep.subr.mxu0 0.0
    %787 = vmatpush2.msra.mxu0 0.0
    %788 = vmatprep.mubr.f32.mxu0 0.0
    %789 = vmatmul.mubr.f32.gmra.mxu0 %v651
    %v790 = vpop.f32.mrf.mxu0
    %v791 = vadd.f32 0.0, %v790
    %v792 = vpop.f32.mrf.mxu0
    %793 = vdwg.mxu0
    %v794 = vmul.f32 %v721, %v721
    %v795 = vsub.f32 %v791, %v794
    %v796 = vadd.f32 %v795, 1e-05
    %v797 = vrsqrt.pop %v796
    %v798 = vlaneseq
    %v799 = vshrl.u32 %v798, 7
    %v800 = vsub.s32 0, %v799
    %v801 = vrot.slane %v721, %v800
    %v802 = vsub.f32 %v450, %v801
    %v803 = vsub.f32 %v451, %v801
    %v804 = vsub.f32 %v452, %v801
    %v805 = vsub.f32 %v453, %v801
    %v806 = vsub.f32 %v454, %v801
    %v807 = vsub.f32 %v455, %v801
    %v808 = vsub.f32 %v456, %v801
    %v809 = vsub.f32 %v457, %v801
    %v810 = vsub.f32 %v458, %v801
    %v811 = vsub.f32 %v459, %v801
    %v812 = vsub.f32 %v460, %v801
    %v813 = vsub.f32 %v461, %v801
    %v814 = vsub.f32 %v462, %v801
    %v815 = vsub.f32 %v463, %v801
    %v816 = vsub.f32 %v464, %v801
    %v817 = vsub.f32 %v465, %v801
    %v818 = vsub.f32 %v466, %v801
    %v819 = vsub.f32 %v467, %v801
    %v820 = vsub.f32 %v468, %v801
    %v821 = vsub.f32 %v469, %v801
    %v822 = vsub.f32 %v470, %v801
    %v823 = vsub.f32 %v471, %v801
    %v824 = vsub.f32 %v472, %v801
    %v825 = vsub.f32 %v473, %v801
    %v826 = vsub.f32 %v474, %v801
    %v827 = vsub.f32 %v475, %v801
    %v828 = vsub.f32 %v476, %v801
    %v829 = vsub.f32 %v477, %v801
    %v830 = vsub.f32 %v478, %v801
    %v831 = vsub.f32 %v479, %v801
    %v832 = vsub.f32 %v480, %v801
    %v833 = vsub.f32 %v481, %v801
    %v834 = vlaneseq
    %v835 = vshrl.u32 %v834, 7
    %v836 = vsub.s32 0, %v835
    %v837 = vrot.slane %v797, %v836
    %v838 = vmul.f32 %v802, %v837
    %v839 = vmul.f32 %v803, %v837
    %v840 = vmul.f32 %v804, %v837
    %v841 = vmul.f32 %v805, %v837
    %v842 = vmul.f32 %v806, %v837
    %v843 = vmul.f32 %v807, %v837
    %v844 = vmul.f32 %v808, %v837
    %v845 = vmul.f32 %v809, %v837
    %v846 = vmul.f32 %v810, %v837
    %v847 = vmul.f32 %v811, %v837
    %v848 = vmul.f32 %v812, %v837
    %v849 = vmul.f32 %v813, %v837
    %v850 = vmul.f32 %v814, %v837
    %v851 = vmul.f32 %v815, %v837
    %v852 = vmul.f32 %v816, %v837
    %v853 = vmul.f32 %v817, %v837
    %v854 = vmul.f32 %v818, %v837
    %v855 = vmul.f32 %v819, %v837
    %v856 = vmul.f32 %v820, %v837
    %v857 = vmul.f32 %v821, %v837
    %v858 = vmul.f32 %v822, %v837
    %v859 = vmul.f32 %v823, %v837
    %v860 = vmul.f32 %v824, %v837
    %v861 = vmul.f32 %v825, %v837
    %v862 = vmul.f32 %v826, %v837
    %v863 = vmul.f32 %v827, %v837
    %v864 = vmul.f32 %v828, %v837
    %v865 = vmul.f32 %v829, %v837
    %v866 = vmul.f32 %v830, %v837
    %v867 = vmul.f32 %v831, %v837
    %v868 = vmul.f32 %v832, %v837
    %v869 = vmul.f32 %v833, %v837
    %v871 = vlaneseq
    %v872 = vshrl.u32 %v871, 7
    %v873 = vsub.s32 0, %v872
    %v874 = vrot.slane %v125, %v873
    %v876 = vmul.f32 %v838, %v874
    %v877 = vmul.f32 %v839, %v874
    %v878 = vmul.f32 %v840, %v874
    %v879 = vmul.f32 %v841, %v874
    %v880 = vmul.f32 %v842, %v874
    %v881 = vmul.f32 %v843, %v874
    %v882 = vmul.f32 %v844, %v874
    %v883 = vmul.f32 %v845, %v874
    %v884 = vmul.f32 %v846, %v874
    %v885 = vmul.f32 %v847, %v874
    %v886 = vmul.f32 %v848, %v874
    %v887 = vmul.f32 %v849, %v874
    %v888 = vmul.f32 %v850, %v874
    %v889 = vmul.f32 %v851, %v874
    %v890 = vmul.f32 %v852, %v874
    %v891 = vmul.f32 %v853, %v874
    %v892 = vmul.f32 %v854, %v874
    %v893 = vmul.f32 %v855, %v874
    %v894 = vmul.f32 %v856, %v874
    %v895 = vmul.f32 %v857, %v874
    %v896 = vmul.f32 %v858, %v874
    %v897 = vmul.f32 %v859, %v874
    %v898 = vmul.f32 %v860, %v874
    %v899 = vmul.f32 %v861, %v874
    %v900 = vmul.f32 %v862, %v874
    %v901 = vmul.f32 %v863, %v874
    %v902 = vmul.f32 %v864, %v874
    %v903 = vmul.f32 %v865, %v874
    %v904 = vmul.f32 %v866, %v874
    %v905 = vmul.f32 %v867, %v874
    %v906 = vmul.f32 %v868, %v874
    %v907 = vmul.f32 %v869, %v874
    %v909 = vlaneseq
    %v910 = vshrl.u32 %v909, 7
    %v911 = vsub.s32 0, %v910
    %v912 = vrot.slane %v126, %v911
    %v914 = vadd.f32 %v876, %v912
    %v915 = vadd.f32 %v877, %v912
    %v916 = vadd.f32 %v878, %v912
    %v917 = vadd.f32 %v879, %v912
    %v918 = vadd.f32 %v880, %v912
    %v919 = vadd.f32 %v881, %v912
    %v920 = vadd.f32 %v882, %v912
    %v921 = vadd.f32 %v883, %v912
    %v922 = vadd.f32 %v884, %v912
    %v923 = vadd.f32 %v885, %v912
    %v924 = vadd.f32 %v886, %v912
    %v925 = vadd.f32 %v887, %v912
    %v926 = vadd.f32 %v888, %v912
    %v927 = vadd.f32 %v889, %v912
    %v928 = vadd.f32 %v890, %v912
    %v929 = vadd.f32 %v891, %v912
    %v930 = vadd.f32 %v892, %v912
    %v931 = vadd.f32 %v893, %v912
    %v932 = vadd.f32 %v894, %v912
    %v933 = vadd.f32 %v895, %v912
    %v934 = vadd.f32 %v896, %v912
    %v935 = vadd.f32 %v897, %v912
    %v936 = vadd.f32 %v898, %v912
    %v937 = vadd.f32 %v899, %v912
    %v938 = vadd.f32 %v900, %v912
    %v939 = vadd.f32 %v901, %v912
    %v940 = vadd.f32 %v902, %v912
    %v941 = vadd.f32 %v903, %v912
    %v942 = vadd.f32 %v904, %v912
    %v943 = vadd.f32 %v905, %v912
    %v944 = vadd.f32 %v906, %v912
    %v945 = vadd.f32 %v907, %v912
    %v946 = vsub.f32 0.0, %v914
    %v947 = vsub.f32 0.0, %v915
    %v948 = vsub.f32 0.0, %v916
    %v949 = vsub.f32 0.0, %v917
    %v950 = vsub.f32 0.0, %v918
    %v951 = vsub.f32 0.0, %v919
    %v952 = vsub.f32 0.0, %v920
    %v953 = vsub.f32 0.0, %v921
    %v954 = vsub.f32 0.0, %v922
    %v955 = vsub.f32 0.0, %v923
    %v956 = vsub.f32 0.0, %v924
    %v957 = vsub.f32 0.0, %v925
    %v958 = vsub.f32 0.0, %v926
    %v959 = vsub.f32 0.0, %v927
    %v960 = vsub.f32 0.0, %v928
    %v961 = vsub.f32 0.0, %v929
    %v962 = vsub.f32 0.0, %v930
    %v963 = vsub.f32 0.0, %v931
    %v964 = vsub.f32 0.0, %v932
    %v965 = vsub.f32 0.0, %v933
    %v966 = vsub.f32 0.0, %v934
    %v967 = vsub.f32 0.0, %v935
    %v968 = vsub.f32 0.0, %v936
    %v969 = vsub.f32 0.0, %v937
    %v970 = vsub.f32 0.0, %v938
    %v971 = vsub.f32 0.0, %v939
    %v972 = vsub.f32 0.0, %v940
    %v973 = vsub.f32 0.0, %v941
    %v974 = vsub.f32 0.0, %v942
    %v975 = vsub.f32 0.0, %v943
    %v976 = vsub.f32 0.0, %v944
    %v977 = vsub.f32 0.0, %v945
    %v978 = vmul.f32 %v946, 1.442695
    %v979 = vpow.pop %v978
    %v980 = vmul.f32 %v947, 1.442695
    %v981 = vpow.pop %v980
    %v982 = vmul.f32 %v948, 1.442695
    %v983 = vpow.pop %v982
    %v984 = vmul.f32 %v949, 1.442695
    %v985 = vpow.pop %v984
    %v986 = vmul.f32 %v950, 1.442695
    %v987 = vpow.pop %v986
    %v988 = vmul.f32 %v951, 1.442695
    %v989 = vpow.pop %v988
    %v990 = vmul.f32 %v952, 1.442695
    %v991 = vpow.pop %v990
    %v992 = vmul.f32 %v953, 1.442695
    %v993 = vpow.pop %v992
    %v994 = vmul.f32 %v954, 1.442695
    %v995 = vpow.pop %v994
    %v996 = vmul.f32 %v955, 1.442695
    %v997 = vpow.pop %v996
    %v998 = vmul.f32 %v956, 1.442695
    %v999 = vpow.pop %v998
    %v1000 = vmul.f32 %v957, 1.442695
    %v1001 = vpow.pop %v1000
    %v1002 = vmul.f32 %v958, 1.442695
    %v1003 = vpow.pop %v1002
    %v1004 = vmul.f32 %v959, 1.442695
    %v1005 = vpow.pop %v1004
    %v1006 = vmul.f32 %v960, 1.442695
    %v1007 = vpow.pop %v1006
    %v1008 = vmul.f32 %v961, 1.442695
    %v1009 = vpow.pop %v1008
    %v1010 = vmul.f32 %v962, 1.442695
    %v1011 = vpow.pop %v1010
    %v1012 = vmul.f32 %v963, 1.442695
    %v1013 = vpow.pop %v1012
    %v1014 = vmul.f32 %v964, 1.442695
    %v1015 = vpow.pop %v1014
    %v1016 = vmul.f32 %v965, 1.442695
    %v1017 = vpow.pop %v1016
    %v1018 = vmul.f32 %v966, 1.442695
    %v1019 = vpow.pop %v1018
    %v1020 = vmul.f32 %v967, 1.442695
    %v1021 = vpow.pop %v1020
    %v1022 = vmul.f32 %v968, 1.442695
    %v1023 = vpow.pop %v1022
    %v1024 = vmul.f32 %v969, 1.442695
    %v1025 = vpow.pop %v1024
    %v1026 = vmul.f32 %v970, 1.442695
    %v1027 = vpow.pop %v1026
    %v1028 = vmul.f32 %v971, 1.442695
    %v1029 = vpow.pop %v1028
    %v1030 = vmul.f32 %v972, 1.442695
    %v1031 = vpow.pop %v1030
    %v1032 = vmul.f32 %v973, 1.442695
    %v1033 = vpow.pop %v1032
    %v1034 = vmul.f32 %v974, 1.442695
    %v1035 = vpow.pop %v1034
    %v1036 = vmul.f32 %v975, 1.442695
    %v1037 = vpow.pop %v1036
    %v1038 = vmul.f32 %v976, 1.442695
    %v1039 = vpow.pop %v1038
    %v1040 = vmul.f32 %v977, 1.442695
    %v1041 = vpow.pop %v1040
    %v1042 = vadd.f32 %v979, 1.0
    %v1043 = vadd.f32 %v981, 1.0
    %v1044 = vadd.f32 %v983, 1.0
    %v1045 = vadd.f32 %v985, 1.0
    %v1046 = vadd.f32 %v987, 1.0
    %v1047 = vadd.f32 %v989, 1.0
    %v1048 = vadd.f32 %v991, 1.0
    %v1049 = vadd.f32 %v993, 1.0
    %v1050 = vadd.f32 %v995, 1.0
    %v1051 = vadd.f32 %v997, 1.0
    %v1052 = vadd.f32 %v999, 1.0
    %v1053 = vadd.f32 %v1001, 1.0
    %v1054 = vadd.f32 %v1003, 1.0
    %v1055 = vadd.f32 %v1005, 1.0
    %v1056 = vadd.f32 %v1007, 1.0
    %v1057 = vadd.f32 %v1009, 1.0
    %v1058 = vadd.f32 %v1011, 1.0
    %v1059 = vadd.f32 %v1013, 1.0
    %v1060 = vadd.f32 %v1015, 1.0
    %v1061 = vadd.f32 %v1017, 1.0
    %v1062 = vadd.f32 %v1019, 1.0
    %v1063 = vadd.f32 %v1021, 1.0
    %v1064 = vadd.f32 %v1023, 1.0
    %v1065 = vadd.f32 %v1025, 1.0
    %v1066 = vadd.f32 %v1027, 1.0
    %v1067 = vadd.f32 %v1029, 1.0
    %v1068 = vadd.f32 %v1031, 1.0
    %v1069 = vadd.f32 %v1033, 1.0
    %v1070 = vadd.f32 %v1035, 1.0
    %v1071 = vadd.f32 %v1037, 1.0
    %v1072 = vadd.f32 %v1039, 1.0
    %v1073 = vadd.f32 %v1041, 1.0
    %v1074 = vrcp.pop %v1042
    %v1075 = vrcp.pop %v1043
    %v1076 = vrcp.pop %v1044
    %v1077 = vrcp.pop %v1045
    %v1078 = vrcp.pop %v1046
    %v1079 = vrcp.pop %v1047
    %v1080 = vrcp.pop %v1048
    %v1081 = vrcp.pop %v1049
    %v1082 = vrcp.pop %v1050
    %v1083 = vrcp.pop %v1051
    %v1084 = vrcp.pop %v1052
    %v1085 = vrcp.pop %v1053
    %v1086 = vrcp.pop %v1054
    %v1087 = vrcp.pop %v1055
    %v1088 = vrcp.pop %v1056
    %v1089 = vrcp.pop %v1057
    %v1090 = vrcp.pop %v1058
    %v1091 = vrcp.pop %v1059
    %v1092 = vrcp.pop %v1060
    %v1093 = vrcp.pop %v1061
    %v1094 = vrcp.pop %v1062
    %v1095 = vrcp.pop %v1063
    %v1096 = vrcp.pop %v1064
    %v1097 = vrcp.pop %v1065
    %v1098 = vrcp.pop %v1066
    %v1099 = vrcp.pop %v1067
    %v1100 = vrcp.pop %v1068
    %v1101 = vrcp.pop %v1069
    %v1102 = vrcp.pop %v1070
    %v1103 = vrcp.pop %v1071
    %v1104 = vrcp.pop %v1072
    %v1105 = vrcp.pop %v1073
    %v1106 = vmul.f32 %v914, %v1074
    %v1107 = vmul.f32 %v915, %v1075
    %v1108 = vmul.f32 %v916, %v1076
    %v1109 = vmul.f32 %v917, %v1077
    %v1110 = vmul.f32 %v918, %v1078
    %v1111 = vmul.f32 %v919, %v1079
    %v1112 = vmul.f32 %v920, %v1080
    %v1113 = vmul.f32 %v921, %v1081
    %v1114 = vmul.f32 %v922, %v1082
    %v1115 = vmul.f32 %v923, %v1083
    %v1116 = vmul.f32 %v924, %v1084
    %v1117 = vmul.f32 %v925, %v1085
    %v1118 = vmul.f32 %v926, %v1086
    %v1119 = vmul.f32 %v927, %v1087
    %v1120 = vmul.f32 %v928, %v1088
    %v1121 = vmul.f32 %v929, %v1089
    %v1122 = vmul.f32 %v930, %v1090
    %v1123 = vmul.f32 %v931, %v1091
    %v1124 = vmul.f32 %v932, %v1092
    %v1125 = vmul.f32 %v933, %v1093
    %v1126 = vmul.f32 %v934, %v1094
    %v1127 = vmul.f32 %v935, %v1095
    %v1128 = vmul.f32 %v936, %v1096
    %v1129 = vmul.f32 %v937, %v1097
    %v1130 = vmul.f32 %v938, %v1098
    %v1131 = vmul.f32 %v939, %v1099
    %v1132 = vmul.f32 %v940, %v1100
    %v1133 = vmul.f32 %v941, %v1101
    %v1134 = vmul.f32 %v942, %v1102
    %v1135 = vmul.f32 %v943, %v1103
    %v1136 = vmul.f32 %v944, %v1104
    %v1137 = vmul.f32 %v945, %v1105
    %v1138 = vrot.slane %v1106, 7
    %v1139 = vrot.slane %v1107, 7
    %v1140 = vrot.slane %v1108, 7
    %v1141 = vrot.slane %v1109, 7
    %v1142 = vrot.slane %v1110, 7
    %v1143 = vrot.slane %v1111, 7
    %v1144 = vrot.slane %v1112, 7
    %v1145 = vrot.slane %v1113, 7
    %v1146 = vrot.slane %v1114, 7
    %v1147 = vrot.slane %v1115, 7
    %v1148 = vrot.slane %v1116, 7
    %v1149 = vrot.slane %v1117, 7
    %v1150 = vrot.slane %v1118, 7
    %v1151 = vrot.slane %v1119, 7
    %v1152 = vrot.slane %v1120, 7
    %v1153 = vrot.slane %v1121, 7
    %v1154 = vrot.slane %v1122, 7
    %v1155 = vrot.slane %v1123, 7
    %v1156 = vrot.slane %v1124, 7
    %v1157 = vrot.slane %v1125, 7
    %v1158 = vrot.slane %v1126, 7
    %v1159 = vrot.slane %v1127, 7
    %v1160 = vrot.slane %v1128, 7
    %v1161 = vrot.slane %v1129, 7
    %v1162 = vrot.slane %v1130, 7
    %v1163 = vrot.slane %v1131, 7
    %v1164 = vrot.slane %v1132, 7
    %v1165 = vrot.slane %v1133, 7
    %v1166 = vrot.slane %v1134, 7
    %v1167 = vrot.slane %v1135, 7
    %v1168 = vrot.slane %v1137, 7
    %vm1169 = vcmp.lt.s32.totalorder %v123, 1
    %v1170 = vsel %vm1169, %v1166, %v1167
    %v1171 = vsel %vm1169, %v1165, %v1166
    %v1172 = vsel %vm1169, %v1164, %v1165
    %v1173 = vsel %vm1169, %v1163, %v1164
    %v1174 = vsel %vm1169, %v1162, %v1163
    %v1175 = vsel %vm1169, %v1161, %v1162
    %v1176 = vsel %vm1169, %v1160, %v1161
    %v1177 = vsel %vm1169, %v1159, %v1160
    %v1178 = vsel %vm1169, %v1158, %v1159
    %v1179 = vsel %vm1169, %v1157, %v1158
    %v1180 = vsel %vm1169, %v1156, %v1157
    %v1181 = vsel %vm1169, %v1155, %v1156
    %v1182 = vsel %vm1169, %v1154, %v1155
    %v1183 = vsel %vm1169, %v1153, %v1154
    %v1184 = vsel %vm1169, %v1152, %v1153
    %v1185 = vsel %vm1169, %v1151, %v1152
    %v1186 = vsel %vm1169, %v1150, %v1151
    %v1187 = vsel %vm1169, %v1149, %v1150
    %v1188 = vsel %vm1169, %v1148, %v1149
    %v1189 = vsel %vm1169, %v1147, %v1148
    %v1190 = vsel %vm1169, %v1146, %v1147
    %v1191 = vsel %vm1169, %v1145, %v1146
    %v1192 = vsel %vm1169, %v1144, %v1145
    %v1193 = vsel %vm1169, %v1143, %v1144
    %v1194 = vsel %vm1169, %v1142, %v1143
    %v1195 = vsel %vm1169, %v1141, %v1142
    %v1196 = vsel %vm1169, %v1140, %v1141
    %v1197 = vsel %vm1169, %v1139, %v1140
    %v1198 = vsel %vm1169, %v1138, %v1139
    %v1199 = vsel %vm1169, %v1168, %v1138
    %vm1200 = vcmp.ge.s32.totalorder %v123, 1
    %vm1201 = vcmp.ge.s32.totalorder %v124, 1
    %v1202 = vsel %vm1200, %v1199, 0.0
    %v1203 = vsel %vm1201, %v1198, 0.0
    %v1204 = vsel %vm1200, %v1197, 0.0
    %v1205 = vsel %vm1201, %v1196, 0.0
    %v1206 = vsel %vm1200, %v1195, 0.0
    %v1207 = vsel %vm1201, %v1194, 0.0
    %v1208 = vsel %vm1200, %v1193, 0.0
    %v1209 = vsel %vm1201, %v1192, 0.0
    %v1210 = vsel %vm1200, %v1191, 0.0
    %v1211 = vsel %vm1201, %v1190, 0.0
    %v1212 = vsel %vm1200, %v1189, 0.0
    %v1213 = vsel %vm1201, %v1188, 0.0
    %v1214 = vsel %vm1200, %v1187, 0.0
    %v1215 = vsel %vm1201, %v1186, 0.0
    %v1216 = vsel %vm1200, %v1185, 0.0
    %v1217 = vsel %vm1201, %v1184, 0.0
    %v1218 = vsel %vm1200, %v1183, 0.0
    %v1219 = vsel %vm1201, %v1182, 0.0
    %v1220 = vsel %vm1200, %v1181, 0.0
    %v1221 = vsel %vm1201, %v1180, 0.0
    %v1222 = vsel %vm1200, %v1179, 0.0
    %v1223 = vsel %vm1201, %v1178, 0.0
    %v1224 = vsel %vm1200, %v1177, 0.0
    %v1225 = vsel %vm1201, %v1176, 0.0
    %v1226 = vsel %vm1200, %v1175, 0.0
    %v1227 = vsel %vm1201, %v1174, 0.0
    %v1228 = vsel %vm1200, %v1173, 0.0
    %v1229 = vsel %vm1201, %v1172, 0.0
    %v1230 = vsel %vm1200, %v1171, 0.0
    %v1231 = vsel %vm1201, %v1170, 0.0
    %v1232 = vpack.c.bf16 0.0, 0.0
    %v1233 = vpack.c.bf16 %v1203, %v1202
    %v1234 = vpack.c.bf16 %v1205, %v1204
    %v1235 = vpack.c.bf16 %v1207, %v1206
    %v1236 = vpack.c.bf16 %v1209, %v1208
    %v1237 = vpack.c.bf16 %v1211, %v1210
    %v1238 = vpack.c.bf16 %v1213, %v1212
    %v1239 = vpack.c.bf16 %v1215, %v1214
    %v1240 = vpack.c.bf16 %v1217, %v1216
    %v1241 = vpack.c.bf16 %v1219, %v1218
    %v1242 = vpack.c.bf16 %v1221, %v1220
    %v1243 = vpack.c.bf16 %v1223, %v1222
    %v1244 = vpack.c.bf16 %v1225, %v1224
    %v1245 = vpack.c.bf16 %v1227, %v1226
    %v1246 = vpack.c.bf16 %v1229, %v1228
    %v1247 = vpack.c.bf16 %v1231, %v1230
    %v1248 = vpack.c.bf16 %v1107, %v1106
    %v1249 = vpack.c.bf16 %v1109, %v1108
    %v1250 = vpack.c.bf16 %v1111, %v1110
    %v1251 = vpack.c.bf16 %v1113, %v1112
    %v1252 = vpack.c.bf16 %v1115, %v1114
    %v1253 = vpack.c.bf16 %v1117, %v1116
    %v1254 = vpack.c.bf16 %v1119, %v1118
    %v1255 = vpack.c.bf16 %v1121, %v1120
    %v1256 = vpack.c.bf16 %v1123, %v1122
    %v1257 = vpack.c.bf16 %v1125, %v1124
    %v1258 = vpack.c.bf16 %v1127, %v1126
    %v1259 = vpack.c.bf16 %v1129, %v1128
    %v1260 = vpack.c.bf16 %v1131, %v1130
    %v1261 = vpack.c.bf16 %v1133, %v1132
    %v1262 = vpack.c.bf16 %v1135, %v1134
    %v1263 = vrot.slane %v1106, 1
    %v1264 = vrot.slane %v1107, 1
    %v1265 = vrot.slane %v1108, 1
    %v1266 = vrot.slane %v1109, 1
    %v1267 = vrot.slane %v1110, 1
    %v1268 = vrot.slane %v1111, 1
    %v1269 = vrot.slane %v1112, 1
    %v1270 = vrot.slane %v1113, 1
    %v1271 = vrot.slane %v1114, 1
    %v1272 = vrot.slane %v1115, 1
    %v1273 = vrot.slane %v1116, 1
    %v1274 = vrot.slane %v1117, 1
    %v1275 = vrot.slane %v1118, 1
    %v1276 = vrot.slane %v1119, 1
    %v1277 = vrot.slane %v1120, 1
    %v1278 = vrot.slane %v1121, 1
    %v1279 = vrot.slane %v1122, 1
    %v1280 = vrot.slane %v1123, 1
    %v1281 = vrot.slane %v1124, 1
    %v1282 = vrot.slane %v1125, 1
    %v1283 = vrot.slane %v1126, 1
    %v1284 = vrot.slane %v1127, 1
    %v1285 = vrot.slane %v1128, 1
    %v1286 = vrot.slane %v1129, 1
    %v1287 = vrot.slane %v1130, 1
    %v1288 = vrot.slane %v1131, 1
    %v1289 = vrot.slane %v1132, 1
    %v1290 = vrot.slane %v1133, 1
    %v1291 = vrot.slane %v1134, 1
    %v1292 = vrot.slane %v1135, 1
    %v1293 = vrot.slane %v1136, 1
    %vm1294 = vcmp.lt.s32.totalorder %v123, 7
    %v1295 = vsel %vm1294, %v1292, %v1293
    %v1296 = vsel %vm1294, %v1291, %v1292
    %v1297 = vsel %vm1294, %v1290, %v1291
    %v1298 = vsel %vm1294, %v1289, %v1290
    %v1299 = vsel %vm1294, %v1288, %v1289
    %v1300 = vsel %vm1294, %v1287, %v1288
    %v1301 = vsel %vm1294, %v1286, %v1287
    %v1302 = vsel %vm1294, %v1285, %v1286
    %v1303 = vsel %vm1294, %v1284, %v1285
    %v1304 = vsel %vm1294, %v1283, %v1284
    %v1305 = vsel %vm1294, %v1282, %v1283
    %v1306 = vsel %vm1294, %v1281, %v1282
    %v1307 = vsel %vm1294, %v1280, %v1281
    %v1308 = vsel %vm1294, %v1279, %v1280
    %v1309 = vsel %vm1294, %v1278, %v1279
    %v1310 = vsel %vm1294, %v1277, %v1278
    %v1311 = vsel %vm1294, %v1276, %v1277
    %v1312 = vsel %vm1294, %v1275, %v1276
    %v1313 = vsel %vm1294, %v1274, %v1275
    %v1314 = vsel %vm1294, %v1273, %v1274
    %v1315 = vsel %vm1294, %v1272, %v1273
    %v1316 = vsel %vm1294, %v1271, %v1272
    %v1317 = vsel %vm1294, %v1270, %v1271
    %v1318 = vsel %vm1294, %v1269, %v1270
    %v1319 = vsel %vm1294, %v1268, %v1269
    %v1320 = vsel %vm1294, %v1267, %v1268
    %v1321 = vsel %vm1294, %v1266, %v1267
    %v1322 = vsel %vm1294, %v1265, %v1266
    %v1323 = vsel %vm1294, %v1264, %v1265
    %v1324 = vsel %vm1294, %v1263, %v1264
    %vm1325 = vcmp.lt.s32.totalorder %v123, 15
    %vm1326 = vcmp.lt.s32.totalorder %v124, 15
    %v1327 = vsel %vm1325, %v1324, 0.0
    %v1328 = vsel %vm1326, %v1323, 0.0
    %v1329 = vsel %vm1325, %v1322, 0.0
    %v1330 = vsel %vm1326, %v1321, 0.0
    %v1331 = vsel %vm1325, %v1320, 0.0
    %v1332 = vsel %vm1326, %v1319, 0.0
    %v1333 = vsel %vm1325, %v1318, 0.0
    %v1334 = vsel %vm1326, %v1317, 0.0
    %v1335 = vsel %vm1325, %v1316, 0.0
    %v1336 = vsel %vm1326, %v1315, 0.0
    %v1337 = vsel %vm1325, %v1314, 0.0
    %v1338 = vsel %vm1326, %v1313, 0.0
    %v1339 = vsel %vm1325, %v1312, 0.0
    %v1340 = vsel %vm1326, %v1311, 0.0
    %v1341 = vsel %vm1325, %v1310, 0.0
    %v1342 = vsel %vm1326, %v1309, 0.0
    %v1343 = vsel %vm1325, %v1308, 0.0
    %v1344 = vsel %vm1326, %v1307, 0.0
    %v1345 = vsel %vm1325, %v1306, 0.0
    %v1346 = vsel %vm1326, %v1305, 0.0
    %v1347 = vsel %vm1325, %v1304, 0.0
    %v1348 = vsel %vm1326, %v1303, 0.0
    %v1349 = vsel %vm1325, %v1302, 0.0
    %v1350 = vsel %vm1326, %v1301, 0.0
    %v1351 = vsel %vm1325, %v1300, 0.0
    %v1352 = vsel %vm1326, %v1299, 0.0
    %v1353 = vsel %vm1325, %v1298, 0.0
    %v1354 = vsel %vm1326, %v1297, 0.0
    %v1355 = vsel %vm1325, %v1296, 0.0
    %v1356 = vsel %vm1326, %v1295, 0.0
    %v1357 = vpack.c.bf16 %v1328, %v1327
    %v1358 = vpack.c.bf16 %v1330, %v1329
    %v1359 = vpack.c.bf16 %v1332, %v1331
    %v1360 = vpack.c.bf16 %v1334, %v1333
    %v1361 = vpack.c.bf16 %v1336, %v1335
    %v1362 = vpack.c.bf16 %v1338, %v1337
    %v1363 = vpack.c.bf16 %v1340, %v1339
    %v1364 = vpack.c.bf16 %v1342, %v1341
    %v1365 = vpack.c.bf16 %v1344, %v1343
    %v1366 = vpack.c.bf16 %v1346, %v1345
    %v1367 = vpack.c.bf16 %v1348, %v1347
    %v1368 = vpack.c.bf16 %v1350, %v1349
    %v1369 = vpack.c.bf16 %v1352, %v1351
    %v1370 = vpack.c.bf16 %v1354, %v1353
    %v1371 = vpack.c.bf16 %v1356, %v1355
    %v1372 = vrot.slane %v1136, 7
    %v1373 = vsel %vm1169, %v1372, %v1168
    %v1374 = vsel %vm1169, %v1167, %v1372
    %v1375 = vsel %vm1200, %v1374, 0.0
    %v1376 = vsel %vm1201, %v1373, 0.0
    %v1377 = vpack.c.bf16 %v1376, %v1375
    %v1378 = vpack.c.bf16 %v1137, %v1136
    %v1379 = vrot.slane %v1137, 1
    %v1380 = vsel %vm1294, %v1293, %v1379
    %v1381 = vsel %vm1294, %v1379, %v1263
    %v1382 = vsel %vm1325, %v1380, 0.0
    %v1383 = vsel %vm1326, %v1381, 0.0
    %v1384 = vpack.c.bf16 %v1383, %v1382
    %v1385 = vld [vmem:[#allocation5] sm:$0x1]
    %v1387 = vlaneseq
    %v1388 = vshrl.u32 %v1387, 7
    %v1389 = vsub.s32 0, %v1388
    %v1390 = vrot.slane %v1385, %v1389
    %v1536 = vunpack.c.l.b16 %v161
    %v1537 = vunpack.c.l.b16 %v162
    %v1538 = vunpack.c.l.b16 %v163
    %v1539 = vunpack.c.l.b16 %v164
    %v1540 = vunpack.c.l.b16 %v165
    %v1541 = vunpack.c.l.b16 %v166
    %v1542 = vunpack.c.l.b16 %v167
    %v1543 = vunpack.c.l.b16 %v168
    %v1544 = vunpack.c.l.b16 %v169
    %v1545 = vunpack.c.l.b16 %v170
    %v1546 = vunpack.c.l.b16 %v171
    %v1547 = vunpack.c.l.b16 %v172
    %v1548 = vunpack.c.l.b16 %v173
    %v1549 = vunpack.c.l.b16 %v174
    %v1550 = vunpack.c.l.b16 %v175
    %v1551 = vunpack.c.l.b16 %v176
    %v1552 = vunpack.c.l.b16 %v177
    %v1553 = vunpack.c.l.b16 %v178
    %v1554 = vunpack.c.l.b16 %v179
    %v1555 = vunpack.c.l.b16 %v180
    %v1556 = vunpack.c.l.b16 %v181
    %v1557 = vunpack.c.l.b16 %v182
    %v1558 = vunpack.c.l.b16 %v183
    %v1559 = vunpack.c.l.b16 %v184
    %v1560 = vunpack.c.l.b16 %v185
    %v1561 = vunpack.c.l.b16 %v186
    %v1562 = vunpack.c.l.b16 %v187
    %v1563 = vunpack.c.l.b16 %v188
    %v1564 = vunpack.c.l.b16 %v189
    %v1565 = vunpack.c.l.b16 %v190
    %v1566 = vunpack.c.l.b16 %v191
    %v1567 = vunpack.c.l.b16 %v192
    %v1568 = vunpack.c.l.b16 %v193
    %v1569 = vunpack.c.l.b16 %v194
    %v1570 = vunpack.c.l.b16 %v195
    %v1571 = vunpack.c.l.b16 %v196
    %v1572 = vunpack.c.l.b16 %v197
    %v1573 = vunpack.c.l.b16 %v198
    %v1574 = vunpack.c.l.b16 %v199
    %v1575 = vunpack.c.l.b16 %v200
    %v1576 = vunpack.c.l.b16 %v201
    %v1577 = vunpack.c.l.b16 %v202
    %v1578 = vunpack.c.l.b16 %v203
    %v1579 = vunpack.c.l.b16 %v204
    %v1580 = vunpack.c.l.b16 %v205
    %v1581 = vunpack.c.l.b16 %v206
    %v1582 = vunpack.c.l.b16 %v207
    %v1583 = vunpack.c.l.b16 %v208
    %v1584 = vunpack.c.l.b16 %v209
    %v1585 = vunpack.c.l.b16 %v210
    %v1586 = vunpack.c.l.b16 %v211
    %v1587 = vunpack.c.l.b16 %v212
    %v1588 = vunpack.c.l.b16 %v213
    %v1589 = vunpack.c.l.b16 %v214
    %v1590 = vunpack.c.l.b16 %v215
    %v1591 = vunpack.c.l.b16 %v216
    %v1592 = vunpack.c.l.b16 %v217
    %v1593 = vunpack.c.l.b16 %v218
    %v1594 = vunpack.c.l.b16 %v219
    %v1595 = vunpack.c.l.b16 %v220
    %v1596 = vunpack.c.l.b16 %v221
    %v1597 = vunpack.c.l.b16 %v222
    %v1598 = vunpack.c.l.b16 %v223
    %v1599 = vunpack.c.l.b16 %v224
    %v1600 = vunpack.c.l.b16 %v225
    %v1601 = vunpack.c.l.b16 %v226
    %v1602 = vunpack.c.l.b16 %v227
    %v1603 = vunpack.c.l.b16 %v228
    %v1604 = vunpack.c.l.b16 %v229
    %v1605 = vunpack.c.l.b16 %v230
    %v1606 = vunpack.c.l.b16 %v231
    %v1607 = vunpack.c.l.b16 %v232
    %v1608 = vunpack.c.l.b16 %v233
    %v1609 = vunpack.c.l.b16 %v234
    %v1610 = vunpack.c.l.b16 %v235
    %v1611 = vunpack.c.l.b16 %v236
    %v1612 = vunpack.c.l.b16 %v237
    %v1613 = vunpack.c.l.b16 %v238
    %v1614 = vunpack.c.l.b16 %v239
    %v1615 = vunpack.c.l.b16 %v240
    %v1616 = vunpack.c.l.b16 %v241
    %v1617 = vunpack.c.l.b16 %v242
    %v1618 = vunpack.c.l.b16 %v243
    %v1619 = vunpack.c.l.b16 %v244
    %v1620 = vunpack.c.l.b16 %v245
    %v1621 = vunpack.c.l.b16 %v246
    %v1622 = vunpack.c.l.b16 %v247
    %v1623 = vunpack.c.l.b16 %v248
    %v1624 = vunpack.c.l.b16 %v249
    %v1625 = vunpack.c.l.b16 %v250
    %v1626 = vunpack.c.l.b16 %v251
    %v1627 = vunpack.c.l.b16 %v252
    %v1628 = vunpack.c.l.b16 %v253
    %v1629 = vunpack.c.l.b16 %v254
    %v1630 = vunpack.c.l.b16 %v255
    %v1631 = vunpack.c.l.b16 %v256
    %v1632 = vunpack.c.l.b16 %v257
    %v1633 = vunpack.c.l.b16 %v258
    %v1634 = vunpack.c.l.b16 %v259
    %v1635 = vunpack.c.l.b16 %v260
    %v1636 = vunpack.c.l.b16 %v261
    %v1637 = vunpack.c.l.b16 %v262
    %v1638 = vunpack.c.l.b16 %v263
    %v1639 = vunpack.c.l.b16 %v264
    %v1640 = vunpack.c.l.b16 %v265
    %v1641 = vunpack.c.l.b16 %v266
    %v1642 = vunpack.c.l.b16 %v267
    %v1643 = vunpack.c.l.b16 %v268
    %v1644 = vunpack.c.l.b16 %v269
    %v1645 = vunpack.c.l.b16 %v270
    %v1646 = vunpack.c.l.b16 %v271
    %v1647 = vunpack.c.l.b16 %v272
    %v1648 = vunpack.c.l.b16 %v273
    %v1649 = vunpack.c.l.b16 %v274
    %v1650 = vunpack.c.l.b16 %v275
    %v1651 = vunpack.c.l.b16 %v276
    %v1652 = vunpack.c.l.b16 %v277
    %v1653 = vunpack.c.l.b16 %v278
    %v1654 = vunpack.c.l.b16 %v279
    %v1655 = vunpack.c.l.b16 %v280
    %v1656 = vunpack.c.l.b16 %v281
    %v1657 = vunpack.c.l.b16 %v282
    %v1658 = vunpack.c.l.b16 %v283
    %v1659 = vunpack.c.l.b16 %v284
    %v1660 = vunpack.c.l.b16 %v285
    %v1661 = vunpack.c.l.b16 %v286
    %v1662 = vunpack.c.l.b16 %v287
    %v1663 = vunpack.c.l.b16 %v288
    %v1664 = vunpack.c.l.b16 %v289
    %v1665 = vunpack.c.l.b16 %v290
    %v1666 = vunpack.c.l.b16 %v291
    %v1667 = vunpack.c.l.b16 %v292
    %v1668 = vunpack.c.l.b16 %v293
    %v1669 = vunpack.c.l.b16 %v294
    %v1670 = vunpack.c.l.b16 %v295
    %v1671 = vunpack.c.l.b16 %v296
    %v1672 = vunpack.c.l.b16 %v297
    %v1673 = vunpack.c.l.b16 %v298
    %v1674 = vunpack.c.l.b16 %v299
    %v1675 = vunpack.c.l.b16 %v300
    %v1676 = vunpack.c.l.b16 %v301
    %v1677 = vunpack.c.l.b16 %v302
    %v1678 = vunpack.c.l.b16 %v303
    %v1679 = vunpack.c.l.b16 %v304
    %v1680 = vpack.c.b16 %v1537, %v1536
    %v1681 = vpack.c.b16 %v1539, %v1538
    %v1682 = vpack.c.b16 %v1541, %v1540
    %v1683 = vpack.c.b16 %v1543, %v1542
    %v1684 = vpack.c.b16 %v1545, %v1544
    %v1685 = vpack.c.b16 %v1547, %v1546
    %v1686 = vpack.c.b16 %v1549, %v1548
    %v1687 = vpack.c.b16 %v1551, %v1550
    %v1688 = vpack.c.b16 %v1553, %v1552
    %v1689 = vpack.c.b16 %v1555, %v1554
    %v1690 = vpack.c.b16 %v1557, %v1556
    %v1691 = vpack.c.b16 %v1559, %v1558
    %v1692 = vpack.c.b16 %v1561, %v1560
    %v1693 = vpack.c.b16 %v1563, %v1562
    %v1694 = vpack.c.b16 %v1565, %v1564
    %v1695 = vpack.c.b16 %v1567, %v1566
    %v1696 = vpack.c.b16 %v1569, %v1568
    %v1697 = vpack.c.b16 %v1571, %v1570
    %v1698 = vpack.c.b16 %v1573, %v1572
    %v1699 = vpack.c.b16 %v1575, %v1574
    %v1700 = vpack.c.b16 %v1577, %v1576
    %v1701 = vpack.c.b16 %v1579, %v1578
    %v1702 = vpack.c.b16 %v1581, %v1580
    %v1703 = vpack.c.b16 %v1583, %v1582
    %v1704 = vpack.c.b16 %v1585, %v1584
    %v1705 = vpack.c.b16 %v1587, %v1586
    %v1706 = vpack.c.b16 %v1589, %v1588
    %v1707 = vpack.c.b16 %v1591, %v1590
    %v1708 = vpack.c.b16 %v1593, %v1592
    %v1709 = vpack.c.b16 %v1595, %v1594
    %v1710 = vpack.c.b16 %v1597, %v1596
    %v1711 = vpack.c.b16 %v1599, %v1598
    %v1712 = vpack.c.b16 %v1601, %v1600
    %v1713 = vpack.c.b16 %v1603, %v1602
    %v1714 = vpack.c.b16 %v1605, %v1604
    %v1715 = vpack.c.b16 %v1607, %v1606
    %v1716 = vpack.c.b16 %v1609, %v1608
    %v1717 = vpack.c.b16 %v1611, %v1610
    %v1718 = vpack.c.b16 %v1613, %v1612
    %v1719 = vpack.c.b16 %v1615, %v1614
    %v1720 = vpack.c.b16 %v1617, %v1616
    %v1721 = vpack.c.b16 %v1619, %v1618
    %v1722 = vpack.c.b16 %v1621, %v1620
    %v1723 = vpack.c.b16 %v1623, %v1622
    %v1724 = vpack.c.b16 %v1625, %v1624
    %v1725 = vpack.c.b16 %v1627, %v1626
    %v1726 = vpack.c.b16 %v1629, %v1628
    %v1727 = vpack.c.b16 %v1631, %v1630
    %v1728 = vpack.c.b16 %v1633, %v1632
    %v1729 = vpack.c.b16 %v1635, %v1634
    %v1730 = vpack.c.b16 %v1637, %v1636
    %v1731 = vpack.c.b16 %v1639, %v1638
    %v1732 = vpack.c.b16 %v1641, %v1640
    %v1733 = vpack.c.b16 %v1643, %v1642
    %v1734 = vpack.c.b16 %v1645, %v1644
    %v1735 = vpack.c.b16 %v1647, %v1646
    %v1736 = vpack.c.b16 %v1649, %v1648
    %v1737 = vpack.c.b16 %v1651, %v1650
    %v1738 = vpack.c.b16 %v1653, %v1652
    %v1739 = vpack.c.b16 %v1655, %v1654
    %v1740 = vpack.c.b16 %v1657, %v1656
    %v1741 = vpack.c.b16 %v1659, %v1658
    %v1742 = vpack.c.b16 %v1661, %v1660
    %v1743 = vpack.c.b16 %v1663, %v1662
    %v1744 = vpack.c.b16 %v1665, %v1664
    %v1745 = vpack.c.b16 %v1667, %v1666
    %v1746 = vpack.c.b16 %v1669, %v1668
    %v1747 = vpack.c.b16 %v1671, %v1670
    %v1748 = vpack.c.b16 %v1673, %v1672
    %v1749 = vpack.c.b16 %v1675, %v1674
    %v1750 = vpack.c.b16 %v1677, %v1676
    %v1751 = vpack.c.b16 %v1679, %v1678
    %1824 = vmatprep.subr.bf16.mxu0 0
    %1825 = vmatpush1.bf16.msra.mxu0 %v1687
    %1826 = vmatprep.subr.bf16.mxu0 0
    %1827 = vmatpush1.bf16.msra.mxu0 %v1686
    %1828 = vmatprep.subr.bf16.mxu0 0
    %1829 = vmatpush1.bf16.msra.mxu0 %v1685
    %1830 = vmatprep.subr.bf16.mxu0 0
    %1831 = vmatpush1.bf16.msra.mxu0 %v1684
    %1832 = vmatprep.subr.bf16.mxu0 0
    %1833 = vmatpush1.bf16.msra.mxu0 %v1683
    %1834 = vmatprep.subr.bf16.mxu0 0
    %1835 = vmatpush1.bf16.msra.mxu0 %v1682
    %1836 = vmatprep.subr.bf16.mxu0 0
    %1837 = vmatpush1.bf16.msra.mxu0 %v1681
    %1838 = vmatprep.subr.bf16.mxu0 0
    %1839 = vmatpush1.bf16.msra.mxu0 %v1680
    %1840 = vmatprep.subr.bf16.mxu0 0
    %1841 = vmatpush2.bf16.msra.mxu0 %v1695
    %1842 = vmatprep.subr.bf16.mxu0 0
    %1843 = vmatpush2.bf16.msra.mxu0 %v1694
    %1844 = vmatprep.subr.bf16.mxu0 0
    %1845 = vmatpush2.bf16.msra.mxu0 %v1693
    %1846 = vmatprep.subr.bf16.mxu0 0
    %1847 = vmatpush2.bf16.msra.mxu0 %v1692
    %1848 = vmatprep.subr.bf16.mxu0 0
    %1849 = vmatpush2.bf16.msra.mxu0 %v1691
    %1850 = vmatprep.subr.bf16.mxu0 0
    %1851 = vmatpush2.bf16.msra.mxu0 %v1690
    %1852 = vmatprep.subr.bf16.mxu0 0
    %1853 = vmatpush2.bf16.msra.mxu0 %v1689
    %1854 = vmatprep.subr.bf16.mxu0 0
    %1855 = vmatpush2.bf16.msra.mxu0 %v1688
    %1856 = vmatprep.mubr.bf16.mxu0 %v1232
    %1857 = vmatmul.mubr.bf16.gmra.mxu0 %v1232
    %v1858 = vpop.f32.mrf.mxu0
    %v1859 = vadd.f32 %v1390, %v1858
    %v1860 = vpop.f32.mrf.mxu0
    %v1861 = vpop.f32.mrf.mxu0
    %v1862 = vadd.f32 %v1390, %v1861
    %v1863 = vpop.f32.mrf.mxu0
    %1864 = vmatprep.mubr.bf16.mxu0 %v1248
    %1865 = vmatmul.mubr.bf16.gmra.mxu0 %v1233
    %v1866 = vpop.f32.mrf.mxu0
    %v1867 = vadd.f32 %v1390, %v1866
    %v1868 = vpop.f32.mrf.mxu0
    %v1869 = vpop.f32.mrf.mxu0
    %v1870 = vadd.f32 %v1390, %v1869
    %v1871 = vpop.f32.mrf.mxu0
    %1872 = vmatprep.mubr.bf16.mxu0 %v1249
    %1873 = vmatmul.mubr.bf16.gmra.mxu0 %v1234
    %v1874 = vpop.f32.mrf.mxu0
    %v1875 = vadd.f32 %v1390, %v1874
    %v1876 = vpop.f32.mrf.mxu0
    %v1877 = vpop.f32.mrf.mxu0
    %v1878 = vadd.f32 %v1390, %v1877
    %v1879 = vpop.f32.mrf.mxu0
    %1880 = vmatprep.mubr.bf16.mxu0 %v1250
    %1881 = vmatmul.mubr.bf16.gmra.mxu0 %v1235
    %v1882 = vpop.f32.mrf.mxu0
    %v1883 = vadd.f32 %v1390, %v1882
    %v1884 = vpop.f32.mrf.mxu0
    %v1885 = vpop.f32.mrf.mxu0
    %v1886 = vadd.f32 %v1390, %v1885
    %v1887 = vpop.f32.mrf.mxu0
    %1888 = vmatprep.mubr.bf16.mxu0 %v1251
    %1889 = vmatmul.mubr.bf16.gmra.mxu0 %v1236
    %v1890 = vpop.f32.mrf.mxu0
    %v1891 = vadd.f32 %v1390, %v1890
    %v1892 = vpop.f32.mrf.mxu0
    %v1893 = vpop.f32.mrf.mxu0
    %v1894 = vadd.f32 %v1390, %v1893
    %v1895 = vpop.f32.mrf.mxu0
    %1896 = vmatprep.mubr.bf16.mxu0 %v1252
    %1897 = vmatmul.mubr.bf16.gmra.mxu0 %v1237
    %v1898 = vpop.f32.mrf.mxu0
    %v1899 = vadd.f32 %v1390, %v1898
    %v1900 = vpop.f32.mrf.mxu0
    %v1901 = vpop.f32.mrf.mxu0
    %v1902 = vadd.f32 %v1390, %v1901
    %v1903 = vpop.f32.mrf.mxu0
    %1904 = vmatprep.mubr.bf16.mxu0 %v1253
    %1905 = vmatmul.mubr.bf16.gmra.mxu0 %v1238
    %v1906 = vpop.f32.mrf.mxu0
    %v1907 = vadd.f32 %v1390, %v1906
    %v1908 = vpop.f32.mrf.mxu0
    %v1909 = vpop.f32.mrf.mxu0
    %v1910 = vadd.f32 %v1390, %v1909
    %v1911 = vpop.f32.mrf.mxu0
    %1912 = vmatprep.mubr.bf16.mxu0 %v1254
    %1913 = vmatmul.mubr.bf16.gmra.mxu0 %v1239
    %v1914 = vpop.f32.mrf.mxu0
    %v1915 = vadd.f32 %v1390, %v1914
    %v1916 = vpop.f32.mrf.mxu0
    %v1917 = vpop.f32.mrf.mxu0
    %v1918 = vadd.f32 %v1390, %v1917
    %v1919 = vpop.f32.mrf.mxu0
    %1920 = vmatprep.mubr.bf16.mxu0 %v1255
    %1921 = vmatmul.mubr.bf16.gmra.mxu0 %v1240
    %v1922 = vpop.f32.mrf.mxu0
    %v1923 = vadd.f32 %v1390, %v1922
    %v1924 = vpop.f32.mrf.mxu0
    %v1925 = vpop.f32.mrf.mxu0
    %v1926 = vadd.f32 %v1390, %v1925
    %v1927 = vpop.f32.mrf.mxu0
    %1928 = vmatprep.mubr.bf16.mxu0 %v1256
    %1929 = vmatmul.mubr.bf16.gmra.mxu0 %v1241
    %v1930 = vpop.f32.mrf.mxu0
    %v1931 = vadd.f32 %v1390, %v1930
    %v1932 = vpop.f32.mrf.mxu0
    %v1933 = vpop.f32.mrf.mxu0
    %v1934 = vadd.f32 %v1390, %v1933
    %v1935 = vpop.f32.mrf.mxu0
    %1936 = vmatprep.mubr.bf16.mxu0 %v1257
    %1937 = vmatmul.mubr.bf16.gmra.mxu0 %v1242
    %v1938 = vpop.f32.mrf.mxu0
    %v1939 = vadd.f32 %v1390, %v1938
    %v1940 = vpop.f32.mrf.mxu0
    %v1941 = vpop.f32.mrf.mxu0
    %v1942 = vadd.f32 %v1390, %v1941
    %v1943 = vpop.f32.mrf.mxu0
    %1944 = vmatprep.mubr.bf16.mxu0 %v1258
    %1945 = vmatmul.mubr.bf16.gmra.mxu0 %v1243
    %v1946 = vpop.f32.mrf.mxu0
    %v1947 = vadd.f32 %v1390, %v1946
    %v1948 = vpop.f32.mrf.mxu0
    %v1949 = vpop.f32.mrf.mxu0
    %v1950 = vadd.f32 %v1390, %v1949
    %v1951 = vpop.f32.mrf.mxu0
    %1952 = vmatprep.mubr.bf16.mxu0 %v1259
    %1953 = vmatmul.mubr.bf16.gmra.mxu0 %v1244
    %v1954 = vpop.f32.mrf.mxu0
    %v1955 = vadd.f32 %v1390, %v1954
    %v1956 = vpop.f32.mrf.mxu0
    %v1957 = vpop.f32.mrf.mxu0
    %v1958 = vadd.f32 %v1390, %v1957
    %v1959 = vpop.f32.mrf.mxu0
    %1960 = vmatprep.mubr.bf16.mxu0 %v1260
    %1961 = vmatmul.mubr.bf16.gmra.mxu0 %v1245
    %v1962 = vpop.f32.mrf.mxu0
    %v1963 = vadd.f32 %v1390, %v1962
    %v1964 = vpop.f32.mrf.mxu0
    %v1965 = vpop.f32.mrf.mxu0
    %v1966 = vadd.f32 %v1390, %v1965
    %v1967 = vpop.f32.mrf.mxu0
    %1968 = vmatprep.mubr.bf16.mxu0 %v1261
    %1969 = vmatmul.mubr.bf16.gmra.mxu0 %v1246
    %v1970 = vpop.f32.mrf.mxu0
    %v1971 = vadd.f32 %v1390, %v1970
    %v1972 = vpop.f32.mrf.mxu0
    %v1973 = vpop.f32.mrf.mxu0
    %v1974 = vadd.f32 %v1390, %v1973
    %v1975 = vpop.f32.mrf.mxu0
    %1976 = vmatprep.mubr.bf16.mxu0 %v1262
    %1977 = vmatmul.mubr.bf16.gmra.mxu0 %v1247
    %v1978 = vpop.f32.mrf.mxu0
    %v1979 = vadd.f32 %v1390, %v1978
    %v1980 = vpop.f32.mrf.mxu0
    %v1981 = vpop.f32.mrf.mxu0
    %v1982 = vadd.f32 %v1390, %v1981
    %v1983 = vpop.f32.mrf.mxu0
    %1984 = vdwg.mxu0
    %1985 = vmatprep.subr.bf16.mxu0 0
    %1986 = vmatpush1.bf16.msra.mxu0 %v1703
    %1987 = vmatprep.subr.bf16.mxu0 0
    %1988 = vmatpush1.bf16.msra.mxu0 %v1702
    %1989 = vmatprep.subr.bf16.mxu0 0
    %1990 = vmatpush1.bf16.msra.mxu0 %v1701
    %1991 = vmatprep.subr.bf16.mxu0 0
    %1992 = vmatpush1.bf16.msra.mxu0 %v1700
    %1993 = vmatprep.subr.bf16.mxu0 0
    %1994 = vmatpush1.bf16.msra.mxu0 %v1699
    %1995 = vmatprep.subr.bf16.mxu0 0
    %1996 = vmatpush1.bf16.msra.mxu0 %v1698
    %1997 = vmatprep.subr.bf16.mxu0 0
    %1998 = vmatpush1.bf16.msra.mxu0 %v1697
    %1999 = vmatprep.subr.bf16.mxu0 0
    %2000 = vmatpush1.bf16.msra.mxu0 %v1696
    %2001 = vmatprep.subr.bf16.mxu0 0
    %2002 = vmatpush2.bf16.msra.mxu0 %v1711
    %2003 = vmatprep.subr.bf16.mxu0 0
    %2004 = vmatpush2.bf16.msra.mxu0 %v1710
    %2005 = vmatprep.subr.bf16.mxu0 0
    %2006 = vmatpush2.bf16.msra.mxu0 %v1709
    %2007 = vmatprep.subr.bf16.mxu0 0
    %2008 = vmatpush2.bf16.msra.mxu0 %v1708
    %2009 = vmatprep.subr.bf16.mxu0 0
    %2010 = vmatpush2.bf16.msra.mxu0 %v1707
    %2011 = vmatprep.subr.bf16.mxu0 0
    %2012 = vmatpush2.bf16.msra.mxu0 %v1706
    %2013 = vmatprep.subr.bf16.mxu0 0
    %2014 = vmatpush2.bf16.msra.mxu0 %v1705
    %2015 = vmatprep.subr.bf16.mxu0 0
    %2016 = vmatpush2.bf16.msra.mxu0 %v1704
    %2017 = vmatprep.mubr.bf16.mxu0 %v1233
    %2018 = vmatmul.mubr.bf16.gmra.mxu0 %v1232
    %v2019 = vpop.f32.mrf.mxu0
    %v2020 = vadd.f32 %v1859, %v2019
    %v2021 = vpop.f32.mrf.mxu0
    %v2022 = vpop.f32.mrf.mxu0
    %v2023 = vadd.f32 %v1862, %v2022
    %v2024 = vpop.f32.mrf.mxu0
    %2025 = vmatprep.mubr.bf16.mxu0 %v1234
    %2026 = vmatmul.mubr.bf16.gmra.mxu0 %v1357
    %v2027 = vpop.f32.mrf.mxu0
    %v2028 = vadd.f32 %v1867, %v2027
    %v2029 = vpop.f32.mrf.mxu0
    %v2030 = vpop.f32.mrf.mxu0
    %v2031 = vadd.f32 %v1870, %v2030
    %v2032 = vpop.f32.mrf.mxu0
    %2033 = vmatprep.mubr.bf16.mxu0 %v1235
    %2034 = vmatmul.mubr.bf16.gmra.mxu0 %v1358
    %v2035 = vpop.f32.mrf.mxu0
    %v2036 = vadd.f32 %v1875, %v2035
    %v2037 = vpop.f32.mrf.mxu0
    %v2038 = vpop.f32.mrf.mxu0
    %v2039 = vadd.f32 %v1878, %v2038
    %v2040 = vpop.f32.mrf.mxu0
    %2041 = vmatprep.mubr.bf16.mxu0 %v1236
    %2042 = vmatmul.mubr.bf16.gmra.mxu0 %v1359
    %v2043 = vpop.f32.mrf.mxu0
    %v2044 = vadd.f32 %v1883, %v2043
    %v2045 = vpop.f32.mrf.mxu0
    %v2046 = vpop.f32.mrf.mxu0
    %v2047 = vadd.f32 %v1886, %v2046
    %v2048 = vpop.f32.mrf.mxu0
    %2049 = vmatprep.mubr.bf16.mxu0 %v1237
    %2050 = vmatmul.mubr.bf16.gmra.mxu0 %v1360
    %v2051 = vpop.f32.mrf.mxu0
    %v2052 = vadd.f32 %v1891, %v2051
    %v2053 = vpop.f32.mrf.mxu0
    %v2054 = vpop.f32.mrf.mxu0
    %v2055 = vadd.f32 %v1894, %v2054
    %v2056 = vpop.f32.mrf.mxu0
    %2057 = vmatprep.mubr.bf16.mxu0 %v1238
    %2058 = vmatmul.mubr.bf16.gmra.mxu0 %v1361
    %v2059 = vpop.f32.mrf.mxu0
    %v2060 = vadd.f32 %v1899, %v2059
    %v2061 = vpop.f32.mrf.mxu0
    %v2062 = vpop.f32.mrf.mxu0
    %v2063 = vadd.f32 %v1902, %v2062
    %v2064 = vpop.f32.mrf.mxu0
    %2065 = vmatprep.mubr.bf16.mxu0 %v1239
    %2066 = vmatmul.mubr.bf16.gmra.mxu0 %v1362
    %v2067 = vpop.f32.mrf.mxu0
    %v2068 = vadd.f32 %v1907, %v2067
    %v2069 = vpop.f32.mrf.mxu0
    %v2070 = vpop.f32.mrf.mxu0
    %v2071 = vadd.f32 %v1910, %v2070
    %v2072 = vpop.f32.mrf.mxu0
    %2073 = vmatprep.mubr.bf16.mxu0 %v1240
    %2074 = vmatmul.mubr.bf16.gmra.mxu0 %v1363
    %v2075 = vpop.f32.mrf.mxu0
    %v2076 = vadd.f32 %v1915, %v2075
    %v2077 = vpop.f32.mrf.mxu0
    %v2078 = vpop.f32.mrf.mxu0
    %v2079 = vadd.f32 %v1918, %v2078
    %v2080 = vpop.f32.mrf.mxu0
    %2081 = vmatprep.mubr.bf16.mxu0 %v1241
    %2082 = vmatmul.mubr.bf16.gmra.mxu0 %v1364
    %v2083 = vpop.f32.mrf.mxu0
    %v2084 = vadd.f32 %v1923, %v2083
    %v2085 = vpop.f32.mrf.mxu0
    %v2086 = vpop.f32.mrf.mxu0
    %v2087 = vadd.f32 %v1926, %v2086
    %v2088 = vpop.f32.mrf.mxu0
    %2089 = vmatprep.mubr.bf16.mxu0 %v1242
    %2090 = vmatmul.mubr.bf16.gmra.mxu0 %v1365
    %v2091 = vpop.f32.mrf.mxu0
    %v2092 = vadd.f32 %v1931, %v2091
    %v2093 = vpop.f32.mrf.mxu0
    %v2094 = vpop.f32.mrf.mxu0
    %v2095 = vadd.f32 %v1934, %v2094
    %v2096 = vpop.f32.mrf.mxu0
    %2097 = vmatprep.mubr.bf16.mxu0 %v1243
    %2098 = vmatmul.mubr.bf16.gmra.mxu0 %v1366
    %v2099 = vpop.f32.mrf.mxu0
    %v2100 = vadd.f32 %v1939, %v2099
    %v2101 = vpop.f32.mrf.mxu0
    %v2102 = vpop.f32.mrf.mxu0
    %v2103 = vadd.f32 %v1942, %v2102
    %v2104 = vpop.f32.mrf.mxu0
    %2105 = vmatprep.mubr.bf16.mxu0 %v1244
    %2106 = vmatmul.mubr.bf16.gmra.mxu0 %v1367
    %v2107 = vpop.f32.mrf.mxu0
    %v2108 = vadd.f32 %v1947, %v2107
    %v2109 = vpop.f32.mrf.mxu0
    %v2110 = vpop.f32.mrf.mxu0
    %v2111 = vadd.f32 %v1950, %v2110
    %v2112 = vpop.f32.mrf.mxu0
    %2113 = vmatprep.mubr.bf16.mxu0 %v1245
    %2114 = vmatmul.mubr.bf16.gmra.mxu0 %v1368
    %v2115 = vpop.f32.mrf.mxu0
    %v2116 = vadd.f32 %v1955, %v2115
    %v2117 = vpop.f32.mrf.mxu0
    %v2118 = vpop.f32.mrf.mxu0
    %v2119 = vadd.f32 %v1958, %v2118
    %v2120 = vpop.f32.mrf.mxu0
    %2121 = vmatprep.mubr.bf16.mxu0 %v1246
    %2122 = vmatmul.mubr.bf16.gmra.mxu0 %v1369
    %v2123 = vpop.f32.mrf.mxu0
    %v2124 = vadd.f32 %v1963, %v2123
    %v2125 = vpop.f32.mrf.mxu0
    %v2126 = vpop.f32.mrf.mxu0
    %v2127 = vadd.f32 %v1966, %v2126
    %v2128 = vpop.f32.mrf.mxu0
    %2129 = vmatprep.mubr.bf16.mxu0 %v1247
    %2130 = vmatmul.mubr.bf16.gmra.mxu0 %v1370
    %v2131 = vpop.f32.mrf.mxu0
    %v2132 = vadd.f32 %v1971, %v2131
    %v2133 = vpop.f32.mrf.mxu0
    %v2134 = vpop.f32.mrf.mxu0
    %v2135 = vadd.f32 %v1974, %v2134
    %v2136 = vpop.f32.mrf.mxu0
    %2137 = vmatprep.mubr.bf16.mxu0 %v1377
    %2138 = vmatmul.mubr.bf16.gmra.mxu0 %v1371
    %v2139 = vpop.f32.mrf.mxu0
    %v2140 = vadd.f32 %v1979, %v2139
    %v2141 = vpop.f32.mrf.mxu0
    %v2142 = vpop.f32.mrf.mxu0
    %v2143 = vadd.f32 %v1982, %v2142
    %v2144 = vpop.f32.mrf.mxu0
    %2145 = vdwg.mxu0
    %2146 = vmatprep.subr.bf16.mxu0 0
    %2147 = vmatpush1.bf16.msra.mxu0 %v1719
    %2148 = vmatprep.subr.bf16.mxu0 0
    %2149 = vmatpush1.bf16.msra.mxu0 %v1718
    %2150 = vmatprep.subr.bf16.mxu0 0
    %2151 = vmatpush1.bf16.msra.mxu0 %v1717
    %2152 = vmatprep.subr.bf16.mxu0 0
    %2153 = vmatpush1.bf16.msra.mxu0 %v1716
    %2154 = vmatprep.subr.bf16.mxu0 0
    %2155 = vmatpush1.bf16.msra.mxu0 %v1715
    %2156 = vmatprep.subr.bf16.mxu0 0
    %2157 = vmatpush1.bf16.msra.mxu0 %v1714
    %2158 = vmatprep.subr.bf16.mxu0 0
    %2159 = vmatpush1.bf16.msra.mxu0 %v1713
    %2160 = vmatprep.subr.bf16.mxu0 0
    %2161 = vmatpush1.bf16.msra.mxu0 %v1712
    %2162 = vmatprep.subr.bf16.mxu0 0
    %2163 = vmatpush2.bf16.msra.mxu0 %v1727
    %2164 = vmatprep.subr.bf16.mxu0 0
    %2165 = vmatpush2.bf16.msra.mxu0 %v1726
    %2166 = vmatprep.subr.bf16.mxu0 0
    %2167 = vmatpush2.bf16.msra.mxu0 %v1725
    %2168 = vmatprep.subr.bf16.mxu0 0
    %2169 = vmatpush2.bf16.msra.mxu0 %v1724
    %2170 = vmatprep.subr.bf16.mxu0 0
    %2171 = vmatpush2.bf16.msra.mxu0 %v1723
    %2172 = vmatprep.subr.bf16.mxu0 0
    %2173 = vmatpush2.bf16.msra.mxu0 %v1722
    %2174 = vmatprep.subr.bf16.mxu0 0
    %2175 = vmatpush2.bf16.msra.mxu0 %v1721
    %2176 = vmatprep.subr.bf16.mxu0 0
    %2177 = vmatpush2.bf16.msra.mxu0 %v1720
    %2178 = vmatprep.mubr.bf16.mxu0 %v1357
    %2179 = vmatmul.mubr.bf16.gmra.mxu0 %v1248
    %v2180 = vpop.f32.mrf.mxu0
    %v2181 = vadd.f32 %v2020, %v2180
    %v2182 = vpop.f32.mrf.mxu0
    %v2183 = vpop.f32.mrf.mxu0
    %v2184 = vadd.f32 %v2023, %v2183
    %v2185 = vpop.f32.mrf.mxu0
    %2186 = vmatprep.mubr.bf16.mxu0 %v1358
    %2187 = vmatmul.mubr.bf16.gmra.mxu0 %v1249
    %v2188 = vpop.f32.mrf.mxu0
    %v2189 = vadd.f32 %v2028, %v2188
    %v2190 = vpop.f32.mrf.mxu0
    %v2191 = vpop.f32.mrf.mxu0
    %v2192 = vadd.f32 %v2031, %v2191
    %v2193 = vpop.f32.mrf.mxu0
    %2194 = vmatprep.mubr.bf16.mxu0 %v1359
    %2195 = vmatmul.mubr.bf16.gmra.mxu0 %v1250
    %v2196 = vpop.f32.mrf.mxu0
    %v2197 = vadd.f32 %v2036, %v2196
    %v2198 = vpop.f32.mrf.mxu0
    %v2199 = vpop.f32.mrf.mxu0
    %v2200 = vadd.f32 %v2039, %v2199
    %v2201 = vpop.f32.mrf.mxu0
    %2202 = vmatprep.mubr.bf16.mxu0 %v1360
    %2203 = vmatmul.mubr.bf16.gmra.mxu0 %v1251
    %v2204 = vpop.f32.mrf.mxu0
    %v2205 = vadd.f32 %v2044, %v2204
    %v2206 = vpop.f32.mrf.mxu0
    %v2207 = vpop.f32.mrf.mxu0
    %v2208 = vadd.f32 %v2047, %v2207
    %v2209 = vpop.f32.mrf.mxu0
    %2210 = vmatprep.mubr.bf16.mxu0 %v1361
    %2211 = vmatmul.mubr.bf16.gmra.mxu0 %v1252
    %v2212 = vpop.f32.mrf.mxu0
    %v2213 = vadd.f32 %v2052, %v2212
    %v2214 = vpop.f32.mrf.mxu0
    %v2215 = vpop.f32.mrf.mxu0
    %v2216 = vadd.f32 %v2055, %v2215
    %v2217 = vpop.f32.mrf.mxu0
    %2218 = vmatprep.mubr.bf16.mxu0 %v1362
    %2219 = vmatmul.mubr.bf16.gmra.mxu0 %v1253
    %v2220 = vpop.f32.mrf.mxu0
    %v2221 = vadd.f32 %v2060, %v2220
    %v2222 = vpop.f32.mrf.mxu0
    %v2223 = vpop.f32.mrf.mxu0
    %v2224 = vadd.f32 %v2063, %v2223
    %v2225 = vpop.f32.mrf.mxu0
    %2226 = vmatprep.mubr.bf16.mxu0 %v1363
    %2227 = vmatmul.mubr.bf16.gmra.mxu0 %v1254
    %v2228 = vpop.f32.mrf.mxu0
    %v2229 = vadd.f32 %v2068, %v2228
    %v2230 = vpop.f32.mrf.mxu0
    %v2231 = vpop.f32.mrf.mxu0
    %v2232 = vadd.f32 %v2071, %v2231
    %v2233 = vpop.f32.mrf.mxu0
    %2234 = vmatprep.mubr.bf16.mxu0 %v1364
    %2235 = vmatmul.mubr.bf16.gmra.mxu0 %v1255
    %v2236 = vpop.f32.mrf.mxu0
    %v2237 = vadd.f32 %v2076, %v2236
    %v2238 = vpop.f32.mrf.mxu0
    %v2239 = vpop.f32.mrf.mxu0
    %v2240 = vadd.f32 %v2079, %v2239
    %v2241 = vpop.f32.mrf.mxu0
    %2242 = vmatprep.mubr.bf16.mxu0 %v1365
    %2243 = vmatmul.mubr.bf16.gmra.mxu0 %v1256
    %v2244 = vpop.f32.mrf.mxu0
    %v2245 = vadd.f32 %v2084, %v2244
    %v2246 = vpop.f32.mrf.mxu0
    %v2247 = vpop.f32.mrf.mxu0
    %v2248 = vadd.f32 %v2087, %v2247
    %v2249 = vpop.f32.mrf.mxu0
    %2250 = vmatprep.mubr.bf16.mxu0 %v1366
    %2251 = vmatmul.mubr.bf16.gmra.mxu0 %v1257
    %v2252 = vpop.f32.mrf.mxu0
    %v2253 = vadd.f32 %v2092, %v2252
    %v2254 = vpop.f32.mrf.mxu0
    %v2255 = vpop.f32.mrf.mxu0
    %v2256 = vadd.f32 %v2095, %v2255
    %v2257 = vpop.f32.mrf.mxu0
    %2258 = vmatprep.mubr.bf16.mxu0 %v1367
    %2259 = vmatmul.mubr.bf16.gmra.mxu0 %v1258
    %v2260 = vpop.f32.mrf.mxu0
    %v2261 = vadd.f32 %v2100, %v2260
    %v2262 = vpop.f32.mrf.mxu0
    %v2263 = vpop.f32.mrf.mxu0
    %v2264 = vadd.f32 %v2103, %v2263
    %v2265 = vpop.f32.mrf.mxu0
    %2266 = vmatprep.mubr.bf16.mxu0 %v1368
    %2267 = vmatmul.mubr.bf16.gmra.mxu0 %v1259
    %v2268 = vpop.f32.mrf.mxu0
    %v2269 = vadd.f32 %v2108, %v2268
    %v2270 = vpop.f32.mrf.mxu0
    %v2271 = vpop.f32.mrf.mxu0
    %v2272 = vadd.f32 %v2111, %v2271
    %v2273 = vpop.f32.mrf.mxu0
    %2274 = vmatprep.mubr.bf16.mxu0 %v1369
    %2275 = vmatmul.mubr.bf16.gmra.mxu0 %v1260
    %v2276 = vpop.f32.mrf.mxu0
    %v2277 = vadd.f32 %v2116, %v2276
    %v2278 = vpop.f32.mrf.mxu0
    %v2279 = vpop.f32.mrf.mxu0
    %v2280 = vadd.f32 %v2119, %v2279
    %v2281 = vpop.f32.mrf.mxu0
    %2282 = vmatprep.mubr.bf16.mxu0 %v1370
    %2283 = vmatmul.mubr.bf16.gmra.mxu0 %v1261
    %v2284 = vpop.f32.mrf.mxu0
    %v2285 = vadd.f32 %v2124, %v2284
    %v2286 = vpop.f32.mrf.mxu0
    %v2287 = vpop.f32.mrf.mxu0
    %v2288 = vadd.f32 %v2127, %v2287
    %v2289 = vpop.f32.mrf.mxu0
    %2290 = vmatprep.mubr.bf16.mxu0 %v1371
    %2291 = vmatmul.mubr.bf16.gmra.mxu0 %v1262
    %v2292 = vpop.f32.mrf.mxu0
    %v2293 = vadd.f32 %v2132, %v2292
    %v2294 = vpop.f32.mrf.mxu0
    %v2295 = vpop.f32.mrf.mxu0
    %v2296 = vadd.f32 %v2135, %v2295
    %v2297 = vpop.f32.mrf.mxu0
    %2298 = vmatprep.mubr.bf16.mxu0 %v1384
    %2299 = vmatmul.mubr.bf16.gmra.mxu0 %v1378
    %v2300 = vpop.f32.mrf.mxu0
    %v2301 = vadd.f32 %v2140, %v2300
    %v2302 = vpop.f32.mrf.mxu0
    %v2303 = vpop.f32.mrf.mxu0
    %v2304 = vadd.f32 %v2143, %v2303
    %v2305 = vpop.f32.mrf.mxu0
    %2306 = vdwg.mxu0
    %2307 = vmatprep.subr.bf16.mxu0 0
    %2308 = vmatpush1.bf16.msra.mxu0 %v1735
    %2309 = vmatprep.subr.bf16.mxu0 0
    %2310 = vmatpush1.bf16.msra.mxu0 %v1734
    %2311 = vmatprep.subr.bf16.mxu0 0
    %2312 = vmatpush1.bf16.msra.mxu0 %v1733
    %2313 = vmatprep.subr.bf16.mxu0 0
    %2314 = vmatpush1.bf16.msra.mxu0 %v1732
    %2315 = vmatprep.subr.bf16.mxu0 0
    %2316 = vmatpush1.bf16.msra.mxu0 %v1731
    %2317 = vmatprep.subr.bf16.mxu0 0
    %2318 = vmatpush1.bf16.msra.mxu0 %v1730
    %2319 = vmatprep.subr.bf16.mxu0 0
    %2320 = vmatpush1.bf16.msra.mxu0 %v1729
    %2321 = vmatprep.subr.bf16.mxu0 0
    %2322 = vmatpush1.bf16.msra.mxu0 %v1728
    %2323 = vmatprep.subr.bf16.mxu0 0
    %2324 = vmatpush2.bf16.msra.mxu0 %v1743
    %2325 = vmatprep.subr.bf16.mxu0 0
    %2326 = vmatpush2.bf16.msra.mxu0 %v1742
    %2327 = vmatprep.subr.bf16.mxu0 0
    %2328 = vmatpush2.bf16.msra.mxu0 %v1741
    %2329 = vmatprep.subr.bf16.mxu0 0
    %2330 = vmatpush2.bf16.msra.mxu0 %v1740
    %2331 = vmatprep.subr.bf16.mxu0 0
    %2332 = vmatpush2.bf16.msra.mxu0 %v1739
    %2333 = vmatprep.subr.bf16.mxu0 0
    %2334 = vmatpush2.bf16.msra.mxu0 %v1738
    %2335 = vmatprep.subr.bf16.mxu0 0
    %2336 = vmatpush2.bf16.msra.mxu0 %v1737
    %2337 = vmatprep.subr.bf16.mxu0 0
    %2338 = vmatpush2.bf16.msra.mxu0 %v1736
    %2339 = vmatprep.mubr.bf16.mxu0 %v1249
    %2340 = vmatmul.mubr.bf16.gmra.mxu0 %v1234
    %v2341 = vpop.f32.mrf.mxu0
    %v2342 = vadd.f32 %v2181, %v2341
    %v2343 = vpop.f32.mrf.mxu0
    %v2344 = vpop.f32.mrf.mxu0
    %v2345 = vadd.f32 %v2184, %v2344
    %v2346 = vpop.f32.mrf.mxu0
    %2347 = vmatprep.mubr.bf16.mxu0 %v1250
    %2348 = vmatmul.mubr.bf16.gmra.mxu0 %v1235
    %v2349 = vpop.f32.mrf.mxu0
    %v2350 = vadd.f32 %v2189, %v2349
    %v2351 = vpop.f32.mrf.mxu0
    %v2352 = vpop.f32.mrf.mxu0
    %v2353 = vadd.f32 %v2192, %v2352
    %v2354 = vpop.f32.mrf.mxu0
    %2355 = vmatprep.mubr.bf16.mxu0 %v1251
    %2356 = vmatmul.mubr.bf16.gmra.mxu0 %v1236
    %v2357 = vpop.f32.mrf.mxu0
    %v2358 = vadd.f32 %v2197, %v2357
    %v2359 = vpop.f32.mrf.mxu0
    %v2360 = vpop.f32.mrf.mxu0
    %v2361 = vadd.f32 %v2200, %v2360
    %v2362 = vpop.f32.mrf.mxu0
    %2363 = vmatprep.mubr.bf16.mxu0 %v1252
    %2364 = vmatmul.mubr.bf16.gmra.mxu0 %v1237
    %v2365 = vpop.f32.mrf.mxu0
    %v2366 = vadd.f32 %v2205, %v2365
    %v2367 = vpop.f32.mrf.mxu0
    %v2368 = vpop.f32.mrf.mxu0
    %v2369 = vadd.f32 %v2208, %v2368
    %v2370 = vpop.f32.mrf.mxu0
    %2371 = vmatprep.mubr.bf16.mxu0 %v1253
    %2372 = vmatmul.mubr.bf16.gmra.mxu0 %v1238
    %v2373 = vpop.f32.mrf.mxu0
    %v2374 = vadd.f32 %v2213, %v2373
    %v2375 = vpop.f32.mrf.mxu0
    %v2376 = vpop.f32.mrf.mxu0
    %v2377 = vadd.f32 %v2216, %v2376
    %v2378 = vpop.f32.mrf.mxu0
    %2379 = vmatprep.mubr.bf16.mxu0 %v1254
    %2380 = vmatmul.mubr.bf16.gmra.mxu0 %v1239
    %v2381 = vpop.f32.mrf.mxu0
    %v2382 = vadd.f32 %v2221, %v2381
    %v2383 = vpop.f32.mrf.mxu0
    %v2384 = vpop.f32.mrf.mxu0
    %v2385 = vadd.f32 %v2224, %v2384
    %v2386 = vpop.f32.mrf.mxu0
    %2387 = vmatprep.mubr.bf16.mxu0 %v1255
    %2388 = vmatmul.mubr.bf16.gmra.mxu0 %v1240
    %v2389 = vpop.f32.mrf.mxu0
    %v2390 = vadd.f32 %v2229, %v2389
    %v2391 = vpop.f32.mrf.mxu0
    %v2392 = vpop.f32.mrf.mxu0
    %v2393 = vadd.f32 %v2232, %v2392
    %v2394 = vpop.f32.mrf.mxu0
    %2395 = vmatprep.mubr.bf16.mxu0 %v1256
    %2396 = vmatmul.mubr.bf16.gmra.mxu0 %v1241
    %v2397 = vpop.f32.mrf.mxu0
    %v2398 = vadd.f32 %v2237, %v2397
    %v2399 = vpop.f32.mrf.mxu0
    %v2400 = vpop.f32.mrf.mxu0
    %v2401 = vadd.f32 %v2240, %v2400
    %v2402 = vpop.f32.mrf.mxu0
    %2403 = vmatprep.mubr.bf16.mxu0 %v1257
    %2404 = vmatmul.mubr.bf16.gmra.mxu0 %v1242
    %v2405 = vpop.f32.mrf.mxu0
    %v2406 = vadd.f32 %v2245, %v2405
    %v2407 = vpop.f32.mrf.mxu0
    %v2408 = vpop.f32.mrf.mxu0
    %v2409 = vadd.f32 %v2248, %v2408
    %v2410 = vpop.f32.mrf.mxu0
    %2411 = vmatprep.mubr.bf16.mxu0 %v1258
    %2412 = vmatmul.mubr.bf16.gmra.mxu0 %v1243
    %v2413 = vpop.f32.mrf.mxu0
    %v2414 = vadd.f32 %v2253, %v2413
    %v2415 = vpop.f32.mrf.mxu0
    %v2416 = vpop.f32.mrf.mxu0
    %v2417 = vadd.f32 %v2256, %v2416
    %v2418 = vpop.f32.mrf.mxu0
    %2419 = vmatprep.mubr.bf16.mxu0 %v1259
    %2420 = vmatmul.mubr.bf16.gmra.mxu0 %v1244
    %v2421 = vpop.f32.mrf.mxu0
    %v2422 = vadd.f32 %v2261, %v2421
    %v2423 = vpop.f32.mrf.mxu0
    %v2424 = vpop.f32.mrf.mxu0
    %v2425 = vadd.f32 %v2264, %v2424
    %v2426 = vpop.f32.mrf.mxu0
    %2427 = vmatprep.mubr.bf16.mxu0 %v1260
    %2428 = vmatmul.mubr.bf16.gmra.mxu0 %v1245
    %v2429 = vpop.f32.mrf.mxu0
    %v2430 = vadd.f32 %v2269, %v2429
    %v2431 = vpop.f32.mrf.mxu0
    %v2432 = vpop.f32.mrf.mxu0
    %v2433 = vadd.f32 %v2272, %v2432
    %v2434 = vpop.f32.mrf.mxu0
    %2435 = vmatprep.mubr.bf16.mxu0 %v1261
    %2436 = vmatmul.mubr.bf16.gmra.mxu0 %v1246
    %v2437 = vpop.f32.mrf.mxu0
    %v2438 = vadd.f32 %v2277, %v2437
    %v2439 = vpop.f32.mrf.mxu0
    %v2440 = vpop.f32.mrf.mxu0
    %v2441 = vadd.f32 %v2280, %v2440
    %v2442 = vpop.f32.mrf.mxu0
    %2443 = vmatprep.mubr.bf16.mxu0 %v1262
    %2444 = vmatmul.mubr.bf16.gmra.mxu0 %v1247
    %v2445 = vpop.f32.mrf.mxu0
    %v2446 = vadd.f32 %v2285, %v2445
    %v2447 = vpop.f32.mrf.mxu0
    %v2448 = vpop.f32.mrf.mxu0
    %v2449 = vadd.f32 %v2288, %v2448
    %v2450 = vpop.f32.mrf.mxu0
    %2451 = vmatprep.mubr.bf16.mxu0 %v1378
    %2452 = vmatmul.mubr.bf16.gmra.mxu0 %v1377
    %v2453 = vpop.f32.mrf.mxu0
    %v2454 = vadd.f32 %v2293, %v2453
    %v2455 = vpop.f32.mrf.mxu0
    %v2456 = vpop.f32.mrf.mxu0
    %v2457 = vadd.f32 %v2296, %v2456
    %v2458 = vpop.f32.mrf.mxu0
    %2459 = vmatprep.mubr.bf16.mxu0 %v1232
    %2460 = vmatmul.mubr.bf16.gmra.mxu0 %v1232
    %v2461 = vpop.f32.mrf.mxu0
    %v2462 = vadd.f32 %v2301, %v2461
    %v2463 = vpop.f32.mrf.mxu0
    %v2464 = vpop.f32.mrf.mxu0
    %v2465 = vadd.f32 %v2304, %v2464
    %v2466 = vpop.f32.mrf.mxu0
    %2467 = vdwg.mxu0
    %2468 = vmatprep.subr.bf16.mxu0 0
    %2469 = vmatpush1.bf16.msra.mxu0 %v1751
    %2470 = vmatprep.subr.bf16.mxu0 0
    %2471 = vmatpush1.bf16.msra.mxu0 %v1750
    %2472 = vmatprep.subr.bf16.mxu0 0
    %2473 = vmatpush1.bf16.msra.mxu0 %v1749
    %2474 = vmatprep.subr.bf16.mxu0 0
    %2475 = vmatpush1.bf16.msra.mxu0 %v1748
    %2476 = vmatprep.subr.bf16.mxu0 0
    %2477 = vmatpush1.bf16.msra.mxu0 %v1747
    %2478 = vmatprep.subr.bf16.mxu0 0
    %2479 = vmatpush1.bf16.msra.mxu0 %v1746
    %2480 = vmatprep.subr.bf16.mxu0 0
    %2481 = vmatpush1.bf16.msra.mxu0 %v1745
    %2482 = vmatprep.subr.bf16.mxu0 0
    %2483 = vmatpush1.bf16.msra.mxu0 %v1744
    %2484 = vmatprep.subr.bf16.mxu0 0
    %2485 = vmatpush2.bf16.msra.mxu0 0
    %2486 = vmatprep.subr.bf16.mxu0 0
    %2487 = vmatpush2.bf16.msra.mxu0 0
    %2488 = vmatprep.subr.bf16.mxu0 0
    %2489 = vmatpush2.bf16.msra.mxu0 0
    %2490 = vmatprep.subr.bf16.mxu0 0
    %2491 = vmatpush2.bf16.msra.mxu0 0
    %2492 = vmatprep.subr.bf16.mxu0 0
    %2493 = vmatpush2.bf16.msra.mxu0 0
    %2494 = vmatprep.subr.bf16.mxu0 0
    %2495 = vmatpush2.bf16.msra.mxu0 0
    %2496 = vmatprep.subr.bf16.mxu0 0
    %2497 = vmatpush2.bf16.msra.mxu0 0
    %2498 = vmatprep.subr.bf16.mxu0 0
    %2499 = vmatpush2.bf16.msra.mxu0 0
    %2500 = vmatprep.mubr.bf16.mxu0 0
    %2501 = vmatmul.mubr.bf16.gmra.mxu0 %v1358
    %v2502 = vpop.f32.mrf.mxu0
    %v2503 = vadd.f32 %v2342, %v2502
    %v2504 = vpop.f32.mrf.mxu0
    %v2505 = vpop.f32.mrf.mxu0
    %v2506 = vadd.f32 %v2345, %v2505
    %v2507 = vpop.f32.mrf.mxu0
    %2508 = vmatprep.mubr.bf16.mxu0 0
    %2509 = vmatmul.mubr.bf16.gmra.mxu0 %v1359
    %v2510 = vpop.f32.mrf.mxu0
    %v2511 = vadd.f32 %v2350, %v2510
    %v2512 = vpop.f32.mrf.mxu0
    %v2513 = vpop.f32.mrf.mxu0
    %v2514 = vadd.f32 %v2353, %v2513
    %v2515 = vpop.f32.mrf.mxu0
    %2516 = vmatprep.mubr.bf16.mxu0 0
    %2517 = vmatmul.mubr.bf16.gmra.mxu0 %v1360
    %v2518 = vpop.f32.mrf.mxu0
    %v2519 = vadd.f32 %v2358, %v2518
    %v2520 = vpop.f32.mrf.mxu0
    %v2521 = vpop.f32.mrf.mxu0
    %v2522 = vadd.f32 %v2361, %v2521
    %v2523 = vpop.f32.mrf.mxu0
    %2524 = vmatprep.mubr.bf16.mxu0 0
    %2525 = vmatmul.mubr.bf16.gmra.mxu0 %v1361
    %v2526 = vpop.f32.mrf.mxu0
    %v2527 = vadd.f32 %v2366, %v2526
    %v2528 = vpop.f32.mrf.mxu0
    %v2529 = vpop.f32.mrf.mxu0
    %v2530 = vadd.f32 %v2369, %v2529
    %v2531 = vpop.f32.mrf.mxu0
    %2532 = vmatprep.mubr.bf16.mxu0 0
    %2533 = vmatmul.mubr.bf16.gmra.mxu0 %v1362
    %v2534 = vpop.f32.mrf.mxu0
    %v2535 = vadd.f32 %v2374, %v2534
    %v2536 = vpop.f32.mrf.mxu0
    %v2537 = vpop.f32.mrf.mxu0
    %v2538 = vadd.f32 %v2377, %v2537
    %v2539 = vpop.f32.mrf.mxu0
    %2540 = vmatprep.mubr.bf16.mxu0 0
    %2541 = vmatmul.mubr.bf16.gmra.mxu0 %v1363
    %v2542 = vpop.f32.mrf.mxu0
    %v2543 = vadd.f32 %v2382, %v2542
    %v2544 = vpop.f32.mrf.mxu0
    %v2545 = vpop.f32.mrf.mxu0
    %v2546 = vadd.f32 %v2385, %v2545
    %v2547 = vpop.f32.mrf.mxu0
    %2548 = vmatprep.mubr.bf16.mxu0 0
    %2549 = vmatmul.mubr.bf16.gmra.mxu0 %v1364
    %v2550 = vpop.f32.mrf.mxu0
    %v2551 = vadd.f32 %v2390, %v2550
    %v2552 = vpop.f32.mrf.mxu0
    %v2553 = vpop.f32.mrf.mxu0
    %v2554 = vadd.f32 %v2393, %v2553
    %v2555 = vpop.f32.mrf.mxu0
    %2556 = vmatprep.mubr.bf16.mxu0 0
    %2557 = vmatmul.mubr.bf16.gmra.mxu0 %v1365
    %v2558 = vpop.f32.mrf.mxu0
    %v2559 = vadd.f32 %v2398, %v2558
    %v2560 = vpop.f32.mrf.mxu0
    %v2561 = vpop.f32.mrf.mxu0
    %v2562 = vadd.f32 %v2401, %v2561
    %v2563 = vpop.f32.mrf.mxu0
    %2564 = vmatprep.mubr.bf16.mxu0 0
    %2565 = vmatmul.mubr.bf16.gmra.mxu0 %v1366
    %v2566 = vpop.f32.mrf.mxu0
    %v2567 = vadd.f32 %v2406, %v2566
    %v2568 = vpop.f32.mrf.mxu0
    %v2569 = vpop.f32.mrf.mxu0
    %v2570 = vadd.f32 %v2409, %v2569
    %v2571 = vpop.f32.mrf.mxu0
    %2572 = vmatprep.mubr.bf16.mxu0 0
    %2573 = vmatmul.mubr.bf16.gmra.mxu0 %v1367
    %v2574 = vpop.f32.mrf.mxu0
    %v2575 = vadd.f32 %v2414, %v2574
    %v2576 = vpop.f32.mrf.mxu0
    %v2577 = vpop.f32.mrf.mxu0
    %v2578 = vadd.f32 %v2417, %v2577
    %v2579 = vpop.f32.mrf.mxu0
    %2580 = vmatprep.mubr.bf16.mxu0 0
    %2581 = vmatmul.mubr.bf16.gmra.mxu0 %v1368
    %v2582 = vpop.f32.mrf.mxu0
    %v2583 = vadd.f32 %v2422, %v2582
    %v2584 = vpop.f32.mrf.mxu0
    %v2585 = vpop.f32.mrf.mxu0
    %v2586 = vadd.f32 %v2425, %v2585
    %v2587 = vpop.f32.mrf.mxu0
    %2588 = vmatprep.mubr.bf16.mxu0 0
    %2589 = vmatmul.mubr.bf16.gmra.mxu0 %v1369
    %v2590 = vpop.f32.mrf.mxu0
    %v2591 = vadd.f32 %v2430, %v2590
    %v2592 = vpop.f32.mrf.mxu0
    %v2593 = vpop.f32.mrf.mxu0
    %v2594 = vadd.f32 %v2433, %v2593
    %v2595 = vpop.f32.mrf.mxu0
    %2596 = vmatprep.mubr.bf16.mxu0 0
    %2597 = vmatmul.mubr.bf16.gmra.mxu0 %v1370
    %v2598 = vpop.f32.mrf.mxu0
    %v2599 = vadd.f32 %v2438, %v2598
    %v2600 = vpop.f32.mrf.mxu0
    %v2601 = vpop.f32.mrf.mxu0
    %v2602 = vadd.f32 %v2441, %v2601
    %v2603 = vpop.f32.mrf.mxu0
    %2604 = vmatprep.mubr.bf16.mxu0 0
    %2605 = vmatmul.mubr.bf16.gmra.mxu0 %v1371
    %v2606 = vpop.f32.mrf.mxu0
    %v2607 = vadd.f32 %v2446, %v2606
    %v2608 = vpop.f32.mrf.mxu0
    %v2609 = vpop.f32.mrf.mxu0
    %v2610 = vadd.f32 %v2449, %v2609
    %v2611 = vpop.f32.mrf.mxu0
    %2612 = vmatprep.mubr.bf16.mxu0 0
    %2613 = vmatmul.mubr.bf16.gmra.mxu0 %v1384
    %v2614 = vpop.f32.mrf.mxu0
    %v2615 = vadd.f32 %v2454, %v2614
    %v2616 = vpop.f32.mrf.mxu0
    %v2617 = vpop.f32.mrf.mxu0
    %v2618 = vadd.f32 %v2457, %v2617
    %v2619 = vpop.f32.mrf.mxu0
    %2620 = vmatprep.mubr.bf16.mxu0 0
    %2621 = vmatmul.mubr.bf16.gmra.mxu0 %v1232
    %v2622 = vpop.f32.mrf.mxu0
    %v2623 = vadd.f32 %v2462, %v2622
    %v2624 = vpop.f32.mrf.mxu0
    %v2625 = vpop.f32.mrf.mxu0
    %v2626 = vadd.f32 %v2465, %v2625
    %v2627 = vpop.f32.mrf.mxu0
    %2628 = vdwg.mxu0
    %2629 = vmatprep.subr.mxu0 0.0
    %2630 = vmatpush1.msra.mxu0 %v2562
    %2631 = vmatprep.subr.mxu0 0.0
    %2632 = vmatpush1.msra.mxu0 %v2559
    %2633 = vmatprep.subr.mxu0 0.0
    %2634 = vmatpush1.msra.mxu0 %v2554
    %2635 = vmatprep.subr.mxu0 0.0
    %2636 = vmatpush1.msra.mxu0 %v2551
    %2637 = vmatprep.subr.mxu0 0.0
    %2638 = vmatpush1.msra.mxu0 %v2546
    %2639 = vmatprep.subr.mxu0 0.0
    %2640 = vmatpush1.msra.mxu0 %v2543
    %2641 = vmatprep.subr.mxu0 0.0
    %2642 = vmatpush1.msra.mxu0 %v2538
    %2643 = vmatprep.subr.mxu0 0.0
    %2644 = vmatpush1.msra.mxu0 %v2535
    %2645 = vmatprep.subr.mxu0 0.0
    %2646 = vmatpush1.msra.mxu0 %v2530
    %2647 = vmatprep.subr.mxu0 0.0
    %2648 = vmatpush1.msra.mxu0 %v2527
    %2649 = vmatprep.subr.mxu0 0.0
    %2650 = vmatpush1.msra.mxu0 %v2522
    %2651 = vmatprep.subr.mxu0 0.0
    %2652 = vmatpush1.msra.mxu0 %v2519
    %2653 = vmatprep.subr.mxu0 0.0
    %2654 = vmatpush1.msra.mxu0 %v2514
    %2655 = vmatprep.subr.mxu0 0.0
    %2656 = vmatpush1.msra.mxu0 %v2511
    %2657 = vmatprep.subr.mxu0 0.0
    %2658 = vmatpush1.msra.mxu0 %v2506
    %2659 = vmatprep.subr.mxu0 0.0
    %2660 = vmatpush1.msra.mxu0 %v2503
    %2661 = vmatprep.subr.mxu0 0.0
    %2662 = vmatpush2.msra.mxu0 %v2626
    %2663 = vmatprep.subr.mxu0 0.0
    %2664 = vmatpush2.msra.mxu0 %v2623
    %2665 = vmatprep.subr.mxu0 0.0
    %2666 = vmatpush2.msra.mxu0 %v2618
    %2667 = vmatprep.subr.mxu0 0.0
    %2668 = vmatpush2.msra.mxu0 %v2615
    %2669 = vmatprep.subr.mxu0 0.0
    %2670 = vmatpush2.msra.mxu0 %v2610
    %2671 = vmatprep.subr.mxu0 0.0
    %2672 = vmatpush2.msra.mxu0 %v2607
    %2673 = vmatprep.subr.mxu0 0.0
    %2674 = vmatpush2.msra.mxu0 %v2602
    %2675 = vmatprep.subr.mxu0 0.0
    %2676 = vmatpush2.msra.mxu0 %v2599
    %2677 = vmatprep.subr.mxu0 0.0
    %2678 = vmatpush2.msra.mxu0 %v2594
    %2679 = vmatprep.subr.mxu0 0.0
    %2680 = vmatpush2.msra.mxu0 %v2591
    %2681 = vmatprep.subr.mxu0 0.0
    %2682 = vmatpush2.msra.mxu0 %v2586
    %2683 = vmatprep.subr.mxu0 0.0
    %2684 = vmatpush2.msra.mxu0 %v2583
    %2685 = vmatprep.subr.mxu0 0.0
    %2686 = vmatpush2.msra.mxu0 %v2578
    %2687 = vmatprep.subr.mxu0 0.0
    %2688 = vmatpush2.msra.mxu0 %v2575
    %2689 = vmatprep.subr.mxu0 0.0
    %2690 = vmatpush2.msra.mxu0 %v2570
    %2691 = vmatprep.subr.mxu0 0.0
    %2692 = vmatpush2.msra.mxu0 %v2567
    %2693 = vmatprep.mubr.f32.mxu0 0.00390625
    %2694 = vmatmul.mubr.f32.gmra.mxu0 0.00390625
    %v2695 = vpop.f32.mrf.mxu0
    %v2696 = vadd.f32 0.0, %v2695
    %v2697 = vpop.f32.mrf.mxu0
    %2698 = vdwg.mxu0
    %v2699 = vmul.f32 %v2503, %v2503
    %v2700 = vmul.f32 %v2506, %v2506
    %v2701 = vmul.f32 %v2511, %v2511
    %v2702 = vmul.f32 %v2514, %v2514
    %v2703 = vmul.f32 %v2519, %v2519
    %v2704 = vmul.f32 %v2522, %v2522
    %v2705 = vmul.f32 %v2527, %v2527
    %v2706 = vmul.f32 %v2530, %v2530
    %v2707 = vmul.f32 %v2535, %v2535
    %v2708 = vmul.f32 %v2538, %v2538
    %v2709 = vmul.f32 %v2543, %v2543
    %v2710 = vmul.f32 %v2546, %v2546
    %v2711 = vmul.f32 %v2551, %v2551
    %v2712 = vmul.f32 %v2554, %v2554
    %v2713 = vmul.f32 %v2559, %v2559
    %v2714 = vmul.f32 %v2562, %v2562
    %v2715 = vmul.f32 %v2567, %v2567
    %v2716 = vmul.f32 %v2570, %v2570
    %v2717 = vmul.f32 %v2575, %v2575
    %v2718 = vmul.f32 %v2578, %v2578
    %v2719 = vmul.f32 %v2583, %v2583
    %v2720 = vmul.f32 %v2586, %v2586
    %v2721 = vmul.f32 %v2591, %v2591
    %v2722 = vmul.f32 %v2594, %v2594
    %v2723 = vmul.f32 %v2599, %v2599
    %v2724 = vmul.f32 %v2602, %v2602
    %v2725 = vmul.f32 %v2607, %v2607
    %v2726 = vmul.f32 %v2610, %v2610
    %v2727 = vmul.f32 %v2615, %v2615
    %v2728 = vmul.f32 %v2618, %v2618
    %v2729 = vmul.f32 %v2623, %v2623
    %v2730 = vmul.f32 %v2626, %v2626
    %2731 = vmatprep.subr.mxu0 0.0
    %2732 = vmatpush1.msra.mxu0 %v2714
    %2733 = vmatprep.subr.mxu0 0.0
    %2734 = vmatpush1.msra.mxu0 %v2713
    %2735 = vmatprep.subr.mxu0 0.0
    %2736 = vmatpush1.msra.mxu0 %v2712
    %2737 = vmatprep.subr.mxu0 0.0
    %2738 = vmatpush1.msra.mxu0 %v2711
    %2739 = vmatprep.subr.mxu0 0.0
    %2740 = vmatpush1.msra.mxu0 %v2710
    %2741 = vmatprep.subr.mxu0 0.0
    %2742 = vmatpush1.msra.mxu0 %v2709
    %2743 = vmatprep.subr.mxu0 0.0
    %2744 = vmatpush1.msra.mxu0 %v2708
    %2745 = vmatprep.subr.mxu0 0.0
    %2746 = vmatpush1.msra.mxu0 %v2707
    %2747 = vmatprep.subr.mxu0 0.0
    %2748 = vmatpush1.msra.mxu0 %v2706
    %2749 = vmatprep.subr.mxu0 0.0
    %2750 = vmatpush1.msra.mxu0 %v2705
    %2751 = vmatprep.subr.mxu0 0.0
    %2752 = vmatpush1.msra.mxu0 %v2704
    %2753 = vmatprep.subr.mxu0 0.0
    %2754 = vmatpush1.msra.mxu0 %v2703
    %2755 = vmatprep.subr.mxu0 0.0
    %2756 = vmatpush1.msra.mxu0 %v2702
    %2757 = vmatprep.subr.mxu0 0.0
    %2758 = vmatpush1.msra.mxu0 %v2701
    %2759 = vmatprep.subr.mxu0 0.0
    %2760 = vmatpush1.msra.mxu0 %v2700
    %2761 = vmatprep.subr.mxu0 0.0
    %2762 = vmatpush1.msra.mxu0 %v2699
    %2763 = vmatprep.subr.mxu0 0.0
    %2764 = vmatpush2.msra.mxu0 %v2730
    %2765 = vmatprep.subr.mxu0 0.0
    %2766 = vmatpush2.msra.mxu0 %v2729
    %2767 = vmatprep.subr.mxu0 0.0
    %2768 = vmatpush2.msra.mxu0 %v2728
    %2769 = vmatprep.subr.mxu0 0.0
    %2770 = vmatpush2.msra.mxu0 %v2727
    %2771 = vmatprep.subr.mxu0 0.0
    %2772 = vmatpush2.msra.mxu0 %v2726
    %2773 = vmatprep.subr.mxu0 0.0
    %2774 = vmatpush2.msra.mxu0 %v2725
    %2775 = vmatprep.subr.mxu0 0.0
    %2776 = vmatpush2.msra.mxu0 %v2724
    %2777 = vmatprep.subr.mxu0 0.0
    %2778 = vmatpush2.msra.mxu0 %v2723
    %2779 = vmatprep.subr.mxu0 0.0
    %2780 = vmatpush2.msra.mxu0 %v2722
    %2781 = vmatprep.subr.mxu0 0.0
    %2782 = vmatpush2.msra.mxu0 %v2721
    %2783 = vmatprep.subr.mxu0 0.0
    %2784 = vmatpush2.msra.mxu0 %v2720
    %2785 = vmatprep.subr.mxu0 0.0
    %2786 = vmatpush2.msra.mxu0 %v2719
    %2787 = vmatprep.subr.mxu0 0.0
    %2788 = vmatpush2.msra.mxu0 %v2718
    %2789 = vmatprep.subr.mxu0 0.0
    %2790 = vmatpush2.msra.mxu0 %v2717
    %2791 = vmatprep.subr.mxu0 0.0
    %2792 = vmatpush2.msra.mxu0 %v2716
    %2793 = vmatprep.subr.mxu0 0.0
    %2794 = vmatpush2.msra.mxu0 %v2715
    %2795 = vmatprep.mubr.f32.mxu0 0.00390625
    %2796 = vmatmul.mubr.f32.gmra.mxu0 0.00390625
    %v2797 = vpop.f32.mrf.mxu0
    %v2798 = vadd.f32 0.0, %v2797
    %v2799 = vpop.f32.mrf.mxu0
    %2800 = vdwg.mxu0
    %2801 = vmatprep.subr.mxu0 0.0
    %2802 = vmatpush1.msra.mxu0 %v160
    %2803 = vmatprep.subr.mxu0 0.0
    %2804 = vmatpush1.msra.mxu0 %v159
    %2805 = vmatprep.subr.mxu0 0.0
    %2806 = vmatpush1.msra.mxu0 %v158
    %2807 = vmatprep.subr.mxu0 0.0
    %2808 = vmatpush1.msra.mxu0 %v157
    %2809 = vmatprep.subr.mxu0 0.0
    %2810 = vmatpush1.msra.mxu0 %v156
    %2811 = vmatprep.subr.mxu0 0.0
    %2812 = vmatpush1.msra.mxu0 %v155
    %2813 = vmatprep.subr.mxu0 0.0
    %2814 = vmatpush1.msra.mxu0 %v154
    %2815 = vmatprep.subr.mxu0 0.0
    %2816 = vmatpush1.msra.mxu0 %v153
    %2817 = vmatprep.subr.mxu0 0.0
    %2818 = vmatpush1.msra.mxu0 %v152
    %2819 = vmatprep.subr.mxu0 0.0
    %2820 = vmatpush1.msra.mxu0 %v151
    %2821 = vmatprep.subr.mxu0 0.0
    %2822 = vmatpush1.msra.mxu0 %v150
    %2823 = vmatprep.subr.mxu0 0.0
    %2824 = vmatpush1.msra.mxu0 %v149
    %2825 = vmatprep.subr.mxu0 0.0
    %2826 = vmatpush1.msra.mxu0 %v148
    %2827 = vmatprep.subr.mxu0 0.0
    %2828 = vmatpush1.msra.mxu0 %v147
    %2829 = vmatprep.subr.mxu0 0.0
    %2830 = vmatpush1.msra.mxu0 %v146
    %2831 = vmatprep.subr.mxu0 0.0
    %2832 = vmatpush1.msra.mxu0 %v145
    %2833 = vmatprep.subr.mxu0 0.0
    %2834 = vmatpush2.msra.mxu0 0.0
    %2835 = vmatprep.subr.mxu0 0.0
    %2836 = vmatpush2.msra.mxu0 0.0
    %2837 = vmatprep.subr.mxu0 0.0
    %2838 = vmatpush2.msra.mxu0 0.0
    %2839 = vmatprep.subr.mxu0 0.0
    %2840 = vmatpush2.msra.mxu0 0.0
    %2841 = vmatprep.subr.mxu0 0.0
    %2842 = vmatpush2.msra.mxu0 0.0
    %2843 = vmatprep.subr.mxu0 0.0
    %2844 = vmatpush2.msra.mxu0 0.0
    %2845 = vmatprep.subr.mxu0 0.0
    %2846 = vmatpush2.msra.mxu0 0.0
    %2847 = vmatprep.subr.mxu0 0.0
    %2848 = vmatpush2.msra.mxu0 0.0
    %2849 = vmatprep.subr.mxu0 0.0
    %2850 = vmatpush2.msra.mxu0 0.0
    %2851 = vmatprep.subr.mxu0 0.0
    %2852 = vmatpush2.msra.mxu0 0.0
    %2853 = vmatprep.subr.mxu0 0.0
    %2854 = vmatpush2.msra.mxu0 0.0
    %2855 = vmatprep.subr.mxu0 0.0
    %2856 = vmatpush2.msra.mxu0 0.0
    %2857 = vmatprep.subr.mxu0 0.0
    %2858 = vmatpush2.msra.mxu0 0.0
    %2859 = vmatprep.subr.mxu0 0.0
    %2860 = vmatpush2.msra.mxu0 0.0
    %2861 = vmatprep.subr.mxu0 0.0
    %2862 = vmatpush2.msra.mxu0 0.0
    %2863 = vmatprep.subr.mxu0 0.0
    %2864 = vmatpush2.msra.mxu0 0.0
    %2865 = vmatprep.mubr.f32.mxu0 0.0
    %2866 = vmatmul.mubr.f32.gmra.mxu0 %v2696
    %v2867 = vpop.f32.mrf.mxu0
    %v2868 = vadd.f32 0.0, %v2867
    %v2869 = vpop.f32.mrf.mxu0
    %2870 = vdwg.mxu0
    %2871 = vmatprep.subr.mxu0 0.0
    %2872 = vmatpush1.msra.mxu0 %v160
    %2873 = vmatprep.subr.mxu0 0.0
    %2874 = vmatpush1.msra.mxu0 %v159
    %2875 = vmatprep.subr.mxu0 0.0
    %2876 = vmatpush1.msra.mxu0 %v158
    %2877 = vmatprep.subr.mxu0 0.0
    %2878 = vmatpush1.msra.mxu0 %v157
    %2879 = vmatprep.subr.mxu0 0.0
    %2880 = vmatpush1.msra.mxu0 %v156
    %2881 = vmatprep.subr.mxu0 0.0
    %2882 = vmatpush1.msra.mxu0 %v155
    %2883 = vmatprep.subr.mxu0 0.0
    %2884 = vmatpush1.msra.mxu0 %v154
    %2885 = vmatprep.subr.mxu0 0.0
    %2886 = vmatpush1.msra.mxu0 %v153
    %2887 = vmatprep.subr.mxu0 0.0
    %2888 = vmatpush1.msra.mxu0 %v152
    %2889 = vmatprep.subr.mxu0 0.0
    %2890 = vmatpush1.msra.mxu0 %v151
    %2891 = vmatprep.subr.mxu0 0.0
    %2892 = vmatpush1.msra.mxu0 %v150
    %2893 = vmatprep.subr.mxu0 0.0
    %2894 = vmatpush1.msra.mxu0 %v149
    %2895 = vmatprep.subr.mxu0 0.0
    %2896 = vmatpush1.msra.mxu0 %v148
    %2897 = vmatprep.subr.mxu0 0.0
    %2898 = vmatpush1.msra.mxu0 %v147
    %2899 = vmatprep.subr.mxu0 0.0
    %2900 = vmatpush1.msra.mxu0 %v146
    %2901 = vmatprep.subr.mxu0 0.0
    %2902 = vmatpush1.msra.mxu0 %v145
    %2903 = vmatprep.subr.mxu0 0.0
    %2904 = vmatpush2.msra.mxu0 0.0
    %2905 = vmatprep.subr.mxu0 0.0
    %2906 = vmatpush2.msra.mxu0 0.0
    %2907 = vmatprep.subr.mxu0 0.0
    %2908 = vmatpush2.msra.mxu0 0.0
    %2909 = vmatprep.subr.mxu0 0.0
    %2910 = vmatpush2.msra.mxu0 0.0
    %2911 = vmatprep.subr.mxu0 0.0
    %2912 = vmatpush2.msra.mxu0 0.0
    %2913 = vmatprep.subr.mxu0 0.0
    %2914 = vmatpush2.msra.mxu0 0.0
    %2915 = vmatprep.subr.mxu0 0.0
    %2916 = vmatpush2.msra.mxu0 0.0
    %2917 = vmatprep.subr.mxu0 0.0
    %2918 = vmatpush2.msra.mxu0 0.0
    %2919 = vmatprep.subr.mxu0 0.0
    %2920 = vmatpush2.msra.mxu0 0.0
    %2921 = vmatprep.subr.mxu0 0.0
    %2922 = vmatpush2.msra.mxu0 0.0
    %2923 = vmatprep.subr.mxu0 0.0
    %2924 = vmatpush2.msra.mxu0 0.0
    %2925 = vmatprep.subr.mxu0 0.0
    %2926 = vmatpush2.msra.mxu0 0.0
    %2927 = vmatprep.subr.mxu0 0.0
    %2928 = vmatpush2.msra.mxu0 0.0
    %2929 = vmatprep.subr.mxu0 0.0
    %2930 = vmatpush2.msra.mxu0 0.0
    %2931 = vmatprep.subr.mxu0 0.0
    %2932 = vmatpush2.msra.mxu0 0.0
    %2933 = vmatprep.subr.mxu0 0.0
    %2934 = vmatpush2.msra.mxu0 0.0
    %2935 = vmatprep.mubr.f32.mxu0 0.0
    %2936 = vmatmul.mubr.f32.gmra.mxu0 %v2798
    %v2937 = vpop.f32.mrf.mxu0
    %v2938 = vadd.f32 0.0, %v2937
    %v2939 = vpop.f32.mrf.mxu0
    %2940 = vdwg.mxu0
    %v2941 = vmul.f32 %v2868, %v2868
    %v2942 = vsub.f32 %v2938, %v2941
    %v2943 = vadd.f32 %v2942, 1e-05
    %v2944 = vrsqrt.pop %v2943
    %v2945 = vlaneseq
    %v2946 = vshrl.u32 %v2945, 7
    %v2947 = vsub.s32 0, %v2946
    %v2948 = vrot.slane %v2868, %v2947
    %v2949 = vsub.f32 %v2503, %v2948
    %v2950 = vsub.f32 %v2506, %v2948
    %v2951 = vsub.f32 %v2511, %v2948
    %v2952 = vsub.f32 %v2514, %v2948
    %v2953 = vsub.f32 %v2519, %v2948
    %v2954 = vsub.f32 %v2522, %v2948
    %v2955 = vsub.f32 %v2527, %v2948
    %v2956 = vsub.f32 %v2530, %v2948
    %v2957 = vsub.f32 %v2535, %v2948
    %v2958 = vsub.f32 %v2538, %v2948
    %v2959 = vsub.f32 %v2543, %v2948
    %v2960 = vsub.f32 %v2546, %v2948
    %v2961 = vsub.f32 %v2551, %v2948
    %v2962 = vsub.f32 %v2554, %v2948
    %v2963 = vsub.f32 %v2559, %v2948
    %v2964 = vsub.f32 %v2562, %v2948
    %v2965 = vsub.f32 %v2567, %v2948
    %v2966 = vsub.f32 %v2570, %v2948
    %v2967 = vsub.f32 %v2575, %v2948
    %v2968 = vsub.f32 %v2578, %v2948
    %v2969 = vsub.f32 %v2583, %v2948
    %v2970 = vsub.f32 %v2586, %v2948
    %v2971 = vsub.f32 %v2591, %v2948
    %v2972 = vsub.f32 %v2594, %v2948
    %v2973 = vsub.f32 %v2599, %v2948
    %v2974 = vsub.f32 %v2602, %v2948
    %v2975 = vsub.f32 %v2607, %v2948
    %v2976 = vsub.f32 %v2610, %v2948
    %v2977 = vsub.f32 %v2615, %v2948
    %v2978 = vsub.f32 %v2618, %v2948
    %v2979 = vsub.f32 %v2623, %v2948
    %v2980 = vsub.f32 %v2626, %v2948
    %v2981 = vlaneseq
    %v2982 = vshrl.u32 %v2981, 7
    %v2983 = vsub.s32 0, %v2982
    %v2984 = vrot.slane %v2944, %v2983
    %v2985 = vmul.f32 %v2949, %v2984
    %v2986 = vmul.f32 %v2950, %v2984
    %v2987 = vmul.f32 %v2951, %v2984
    %v2988 = vmul.f32 %v2952, %v2984
    %v2989 = vmul.f32 %v2953, %v2984
    %v2990 = vmul.f32 %v2954, %v2984
    %v2991 = vmul.f32 %v2955, %v2984
    %v2992 = vmul.f32 %v2956, %v2984
    %v2993 = vmul.f32 %v2957, %v2984
    %v2994 = vmul.f32 %v2958, %v2984
    %v2995 = vmul.f32 %v2959, %v2984
    %v2996 = vmul.f32 %v2960, %v2984
    %v2997 = vmul.f32 %v2961, %v2984
    %v2998 = vmul.f32 %v2962, %v2984
    %v2999 = vmul.f32 %v2963, %v2984
    %v3000 = vmul.f32 %v2964, %v2984
    %v3001 = vmul.f32 %v2965, %v2984
    %v3002 = vmul.f32 %v2966, %v2984
    %v3003 = vmul.f32 %v2967, %v2984
    %v3004 = vmul.f32 %v2968, %v2984
    %v3005 = vmul.f32 %v2969, %v2984
    %v3006 = vmul.f32 %v2970, %v2984
    %v3007 = vmul.f32 %v2971, %v2984
    %v3008 = vmul.f32 %v2972, %v2984
    %v3009 = vmul.f32 %v2973, %v2984
    %v3010 = vmul.f32 %v2974, %v2984
    %v3011 = vmul.f32 %v2975, %v2984
    %v3012 = vmul.f32 %v2976, %v2984
    %v3013 = vmul.f32 %v2977, %v2984
    %v3014 = vmul.f32 %v2978, %v2984
    %v3015 = vmul.f32 %v2979, %v2984
    %v3016 = vmul.f32 %v2980, %v2984
    %v3018 = vlaneseq
    %v3019 = vshrl.u32 %v3018, 7
    %v3020 = vsub.s32 0, %v3019
    %v3021 = vrot.slane %v127, %v3020
    %v3023 = vmul.f32 %v2985, %v3021
    %v3024 = vmul.f32 %v2986, %v3021
    %v3025 = vmul.f32 %v2987, %v3021
    %v3026 = vmul.f32 %v2988, %v3021
    %v3027 = vmul.f32 %v2989, %v3021
    %v3028 = vmul.f32 %v2990, %v3021
    %v3029 = vmul.f32 %v2991, %v3021
    %v3030 = vmul.f32 %v2992, %v3021
    %v3031 = vmul.f32 %v2993, %v3021
    %v3032 = vmul.f32 %v2994, %v3021
    %v3033 = vmul.f32 %v2995, %v3021
    %v3034 = vmul.f32 %v2996, %v3021
    %v3035 = vmul.f32 %v2997, %v3021
    %v3036 = vmul.f32 %v2998, %v3021
    %v3037 = vmul.f32 %v2999, %v3021
    %v3038 = vmul.f32 %v3000, %v3021
    %v3039 = vmul.f32 %v3001, %v3021
    %v3040 = vmul.f32 %v3002, %v3021
    %v3041 = vmul.f32 %v3003, %v3021
    %v3042 = vmul.f32 %v3004, %v3021
    %v3043 = vmul.f32 %v3005, %v3021
    %v3044 = vmul.f32 %v3006, %v3021
    %v3045 = vmul.f32 %v3007, %v3021
    %v3046 = vmul.f32 %v3008, %v3021
    %v3047 = vmul.f32 %v3009, %v3021
    %v3048 = vmul.f32 %v3010, %v3021
    %v3049 = vmul.f32 %v3011, %v3021
    %v3050 = vmul.f32 %v3012, %v3021
    %v3051 = vmul.f32 %v3013, %v3021
    %v3052 = vmul.f32 %v3014, %v3021
    %v3053 = vmul.f32 %v3015, %v3021
    %v3054 = vmul.f32 %v3016, %v3021
    %v3056 = vlaneseq
    %v3057 = vshrl.u32 %v3056, 7
    %v3058 = vsub.s32 0, %v3057
    %v3059 = vrot.slane %v128, %v3058
    %v3061 = vadd.f32 %v3023, %v3059
    %v3062 = vadd.f32 %v3024, %v3059
    %v3063 = vadd.f32 %v3025, %v3059
    %v3064 = vadd.f32 %v3026, %v3059
    %v3065 = vadd.f32 %v3027, %v3059
    %v3066 = vadd.f32 %v3028, %v3059
    %v3067 = vadd.f32 %v3029, %v3059
    %v3068 = vadd.f32 %v3030, %v3059
    %v3069 = vadd.f32 %v3031, %v3059
    %v3070 = vadd.f32 %v3032, %v3059
    %v3071 = vadd.f32 %v3033, %v3059
    %v3072 = vadd.f32 %v3034, %v3059
    %v3073 = vadd.f32 %v3035, %v3059
    %v3074 = vadd.f32 %v3036, %v3059
    %v3075 = vadd.f32 %v3037, %v3059
    %v3076 = vadd.f32 %v3038, %v3059
    %v3077 = vadd.f32 %v3039, %v3059
    %v3078 = vadd.f32 %v3040, %v3059
    %v3079 = vadd.f32 %v3041, %v3059
    %v3080 = vadd.f32 %v3042, %v3059
    %v3081 = vadd.f32 %v3043, %v3059
    %v3082 = vadd.f32 %v3044, %v3059
    %v3083 = vadd.f32 %v3045, %v3059
    %v3084 = vadd.f32 %v3046, %v3059
    %v3085 = vadd.f32 %v3047, %v3059
    %v3086 = vadd.f32 %v3048, %v3059
    %v3087 = vadd.f32 %v3049, %v3059
    %v3088 = vadd.f32 %v3050, %v3059
    %v3089 = vadd.f32 %v3051, %v3059
    %v3090 = vadd.f32 %v3052, %v3059
    %v3091 = vadd.f32 %v3053, %v3059
    %v3092 = vadd.f32 %v3054, %v3059
    %v3093 = vsub.f32 0.0, %v3061
    %v3094 = vsub.f32 0.0, %v3062
    %v3095 = vsub.f32 0.0, %v3063
    %v3096 = vsub.f32 0.0, %v3064
    %v3097 = vsub.f32 0.0, %v3065
    %v3098 = vsub.f32 0.0, %v3066
    %v3099 = vsub.f32 0.0, %v3067
    %v3100 = vsub.f32 0.0, %v3068
    %v3101 = vsub.f32 0.0, %v3069
    %v3102 = vsub.f32 0.0, %v3070
    %v3103 = vsub.f32 0.0, %v3071
    %v3104 = vsub.f32 0.0, %v3072
    %v3105 = vsub.f32 0.0, %v3073
    %v3106 = vsub.f32 0.0, %v3074
    %v3107 = vsub.f32 0.0, %v3075
    %v3108 = vsub.f32 0.0, %v3076
    %v3109 = vsub.f32 0.0, %v3077
    %v3110 = vsub.f32 0.0, %v3078
    %v3111 = vsub.f32 0.0, %v3079
    %v3112 = vsub.f32 0.0, %v3080
    %v3113 = vsub.f32 0.0, %v3081
    %v3114 = vsub.f32 0.0, %v3082
    %v3115 = vsub.f32 0.0, %v3083
    %v3116 = vsub.f32 0.0, %v3084
    %v3117 = vsub.f32 0.0, %v3085
    %v3118 = vsub.f32 0.0, %v3086
    %v3119 = vsub.f32 0.0, %v3087
    %v3120 = vsub.f32 0.0, %v3088
    %v3121 = vsub.f32 0.0, %v3089
    %v3122 = vsub.f32 0.0, %v3090
    %v3123 = vsub.f32 0.0, %v3091
    %v3124 = vsub.f32 0.0, %v3092
    %v3125 = vmul.f32 %v3093, 1.442695
    %v3126 = vpow.pop %v3125
    %v3127 = vmul.f32 %v3094, 1.442695
    %v3128 = vpow.pop %v3127
    %v3129 = vmul.f32 %v3095, 1.442695
    %v3130 = vpow.pop %v3129
    %v3131 = vmul.f32 %v3096, 1.442695
    %v3132 = vpow.pop %v3131
    %v3133 = vmul.f32 %v3097, 1.442695
    %v3134 = vpow.pop %v3133
    %v3135 = vmul.f32 %v3098, 1.442695
    %v3136 = vpow.pop %v3135
    %v3137 = vmul.f32 %v3099, 1.442695
    %v3138 = vpow.pop %v3137
    %v3139 = vmul.f32 %v3100, 1.442695
    %v3140 = vpow.pop %v3139
    %v3141 = vmul.f32 %v3101, 1.442695
    %v3142 = vpow.pop %v3141
    %v3143 = vmul.f32 %v3102, 1.442695
    %v3144 = vpow.pop %v3143
    %v3145 = vmul.f32 %v3103, 1.442695
    %v3146 = vpow.pop %v3145
    %v3147 = vmul.f32 %v3104, 1.442695
    %v3148 = vpow.pop %v3147
    %v3149 = vmul.f32 %v3105, 1.442695
    %v3150 = vpow.pop %v3149
    %v3151 = vmul.f32 %v3106, 1.442695
    %v3152 = vpow.pop %v3151
    %v3153 = vmul.f32 %v3107, 1.442695
    %v3154 = vpow.pop %v3153
    %v3155 = vmul.f32 %v3108, 1.442695
    %v3156 = vpow.pop %v3155
    %v3157 = vmul.f32 %v3109, 1.442695
    %v3158 = vpow.pop %v3157
    %v3159 = vmul.f32 %v3110, 1.442695
    %v3160 = vpow.pop %v3159
    %v3161 = vmul.f32 %v3111, 1.442695
    %v3162 = vpow.pop %v3161
    %v3163 = vmul.f32 %v3112, 1.442695
    %v3164 = vpow.pop %v3163
    %v3165 = vmul.f32 %v3113, 1.442695
    %v3166 = vpow.pop %v3165
    %v3167 = vmul.f32 %v3114, 1.442695
    %v3168 = vpow.pop %v3167
    %v3169 = vmul.f32 %v3115, 1.442695
    %v3170 = vpow.pop %v3169
    %v3171 = vmul.f32 %v3116, 1.442695
    %v3172 = vpow.pop %v3171
    %v3173 = vmul.f32 %v3117, 1.442695
    %v3174 = vpow.pop %v3173
    %v3175 = vmul.f32 %v3118, 1.442695
    %v3176 = vpow.pop %v3175
    %v3177 = vmul.f32 %v3119, 1.442695
    %v3178 = vpow.pop %v3177
    %v3179 = vmul.f32 %v3120, 1.442695
    %v3180 = vpow.pop %v3179
    %v3181 = vmul.f32 %v3121, 1.442695
    %v3182 = vpow.pop %v3181
    %v3183 = vmul.f32 %v3122, 1.442695
    %v3184 = vpow.pop %v3183
    %v3185 = vmul.f32 %v3123, 1.442695
    %v3186 = vpow.pop %v3185
    %v3187 = vmul.f32 %v3124, 1.442695
    %v3188 = vpow.pop %v3187
    %v3189 = vadd.f32 %v3126, 1.0
    %v3190 = vadd.f32 %v3128, 1.0
    %v3191 = vadd.f32 %v3130, 1.0
    %v3192 = vadd.f32 %v3132, 1.0
    %v3193 = vadd.f32 %v3134, 1.0
    %v3194 = vadd.f32 %v3136, 1.0
    %v3195 = vadd.f32 %v3138, 1.0
    %v3196 = vadd.f32 %v3140, 1.0
    %v3197 = vadd.f32 %v3142, 1.0
    %v3198 = vadd.f32 %v3144, 1.0
    %v3199 = vadd.f32 %v3146, 1.0
    %v3200 = vadd.f32 %v3148, 1.0
    %v3201 = vadd.f32 %v3150, 1.0
    %v3202 = vadd.f32 %v3152, 1.0
    %v3203 = vadd.f32 %v3154, 1.0
    %v3204 = vadd.f32 %v3156, 1.0
    %v3205 = vadd.f32 %v3158, 1.0
    %v3206 = vadd.f32 %v3160, 1.0
    %v3207 = vadd.f32 %v3162, 1.0
    %v3208 = vadd.f32 %v3164, 1.0
    %v3209 = vadd.f32 %v3166, 1.0
    %v3210 = vadd.f32 %v3168, 1.0
    %v3211 = vadd.f32 %v3170, 1.0
    %v3212 = vadd.f32 %v3172, 1.0
    %v3213 = vadd.f32 %v3174, 1.0
    %v3214 = vadd.f32 %v3176, 1.0
    %v3215 = vadd.f32 %v3178, 1.0
    %v3216 = vadd.f32 %v3180, 1.0
    %v3217 = vadd.f32 %v3182, 1.0
    %v3218 = vadd.f32 %v3184, 1.0
    %v3219 = vadd.f32 %v3186, 1.0
    %v3220 = vadd.f32 %v3188, 1.0
    %v3221 = vrcp.pop %v3189
    %v3222 = vrcp.pop %v3190
    %v3223 = vrcp.pop %v3191
    %v3224 = vrcp.pop %v3192
    %v3225 = vrcp.pop %v3193
    %v3226 = vrcp.pop %v3194
    %v3227 = vrcp.pop %v3195
    %v3228 = vrcp.pop %v3196
    %v3229 = vrcp.pop %v3197
    %v3230 = vrcp.pop %v3198
    %v3231 = vrcp.pop %v3199
    %v3232 = vrcp.pop %v3200
    %v3233 = vrcp.pop %v3201
    %v3234 = vrcp.pop %v3202
    %v3235 = vrcp.pop %v3203
    %v3236 = vrcp.pop %v3204
    %v3237 = vrcp.pop %v3205
    %v3238 = vrcp.pop %v3206
    %v3239 = vrcp.pop %v3207
    %v3240 = vrcp.pop %v3208
    %v3241 = vrcp.pop %v3209
    %v3242 = vrcp.pop %v3210
    %v3243 = vrcp.pop %v3211
    %v3244 = vrcp.pop %v3212
    %v3245 = vrcp.pop %v3213
    %v3246 = vrcp.pop %v3214
    %v3247 = vrcp.pop %v3215
    %v3248 = vrcp.pop %v3216
    %v3249 = vrcp.pop %v3217
    %v3250 = vrcp.pop %v3218
    %v3251 = vrcp.pop %v3219
    %v3252 = vrcp.pop %v3220
    %v3253 = vmul.f32 %v3061, %v3221
    %v3254 = vmul.f32 %v3062, %v3222
    %v3255 = vmul.f32 %v3063, %v3223
    %v3256 = vmul.f32 %v3064, %v3224
    %v3257 = vmul.f32 %v3065, %v3225
    %v3258 = vmul.f32 %v3066, %v3226
    %v3259 = vmul.f32 %v3067, %v3227
    %v3260 = vmul.f32 %v3068, %v3228
    %v3261 = vmul.f32 %v3069, %v3229
    %v3262 = vmul.f32 %v3070, %v3230
    %v3263 = vmul.f32 %v3071, %v3231
    %v3264 = vmul.f32 %v3072, %v3232
    %v3265 = vmul.f32 %v3073, %v3233
    %v3266 = vmul.f32 %v3074, %v3234
    %v3267 = vmul.f32 %v3075, %v3235
    %v3268 = vmul.f32 %v3076, %v3236
    %v3269 = vmul.f32 %v3077, %v3237
    %v3270 = vmul.f32 %v3078, %v3238
    %v3271 = vmul.f32 %v3079, %v3239
    %v3272 = vmul.f32 %v3080, %v3240
    %v3273 = vmul.f32 %v3081, %v3241
    %v3274 = vmul.f32 %v3082, %v3242
    %v3275 = vmul.f32 %v3083, %v3243
    %v3276 = vmul.f32 %v3084, %v3244
    %v3277 = vmul.f32 %v3085, %v3245
    %v3278 = vmul.f32 %v3086, %v3246
    %v3279 = vmul.f32 %v3087, %v3247
    %v3280 = vmul.f32 %v3088, %v3248
    %v3281 = vmul.f32 %v3089, %v3249
    %v3282 = vmul.f32 %v3090, %v3250
    %v3283 = vmul.f32 %v3091, %v3251
    %v3284 = vmul.f32 %v3092, %v3252
    %v3285 = vrot.slane %v3253, 7
    %v3286 = vrot.slane %v3254, 7
    %v3287 = vrot.slane %v3255, 7
    %v3288 = vrot.slane %v3256, 7
    %v3289 = vrot.slane %v3257, 7
    %v3290 = vrot.slane %v3258, 7
    %v3291 = vrot.slane %v3259, 7
    %v3292 = vrot.slane %v3260, 7
    %v3293 = vrot.slane %v3261, 7
    %v3294 = vrot.slane %v3262, 7
    %v3295 = vrot.slane %v3263, 7
    %v3296 = vrot.slane %v3264, 7
    %v3297 = vrot.slane %v3265, 7
    %v3298 = vrot.slane %v3266, 7
    %v3299 = vrot.slane %v3267, 7
    %v3300 = vrot.slane %v3268, 7
    %v3301 = vrot.slane %v3269, 7
    %v3302 = vrot.slane %v3270, 7
    %v3303 = vrot.slane %v3271, 7
    %v3304 = vrot.slane %v3272, 7
    %v3305 = vrot.slane %v3273, 7
    %v3306 = vrot.slane %v3274, 7
    %v3307 = vrot.slane %v3275, 7
    %v3308 = vrot.slane %v3276, 7
    %v3309 = vrot.slane %v3277, 7
    %v3310 = vrot.slane %v3278, 7
    %v3311 = vrot.slane %v3279, 7
    %v3312 = vrot.slane %v3280, 7
    %v3313 = vrot.slane %v3281, 7
    %v3314 = vrot.slane %v3282, 7
    %v3315 = vrot.slane %v3284, 7
    %v3316 = vsel %vm1169, %v3313, %v3314
    %v3317 = vsel %vm1169, %v3312, %v3313
    %v3318 = vsel %vm1169, %v3311, %v3312
    %v3319 = vsel %vm1169, %v3310, %v3311
    %v3320 = vsel %vm1169, %v3309, %v3310
    %v3321 = vsel %vm1169, %v3308, %v3309
    %v3322 = vsel %vm1169, %v3307, %v3308
    %v3323 = vsel %vm1169, %v3306, %v3307
    %v3324 = vsel %vm1169, %v3305, %v3306
    %v3325 = vsel %vm1169, %v3304, %v3305
    %v3326 = vsel %vm1169, %v3303, %v3304
    %v3327 = vsel %vm1169, %v3302, %v3303
    %v3328 = vsel %vm1169, %v3301, %v3302
    %v3329 = vsel %vm1169, %v3300, %v3301
    %v3330 = vsel %vm1169, %v3299, %v3300
    %v3331 = vsel %vm1169, %v3298, %v3299
    %v3332 = vsel %vm1169, %v3297, %v3298
    %v3333 = vsel %vm1169, %v3296, %v3297
    %v3334 = vsel %vm1169, %v3295, %v3296
    %v3335 = vsel %vm1169, %v3294, %v3295
    %v3336 = vsel %vm1169, %v3293, %v3294
    %v3337 = vsel %vm1169, %v3292, %v3293
    %v3338 = vsel %vm1169, %v3291, %v3292
    %v3339 = vsel %vm1169, %v3290, %v3291
    %v3340 = vsel %vm1169, %v3289, %v3290
    %v3341 = vsel %vm1169, %v3288, %v3289
    %v3342 = vsel %vm1169, %v3287, %v3288
    %v3343 = vsel %vm1169, %v3286, %v3287
    %v3344 = vsel %vm1169, %v3285, %v3286
    %v3345 = vsel %vm1169, %v3315, %v3285
    %v3346 = vsel %vm1200, %v3345, 0.0
    %v3347 = vsel %vm1201, %v3344, 0.0
    %v3348 = vsel %vm1200, %v3343, 0.0
    %v3349 = vsel %vm1201, %v3342, 0.0
    %v3350 = vsel %vm1200, %v3341, 0.0
    %v3351 = vsel %vm1201, %v3340, 0.0
    %v3352 = vsel %vm1200, %v3339, 0.0
    %v3353 = vsel %vm1201, %v3338, 0.0
    %v3354 = vsel %vm1200, %v3337, 0.0
    %v3355 = vsel %vm1201, %v3336, 0.0
    %v3356 = vsel %vm1200, %v3335, 0.0
    %v3357 = vsel %vm1201, %v3334, 0.0
    %v3358 = vsel %vm1200, %v3333, 0.0
    %v3359 = vsel %vm1201, %v3332, 0.0
    %v3360 = vsel %vm1200, %v3331, 0.0
    %v3361 = vsel %vm1201, %v3330, 0.0
    %v3362 = vsel %vm1200, %v3329, 0.0
    %v3363 = vsel %vm1201, %v3328, 0.0
    %v3364 = vsel %vm1200, %v3327, 0.0
    %v3365 = vsel %vm1201, %v3326, 0.0
    %v3366 = vsel %vm1200, %v3325, 0.0
    %v3367 = vsel %vm1201, %v3324, 0.0
    %v3368 = vsel %vm1200, %v3323, 0.0
    %v3369 = vsel %vm1201, %v3322, 0.0
    %v3370 = vsel %vm1200, %v3321, 0.0
    %v3371 = vsel %vm1201, %v3320, 0.0
    %v3372 = vsel %vm1200, %v3319, 0.0
    %v3373 = vsel %vm1201, %v3318, 0.0
    %v3374 = vsel %vm1200, %v3317, 0.0
    %v3375 = vsel %vm1201, %v3316, 0.0
    %v3376 = vpack.c.bf16 %v3347, %v3346
    %v3377 = vpack.c.bf16 %v3349, %v3348
    %v3378 = vpack.c.bf16 %v3351, %v3350
    %v3379 = vpack.c.bf16 %v3353, %v3352
    %v3380 = vpack.c.bf16 %v3355, %v3354
    %v3381 = vpack.c.bf16 %v3357, %v3356
    %v3382 = vpack.c.bf16 %v3359, %v3358
    %v3383 = vpack.c.bf16 %v3361, %v3360
    %v3384 = vpack.c.bf16 %v3363, %v3362
    %v3385 = vpack.c.bf16 %v3365, %v3364
    %v3386 = vpack.c.bf16 %v3367, %v3366
    %v3387 = vpack.c.bf16 %v3369, %v3368
    %v3388 = vpack.c.bf16 %v3371, %v3370
    %v3389 = vpack.c.bf16 %v3373, %v3372
    %v3390 = vpack.c.bf16 %v3375, %v3374
    %v3391 = vpack.c.bf16 %v3254, %v3253
    %v3392 = vpack.c.bf16 %v3256, %v3255
    %v3393 = vpack.c.bf16 %v3258, %v3257
    %v3394 = vpack.c.bf16 %v3260, %v3259
    %v3395 = vpack.c.bf16 %v3262, %v3261
    %v3396 = vpack.c.bf16 %v3264, %v3263
    %v3397 = vpack.c.bf16 %v3266, %v3265
    %v3398 = vpack.c.bf16 %v3268, %v3267
    %v3399 = vpack.c.bf16 %v3270, %v3269
    %v3400 = vpack.c.bf16 %v3272, %v3271
    %v3401 = vpack.c.bf16 %v3274, %v3273
    %v3402 = vpack.c.bf16 %v3276, %v3275
    %v3403 = vpack.c.bf16 %v3278, %v3277
    %v3404 = vpack.c.bf16 %v3280, %v3279
    %v3405 = vpack.c.bf16 %v3282, %v3281
    %v3406 = vrot.slane %v3253, 1
    %v3407 = vrot.slane %v3254, 1
    %v3408 = vrot.slane %v3255, 1
    %v3409 = vrot.slane %v3256, 1
    %v3410 = vrot.slane %v3257, 1
    %v3411 = vrot.slane %v3258, 1
    %v3412 = vrot.slane %v3259, 1
    %v3413 = vrot.slane %v3260, 1
    %v3414 = vrot.slane %v3261, 1
    %v3415 = vrot.slane %v3262, 1
    %v3416 = vrot.slane %v3263, 1
    %v3417 = vrot.slane %v3264, 1
    %v3418 = vrot.slane %v3265, 1
    %v3419 = vrot.slane %v3266, 1
    %v3420 = vrot.slane %v3267, 1
    %v3421 = vrot.slane %v3268, 1
    %v3422 = vrot.slane %v3269, 1
    %v3423 = vrot.slane %v3270, 1
    %v3424 = vrot.slane %v3271, 1
    %v3425 = vrot.slane %v3272, 1
    %v3426 = vrot.slane %v3273, 1
    %v3427 = vrot.slane %v3274, 1
    %v3428 = vrot.slane %v3275, 1
    %v3429 = vrot.slane %v3276, 1
    %v3430 = vrot.slane %v3277, 1
    %v3431 = vrot.slane %v3278, 1
    %v3432 = vrot.slane %v3279, 1
    %v3433 = vrot.slane %v3280, 1
    %v3434 = vrot.slane %v3281, 1
    %v3435 = vrot.slane %v3282, 1
    %v3436 = vrot.slane %v3283, 1
    %v3437 = vsel %vm1294, %v3435, %v3436
    %v3438 = vsel %vm1294, %v3434, %v3435
    %v3439 = vsel %vm1294, %v3433, %v3434
    %v3440 = vsel %vm1294, %v3432, %v3433
    %v3441 = vsel %vm1294, %v3431, %v3432
    %v3442 = vsel %vm1294, %v3430, %v3431
    %v3443 = vsel %vm1294, %v3429, %v3430
    %v3444 = vsel %vm1294, %v3428, %v3429
    %v3445 = vsel %vm1294, %v3427, %v3428
    %v3446 = vsel %vm1294, %v3426, %v3427
    %v3447 = vsel %vm1294, %v3425, %v3426
    %v3448 = vsel %vm1294, %v3424, %v3425
    %v3449 = vsel %vm1294, %v3423, %v3424
    %v3450 = vsel %vm1294, %v3422, %v3423
    %v3451 = vsel %vm1294, %v3421, %v3422
    %v3452 = vsel %vm1294, %v3420, %v3421
    %v3453 = vsel %vm1294, %v3419, %v3420
    %v3454 = vsel %vm1294, %v3418, %v3419
    %v3455 = vsel %vm1294, %v3417, %v3418
    %v3456 = vsel %vm1294, %v3416, %v3417
    %v3457 = vsel %vm1294, %v3415, %v3416
    %v3458 = vsel %vm1294, %v3414, %v3415
    %v3459 = vsel %vm1294, %v3413, %v3414
    %v3460 = vsel %vm1294, %v3412, %v3413
    %v3461 = vsel %vm1294, %v3411, %v3412
    %v3462 = vsel %vm1294, %v3410, %v3411
    %v3463 = vsel %vm1294, %v3409, %v3410
    %v3464 = vsel %vm1294, %v3408, %v3409
    %v3465 = vsel %vm1294, %v3407, %v3408
    %v3466 = vsel %vm1294, %v3406, %v3407
    %v3467 = vsel %vm1325, %v3466, 0.0
    %v3468 = vsel %vm1326, %v3465, 0.0
    %v3469 = vsel %vm1325, %v3464, 0.0
    %v3470 = vsel %vm1326, %v3463, 0.0
    %v3471 = vsel %vm1325, %v3462, 0.0
    %v3472 = vsel %vm1326, %v3461, 0.0
    %v3473 = vsel %vm1325, %v3460, 0.0
    %v3474 = vsel %vm1326, %v3459, 0.0
    %v3475 = vsel %vm1325, %v3458, 0.0
    %v3476 = vsel %vm1326, %v3457, 0.0
    %v3477 = vsel %vm1325, %v3456, 0.0
    %v3478 = vsel %vm1326, %v3455, 0.0
    %v3479 = vsel %vm1325, %v3454, 0.0
    %v3480 = vsel %vm1326, %v3453, 0.0
    %v3481 = vsel %vm1325, %v3452, 0.0
    %v3482 = vsel %vm1326, %v3451, 0.0
    %v3483 = vsel %vm1325, %v3450, 0.0
    %v3484 = vsel %vm1326, %v3449, 0.0
    %v3485 = vsel %vm1325, %v3448, 0.0
    %v3486 = vsel %vm1326, %v3447, 0.0
    %v3487 = vsel %vm1325, %v3446, 0.0
    %v3488 = vsel %vm1326, %v3445, 0.0
    %v3489 = vsel %vm1325, %v3444, 0.0
    %v3490 = vsel %vm1326, %v3443, 0.0
    %v3491 = vsel %vm1325, %v3442, 0.0
    %v3492 = vsel %vm1326, %v3441, 0.0
    %v3493 = vsel %vm1325, %v3440, 0.0
    %v3494 = vsel %vm1326, %v3439, 0.0
    %v3495 = vsel %vm1325, %v3438, 0.0
    %v3496 = vsel %vm1326, %v3437, 0.0
    %v3497 = vpack.c.bf16 %v3468, %v3467
    %v3498 = vpack.c.bf16 %v3470, %v3469
    %v3499 = vpack.c.bf16 %v3472, %v3471
    %v3500 = vpack.c.bf16 %v3474, %v3473
    %v3501 = vpack.c.bf16 %v3476, %v3475
    %v3502 = vpack.c.bf16 %v3478, %v3477
    %v3503 = vpack.c.bf16 %v3480, %v3479
    %v3504 = vpack.c.bf16 %v3482, %v3481
    %v3505 = vpack.c.bf16 %v3484, %v3483
    %v3506 = vpack.c.bf16 %v3486, %v3485
    %v3507 = vpack.c.bf16 %v3488, %v3487
    %v3508 = vpack.c.bf16 %v3490, %v3489
    %v3509 = vpack.c.bf16 %v3492, %v3491
    %v3510 = vpack.c.bf16 %v3494, %v3493
    %v3511 = vpack.c.bf16 %v3496, %v3495
    %v3512 = vrot.slane %v3283, 7
    %v3513 = vsel %vm1169, %v3512, %v3315
    %v3514 = vsel %vm1169, %v3314, %v3512
    %v3515 = vsel %vm1200, %v3514, 0.0
    %v3516 = vsel %vm1201, %v3513, 0.0
    %v3517 = vpack.c.bf16 %v3516, %v3515
    %v3518 = vpack.c.bf16 %v3284, %v3283
    %v3519 = vrot.slane %v3284, 1
    %v3520 = vsel %vm1294, %v3436, %v3519
    %v3521 = vsel %vm1294, %v3519, %v3406
    %v3522 = vsel %vm1325, %v3520, 0.0
    %v3523 = vsel %vm1326, %v3521, 0.0
    %v3524 = vpack.c.bf16 %v3523, %v3522
    %v3669 = vunpack.c.l.b16 %v305
    %v3670 = vunpack.c.l.b16 %v306
    %v3671 = vunpack.c.l.b16 %v307
    %v3672 = vunpack.c.l.b16 %v308
    %v3673 = vunpack.c.l.b16 %v309
    %v3674 = vunpack.c.l.b16 %v310
    %v3675 = vunpack.c.l.b16 %v311
    %v3676 = vunpack.c.l.b16 %v312
    %v3677 = vunpack.c.l.b16 %v313
    %v3678 = vunpack.c.l.b16 %v314
    %v3679 = vunpack.c.l.b16 %v315
    %v3680 = vunpack.c.l.b16 %v316
    %v3681 = vunpack.c.l.b16 %v317
    %v3682 = vunpack.c.l.b16 %v318
    %v3683 = vunpack.c.l.b16 %v319
    %v3684 = vunpack.c.l.b16 %v320
    %v3685 = vunpack.c.l.b16 %v321
    %v3686 = vunpack.c.l.b16 %v322
    %v3687 = vunpack.c.l.b16 %v323
    %v3688 = vunpack.c.l.b16 %v324
    %v3689 = vunpack.c.l.b16 %v325
    %v3690 = vunpack.c.l.b16 %v326
    %v3691 = vunpack.c.l.b16 %v327
    %v3692 = vunpack.c.l.b16 %v328
    %v3693 = vunpack.c.l.b16 %v329
    %v3694 = vunpack.c.l.b16 %v330
    %v3695 = vunpack.c.l.b16 %v331
    %v3696 = vunpack.c.l.b16 %v332
    %v3697 = vunpack.c.l.b16 %v333
    %v3698 = vunpack.c.l.b16 %v334
    %v3699 = vunpack.c.l.b16 %v335
    %v3700 = vunpack.c.l.b16 %v336
    %v3701 = vunpack.c.l.b16 %v337
    %v3702 = vunpack.c.l.b16 %v338
    %v3703 = vunpack.c.l.b16 %v339
    %v3704 = vunpack.c.l.b16 %v340
    %v3705 = vunpack.c.l.b16 %v341
    %v3706 = vunpack.c.l.b16 %v342
    %v3707 = vunpack.c.l.b16 %v343
    %v3708 = vunpack.c.l.b16 %v344
    %v3709 = vunpack.c.l.b16 %v345
    %v3710 = vunpack.c.l.b16 %v346
    %v3711 = vunpack.c.l.b16 %v347
    %v3712 = vunpack.c.l.b16 %v348
    %v3713 = vunpack.c.l.b16 %v349
    %v3714 = vunpack.c.l.b16 %v350
    %v3715 = vunpack.c.l.b16 %v351
    %v3716 = vunpack.c.l.b16 %v352
    %v3717 = vunpack.c.l.b16 %v353
    %v3718 = vunpack.c.l.b16 %v354
    %v3719 = vunpack.c.l.b16 %v355
    %v3720 = vunpack.c.l.b16 %v356
    %v3721 = vunpack.c.l.b16 %v357
    %v3722 = vunpack.c.l.b16 %v358
    %v3723 = vunpack.c.l.b16 %v359
    %v3724 = vunpack.c.l.b16 %v360
    %v3725 = vunpack.c.l.b16 %v361
    %v3726 = vunpack.c.l.b16 %v362
    %v3727 = vunpack.c.l.b16 %v363
    %v3728 = vunpack.c.l.b16 %v364
    %v3729 = vunpack.c.l.b16 %v365
    %v3730 = vunpack.c.l.b16 %v366
    %v3731 = vunpack.c.l.b16 %v367
    %v3732 = vunpack.c.l.b16 %v368
    %v3733 = vunpack.c.l.b16 %v369
    %v3734 = vunpack.c.l.b16 %v370
    %v3735 = vunpack.c.l.b16 %v371
    %v3736 = vunpack.c.l.b16 %v372
    %v3737 = vunpack.c.l.b16 %v373
    %v3738 = vunpack.c.l.b16 %v374
    %v3739 = vunpack.c.l.b16 %v375
    %v3740 = vunpack.c.l.b16 %v376
    %v3741 = vunpack.c.l.b16 %v377
    %v3742 = vunpack.c.l.b16 %v378
    %v3743 = vunpack.c.l.b16 %v379
    %v3744 = vunpack.c.l.b16 %v380
    %v3745 = vunpack.c.l.b16 %v381
    %v3746 = vunpack.c.l.b16 %v382
    %v3747 = vunpack.c.l.b16 %v383
    %v3748 = vunpack.c.l.b16 %v384
    %v3749 = vunpack.c.l.b16 %v385
    %v3750 = vunpack.c.l.b16 %v386
    %v3751 = vunpack.c.l.b16 %v387
    %v3752 = vunpack.c.l.b16 %v388
    %v3753 = vunpack.c.l.b16 %v389
    %v3754 = vunpack.c.l.b16 %v390
    %v3755 = vunpack.c.l.b16 %v391
    %v3756 = vunpack.c.l.b16 %v392
    %v3757 = vunpack.c.l.b16 %v393
    %v3758 = vunpack.c.l.b16 %v394
    %v3759 = vunpack.c.l.b16 %v395
    %v3760 = vunpack.c.l.b16 %v396
    %v3761 = vunpack.c.l.b16 %v397
    %v3762 = vunpack.c.l.b16 %v398
    %v3763 = vunpack.c.l.b16 %v399
    %v3764 = vunpack.c.l.b16 %v400
    %v3765 = vunpack.c.l.b16 %v401
    %v3766 = vunpack.c.l.b16 %v402
    %v3767 = vunpack.c.l.b16 %v403
    %v3768 = vunpack.c.l.b16 %v404
    %v3769 = vunpack.c.l.b16 %v405
    %v3770 = vunpack.c.l.b16 %v406
    %v3771 = vunpack.c.l.b16 %v407
    %v3772 = vunpack.c.l.b16 %v408
    %v3773 = vunpack.c.l.b16 %v409
    %v3774 = vunpack.c.l.b16 %v410
    %v3775 = vunpack.c.l.b16 %v411
    %v3776 = vunpack.c.l.b16 %v412
    %v3777 = vunpack.c.l.b16 %v413
    %v3778 = vunpack.c.l.b16 %v414
    %v3779 = vunpack.c.l.b16 %v415
    %v3780 = vunpack.c.l.b16 %v416
    %v3781 = vunpack.c.l.b16 %v417
    %v3782 = vunpack.c.l.b16 %v418
    %v3783 = vunpack.c.l.b16 %v419
    %v3784 = vunpack.c.l.b16 %v420
    %v3785 = vunpack.c.l.b16 %v421
    %v3786 = vunpack.c.l.b16 %v422
    %v3787 = vunpack.c.l.b16 %v423
    %v3788 = vunpack.c.l.b16 %v424
    %v3789 = vunpack.c.l.b16 %v425
    %v3790 = vunpack.c.l.b16 %v426
    %v3791 = vunpack.c.l.b16 %v427
    %v3792 = vunpack.c.l.b16 %v428
    %v3793 = vunpack.c.l.b16 %v429
    %v3794 = vunpack.c.l.b16 %v430
    %v3795 = vunpack.c.l.b16 %v431
    %v3796 = vunpack.c.l.b16 %v432
    %v3797 = vunpack.c.l.b16 %v433
    %v3798 = vunpack.c.l.b16 %v434
    %v3799 = vunpack.c.l.b16 %v435
    %v3800 = vunpack.c.l.b16 %v436
    %v3801 = vunpack.c.l.b16 %v437
    %v3802 = vunpack.c.l.b16 %v438
    %v3803 = vunpack.c.l.b16 %v439
    %v3804 = vunpack.c.l.b16 %v440
    %v3805 = vunpack.c.l.b16 %v441
    %v3806 = vunpack.c.l.b16 %v442
    %v3807 = vunpack.c.l.b16 %v443
    %v3808 = vunpack.c.l.b16 %v444
    %v3809 = vunpack.c.l.b16 %v445
    %v3810 = vunpack.c.l.b16 %v446
    %v3811 = vunpack.c.l.b16 %v447
    %v3812 = vunpack.c.l.b16 %v448
    %v3813 = vpack.c.b16 %v3670, %v3669
    %v3814 = vpack.c.b16 %v3672, %v3671
    %v3815 = vpack.c.b16 %v3674, %v3673
    %v3816 = vpack.c.b16 %v3676, %v3675
    %v3817 = vpack.c.b16 %v3678, %v3677
    %v3818 = vpack.c.b16 %v3680, %v3679
    %v3819 = vpack.c.b16 %v3682, %v3681
    %v3820 = vpack.c.b16 %v3684, %v3683
    %v3821 = vpack.c.b16 %v3686, %v3685
    %v3822 = vpack.c.b16 %v3688, %v3687
    %v3823 = vpack.c.b16 %v3690, %v3689
    %v3824 = vpack.c.b16 %v3692, %v3691
    %v3825 = vpack.c.b16 %v3694, %v3693
    %v3826 = vpack.c.b16 %v3696, %v3695
    %v3827 = vpack.c.b16 %v3698, %v3697
    %v3828 = vpack.c.b16 %v3700, %v3699
    %v3829 = vpack.c.b16 %v3702, %v3701
    %v3830 = vpack.c.b16 %v3704, %v3703
    %v3831 = vpack.c.b16 %v3706, %v3705
    %v3832 = vpack.c.b16 %v3708, %v3707
    %v3833 = vpack.c.b16 %v3710, %v3709
    %v3834 = vpack.c.b16 %v3712, %v3711
    %v3835 = vpack.c.b16 %v3714, %v3713
    %v3836 = vpack.c.b16 %v3716, %v3715
    %v3837 = vpack.c.b16 %v3718, %v3717
    %v3838 = vpack.c.b16 %v3720, %v3719
    %v3839 = vpack.c.b16 %v3722, %v3721
    %v3840 = vpack.c.b16 %v3724, %v3723
    %v3841 = vpack.c.b16 %v3726, %v3725
    %v3842 = vpack.c.b16 %v3728, %v3727
    %v3843 = vpack.c.b16 %v3730, %v3729
    %v3844 = vpack.c.b16 %v3732, %v3731
    %v3845 = vpack.c.b16 %v3734, %v3733
    %v3846 = vpack.c.b16 %v3736, %v3735
    %v3847 = vpack.c.b16 %v3738, %v3737
    %v3848 = vpack.c.b16 %v3740, %v3739
    %v3849 = vpack.c.b16 %v3742, %v3741
    %v3850 = vpack.c.b16 %v3744, %v3743
    %v3851 = vpack.c.b16 %v3746, %v3745
    %v3852 = vpack.c.b16 %v3748, %v3747
    %v3853 = vpack.c.b16 %v3750, %v3749
    %v3854 = vpack.c.b16 %v3752, %v3751
    %v3855 = vpack.c.b16 %v3754, %v3753
    %v3856 = vpack.c.b16 %v3756, %v3755
    %v3857 = vpack.c.b16 %v3758, %v3757
    %v3858 = vpack.c.b16 %v3760, %v3759
    %v3859 = vpack.c.b16 %v3762, %v3761
    %v3860 = vpack.c.b16 %v3764, %v3763
    %v3861 = vpack.c.b16 %v3766, %v3765
    %v3862 = vpack.c.b16 %v3768, %v3767
    %v3863 = vpack.c.b16 %v3770, %v3769
    %v3864 = vpack.c.b16 %v3772, %v3771
    %v3865 = vpack.c.b16 %v3774, %v3773
    %v3866 = vpack.c.b16 %v3776, %v3775
    %v3867 = vpack.c.b16 %v3778, %v3777
    %v3868 = vpack.c.b16 %v3780, %v3779
    %v3869 = vpack.c.b16 %v3782, %v3781
    %v3870 = vpack.c.b16 %v3784, %v3783
    %v3871 = vpack.c.b16 %v3786, %v3785
    %v3872 = vpack.c.b16 %v3788, %v3787
    %v3873 = vpack.c.b16 %v3790, %v3789
    %v3874 = vpack.c.b16 %v3792, %v3791
    %v3875 = vpack.c.b16 %v3794, %v3793
    %v3876 = vpack.c.b16 %v3796, %v3795
    %v3877 = vpack.c.b16 %v3798, %v3797
    %v3878 = vpack.c.b16 %v3800, %v3799
    %v3879 = vpack.c.b16 %v3802, %v3801
    %v3880 = vpack.c.b16 %v3804, %v3803
    %v3881 = vpack.c.b16 %v3806, %v3805
    %v3882 = vpack.c.b16 %v3808, %v3807
    %v3883 = vpack.c.b16 %v3810, %v3809
    %v3884 = vpack.c.b16 %v3812, %v3811
    %3957 = vmatprep.subr.bf16.mxu0 0
    %3958 = vmatpush1.bf16.msra.mxu0 %v3820
    %3959 = vmatprep.subr.bf16.mxu0 0
    %3960 = vmatpush1.bf16.msra.mxu0 %v3819
    %3961 = vmatprep.subr.bf16.mxu0 0
    %3962 = vmatpush1.bf16.msra.mxu0 %v3818
    %3963 = vmatprep.subr.bf16.mxu0 0
    %3964 = vmatpush1.bf16.msra.mxu0 %v3817
    %3965 = vmatprep.subr.bf16.mxu0 0
    %3966 = vmatpush1.bf16.msra.mxu0 %v3816
    %3967 = vmatprep.subr.bf16.mxu0 0
    %3968 = vmatpush1.bf16.msra.mxu0 %v3815
    %3969 = vmatprep.subr.bf16.mxu0 0
    %3970 = vmatpush1.bf16.msra.mxu0 %v3814
    %3971 = vmatprep.subr.bf16.mxu0 0
    %3972 = vmatpush1.bf16.msra.mxu0 %v3813
    %3973 = vmatprep.subr.bf16.mxu0 0
    %3974 = vmatpush2.bf16.msra.mxu0 %v3828
    %3975 = vmatprep.subr.bf16.mxu0 0
    %3976 = vmatpush2.bf16.msra.mxu0 %v3827
    %3977 = vmatprep.subr.bf16.mxu0 0
    %3978 = vmatpush2.bf16.msra.mxu0 %v3826
    %3979 = vmatprep.subr.bf16.mxu0 0
    %3980 = vmatpush2.bf16.msra.mxu0 %v3825
    %3981 = vmatprep.subr.bf16.mxu0 0
    %3982 = vmatpush2.bf16.msra.mxu0 %v3824
    %3983 = vmatprep.subr.bf16.mxu0 0
    %3984 = vmatpush2.bf16.msra.mxu0 %v3823
    %3985 = vmatprep.subr.bf16.mxu0 0
    %3986 = vmatpush2.bf16.msra.mxu0 %v3822
    %3987 = vmatprep.subr.bf16.mxu0 0
    %3988 = vmatpush2.bf16.msra.mxu0 %v3821
    %3989 = vmatprep.mubr.bf16.mxu0 %v1232
    %3990 = vmatmul.mubr.bf16.gmra.mxu0 %v1232
    %v3991 = vpop.f32.mrf.mxu0
    %v3992 = vadd.f32 0.0, %v3991
    %v3993 = vpop.f32.mrf.mxu0
    %v3994 = vpop.f32.mrf.mxu0
    %v3995 = vadd.f32 0.0, %v3994
    %v3996 = vpop.f32.mrf.mxu0
    %3997 = vmatprep.mubr.bf16.mxu0 %v3391
    %3998 = vmatmul.mubr.bf16.gmra.mxu0 %v3376
    %v3999 = vpop.f32.mrf.mxu0
    %v4000 = vadd.f32 0.0, %v3999
    %v4001 = vpop.f32.mrf.mxu0
    %v4002 = vpop.f32.mrf.mxu0
    %v4003 = vadd.f32 0.0, %v4002
    %v4004 = vpop.f32.mrf.mxu0
    %4005 = vmatprep.mubr.bf16.mxu0 %v3392
    %4006 = vmatmul.mubr.bf16.gmra.mxu0 %v3377
    %v4007 = vpop.f32.mrf.mxu0
    %v4008 = vadd.f32 0.0, %v4007
    %v4009 = vpop.f32.mrf.mxu0
    %v4010 = vpop.f32.mrf.mxu0
    %v4011 = vadd.f32 0.0, %v4010
    %v4012 = vpop.f32.mrf.mxu0
    %4013 = vmatprep.mubr.bf16.mxu0 %v3393
    %4014 = vmatmul.mubr.bf16.gmra.mxu0 %v3378
    %v4015 = vpop.f32.mrf.mxu0
    %v4016 = vadd.f32 0.0, %v4015
    %v4017 = vpop.f32.mrf.mxu0
    %v4018 = vpop.f32.mrf.mxu0
    %v4019 = vadd.f32 0.0, %v4018
    %v4020 = vpop.f32.mrf.mxu0
    %4021 = vmatprep.mubr.bf16.mxu0 %v3394
    %4022 = vmatmul.mubr.bf16.gmra.mxu0 %v3379
    %v4023 = vpop.f32.mrf.mxu0
    %v4024 = vadd.f32 0.0, %v4023
    %v4025 = vpop.f32.mrf.mxu0
    %v4026 = vpop.f32.mrf.mxu0
    %v4027 = vadd.f32 0.0, %v4026
    %v4028 = vpop.f32.mrf.mxu0
    %4029 = vmatprep.mubr.bf16.mxu0 %v3395
    %4030 = vmatmul.mubr.bf16.gmra.mxu0 %v3380
    %v4031 = vpop.f32.mrf.mxu0
    %v4032 = vadd.f32 0.0, %v4031
    %v4033 = vpop.f32.mrf.mxu0
    %v4034 = vpop.f32.mrf.mxu0
    %v4035 = vadd.f32 0.0, %v4034
    %v4036 = vpop.f32.mrf.mxu0
    %4037 = vmatprep.mubr.bf16.mxu0 %v3396
    %4038 = vmatmul.mubr.bf16.gmra.mxu0 %v3381
    %v4039 = vpop.f32.mrf.mxu0
    %v4040 = vadd.f32 0.0, %v4039
    %v4041 = vpop.f32.mrf.mxu0
    %v4042 = vpop.f32.mrf.mxu0
    %v4043 = vadd.f32 0.0, %v4042
    %v4044 = vpop.f32.mrf.mxu0
    %4045 = vmatprep.mubr.bf16.mxu0 %v3397
    %4046 = vmatmul.mubr.bf16.gmra.mxu0 %v3382
    %v4047 = vpop.f32.mrf.mxu0
    %v4048 = vadd.f32 0.0, %v4047
    %v4049 = vpop.f32.mrf.mxu0
    %v4050 = vpop.f32.mrf.mxu0
    %v4051 = vadd.f32 0.0, %v4050
    %v4052 = vpop.f32.mrf.mxu0
    %4053 = vmatprep.mubr.bf16.mxu0 %v3398
    %4054 = vmatmul.mubr.bf16.gmra.mxu0 %v3383
    %v4055 = vpop.f32.mrf.mxu0
    %v4056 = vadd.f32 0.0, %v4055
    %v4057 = vpop.f32.mrf.mxu0
    %v4058 = vpop.f32.mrf.mxu0
    %v4059 = vadd.f32 0.0, %v4058
    %v4060 = vpop.f32.mrf.mxu0
    %4061 = vmatprep.mubr.bf16.mxu0 %v3399
    %4062 = vmatmul.mubr.bf16.gmra.mxu0 %v3384
    %v4063 = vpop.f32.mrf.mxu0
    %v4064 = vadd.f32 0.0, %v4063
    %v4065 = vpop.f32.mrf.mxu0
    %v4066 = vpop.f32.mrf.mxu0
    %v4067 = vadd.f32 0.0, %v4066
    %v4068 = vpop.f32.mrf.mxu0
    %4069 = vmatprep.mubr.bf16.mxu0 %v3400
    %4070 = vmatmul.mubr.bf16.gmra.mxu0 %v3385
    %v4071 = vpop.f32.mrf.mxu0
    %v4072 = vadd.f32 0.0, %v4071
    %v4073 = vpop.f32.mrf.mxu0
    %v4074 = vpop.f32.mrf.mxu0
    %v4075 = vadd.f32 0.0, %v4074
    %v4076 = vpop.f32.mrf.mxu0
    %4077 = vmatprep.mubr.bf16.mxu0 %v3401
    %4078 = vmatmul.mubr.bf16.gmra.mxu0 %v3386
    %v4079 = vpop.f32.mrf.mxu0
    %v4080 = vadd.f32 0.0, %v4079
    %v4081 = vpop.f32.mrf.mxu0
    %v4082 = vpop.f32.mrf.mxu0
    %v4083 = vadd.f32 0.0, %v4082
    %v4084 = vpop.f32.mrf.mxu0
    %4085 = vmatprep.mubr.bf16.mxu0 %v3402
    %4086 = vmatmul.mubr.bf16.gmra.mxu0 %v3387
    %v4087 = vpop.f32.mrf.mxu0
    %v4088 = vadd.f32 0.0, %v4087
    %v4089 = vpop.f32.mrf.mxu0
    %v4090 = vpop.f32.mrf.mxu0
    %v4091 = vadd.f32 0.0, %v4090
    %v4092 = vpop.f32.mrf.mxu0
    %4093 = vmatprep.mubr.bf16.mxu0 %v3403
    %4094 = vmatmul.mubr.bf16.gmra.mxu0 %v3388
    %v4095 = vpop.f32.mrf.mxu0
    %v4096 = vadd.f32 0.0, %v4095
    %v4097 = vpop.f32.mrf.mxu0
    %v4098 = vpop.f32.mrf.mxu0
    %v4099 = vadd.f32 0.0, %v4098
    %v4100 = vpop.f32.mrf.mxu0
    %4101 = vmatprep.mubr.bf16.mxu0 %v3404
    %4102 = vmatmul.mubr.bf16.gmra.mxu0 %v3389
    %v4103 = vpop.f32.mrf.mxu0
    %v4104 = vadd.f32 0.0, %v4103
    %v4105 = vpop.f32.mrf.mxu0
    %v4106 = vpop.f32.mrf.mxu0
    %v4107 = vadd.f32 0.0, %v4106
    %v4108 = vpop.f32.mrf.mxu0
    %4109 = vmatprep.mubr.bf16.mxu0 %v3405
    %4110 = vmatmul.mubr.bf16.gmra.mxu0 %v3390
    %v4111 = vpop.f32.mrf.mxu0
    %v4112 = vadd.f32 0.0, %v4111
    %v4113 = vpop.f32.mrf.mxu0
    %v4114 = vpop.f32.mrf.mxu0
    %v4115 = vadd.f32 0.0, %v4114
    %v4116 = vpop.f32.mrf.mxu0
    %4117 = vdwg.mxu0
    %4118 = vmatprep.subr.bf16.mxu0 0
    %4119 = vmatpush1.bf16.msra.mxu0 %v3836
    %4120 = vmatprep.subr.bf16.mxu0 0
    %4121 = vmatpush1.bf16.msra.mxu0 %v3835
    %4122 = vmatprep.subr.bf16.mxu0 0
    %4123 = vmatpush1.bf16.msra.mxu0 %v3834
    %4124 = vmatprep.subr.bf16.mxu0 0
    %4125 = vmatpush1.bf16.msra.mxu0 %v3833
    %4126 = vmatprep.subr.bf16.mxu0 0
    %4127 = vmatpush1.bf16.msra.mxu0 %v3832
    %4128 = vmatprep.subr.bf16.mxu0 0
    %4129 = vmatpush1.bf16.msra.mxu0 %v3831
    %4130 = vmatprep.subr.bf16.mxu0 0
    %4131 = vmatpush1.bf16.msra.mxu0 %v3830
    %4132 = vmatprep.subr.bf16.mxu0 0
    %4133 = vmatpush1.bf16.msra.mxu0 %v3829
    %4134 = vmatprep.subr.bf16.mxu0 0
    %4135 = vmatpush2.bf16.msra.mxu0 %v3844
    %4136 = vmatprep.subr.bf16.mxu0 0
    %4137 = vmatpush2.bf16.msra.mxu0 %v3843
    %4138 = vmatprep.subr.bf16.mxu0 0
    %4139 = vmatpush2.bf16.msra.mxu0 %v3842
    %4140 = vmatprep.subr.bf16.mxu0 0
    %4141 = vmatpush2.bf16.msra.mxu0 %v3841
    %4142 = vmatprep.subr.bf16.mxu0 0
    %4143 = vmatpush2.bf16.msra.mxu0 %v3840
    %4144 = vmatprep.subr.bf16.mxu0 0
    %4145 = vmatpush2.bf16.msra.mxu0 %v3839
    %4146 = vmatprep.subr.bf16.mxu0 0
    %4147 = vmatpush2.bf16.msra.mxu0 %v3838
    %4148 = vmatprep.subr.bf16.mxu0 0
    %4149 = vmatpush2.bf16.msra.mxu0 %v3837
    %4150 = vmatprep.mubr.bf16.mxu0 %v3376
    %4151 = vmatmul.mubr.bf16.gmra.mxu0 %v1232
    %v4152 = vpop.f32.mrf.mxu0
    %v4153 = vadd.f32 %v3992, %v4152
    %v4154 = vpop.f32.mrf.mxu0
    %v4155 = vpop.f32.mrf.mxu0
    %v4156 = vadd.f32 %v3995, %v4155
    %v4157 = vpop.f32.mrf.mxu0
    %4158 = vmatprep.mubr.bf16.mxu0 %v3377
    %4159 = vmatmul.mubr.bf16.gmra.mxu0 %v3497
    %v4160 = vpop.f32.mrf.mxu0
    %v4161 = vadd.f32 %v4000, %v4160
    %v4162 = vpop.f32.mrf.mxu0
    %v4163 = vpop.f32.mrf.mxu0
    %v4164 = vadd.f32 %v4003, %v4163
    %v4165 = vpop.f32.mrf.mxu0
    %4166 = vmatprep.mubr.bf16.mxu0 %v3378
    %4167 = vmatmul.mubr.bf16.gmra.mxu0 %v3498
    %v4168 = vpop.f32.mrf.mxu0
    %v4169 = vadd.f32 %v4008, %v4168
    %v4170 = vpop.f32.mrf.mxu0
    %v4171 = vpop.f32.mrf.mxu0
    %v4172 = vadd.f32 %v4011, %v4171
    %v4173 = vpop.f32.mrf.mxu0
    %4174 = vmatprep.mubr.bf16.mxu0 %v3379
    %4175 = vmatmul.mubr.bf16.gmra.mxu0 %v3499
    %v4176 = vpop.f32.mrf.mxu0
    %v4177 = vadd.f32 %v4016, %v4176
    %v4178 = vpop.f32.mrf.mxu0
    %v4179 = vpop.f32.mrf.mxu0
    %v4180 = vadd.f32 %v4019, %v4179
    %v4181 = vpop.f32.mrf.mxu0
    %4182 = vmatprep.mubr.bf16.mxu0 %v3380
    %4183 = vmatmul.mubr.bf16.gmra.mxu0 %v3500
    %v4184 = vpop.f32.mrf.mxu0
    %v4185 = vadd.f32 %v4024, %v4184
    %v4186 = vpop.f32.mrf.mxu0
    %v4187 = vpop.f32.mrf.mxu0
    %v4188 = vadd.f32 %v4027, %v4187
    %v4189 = vpop.f32.mrf.mxu0
    %4190 = vmatprep.mubr.bf16.mxu0 %v3381
    %4191 = vmatmul.mubr.bf16.gmra.mxu0 %v3501
    %v4192 = vpop.f32.mrf.mxu0
    %v4193 = vadd.f32 %v4032, %v4192
    %v4194 = vpop.f32.mrf.mxu0
    %v4195 = vpop.f32.mrf.mxu0
    %v4196 = vadd.f32 %v4035, %v4195
    %v4197 = vpop.f32.mrf.mxu0
    %4198 = vmatprep.mubr.bf16.mxu0 %v3382
    %4199 = vmatmul.mubr.bf16.gmra.mxu0 %v3502
    %v4200 = vpop.f32.mrf.mxu0
    %v4201 = vadd.f32 %v4040, %v4200
    %v4202 = vpop.f32.mrf.mxu0
    %v4203 = vpop.f32.mrf.mxu0
    %v4204 = vadd.f32 %v4043, %v4203
    %v4205 = vpop.f32.mrf.mxu0
    %4206 = vmatprep.mubr.bf16.mxu0 %v3383
    %4207 = vmatmul.mubr.bf16.gmra.mxu0 %v3503
    %v4208 = vpop.f32.mrf.mxu0
    %v4209 = vadd.f32 %v4048, %v4208
    %v4210 = vpop.f32.mrf.mxu0
    %v4211 = vpop.f32.mrf.mxu0
    %v4212 = vadd.f32 %v4051, %v4211
    %v4213 = vpop.f32.mrf.mxu0
    %4214 = vmatprep.mubr.bf16.mxu0 %v3384
    %4215 = vmatmul.mubr.bf16.gmra.mxu0 %v3504
    %v4216 = vpop.f32.mrf.mxu0
    %v4217 = vadd.f32 %v4056, %v4216
    %v4218 = vpop.f32.mrf.mxu0
    %v4219 = vpop.f32.mrf.mxu0
    %v4220 = vadd.f32 %v4059, %v4219
    %v4221 = vpop.f32.mrf.mxu0
    %4222 = vmatprep.mubr.bf16.mxu0 %v3385
    %4223 = vmatmul.mubr.bf16.gmra.mxu0 %v3505
    %v4224 = vpop.f32.mrf.mxu0
    %v4225 = vadd.f32 %v4064, %v4224
    %v4226 = vpop.f32.mrf.mxu0
    %v4227 = vpop.f32.mrf.mxu0
    %v4228 = vadd.f32 %v4067, %v4227
    %v4229 = vpop.f32.mrf.mxu0
    %4230 = vmatprep.mubr.bf16.mxu0 %v3386
    %4231 = vmatmul.mubr.bf16.gmra.mxu0 %v3506
    %v4232 = vpop.f32.mrf.mxu0
    %v4233 = vadd.f32 %v4072, %v4232
    %v4234 = vpop.f32.mrf.mxu0
    %v4235 = vpop.f32.mrf.mxu0
    %v4236 = vadd.f32 %v4075, %v4235
    %v4237 = vpop.f32.mrf.mxu0
    %4238 = vmatprep.mubr.bf16.mxu0 %v3387
    %4239 = vmatmul.mubr.bf16.gmra.mxu0 %v3507
    %v4240 = vpop.f32.mrf.mxu0
    %v4241 = vadd.f32 %v4080, %v4240
    %v4242 = vpop.f32.mrf.mxu0
    %v4243 = vpop.f32.mrf.mxu0
    %v4244 = vadd.f32 %v4083, %v4243
    %v4245 = vpop.f32.mrf.mxu0
    %4246 = vmatprep.mubr.bf16.mxu0 %v3388
    %4247 = vmatmul.mubr.bf16.gmra.mxu0 %v3508
    %v4248 = vpop.f32.mrf.mxu0
    %v4249 = vadd.f32 %v4088, %v4248
    %v4250 = vpop.f32.mrf.mxu0
    %v4251 = vpop.f32.mrf.mxu0
    %v4252 = vadd.f32 %v4091, %v4251
    %v4253 = vpop.f32.mrf.mxu0
    %4254 = vmatprep.mubr.bf16.mxu0 %v3389
    %4255 = vmatmul.mubr.bf16.gmra.mxu0 %v3509
    %v4256 = vpop.f32.mrf.mxu0
    %v4257 = vadd.f32 %v4096, %v4256
    %v4258 = vpop.f32.mrf.mxu0
    %v4259 = vpop.f32.mrf.mxu0
    %v4260 = vadd.f32 %v4099, %v4259
    %v4261 = vpop.f32.mrf.mxu0
    %4262 = vmatprep.mubr.bf16.mxu0 %v3390
    %4263 = vmatmul.mubr.bf16.gmra.mxu0 %v3510
    %v4264 = vpop.f32.mrf.mxu0
    %v4265 = vadd.f32 %v4104, %v4264
    %v4266 = vpop.f32.mrf.mxu0
    %v4267 = vpop.f32.mrf.mxu0
    %v4268 = vadd.f32 %v4107, %v4267
    %v4269 = vpop.f32.mrf.mxu0
    %4270 = vmatprep.mubr.bf16.mxu0 %v3517
    %4271 = vmatmul.mubr.bf16.gmra.mxu0 %v3511
    %v4272 = vpop.f32.mrf.mxu0
    %v4273 = vadd.f32 %v4112, %v4272
    %v4274 = vpop.f32.mrf.mxu0
    %v4275 = vpop.f32.mrf.mxu0
    %v4276 = vadd.f32 %v4115, %v4275
    %v4277 = vpop.f32.mrf.mxu0
    %4278 = vdwg.mxu0
    %4279 = vmatprep.subr.bf16.mxu0 0
    %4280 = vmatpush1.bf16.msra.mxu0 %v3852
    %4281 = vmatprep.subr.bf16.mxu0 0
    %4282 = vmatpush1.bf16.msra.mxu0 %v3851
    %4283 = vmatprep.subr.bf16.mxu0 0
    %4284 = vmatpush1.bf16.msra.mxu0 %v3850
    %4285 = vmatprep.subr.bf16.mxu0 0
    %4286 = vmatpush1.bf16.msra.mxu0 %v3849
    %4287 = vmatprep.subr.bf16.mxu0 0
    %4288 = vmatpush1.bf16.msra.mxu0 %v3848
    %4289 = vmatprep.subr.bf16.mxu0 0
    %4290 = vmatpush1.bf16.msra.mxu0 %v3847
    %4291 = vmatprep.subr.bf16.mxu0 0
    %4292 = vmatpush1.bf16.msra.mxu0 %v3846
    %4293 = vmatprep.subr.bf16.mxu0 0
    %4294 = vmatpush1.bf16.msra.mxu0 %v3845
    %4295 = vmatprep.subr.bf16.mxu0 0
    %4296 = vmatpush2.bf16.msra.mxu0 %v3860
    %4297 = vmatprep.subr.bf16.mxu0 0
    %4298 = vmatpush2.bf16.msra.mxu0 %v3859
    %4299 = vmatprep.subr.bf16.mxu0 0
    %4300 = vmatpush2.bf16.msra.mxu0 %v3858
    %4301 = vmatprep.subr.bf16.mxu0 0
    %4302 = vmatpush2.bf16.msra.mxu0 %v3857
    %4303 = vmatprep.subr.bf16.mxu0 0
    %4304 = vmatpush2.bf16.msra.mxu0 %v3856
    %4305 = vmatprep.subr.bf16.mxu0 0
    %4306 = vmatpush2.bf16.msra.mxu0 %v3855
    %4307 = vmatprep.subr.bf16.mxu0 0
    %4308 = vmatpush2.bf16.msra.mxu0 %v3854
    %4309 = vmatprep.subr.bf16.mxu0 0
    %4310 = vmatpush2.bf16.msra.mxu0 %v3853
    %4311 = vmatprep.mubr.bf16.mxu0 %v3497
    %4312 = vmatmul.mubr.bf16.gmra.mxu0 %v3391
    %v4313 = vpop.f32.mrf.mxu0
    %v4314 = vadd.f32 %v4153, %v4313
    %v4315 = vpop.f32.mrf.mxu0
    %v4316 = vpop.f32.mrf.mxu0
    %v4317 = vadd.f32 %v4156, %v4316
    %v4318 = vpop.f32.mrf.mxu0
    %4319 = vmatprep.mubr.bf16.mxu0 %v3498
    %4320 = vmatmul.mubr.bf16.gmra.mxu0 %v3392
    %v4321 = vpop.f32.mrf.mxu0
    %v4322 = vadd.f32 %v4161, %v4321
    %v4323 = vpop.f32.mrf.mxu0
    %v4324 = vpop.f32.mrf.mxu0
    %v4325 = vadd.f32 %v4164, %v4324
    %v4326 = vpop.f32.mrf.mxu0
    %4327 = vmatprep.mubr.bf16.mxu0 %v3499
    %4328 = vmatmul.mubr.bf16.gmra.mxu0 %v3393
    %v4329 = vpop.f32.mrf.mxu0
    %v4330 = vadd.f32 %v4169, %v4329
    %v4331 = vpop.f32.mrf.mxu0
    %v4332 = vpop.f32.mrf.mxu0
    %v4333 = vadd.f32 %v4172, %v4332
    %v4334 = vpop.f32.mrf.mxu0
    %4335 = vmatprep.mubr.bf16.mxu0 %v3500
    %4336 = vmatmul.mubr.bf16.gmra.mxu0 %v3394
    %v4337 = vpop.f32.mrf.mxu0
    %v4338 = vadd.f32 %v4177, %v4337
    %v4339 = vpop.f32.mrf.mxu0
    %v4340 = vpop.f32.mrf.mxu0
    %v4341 = vadd.f32 %v4180, %v4340
    %v4342 = vpop.f32.mrf.mxu0
    %4343 = vmatprep.mubr.bf16.mxu0 %v3501
    %4344 = vmatmul.mubr.bf16.gmra.mxu0 %v3395
    %v4345 = vpop.f32.mrf.mxu0
    %v4346 = vadd.f32 %v4185, %v4345
    %v4347 = vpop.f32.mrf.mxu0
    %v4348 = vpop.f32.mrf.mxu0
    %v4349 = vadd.f32 %v4188, %v4348
    %v4350 = vpop.f32.mrf.mxu0
    %4351 = vmatprep.mubr.bf16.mxu0 %v3502
    %4352 = vmatmul.mubr.bf16.gmra.mxu0 %v3396
    %v4353 = vpop.f32.mrf.mxu0
    %v4354 = vadd.f32 %v4193, %v4353
    %v4355 = vpop.f32.mrf.mxu0
    %v4356 = vpop.f32.mrf.mxu0
    %v4357 = vadd.f32 %v4196, %v4356
    %v4358 = vpop.f32.mrf.mxu0
    %4359 = vmatprep.mubr.bf16.mxu0 %v3503
    %4360 = vmatmul.mubr.bf16.gmra.mxu0 %v3397
    %v4361 = vpop.f32.mrf.mxu0
    %v4362 = vadd.f32 %v4201, %v4361
    %v4363 = vpop.f32.mrf.mxu0
    %v4364 = vpop.f32.mrf.mxu0
    %v4365 = vadd.f32 %v4204, %v4364
    %v4366 = vpop.f32.mrf.mxu0
    %4367 = vmatprep.mubr.bf16.mxu0 %v3504
    %4368 = vmatmul.mubr.bf16.gmra.mxu0 %v3398
    %v4369 = vpop.f32.mrf.mxu0
    %v4370 = vadd.f32 %v4209, %v4369
    %v4371 = vpop.f32.mrf.mxu0
    %v4372 = vpop.f32.mrf.mxu0
    %v4373 = vadd.f32 %v4212, %v4372
    %v4374 = vpop.f32.mrf.mxu0
    %4375 = vmatprep.mubr.bf16.mxu0 %v3505
    %4376 = vmatmul.mubr.bf16.gmra.mxu0 %v3399
    %v4377 = vpop.f32.mrf.mxu0
    %v4378 = vadd.f32 %v4217, %v4377
    %v4379 = vpop.f32.mrf.mxu0
    %v4380 = vpop.f32.mrf.mxu0
    %v4381 = vadd.f32 %v4220, %v4380
    %v4382 = vpop.f32.mrf.mxu0
    %4383 = vmatprep.mubr.bf16.mxu0 %v3506
    %4384 = vmatmul.mubr.bf16.gmra.mxu0 %v3400
    %v4385 = vpop.f32.mrf.mxu0
    %v4386 = vadd.f32 %v4225, %v4385
    %v4387 = vpop.f32.mrf.mxu0
    %v4388 = vpop.f32.mrf.mxu0
    %v4389 = vadd.f32 %v4228, %v4388
    %v4390 = vpop.f32.mrf.mxu0
    %4391 = vmatprep.mubr.bf16.mxu0 %v3507
    %4392 = vmatmul.mubr.bf16.gmra.mxu0 %v3401
    %v4393 = vpop.f32.mrf.mxu0
    %v4394 = vadd.f32 %v4233, %v4393
    %v4395 = vpop.f32.mrf.mxu0
    %v4396 = vpop.f32.mrf.mxu0
    %v4397 = vadd.f32 %v4236, %v4396
    %v4398 = vpop.f32.mrf.mxu0
    %4399 = vmatprep.mubr.bf16.mxu0 %v3508
    %4400 = vmatmul.mubr.bf16.gmra.mxu0 %v3402
    %v4401 = vpop.f32.mrf.mxu0
    %v4402 = vadd.f32 %v4241, %v4401
    %v4403 = vpop.f32.mrf.mxu0
    %v4404 = vpop.f32.mrf.mxu0
    %v4405 = vadd.f32 %v4244, %v4404
    %v4406 = vpop.f32.mrf.mxu0
    %4407 = vmatprep.mubr.bf16.mxu0 %v3509
    %4408 = vmatmul.mubr.bf16.gmra.mxu0 %v3403
    %v4409 = vpop.f32.mrf.mxu0
    %v4410 = vadd.f32 %v4249, %v4409
    %v4411 = vpop.f32.mrf.mxu0
    %v4412 = vpop.f32.mrf.mxu0
    %v4413 = vadd.f32 %v4252, %v4412
    %v4414 = vpop.f32.mrf.mxu0
    %4415 = vmatprep.mubr.bf16.mxu0 %v3510
    %4416 = vmatmul.mubr.bf16.gmra.mxu0 %v3404
    %v4417 = vpop.f32.mrf.mxu0
    %v4418 = vadd.f32 %v4257, %v4417
    %v4419 = vpop.f32.mrf.mxu0
    %v4420 = vpop.f32.mrf.mxu0
    %v4421 = vadd.f32 %v4260, %v4420
    %v4422 = vpop.f32.mrf.mxu0
    %4423 = vmatprep.mubr.bf16.mxu0 %v3511
    %4424 = vmatmul.mubr.bf16.gmra.mxu0 %v3405
    %v4425 = vpop.f32.mrf.mxu0
    %v4426 = vadd.f32 %v4265, %v4425
    %v4427 = vpop.f32.mrf.mxu0
    %v4428 = vpop.f32.mrf.mxu0
    %v4429 = vadd.f32 %v4268, %v4428
    %v4430 = vpop.f32.mrf.mxu0
    %4431 = vmatprep.mubr.bf16.mxu0 %v3524
    %4432 = vmatmul.mubr.bf16.gmra.mxu0 %v3518
    %v4433 = vpop.f32.mrf.mxu0
    %v4434 = vadd.f32 %v4273, %v4433
    %v4435 = vpop.f32.mrf.mxu0
    %v4436 = vpop.f32.mrf.mxu0
    %v4437 = vadd.f32 %v4276, %v4436
    %v4438 = vpop.f32.mrf.mxu0
    %4439 = vdwg.mxu0
    %4440 = vmatprep.subr.bf16.mxu0 0
    %4441 = vmatpush1.bf16.msra.mxu0 %v3868
    %4442 = vmatprep.subr.bf16.mxu0 0
    %4443 = vmatpush1.bf16.msra.mxu0 %v3867
    %4444 = vmatprep.subr.bf16.mxu0 0
    %4445 = vmatpush1.bf16.msra.mxu0 %v3866
    %4446 = vmatprep.subr.bf16.mxu0 0
    %4447 = vmatpush1.bf16.msra.mxu0 %v3865
    %4448 = vmatprep.subr.bf16.mxu0 0
    %4449 = vmatpush1.bf16.msra.mxu0 %v3864
    %4450 = vmatprep.subr.bf16.mxu0 0
    %4451 = vmatpush1.bf16.msra.mxu0 %v3863
    %4452 = vmatprep.subr.bf16.mxu0 0
    %4453 = vmatpush1.bf16.msra.mxu0 %v3862
    %4454 = vmatprep.subr.bf16.mxu0 0
    %4455 = vmatpush1.bf16.msra.mxu0 %v3861
    %4456 = vmatprep.subr.bf16.mxu0 0
    %4457 = vmatpush2.bf16.msra.mxu0 %v3876
    %4458 = vmatprep.subr.bf16.mxu0 0
    %4459 = vmatpush2.bf16.msra.mxu0 %v3875
    %4460 = vmatprep.subr.bf16.mxu0 0
    %4461 = vmatpush2.bf16.msra.mxu0 %v3874
    %4462 = vmatprep.subr.bf16.mxu0 0
    %4463 = vmatpush2.bf16.msra.mxu0 %v3873
    %4464 = vmatprep.subr.bf16.mxu0 0
    %4465 = vmatpush2.bf16.msra.mxu0 %v3872
    %4466 = vmatprep.subr.bf16.mxu0 0
    %4467 = vmatpush2.bf16.msra.mxu0 %v3871
    %4468 = vmatprep.subr.bf16.mxu0 0
    %4469 = vmatpush2.bf16.msra.mxu0 %v3870
    %4470 = vmatprep.subr.bf16.mxu0 0
    %4471 = vmatpush2.bf16.msra.mxu0 %v3869
    %4472 = vmatprep.mubr.bf16.mxu0 %v3392
    %4473 = vmatmul.mubr.bf16.gmra.mxu0 %v3377
    %v4474 = vpop.f32.mrf.mxu0
    %v4475 = vadd.f32 %v4314, %v4474
    %v4476 = vpop.f32.mrf.mxu0
    %v4477 = vpop.f32.mrf.mxu0
    %v4478 = vadd.f32 %v4317, %v4477
    %v4479 = vpop.f32.mrf.mxu0
    %4480 = vmatprep.mubr.bf16.mxu0 %v3393
    %4481 = vmatmul.mubr.bf16.gmra.mxu0 %v3378
    %v4482 = vpop.f32.mrf.mxu0
    %v4483 = vadd.f32 %v4322, %v4482
    %v4484 = vpop.f32.mrf.mxu0
    %v4485 = vpop.f32.mrf.mxu0
    %v4486 = vadd.f32 %v4325, %v4485
    %v4487 = vpop.f32.mrf.mxu0
    %4488 = vmatprep.mubr.bf16.mxu0 %v3394
    %4489 = vmatmul.mubr.bf16.gmra.mxu0 %v3379
    %v4490 = vpop.f32.mrf.mxu0
    %v4491 = vadd.f32 %v4330, %v4490
    %v4492 = vpop.f32.mrf.mxu0
    %v4493 = vpop.f32.mrf.mxu0
    %v4494 = vadd.f32 %v4333, %v4493
    %v4495 = vpop.f32.mrf.mxu0
    %4496 = vmatprep.mubr.bf16.mxu0 %v3395
    %4497 = vmatmul.mubr.bf16.gmra.mxu0 %v3380
    %v4498 = vpop.f32.mrf.mxu0
    %v4499 = vadd.f32 %v4338, %v4498
    %v4500 = vpop.f32.mrf.mxu0
    %v4501 = vpop.f32.mrf.mxu0
    %v4502 = vadd.f32 %v4341, %v4501
    %v4503 = vpop.f32.mrf.mxu0
    %4504 = vmatprep.mubr.bf16.mxu0 %v3396
    %4505 = vmatmul.mubr.bf16.gmra.mxu0 %v3381
    %v4506 = vpop.f32.mrf.mxu0
    %v4507 = vadd.f32 %v4346, %v4506
    %v4508 = vpop.f32.mrf.mxu0
    %v4509 = vpop.f32.mrf.mxu0
    %v4510 = vadd.f32 %v4349, %v4509
    %v4511 = vpop.f32.mrf.mxu0
    %4512 = vmatprep.mubr.bf16.mxu0 %v3397
    %4513 = vmatmul.mubr.bf16.gmra.mxu0 %v3382
    %v4514 = vpop.f32.mrf.mxu0
    %v4515 = vadd.f32 %v4354, %v4514
    %v4516 = vpop.f32.mrf.mxu0
    %v4517 = vpop.f32.mrf.mxu0
    %v4518 = vadd.f32 %v4357, %v4517
    %v4519 = vpop.f32.mrf.mxu0
    %4520 = vmatprep.mubr.bf16.mxu0 %v3398
    %4521 = vmatmul.mubr.bf16.gmra.mxu0 %v3383
    %v4522 = vpop.f32.mrf.mxu0
    %v4523 = vadd.f32 %v4362, %v4522
    %v4524 = vpop.f32.mrf.mxu0
    %v4525 = vpop.f32.mrf.mxu0
    %v4526 = vadd.f32 %v4365, %v4525
    %v4527 = vpop.f32.mrf.mxu0
    %4528 = vmatprep.mubr.bf16.mxu0 %v3399
    %4529 = vmatmul.mubr.bf16.gmra.mxu0 %v3384
    %v4530 = vpop.f32.mrf.mxu0
    %v4531 = vadd.f32 %v4370, %v4530
    %v4532 = vpop.f32.mrf.mxu0
    %v4533 = vpop.f32.mrf.mxu0
    %v4534 = vadd.f32 %v4373, %v4533
    %v4535 = vpop.f32.mrf.mxu0
    %4536 = vmatprep.mubr.bf16.mxu0 %v3400
    %4537 = vmatmul.mubr.bf16.gmra.mxu0 %v3385
    %v4538 = vpop.f32.mrf.mxu0
    %v4539 = vadd.f32 %v4378, %v4538
    %v4540 = vpop.f32.mrf.mxu0
    %v4541 = vpop.f32.mrf.mxu0
    %v4542 = vadd.f32 %v4381, %v4541
    %v4543 = vpop.f32.mrf.mxu0
    %4544 = vmatprep.mubr.bf16.mxu0 %v3401
    %4545 = vmatmul.mubr.bf16.gmra.mxu0 %v3386
    %v4546 = vpop.f32.mrf.mxu0
    %v4547 = vadd.f32 %v4386, %v4546
    %v4548 = vpop.f32.mrf.mxu0
    %v4549 = vpop.f32.mrf.mxu0
    %v4550 = vadd.f32 %v4389, %v4549
    %v4551 = vpop.f32.mrf.mxu0
    %4552 = vmatprep.mubr.bf16.mxu0 %v3402
    %4553 = vmatmul.mubr.bf16.gmra.mxu0 %v3387
    %v4554 = vpop.f32.mrf.mxu0
    %v4555 = vadd.f32 %v4394, %v4554
    %v4556 = vpop.f32.mrf.mxu0
    %v4557 = vpop.f32.mrf.mxu0
    %v4558 = vadd.f32 %v4397, %v4557
    %v4559 = vpop.f32.mrf.mxu0
    %4560 = vmatprep.mubr.bf16.mxu0 %v3403
    %4561 = vmatmul.mubr.bf16.gmra.mxu0 %v3388
    %v4562 = vpop.f32.mrf.mxu0
    %v4563 = vadd.f32 %v4402, %v4562
    %v4564 = vpop.f32.mrf.mxu0
    %v4565 = vpop.f32.mrf.mxu0
    %v4566 = vadd.f32 %v4405, %v4565
    %v4567 = vpop.f32.mrf.mxu0
    %4568 = vmatprep.mubr.bf16.mxu0 %v3404
    %4569 = vmatmul.mubr.bf16.gmra.mxu0 %v3389
    %v4570 = vpop.f32.mrf.mxu0
    %v4571 = vadd.f32 %v4410, %v4570
    %v4572 = vpop.f32.mrf.mxu0
    %v4573 = vpop.f32.mrf.mxu0
    %v4574 = vadd.f32 %v4413, %v4573
    %v4575 = vpop.f32.mrf.mxu0
    %4576 = vmatprep.mubr.bf16.mxu0 %v3405
    %4577 = vmatmul.mubr.bf16.gmra.mxu0 %v3390
    %v4578 = vpop.f32.mrf.mxu0
    %v4579 = vadd.f32 %v4418, %v4578
    %v4580 = vpop.f32.mrf.mxu0
    %v4581 = vpop.f32.mrf.mxu0
    %v4582 = vadd.f32 %v4421, %v4581
    %v4583 = vpop.f32.mrf.mxu0
    %4584 = vmatprep.mubr.bf16.mxu0 %v3518
    %4585 = vmatmul.mubr.bf16.gmra.mxu0 %v3517
    %v4586 = vpop.f32.mrf.mxu0
    %v4587 = vadd.f32 %v4426, %v4586
    %v4588 = vpop.f32.mrf.mxu0
    %v4589 = vpop.f32.mrf.mxu0
    %v4590 = vadd.f32 %v4429, %v4589
    %v4591 = vpop.f32.mrf.mxu0
    %4592 = vmatprep.mubr.bf16.mxu0 %v1232
    %4593 = vmatmul.mubr.bf16.gmra.mxu0 %v1232
    %v4594 = vpop.f32.mrf.mxu0
    %v4595 = vadd.f32 %v4434, %v4594
    %v4596 = vpop.f32.mrf.mxu0
    %v4597 = vpop.f32.mrf.mxu0
    %v4598 = vadd.f32 %v4437, %v4597
    %v4599 = vpop.f32.mrf.mxu0
    %4600 = vdwg.mxu0
    %4601 = vmatprep.subr.bf16.mxu0 0
    %4602 = vmatpush1.bf16.msra.mxu0 %v3884
    %4603 = vmatprep.subr.bf16.mxu0 0
    %4604 = vmatpush1.bf16.msra.mxu0 %v3883
    %4605 = vmatprep.subr.bf16.mxu0 0
    %4606 = vmatpush1.bf16.msra.mxu0 %v3882
    %4607 = vmatprep.subr.bf16.mxu0 0
    %4608 = vmatpush1.bf16.msra.mxu0 %v3881
    %4609 = vmatprep.subr.bf16.mxu0 0
    %4610 = vmatpush1.bf16.msra.mxu0 %v3880
    %4611 = vmatprep.subr.bf16.mxu0 0
    %4612 = vmatpush1.bf16.msra.mxu0 %v3879
    %4613 = vmatprep.subr.bf16.mxu0 0
    %4614 = vmatpush1.bf16.msra.mxu0 %v3878
    %4615 = vmatprep.subr.bf16.mxu0 0
    %4616 = vmatpush1.bf16.msra.mxu0 %v3877
    %4617 = vmatprep.subr.bf16.mxu0 0
    %4618 = vmatpush2.bf16.msra.mxu0 0
    %4619 = vmatprep.subr.bf16.mxu0 0
    %4620 = vmatpush2.bf16.msra.mxu0 0
    %4621 = vmatprep.subr.bf16.mxu0 0
    %4622 = vmatpush2.bf16.msra.mxu0 0
    %4623 = vmatprep.subr.bf16.mxu0 0
    %4624 = vmatpush2.bf16.msra.mxu0 0
    %4625 = vmatprep.subr.bf16.mxu0 0
    %4626 = vmatpush2.bf16.msra.mxu0 0
    %4627 = vmatprep.subr.bf16.mxu0 0
    %4628 = vmatpush2.bf16.msra.mxu0 0
    %4629 = vmatprep.subr.bf16.mxu0 0
    %4630 = vmatpush2.bf16.msra.mxu0 0
    %4631 = vmatprep.subr.bf16.mxu0 0
    %4632 = vmatpush2.bf16.msra.mxu0 0
    %4633 = vmatprep.mubr.bf16.mxu0 0
    %4634 = vmatmul.mubr.bf16.gmra.mxu0 %v3498
    %v4635 = vpop.f32.mrf.mxu0
    %v4636 = vadd.f32 %v4475, %v4635
    %v4637 = vpop.f32.mrf.mxu0
    %v4638 = vpop.f32.mrf.mxu0
    %v4639 = vadd.f32 %v4478, %v4638
    %v4640 = vpop.f32.mrf.mxu0
    %4641 = vmatprep.mubr.bf16.mxu0 0
    %4642 = vmatmul.mubr.bf16.gmra.mxu0 %v3499
    %v4643 = vpop.f32.mrf.mxu0
    %v4644 = vadd.f32 %v4483, %v4643
    %v4645 = vpop.f32.mrf.mxu0
    %v4646 = vpop.f32.mrf.mxu0
    %v4647 = vadd.f32 %v4486, %v4646
    %v4648 = vpop.f32.mrf.mxu0
    %4649 = vmatprep.mubr.bf16.mxu0 0
    %4650 = vmatmul.mubr.bf16.gmra.mxu0 %v3500
    %v4651 = vpop.f32.mrf.mxu0
    %v4652 = vadd.f32 %v4491, %v4651
    %v4653 = vpop.f32.mrf.mxu0
    %v4654 = vpop.f32.mrf.mxu0
    %v4655 = vadd.f32 %v4494, %v4654
    %v4656 = vpop.f32.mrf.mxu0
    %4657 = vmatprep.mubr.bf16.mxu0 0
    %4658 = vmatmul.mubr.bf16.gmra.mxu0 %v3501
    %v4659 = vpop.f32.mrf.mxu0
    %v4660 = vadd.f32 %v4499, %v4659
    %v4661 = vpop.f32.mrf.mxu0
    %v4662 = vpop.f32.mrf.mxu0
    %v4663 = vadd.f32 %v4502, %v4662
    %v4664 = vpop.f32.mrf.mxu0
    %4665 = vmatprep.mubr.bf16.mxu0 0
    %4666 = vmatmul.mubr.bf16.gmra.mxu0 %v3502
    %v4667 = vpop.f32.mrf.mxu0
    %v4668 = vadd.f32 %v4507, %v4667
    %v4669 = vpop.f32.mrf.mxu0
    %v4670 = vpop.f32.mrf.mxu0
    %v4671 = vadd.f32 %v4510, %v4670
    %v4672 = vpop.f32.mrf.mxu0
    %4673 = vmatprep.mubr.bf16.mxu0 0
    %4674 = vmatmul.mubr.bf16.gmra.mxu0 %v3503
    %v4675 = vpop.f32.mrf.mxu0
    %v4676 = vadd.f32 %v4515, %v4675
    %v4677 = vpop.f32.mrf.mxu0
    %v4678 = vpop.f32.mrf.mxu0
    %v4679 = vadd.f32 %v4518, %v4678
    %v4680 = vpop.f32.mrf.mxu0
    %4681 = vmatprep.mubr.bf16.mxu0 0
    %4682 = vmatmul.mubr.bf16.gmra.mxu0 %v3504
    %v4683 = vpop.f32.mrf.mxu0
    %v4684 = vadd.f32 %v4523, %v4683
    %v4685 = vpop.f32.mrf.mxu0
    %v4686 = vpop.f32.mrf.mxu0
    %v4687 = vadd.f32 %v4526, %v4686
    %v4688 = vpop.f32.mrf.mxu0
    %4689 = vmatprep.mubr.bf16.mxu0 0
    %4690 = vmatmul.mubr.bf16.gmra.mxu0 %v3505
    %v4691 = vpop.f32.mrf.mxu0
    %v4692 = vadd.f32 %v4531, %v4691
    %v4693 = vpop.f32.mrf.mxu0
    %v4694 = vpop.f32.mrf.mxu0
    %v4695 = vadd.f32 %v4534, %v4694
    %v4696 = vpop.f32.mrf.mxu0
    %4697 = vmatprep.mubr.bf16.mxu0 0
    %4698 = vmatmul.mubr.bf16.gmra.mxu0 %v3506
    %v4699 = vpop.f32.mrf.mxu0
    %v4700 = vadd.f32 %v4539, %v4699
    %v4701 = vpop.f32.mrf.mxu0
    %v4702 = vpop.f32.mrf.mxu0
    %v4703 = vadd.f32 %v4542, %v4702
    %v4704 = vpop.f32.mrf.mxu0
    %4705 = vmatprep.mubr.bf16.mxu0 0
    %4706 = vmatmul.mubr.bf16.gmra.mxu0 %v3507
    %v4707 = vpop.f32.mrf.mxu0
    %v4708 = vadd.f32 %v4547, %v4707
    %v4709 = vpop.f32.mrf.mxu0
    %v4710 = vpop.f32.mrf.mxu0
    %v4711 = vadd.f32 %v4550, %v4710
    %v4712 = vpop.f32.mrf.mxu0
    %4713 = vmatprep.mubr.bf16.mxu0 0
    %4714 = vmatmul.mubr.bf16.gmra.mxu0 %v3508
    %v4715 = vpop.f32.mrf.mxu0
    %v4716 = vadd.f32 %v4555, %v4715
    %v4717 = vpop.f32.mrf.mxu0
    %v4718 = vpop.f32.mrf.mxu0
    %v4719 = vadd.f32 %v4558, %v4718
    %v4720 = vpop.f32.mrf.mxu0
    %4721 = vmatprep.mubr.bf16.mxu0 0
    %4722 = vmatmul.mubr.bf16.gmra.mxu0 %v3509
    %v4723 = vpop.f32.mrf.mxu0
    %v4724 = vadd.f32 %v4563, %v4723
    %v4725 = vpop.f32.mrf.mxu0
    %v4726 = vpop.f32.mrf.mxu0
    %v4727 = vadd.f32 %v4566, %v4726
    %v4728 = vpop.f32.mrf.mxu0
    %4729 = vmatprep.mubr.bf16.mxu0 0
    %4730 = vmatmul.mubr.bf16.gmra.mxu0 %v3510
    %v4731 = vpop.f32.mrf.mxu0
    %v4732 = vadd.f32 %v4571, %v4731
    %v4733 = vpop.f32.mrf.mxu0
    %v4734 = vpop.f32.mrf.mxu0
    %v4735 = vadd.f32 %v4574, %v4734
    %v4736 = vpop.f32.mrf.mxu0
    %4737 = vmatprep.mubr.bf16.mxu0 0
    %4738 = vmatmul.mubr.bf16.gmra.mxu0 %v3511
    %v4739 = vpop.f32.mrf.mxu0
    %v4740 = vadd.f32 %v4579, %v4739
    %v4741 = vpop.f32.mrf.mxu0
    %v4742 = vpop.f32.mrf.mxu0
    %v4743 = vadd.f32 %v4582, %v4742
    %v4744 = vpop.f32.mrf.mxu0
    %4745 = vmatprep.mubr.bf16.mxu0 0
    %4746 = vmatmul.mubr.bf16.gmra.mxu0 %v3524
    %v4747 = vpop.f32.mrf.mxu0
    %v4748 = vadd.f32 %v4587, %v4747
    %v4749 = vpop.f32.mrf.mxu0
    %v4750 = vpop.f32.mrf.mxu0
    %v4751 = vadd.f32 %v4590, %v4750
    %v4752 = vpop.f32.mrf.mxu0
    %4753 = vmatprep.mubr.bf16.mxu0 0
    %4754 = vmatmul.mubr.bf16.gmra.mxu0 %v1232
    %v4755 = vpop.f32.mrf.mxu0
    %v4756 = vadd.f32 %v4595, %v4755
    %v4757 = vpop.f32.mrf.mxu0
    %v4758 = vpop.f32.mrf.mxu0
    %v4759 = vadd.f32 %v4598, %v4758
    %v4760 = vpop.f32.mrf.mxu0
    %4761 = vdwg.mxu0
    %v4762 = vadd.f32 %v450, %v4636
    %v4763 = vadd.f32 %v451, %v4639
    %v4764 = vadd.f32 %v452, %v4644
    %v4765 = vadd.f32 %v453, %v4647
    %v4766 = vadd.f32 %v454, %v4652
    %v4767 = vadd.f32 %v455, %v4655
    %v4768 = vadd.f32 %v456, %v4660
    %v4769 = vadd.f32 %v457, %v4663
    %v4770 = vadd.f32 %v458, %v4668
    %v4771 = vadd.f32 %v459, %v4671
    %v4772 = vadd.f32 %v460, %v4676
    %v4773 = vadd.f32 %v461, %v4679
    %v4774 = vadd.f32 %v462, %v4684
    %v4775 = vadd.f32 %v463, %v4687
    %v4776 = vadd.f32 %v464, %v4692
    %v4777 = vadd.f32 %v465, %v4695
    %v4778 = vadd.f32 %v466, %v4700
    %v4779 = vadd.f32 %v467, %v4703
    %v4780 = vadd.f32 %v468, %v4708
    %v4781 = vadd.f32 %v469, %v4711
    %v4782 = vadd.f32 %v470, %v4716
    %v4783 = vadd.f32 %v471, %v4719
    %v4784 = vadd.f32 %v472, %v4724
    %v4785 = vadd.f32 %v473, %v4727
    %v4786 = vadd.f32 %v474, %v4732
    %v4787 = vadd.f32 %v475, %v4735
    %v4788 = vadd.f32 %v476, %v4740
    %v4789 = vadd.f32 %v477, %v4743
    %v4790 = vadd.f32 %v478, %v4748
    %v4791 = vadd.f32 %v479, %v4751
    %v4792 = vadd.f32 %v480, %v4756
    %v4793 = vadd.f32 %v481, %v4759
    %v4795 = vlaneseq
    %v4796 = vshrl.u32 %v4795, 7
    %v4797 = vsub.s32 0, %v4796
    %v4798 = vrot.slane %v449, %v4797
    %v4800 = vadd.f32 %v4762, %v4798
    %v4801 = vadd.f32 %v4763, %v4798
    %v4802 = vadd.f32 %v4764, %v4798
    %v4803 = vadd.f32 %v4765, %v4798
    %v4804 = vadd.f32 %v4766, %v4798
    %v4805 = vadd.f32 %v4767, %v4798
    %v4806 = vadd.f32 %v4768, %v4798
    %v4807 = vadd.f32 %v4769, %v4798
    %v4808 = vadd.f32 %v4770, %v4798
    %v4809 = vadd.f32 %v4771, %v4798
    %v4810 = vadd.f32 %v4772, %v4798
    %v4811 = vadd.f32 %v4773, %v4798
    %v4812 = vadd.f32 %v4774, %v4798
    %v4813 = vadd.f32 %v4775, %v4798
    %v4814 = vadd.f32 %v4776, %v4798
    %v4815 = vadd.f32 %v4777, %v4798
    %v4816 = vadd.f32 %v4778, %v4798
    %v4817 = vadd.f32 %v4779, %v4798
    %v4818 = vadd.f32 %v4780, %v4798
    %v4819 = vadd.f32 %v4781, %v4798
    %v4820 = vadd.f32 %v4782, %v4798
    %v4821 = vadd.f32 %v4783, %v4798
    %v4822 = vadd.f32 %v4784, %v4798
    %v4823 = vadd.f32 %v4785, %v4798
    %v4824 = vadd.f32 %v4786, %v4798
    %v4825 = vadd.f32 %v4787, %v4798
    %v4826 = vadd.f32 %v4788, %v4798
    %v4827 = vadd.f32 %v4789, %v4798
    %v4828 = vadd.f32 %v4790, %v4798
    %v4829 = vadd.f32 %v4791, %v4798
    %v4830 = vadd.f32 %v4792, %v4798
    %v4831 = vadd.f32 %v4793, %v4798
    %4832 = vst [vmem:[#allocation13] sm:$0xff] %v4800
    %4833 = vst [vmem:[#allocation13 + $0x8] sm:$0xff] %v4801
    %4834 = vst [vmem:[#allocation13 + $0x10] sm:$0xff] %v4802
    %4835 = vst [vmem:[#allocation13 + $0x18] sm:$0xff] %v4803
    %4836 = vst [vmem:[#allocation13 + $0x20] sm:$0xff] %v4804
    %4837 = vst [vmem:[#allocation13 + $0x28] sm:$0xff] %v4805
    %4838 = vst [vmem:[#allocation13 + $0x30] sm:$0xff] %v4806
    %4839 = vst [vmem:[#allocation13 + $0x38] sm:$0xff] %v4807
    %4840 = vst [vmem:[#allocation13 + $0x40] sm:$0xff] %v4808
    %4841 = vst [vmem:[#allocation13 + $0x48] sm:$0xff] %v4809
    %4842 = vst [vmem:[#allocation13 + $0x50] sm:$0xff] %v4810
    %4843 = vst [vmem:[#allocation13 + $0x58] sm:$0xff] %v4811
    %4844 = vst [vmem:[#allocation13 + $0x60] sm:$0xff] %v4812
    %4845 = vst [vmem:[#allocation13 + $0x68] sm:$0xff] %v4813
    %4846 = vst [vmem:[#allocation13 + $0x70] sm:$0xff] %v4814
    %4847 = vst [vmem:[#allocation13 + $0x78] sm:$0xff] %v4815
    %4848 = vst [vmem:[#allocation13 + $0x80] sm:$0xff] %v4816
    %4849 = vst [vmem:[#allocation13 + $0x88] sm:$0xff] %v4817
    %4850 = vst [vmem:[#allocation13 + $0x90] sm:$0xff] %v4818
    %4851 = vst [vmem:[#allocation13 + $0x98] sm:$0xff] %v4819
    %4852 = vst [vmem:[#allocation13 + $0xa0] sm:$0xff] %v4820
    %4853 = vst [vmem:[#allocation13 + $0xa8] sm:$0xff] %v4821
    %4854 = vst [vmem:[#allocation13 + $0xb0] sm:$0xff] %v4822
    %4855 = vst [vmem:[#allocation13 + $0xb8] sm:$0xff] %v4823
    %4856 = vst [vmem:[#allocation13 + $0xc0] sm:$0xff] %v4824
    %4857 = vst [vmem:[#allocation13 + $0xc8] sm:$0xff] %v4825
    %4858 = vst [vmem:[#allocation13 + $0xd0] sm:$0xff] %v4826
    %4859 = vst [vmem:[#allocation13 + $0xd8] sm:$0xff] %v4827
    %4860 = vst [vmem:[#allocation13 + $0xe0] sm:$0xff] %v4828
    %4861 = vst [vmem:[#allocation13 + $0xe8] sm:$0xff] %v4829
    %4862 = vst [vmem:[#allocation13 + $0xf0] sm:$0xff] %v4830
    %4863 = vst [vmem:[#allocation13 + $0xf8] sm:$0xff] %v4831
    %s4864 = scalar_lea.vmem [#allocation2], 256
    %v4865 = vld [vmem:[%s4864] sm:$0xff]
    %v4866 = vld [vmem:[%s4864 + $0x8] sm:$0xff]
    %v4867 = vld [vmem:[%s4864 + $0x10] sm:$0xff]
    %v4868 = vld [vmem:[%s4864 + $0x18] sm:$0xff]
    %v4869 = vld [vmem:[%s4864 + $0x20] sm:$0xff]
    %v4870 = vld [vmem:[%s4864 + $0x28] sm:$0xff]
    %v4871 = vld [vmem:[%s4864 + $0x30] sm:$0xff]
    %v4872 = vld [vmem:[%s4864 + $0x38] sm:$0xff]
    %v4873 = vld [vmem:[%s4864 + $0x40] sm:$0xff]
    %v4874 = vld [vmem:[%s4864 + $0x48] sm:$0xff]
    %v4875 = vld [vmem:[%s4864 + $0x50] sm:$0xff]
    %v4876 = vld [vmem:[%s4864 + $0x58] sm:$0xff]
    %v4877 = vld [vmem:[%s4864 + $0x60] sm:$0xff]
    %v4878 = vld [vmem:[%s4864 + $0x68] sm:$0xff]
    %v4879 = vld [vmem:[%s4864 + $0x70] sm:$0xff]
    %v4880 = vld [vmem:[%s4864 + $0x78] sm:$0xff]
    %v4881 = vld [vmem:[%s4864 + $0x80] sm:$0xff]
    %v4882 = vld [vmem:[%s4864 + $0x88] sm:$0xff]
    %v4883 = vld [vmem:[%s4864 + $0x90] sm:$0xff]
    %v4884 = vld [vmem:[%s4864 + $0x98] sm:$0xff]
    %v4885 = vld [vmem:[%s4864 + $0xa0] sm:$0xff]
    %v4886 = vld [vmem:[%s4864 + $0xa8] sm:$0xff]
    %v4887 = vld [vmem:[%s4864 + $0xb0] sm:$0xff]
    %v4888 = vld [vmem:[%s4864 + $0xb8] sm:$0xff]
    %v4889 = vld [vmem:[%s4864 + $0xc0] sm:$0xff]
    %v4890 = vld [vmem:[%s4864 + $0xc8] sm:$0xff]
    %v4891 = vld [vmem:[%s4864 + $0xd0] sm:$0xff]
    %v4892 = vld [vmem:[%s4864 + $0xd8] sm:$0xff]
    %v4893 = vld [vmem:[%s4864 + $0xe0] sm:$0xff]
    %v4894 = vld [vmem:[%s4864 + $0xe8] sm:$0xff]
    %v4895 = vld [vmem:[%s4864 + $0xf0] sm:$0xff]
    %v4896 = vld [vmem:[%s4864 + $0xf8] sm:$0xff]
    %4897 = vmatprep.subr.mxu0 0.0
    %4898 = vmatpush1.msra.mxu0 %v4880
    %4899 = vmatprep.subr.mxu0 0.0
    %4900 = vmatpush1.msra.mxu0 %v4879
    %4901 = vmatprep.subr.mxu0 0.0
    %4902 = vmatpush1.msra.mxu0 %v4878
    %4903 = vmatprep.subr.mxu0 0.0
    %4904 = vmatpush1.msra.mxu0 %v4877
    %4905 = vmatprep.subr.mxu0 0.0
    %4906 = vmatpush1.msra.mxu0 %v4876
    %4907 = vmatprep.subr.mxu0 0.0
    %4908 = vmatpush1.msra.mxu0 %v4875
    %4909 = vmatprep.subr.mxu0 0.0
    %4910 = vmatpush1.msra.mxu0 %v4874
    %4911 = vmatprep.subr.mxu0 0.0
    %4912 = vmatpush1.msra.mxu0 %v4873
    %4913 = vmatprep.subr.mxu0 0.0
    %4914 = vmatpush1.msra.mxu0 %v4872
    %4915 = vmatprep.subr.mxu0 0.0
    %4916 = vmatpush1.msra.mxu0 %v4871
    %4917 = vmatprep.subr.mxu0 0.0
    %4918 = vmatpush1.msra.mxu0 %v4870
    %4919 = vmatprep.subr.mxu0 0.0
    %4920 = vmatpush1.msra.mxu0 %v4869
    %4921 = vmatprep.subr.mxu0 0.0
    %4922 = vmatpush1.msra.mxu0 %v4868
    %4923 = vmatprep.subr.mxu0 0.0
    %4924 = vmatpush1.msra.mxu0 %v4867
    %4925 = vmatprep.subr.mxu0 0.0
    %4926 = vmatpush1.msra.mxu0 %v4866
    %4927 = vmatprep.subr.mxu0 0.0
    %4928 = vmatpush1.msra.mxu0 %v4865
    %4929 = vmatprep.subr.mxu0 0.0
    %4930 = vmatpush2.msra.mxu0 %v4896
    %4931 = vmatprep.subr.mxu0 0.0
    %4932 = vmatpush2.msra.mxu0 %v4895
    %4933 = vmatprep.subr.mxu0 0.0
    %4934 = vmatpush2.msra.mxu0 %v4894
    %4935 = vmatprep.subr.mxu0 0.0
    %4936 = vmatpush2.msra.mxu0 %v4893
    %4937 = vmatprep.subr.mxu0 0.0
    %4938 = vmatpush2.msra.mxu0 %v4892
    %4939 = vmatprep.subr.mxu0 0.0
    %4940 = vmatpush2.msra.mxu0 %v4891
    %4941 = vmatprep.subr.mxu0 0.0
    %4942 = vmatpush2.msra.mxu0 %v4890
    %4943 = vmatprep.subr.mxu0 0.0
    %4944 = vmatpush2.msra.mxu0 %v4889
    %4945 = vmatprep.subr.mxu0 0.0
    %4946 = vmatpush2.msra.mxu0 %v4888
    %4947 = vmatprep.subr.mxu0 0.0
    %4948 = vmatpush2.msra.mxu0 %v4887
    %4949 = vmatprep.subr.mxu0 0.0
    %4950 = vmatpush2.msra.mxu0 %v4886
    %4951 = vmatprep.subr.mxu0 0.0
    %4952 = vmatpush2.msra.mxu0 %v4885
    %4953 = vmatprep.subr.mxu0 0.0
    %4954 = vmatpush2.msra.mxu0 %v4884
    %4955 = vmatprep.subr.mxu0 0.0
    %4956 = vmatpush2.msra.mxu0 %v4883
    %4957 = vmatprep.subr.mxu0 0.0
    %4958 = vmatpush2.msra.mxu0 %v4882
    %4959 = vmatprep.subr.mxu0 0.0
    %4960 = vmatpush2.msra.mxu0 %v4881
    %4961 = vmatprep.mubr.f32.mxu0 0.00390625
    %4962 = vmatmul.mubr.f32.gmra.mxu0 0.00390625
    %v4963 = vpop.f32.mrf.mxu0
    %v4964 = vadd.f32 0.0, %v4963
    %v4965 = vpop.f32.mrf.mxu0
    %4966 = vdwg.mxu0
    %v4967 = vmul.f32 %v4865, %v4865
    %v4968 = vmul.f32 %v4866, %v4866
    %v4969 = vmul.f32 %v4867, %v4867
    %v4970 = vmul.f32 %v4868, %v4868
    %v4971 = vmul.f32 %v4869, %v4869
    %v4972 = vmul.f32 %v4870, %v4870
    %v4973 = vmul.f32 %v4871, %v4871
    %v4974 = vmul.f32 %v4872, %v4872
    %v4975 = vmul.f32 %v4873, %v4873
    %v4976 = vmul.f32 %v4874, %v4874
    %v4977 = vmul.f32 %v4875, %v4875
    %v4978 = vmul.f32 %v4876, %v4876
    %v4979 = vmul.f32 %v4877, %v4877
    %v4980 = vmul.f32 %v4878, %v4878
    %v4981 = vmul.f32 %v4879, %v4879
    %v4982 = vmul.f32 %v4880, %v4880
    %v4983 = vmul.f32 %v4881, %v4881
    %v4984 = vmul.f32 %v4882, %v4882
    %v4985 = vmul.f32 %v4883, %v4883
    %v4986 = vmul.f32 %v4884, %v4884
    %v4987 = vmul.f32 %v4885, %v4885
    %v4988 = vmul.f32 %v4886, %v4886
    %v4989 = vmul.f32 %v4887, %v4887
    %v4990 = vmul.f32 %v4888, %v4888
    %v4991 = vmul.f32 %v4889, %v4889
    %v4992 = vmul.f32 %v4890, %v4890
    %v4993 = vmul.f32 %v4891, %v4891
    %v4994 = vmul.f32 %v4892, %v4892
    %v4995 = vmul.f32 %v4893, %v4893
    %v4996 = vmul.f32 %v4894, %v4894
    %v4997 = vmul.f32 %v4895, %v4895
    %v4998 = vmul.f32 %v4896, %v4896
    %4999 = vmatprep.subr.mxu0 0.0
    %5000 = vmatpush1.msra.mxu0 %v4982
    %5001 = vmatprep.subr.mxu0 0.0
    %5002 = vmatpush1.msra.mxu0 %v4981
    %5003 = vmatprep.subr.mxu0 0.0
    %5004 = vmatpush1.msra.mxu0 %v4980
    %5005 = vmatprep.subr.mxu0 0.0
    %5006 = vmatpush1.msra.mxu0 %v4979
    %5007 = vmatprep.subr.mxu0 0.0
    %5008 = vmatpush1.msra.mxu0 %v4978
    %5009 = vmatprep.subr.mxu0 0.0
    %5010 = vmatpush1.msra.mxu0 %v4977
    %5011 = vmatprep.subr.mxu0 0.0
    %5012 = vmatpush1.msra.mxu0 %v4976
    %5013 = vmatprep.subr.mxu0 0.0
    %5014 = vmatpush1.msra.mxu0 %v4975
    %5015 = vmatprep.subr.mxu0 0.0
    %5016 = vmatpush1.msra.mxu0 %v4974
    %5017 = vmatprep.subr.mxu0 0.0
    %5018 = vmatpush1.msra.mxu0 %v4973
    %5019 = vmatprep.subr.mxu0 0.0
    %5020 = vmatpush1.msra.mxu0 %v4972
    %5021 = vmatprep.subr.mxu0 0.0
    %5022 = vmatpush1.msra.mxu0 %v4971
    %5023 = vmatprep.subr.mxu0 0.0
    %5024 = vmatpush1.msra.mxu0 %v4970
    %5025 = vmatprep.subr.mxu0 0.0
    %5026 = vmatpush1.msra.mxu0 %v4969
    %5027 = vmatprep.subr.mxu0 0.0
    %5028 = vmatpush1.msra.mxu0 %v4968
    %5029 = vmatprep.subr.mxu0 0.0
    %5030 = vmatpush1.msra.mxu0 %v4967
    %5031 = vmatprep.subr.mxu0 0.0
    %5032 = vmatpush2.msra.mxu0 %v4998
    %5033 = vmatprep.subr.mxu0 0.0
    %5034 = vmatpush2.msra.mxu0 %v4997
    %5035 = vmatprep.subr.mxu0 0.0
    %5036 = vmatpush2.msra.mxu0 %v4996
    %5037 = vmatprep.subr.mxu0 0.0
    %5038 = vmatpush2.msra.mxu0 %v4995
    %5039 = vmatprep.subr.mxu0 0.0
    %5040 = vmatpush2.msra.mxu0 %v4994
    %5041 = vmatprep.subr.mxu0 0.0
    %5042 = vmatpush2.msra.mxu0 %v4993
    %5043 = vmatprep.subr.mxu0 0.0
    %5044 = vmatpush2.msra.mxu0 %v4992
    %5045 = vmatprep.subr.mxu0 0.0
    %5046 = vmatpush2.msra.mxu0 %v4991
    %5047 = vmatprep.subr.mxu0 0.0
    %5048 = vmatpush2.msra.mxu0 %v4990
    %5049 = vmatprep.subr.mxu0 0.0
    %5050 = vmatpush2.msra.mxu0 %v4989
    %5051 = vmatprep.subr.mxu0 0.0
    %5052 = vmatpush2.msra.mxu0 %v4988
    %5053 = vmatprep.subr.mxu0 0.0
    %5054 = vmatpush2.msra.mxu0 %v4987
    %5055 = vmatprep.subr.mxu0 0.0
    %5056 = vmatpush2.msra.mxu0 %v4986
    %5057 = vmatprep.subr.mxu0 0.0
    %5058 = vmatpush2.msra.mxu0 %v4985
    %5059 = vmatprep.subr.mxu0 0.0
    %5060 = vmatpush2.msra.mxu0 %v4984
    %5061 = vmatprep.subr.mxu0 0.0
    %5062 = vmatpush2.msra.mxu0 %v4983
    %5063 = vmatprep.mubr.f32.mxu0 0.00390625
    %5064 = vmatmul.mubr.f32.gmra.mxu0 0.00390625
    %v5065 = vpop.f32.mrf.mxu0
    %v5066 = vadd.f32 0.0, %v5065
    %v5067 = vpop.f32.mrf.mxu0
    %5068 = vdwg.mxu0
    %5069 = vmatprep.subr.mxu0 0.0
    %5070 = vmatpush1.msra.mxu0 %v144
    %5071 = vmatprep.subr.mxu0 0.0
    %5072 = vmatpush1.msra.mxu0 %v143
    %5073 = vmatprep.subr.mxu0 0.0
    %5074 = vmatpush1.msra.mxu0 %v142
    %5075 = vmatprep.subr.mxu0 0.0
    %5076 = vmatpush1.msra.mxu0 %v141
    %5077 = vmatprep.subr.mxu0 0.0
    %5078 = vmatpush1.msra.mxu0 %v140
    %5079 = vmatprep.subr.mxu0 0.0
    %5080 = vmatpush1.msra.mxu0 %v139
    %5081 = vmatprep.subr.mxu0 0.0
    %5082 = vmatpush1.msra.mxu0 %v138
    %5083 = vmatprep.subr.mxu0 0.0
    %5084 = vmatpush1.msra.mxu0 %v137
    %5085 = vmatprep.subr.mxu0 0.0
    %5086 = vmatpush1.msra.mxu0 %v136
    %5087 = vmatprep.subr.mxu0 0.0
    %5088 = vmatpush1.msra.mxu0 %v135
    %5089 = vmatprep.subr.mxu0 0.0
    %5090 = vmatpush1.msra.mxu0 %v134
    %5091 = vmatprep.subr.mxu0 0.0
    %5092 = vmatpush1.msra.mxu0 %v133
    %5093 = vmatprep.subr.mxu0 0.0
    %5094 = vmatpush1.msra.mxu0 %v132
    %5095 = vmatprep.subr.mxu0 0.0
    %5096 = vmatpush1.msra.mxu0 %v131
    %5097 = vmatprep.subr.mxu0 0.0
    %5098 = vmatpush1.msra.mxu0 %v130
    %5099 = vmatprep.subr.mxu0 0.0
    %5100 = vmatpush1.msra.mxu0 %v129
    %5101 = vmatprep.subr.mxu0 0.0
    %5102 = vmatpush2.msra.mxu0 0.0
    %5103 = vmatprep.subr.mxu0 0.0
    %5104 = vmatpush2.msra.mxu0 0.0
    %5105 = vmatprep.subr.mxu0 0.0
    %5106 = vmatpush2.msra.mxu0 0.0
    %5107 = vmatprep.subr.mxu0 0.0
    %5108 = vmatpush2.msra.mxu0 0.0
    %5109 = vmatprep.subr.mxu0 0.0
    %5110 = vmatpush2.msra.mxu0 0.0
    %5111 = vmatprep.subr.mxu0 0.0
    %5112 = vmatpush2.msra.mxu0 0.0
    %5113 = vmatprep.subr.mxu0 0.0
    %5114 = vmatpush2.msra.mxu0 0.0
    %5115 = vmatprep.subr.mxu0 0.0
    %5116 = vmatpush2.msra.mxu0 0.0
    %5117 = vmatprep.subr.mxu0 0.0
    %5118 = vmatpush2.msra.mxu0 0.0
    %5119 = vmatprep.subr.mxu0 0.0
    %5120 = vmatpush2.msra.mxu0 0.0
    %5121 = vmatprep.subr.mxu0 0.0
    %5122 = vmatpush2.msra.mxu0 0.0
    %5123 = vmatprep.subr.mxu0 0.0
    %5124 = vmatpush2.msra.mxu0 0.0
    %5125 = vmatprep.subr.mxu0 0.0
    %5126 = vmatpush2.msra.mxu0 0.0
    %5127 = vmatprep.subr.mxu0 0.0
    %5128 = vmatpush2.msra.mxu0 0.0
    %5129 = vmatprep.subr.mxu0 0.0
    %5130 = vmatpush2.msra.mxu0 0.0
    %5131 = vmatprep.subr.mxu0 0.0
    %5132 = vmatpush2.msra.mxu0 0.0
    %5133 = vmatprep.mubr.f32.mxu0 0.0
    %5134 = vmatmul.mubr.f32.gmra.mxu0 %v4964
    %v5135 = vpop.f32.mrf.mxu0
    %v5136 = vadd.f32 0.0, %v5135
    %v5137 = vpop.f32.mrf.mxu0
    %5138 = vdwg.mxu0
    %5139 = vmatprep.subr.mxu0 0.0
    %5140 = vmatpush1.msra.mxu0 %v144
    %5141 = vmatprep.subr.mxu0 0.0
    %5142 = vmatpush1.msra.mxu0 %v143
    %5143 = vmatprep.subr.mxu0 0.0
    %5144 = vmatpush1.msra.mxu0 %v142
    %5145 = vmatprep.subr.mxu0 0.0
    %5146 = vmatpush1.msra.mxu0 %v141
    %5147 = vmatprep.subr.mxu0 0.0
    %5148 = vmatpush1.msra.mxu0 %v140
    %5149 = vmatprep.subr.mxu0 0.0
    %5150 = vmatpush1.msra.mxu0 %v139
    %5151 = vmatprep.subr.mxu0 0.0
    %5152 = vmatpush1.msra.mxu0 %v138
    %5153 = vmatprep.subr.mxu0 0.0
    %5154 = vmatpush1.msra.mxu0 %v137
    %5155 = vmatprep.subr.mxu0 0.0
    %5156 = vmatpush1.msra.mxu0 %v136
    %5157 = vmatprep.subr.mxu0 0.0
    %5158 = vmatpush1.msra.mxu0 %v135
    %5159 = vmatprep.subr.mxu0 0.0
    %5160 = vmatpush1.msra.mxu0 %v134
    %5161 = vmatprep.subr.mxu0 0.0
    %5162 = vmatpush1.msra.mxu0 %v133
    %5163 = vmatprep.subr.mxu0 0.0
    %5164 = vmatpush1.msra.mxu0 %v132
    %5165 = vmatprep.subr.mxu0 0.0
    %5166 = vmatpush1.msra.mxu0 %v131
    %5167 = vmatprep.subr.mxu0 0.0
    %5168 = vmatpush1.msra.mxu0 %v130
    %5169 = vmatprep.subr.mxu0 0.0
    %5170 = vmatpush1.msra.mxu0 %v129
    %5171 = vmatprep.subr.mxu0 0.0
    %5172 = vmatpush2.msra.mxu0 0.0
    %5173 = vmatprep.subr.mxu0 0.0
    %5174 = vmatpush2.msra.mxu0 0.0
    %5175 = vmatprep.subr.mxu0 0.0
    %5176 = vmatpush2.msra.mxu0 0.0
    %5177 = vmatprep.subr.mxu0 0.0
    %5178 = vmatpush2.msra.mxu0 0.0
    %5179 = vmatprep.subr.mxu0 0.0
    %5180 = vmatpush2.msra.mxu0 0.0
    %5181 = vmatprep.subr.mxu0 0.0
    %5182 = vmatpush2.msra.mxu0 0.0
    %5183 = vmatprep.subr.mxu0 0.0
    %5184 = vmatpush2.msra.mxu0 0.0
    %5185 = vmatprep.subr.mxu0 0.0
    %5186 = vmatpush2.msra.mxu0 0.0
    %5187 = vmatprep.subr.mxu0 0.0
    %5188 = vmatpush2.msra.mxu0 0.0
    %5189 = vmatprep.subr.mxu0 0.0
    %5190 = vmatpush2.msra.mxu0 0.0
    %5191 = vmatprep.subr.mxu0 0.0
    %5192 = vmatpush2.msra.mxu0 0.0
    %5193 = vmatprep.subr.mxu0 0.0
    %5194 = vmatpush2.msra.mxu0 0.0
    %5195 = vmatprep.subr.mxu0 0.0
    %5196 = vmatpush2.msra.mxu0 0.0
    %5197 = vmatprep.subr.mxu0 0.0
    %5198 = vmatpush2.msra.mxu0 0.0
    %5199 = vmatprep.subr.mxu0 0.0
    %5200 = vmatpush2.msra.mxu0 0.0
    %5201 = vmatprep.subr.mxu0 0.0
    %5202 = vmatpush2.msra.mxu0 0.0
    %5203 = vmatprep.mubr.f32.mxu0 0.0
    %5204 = vmatmul.mubr.f32.gmra.mxu0 %v5066
    %v5205 = vpop.f32.mrf.mxu0
    %v5206 = vadd.f32 0.0, %v5205
    %v5207 = vpop.f32.mrf.mxu0
    %5208 = vdwg.mxu0
    %v5209 = vmul.f32 %v5136, %v5136
    %v5210 = vsub.f32 %v5206, %v5209
    %v5211 = vadd.f32 %v5210, 1e-05
    %v5212 = vrsqrt.pop %v5211
    %v5213 = vlaneseq
    %v5214 = vshrl.u32 %v5213, 7
    %v5215 = vsub.s32 0, %v5214
    %v5216 = vrot.slane %v5136, %v5215
    %v5217 = vsub.f32 %v4865, %v5216
    %v5218 = vsub.f32 %v4866, %v5216
    %v5219 = vsub.f32 %v4867, %v5216
    %v5220 = vsub.f32 %v4868, %v5216
    %v5221 = vsub.f32 %v4869, %v5216
    %v5222 = vsub.f32 %v4870, %v5216
    %v5223 = vsub.f32 %v4871, %v5216
    %v5224 = vsub.f32 %v4872, %v5216
    %v5225 = vsub.f32 %v4873, %v5216
    %v5226 = vsub.f32 %v4874, %v5216
    %v5227 = vsub.f32 %v4875, %v5216
    %v5228 = vsub.f32 %v4876, %v5216
    %v5229 = vsub.f32 %v4877, %v5216
    %v5230 = vsub.f32 %v4878, %v5216
    %v5231 = vsub.f32 %v4879, %v5216
    %v5232 = vsub.f32 %v4880, %v5216
    %v5233 = vsub.f32 %v4881, %v5216
    %v5234 = vsub.f32 %v4882, %v5216
    %v5235 = vsub.f32 %v4883, %v5216
    %v5236 = vsub.f32 %v4884, %v5216
    %v5237 = vsub.f32 %v4885, %v5216
    %v5238 = vsub.f32 %v4886, %v5216
    %v5239 = vsub.f32 %v4887, %v5216
    %v5240 = vsub.f32 %v4888, %v5216
    %v5241 = vsub.f32 %v4889, %v5216
    %v5242 = vsub.f32 %v4890, %v5216
    %v5243 = vsub.f32 %v4891, %v5216
    %v5244 = vsub.f32 %v4892, %v5216
    %v5245 = vsub.f32 %v4893, %v5216
    %v5246 = vsub.f32 %v4894, %v5216
    %v5247 = vsub.f32 %v4895, %v5216
    %v5248 = vsub.f32 %v4896, %v5216
    %v5249 = vlaneseq
    %v5250 = vshrl.u32 %v5249, 7
    %v5251 = vsub.s32 0, %v5250
    %v5252 = vrot.slane %v5212, %v5251
    %v5253 = vmul.f32 %v5217, %v5252
    %v5254 = vmul.f32 %v5218, %v5252
    %v5255 = vmul.f32 %v5219, %v5252
    %v5256 = vmul.f32 %v5220, %v5252
    %v5257 = vmul.f32 %v5221, %v5252
    %v5258 = vmul.f32 %v5222, %v5252
    %v5259 = vmul.f32 %v5223, %v5252
    %v5260 = vmul.f32 %v5224, %v5252
    %v5261 = vmul.f32 %v5225, %v5252
    %v5262 = vmul.f32 %v5226, %v5252
    %v5263 = vmul.f32 %v5227, %v5252
    %v5264 = vmul.f32 %v5228, %v5252
    %v5265 = vmul.f32 %v5229, %v5252
    %v5266 = vmul.f32 %v5230, %v5252
    %v5267 = vmul.f32 %v5231, %v5252
    %v5268 = vmul.f32 %v5232, %v5252
    %v5269 = vmul.f32 %v5233, %v5252
    %v5270 = vmul.f32 %v5234, %v5252
    %v5271 = vmul.f32 %v5235, %v5252
    %v5272 = vmul.f32 %v5236, %v5252
    %v5273 = vmul.f32 %v5237, %v5252
    %v5274 = vmul.f32 %v5238, %v5252
    %v5275 = vmul.f32 %v5239, %v5252
    %v5276 = vmul.f32 %v5240, %v5252
    %v5277 = vmul.f32 %v5241, %v5252
    %v5278 = vmul.f32 %v5242, %v5252
    %v5279 = vmul.f32 %v5243, %v5252
    %v5280 = vmul.f32 %v5244, %v5252
    %v5281 = vmul.f32 %v5245, %v5252
    %v5282 = vmul.f32 %v5246, %v5252
    %v5283 = vmul.f32 %v5247, %v5252
    %v5284 = vmul.f32 %v5248, %v5252
    %v5285 = vmul.f32 %v5253, %v874
    %v5286 = vmul.f32 %v5254, %v874
    %v5287 = vmul.f32 %v5255, %v874
    %v5288 = vmul.f32 %v5256, %v874
    %v5289 = vmul.f32 %v5257, %v874
    %v5290 = vmul.f32 %v5258, %v874
    %v5291 = vmul.f32 %v5259, %v874
    %v5292 = vmul.f32 %v5260, %v874
    %v5293 = vmul.f32 %v5261, %v874
    %v5294 = vmul.f32 %v5262, %v874
    %v5295 = vmul.f32 %v5263, %v874
    %v5296 = vmul.f32 %v5264, %v874
    %v5297 = vmul.f32 %v5265, %v874
    %v5298 = vmul.f32 %v5266, %v874
    %v5299 = vmul.f32 %v5267, %v874
    %v5300 = vmul.f32 %v5268, %v874
    %v5301 = vmul.f32 %v5269, %v874
    %v5302 = vmul.f32 %v5270, %v874
    %v5303 = vmul.f32 %v5271, %v874
    %v5304 = vmul.f32 %v5272, %v874
    %v5305 = vmul.f32 %v5273, %v874
    %v5306 = vmul.f32 %v5274, %v874
    %v5307 = vmul.f32 %v5275, %v874
    %v5308 = vmul.f32 %v5276, %v874
    %v5309 = vmul.f32 %v5277, %v874
    %v5310 = vmul.f32 %v5278, %v874
    %v5311 = vmul.f32 %v5279, %v874
    %v5312 = vmul.f32 %v5280, %v874
    %v5313 = vmul.f32 %v5281, %v874
    %v5314 = vmul.f32 %v5282, %v874
    %v5315 = vmul.f32 %v5283, %v874
    %v5316 = vmul.f32 %v5284, %v874
    %v5317 = vadd.f32 %v5285, %v912
    %v5318 = vadd.f32 %v5286, %v912
    %v5319 = vadd.f32 %v5287, %v912
    %v5320 = vadd.f32 %v5288, %v912
    %v5321 = vadd.f32 %v5289, %v912
    %v5322 = vadd.f32 %v5290, %v912
    %v5323 = vadd.f32 %v5291, %v912
    %v5324 = vadd.f32 %v5292, %v912
    %v5325 = vadd.f32 %v5293, %v912
    %v5326 = vadd.f32 %v5294, %v912
    %v5327 = vadd.f32 %v5295, %v912
    %v5328 = vadd.f32 %v5296, %v912
    %v5329 = vadd.f32 %v5297, %v912
    %v5330 = vadd.f32 %v5298, %v912
    %v5331 = vadd.f32 %v5299, %v912
    %v5332 = vadd.f32 %v5300, %v912
    %v5333 = vadd.f32 %v5301, %v912
    %v5334 = vadd.f32 %v5302, %v912
    %v5335 = vadd.f32 %v5303, %v912
    %v5336 = vadd.f32 %v5304, %v912
    %v5337 = vadd.f32 %v5305, %v912
    %v5338 = vadd.f32 %v5306, %v912
    %v5339 = vadd.f32 %v5307, %v912
    %v5340 = vadd.f32 %v5308, %v912
    %v5341 = vadd.f32 %v5309, %v912
    %v5342 = vadd.f32 %v5310, %v912
    %v5343 = vadd.f32 %v5311, %v912
    %v5344 = vadd.f32 %v5312, %v912
    %v5345 = vadd.f32 %v5313, %v912
    %v5346 = vadd.f32 %v5314, %v912
    %v5347 = vadd.f32 %v5315, %v912
    %v5348 = vadd.f32 %v5316, %v912
    %v5349 = vsub.f32 0.0, %v5317
    %v5350 = vsub.f32 0.0, %v5318
    %v5351 = vsub.f32 0.0, %v5319
    %v5352 = vsub.f32 0.0, %v5320
    %v5353 = vsub.f32 0.0, %v5321
    %v5354 = vsub.f32 0.0, %v5322
    %v5355 = vsub.f32 0.0, %v5323
    %v5356 = vsub.f32 0.0, %v5324
    %v5357 = vsub.f32 0.0, %v5325
    %v5358 = vsub.f32 0.0, %v5326
    %v5359 = vsub.f32 0.0, %v5327
    %v5360 = vsub.f32 0.0, %v5328
    %v5361 = vsub.f32 0.0, %v5329
    %v5362 = vsub.f32 0.0, %v5330
    %v5363 = vsub.f32 0.0, %v5331
    %v5364 = vsub.f32 0.0, %v5332
    %v5365 = vsub.f32 0.0, %v5333
    %v5366 = vsub.f32 0.0, %v5334
    %v5367 = vsub.f32 0.0, %v5335
    %v5368 = vsub.f32 0.0, %v5336
    %v5369 = vsub.f32 0.0, %v5337
    %v5370 = vsub.f32 0.0, %v5338
    %v5371 = vsub.f32 0.0, %v5339
    %v5372 = vsub.f32 0.0, %v5340
    %v5373 = vsub.f32 0.0, %v5341
    %v5374 = vsub.f32 0.0, %v5342
    %v5375 = vsub.f32 0.0, %v5343
    %v5376 = vsub.f32 0.0, %v5344
    %v5377 = vsub.f32 0.0, %v5345
    %v5378 = vsub.f32 0.0, %v5346
    %v5379 = vsub.f32 0.0, %v5347
    %v5380 = vsub.f32 0.0, %v5348
    %v5381 = vmul.f32 %v5349, 1.442695
    %v5382 = vpow.pop %v5381
    %v5383 = vmul.f32 %v5350, 1.442695
    %v5384 = vpow.pop %v5383
    %v5385 = vmul.f32 %v5351, 1.442695
    %v5386 = vpow.pop %v5385
    %v5387 = vmul.f32 %v5352, 1.442695
    %v5388 = vpow.pop %v5387
    %v5389 = vmul.f32 %v5353, 1.442695
    %v5390 = vpow.pop %v5389
    %v5391 = vmul.f32 %v5354, 1.442695
    %v5392 = vpow.pop %v5391
    %v5393 = vmul.f32 %v5355, 1.442695
    %v5394 = vpow.pop %v5393
    %v5395 = vmul.f32 %v5356, 1.442695
    %v5396 = vpow.pop %v5395
    %v5397 = vmul.f32 %v5357, 1.442695
    %v5398 = vpow.pop %v5397
    %v5399 = vmul.f32 %v5358, 1.442695
    %v5400 = vpow.pop %v5399
    %v5401 = vmul.f32 %v5359, 1.442695
    %v5402 = vpow.pop %v5401
    %v5403 = vmul.f32 %v5360, 1.442695
    %v5404 = vpow.pop %v5403
    %v5405 = vmul.f32 %v5361, 1.442695
    %v5406 = vpow.pop %v5405
    %v5407 = vmul.f32 %v5362, 1.442695
    %v5408 = vpow.pop %v5407
    %v5409 = vmul.f32 %v5363, 1.442695
    %v5410 = vpow.pop %v5409
    %v5411 = vmul.f32 %v5364, 1.442695
    %v5412 = vpow.pop %v5411
    %v5413 = vmul.f32 %v5365, 1.442695
    %v5414 = vpow.pop %v5413
    %v5415 = vmul.f32 %v5366, 1.442695
    %v5416 = vpow.pop %v5415
    %v5417 = vmul.f32 %v5367, 1.442695
    %v5418 = vpow.pop %v5417
    %v5419 = vmul.f32 %v5368, 1.442695
    %v5420 = vpow.pop %v5419
    %v5421 = vmul.f32 %v5369, 1.442695
    %v5422 = vpow.pop %v5421
    %v5423 = vmul.f32 %v5370, 1.442695
    %v5424 = vpow.pop %v5423
    %v5425 = vmul.f32 %v5371, 1.442695
    %v5426 = vpow.pop %v5425
    %v5427 = vmul.f32 %v5372, 1.442695
    %v5428 = vpow.pop %v5427
    %v5429 = vmul.f32 %v5373, 1.442695
    %v5430 = vpow.pop %v5429
    %v5431 = vmul.f32 %v5374, 1.442695
    %v5432 = vpow.pop %v5431
    %v5433 = vmul.f32 %v5375, 1.442695
    %v5434 = vpow.pop %v5433
    %v5435 = vmul.f32 %v5376, 1.442695
    %v5436 = vpow.pop %v5435
    %v5437 = vmul.f32 %v5377, 1.442695
    %v5438 = vpow.pop %v5437
    %v5439 = vmul.f32 %v5378, 1.442695
    %v5440 = vpow.pop %v5439
    %v5441 = vmul.f32 %v5379, 1.442695
    %v5442 = vpow.pop %v5441
    %v5443 = vmul.f32 %v5380, 1.442695
    %v5444 = vpow.pop %v5443
    %v5445 = vadd.f32 %v5382, 1.0
    %v5446 = vadd.f32 %v5384, 1.0
    %v5447 = vadd.f32 %v5386, 1.0
    %v5448 = vadd.f32 %v5388, 1.0
    %v5449 = vadd.f32 %v5390, 1.0
    %v5450 = vadd.f32 %v5392, 1.0
    %v5451 = vadd.f32 %v5394, 1.0
    %v5452 = vadd.f32 %v5396, 1.0
    %v5453 = vadd.f32 %v5398, 1.0
    %v5454 = vadd.f32 %v5400, 1.0
    %v5455 = vadd.f32 %v5402, 1.0
    %v5456 = vadd.f32 %v5404, 1.0
    %v5457 = vadd.f32 %v5406, 1.0
    %v5458 = vadd.f32 %v5408, 1.0
    %v5459 = vadd.f32 %v5410, 1.0
    %v5460 = vadd.f32 %v5412, 1.0
    %v5461 = vadd.f32 %v5414, 1.0
    %v5462 = vadd.f32 %v5416, 1.0
    %v5463 = vadd.f32 %v5418, 1.0
    %v5464 = vadd.f32 %v5420, 1.0
    %v5465 = vadd.f32 %v5422, 1.0
    %v5466 = vadd.f32 %v5424, 1.0
    %v5467 = vadd.f32 %v5426, 1.0
    %v5468 = vadd.f32 %v5428, 1.0
    %v5469 = vadd.f32 %v5430, 1.0
    %v5470 = vadd.f32 %v5432, 1.0
    %v5471 = vadd.f32 %v5434, 1.0
    %v5472 = vadd.f32 %v5436, 1.0
    %v5473 = vadd.f32 %v5438, 1.0
    %v5474 = vadd.f32 %v5440, 1.0
    %v5475 = vadd.f32 %v5442, 1.0
    %v5476 = vadd.f32 %v5444, 1.0
    %v5477 = vrcp.pop %v5445
    %v5478 = vrcp.pop %v5446
    %v5479 = vrcp.pop %v5447
    %v5480 = vrcp.pop %v5448
    %v5481 = vrcp.pop %v5449
    %v5482 = vrcp.pop %v5450
    %v5483 = vrcp.pop %v5451
    %v5484 = vrcp.pop %v5452
    %v5485 = vrcp.pop %v5453
    %v5486 = vrcp.pop %v5454
    %v5487 = vrcp.pop %v5455
    %v5488 = vrcp.pop %v5456
    %v5489 = vrcp.pop %v5457
    %v5490 = vrcp.pop %v5458
    %v5491 = vrcp.pop %v5459
    %v5492 = vrcp.pop %v5460
    %v5493 = vrcp.pop %v5461
    %v5494 = vrcp.pop %v5462
    %v5495 = vrcp.pop %v5463
    %v5496 = vrcp.pop %v5464
    %v5497 = vrcp.pop %v5465
    %v5498 = vrcp.pop %v5466
    %v5499 = vrcp.pop %v5467
    %v5500 = vrcp.pop %v5468
    %v5501 = vrcp.pop %v5469
    %v5502 = vrcp.pop %v5470
    %v5503 = vrcp.pop %v5471
    %v5504 = vrcp.pop %v5472
    %v5505 = vrcp.pop %v5473
    %v5506 = vrcp.pop %v5474
    %v5507 = vrcp.pop %v5475
    %v5508 = vrcp.pop %v5476
    %v5509 = vmul.f32 %v5317, %v5477
    %v5510 = vmul.f32 %v5318, %v5478
    %v5511 = vmul.f32 %v5319, %v5479
    %v5512 = vmul.f32 %v5320, %v5480
    %v5513 = vmul.f32 %v5321, %v5481
    %v5514 = vmul.f32 %v5322, %v5482
    %v5515 = vmul.f32 %v5323, %v5483
    %v5516 = vmul.f32 %v5324, %v5484
    %v5517 = vmul.f32 %v5325, %v5485
    %v5518 = vmul.f32 %v5326, %v5486
    %v5519 = vmul.f32 %v5327, %v5487
    %v5520 = vmul.f32 %v5328, %v5488
    %v5521 = vmul.f32 %v5329, %v5489
    %v5522 = vmul.f32 %v5330, %v5490
    %v5523 = vmul.f32 %v5331, %v5491
    %v5524 = vmul.f32 %v5332, %v5492
    %v5525 = vmul.f32 %v5333, %v5493
    %v5526 = vmul.f32 %v5334, %v5494
    %v5527 = vmul.f32 %v5335, %v5495
    %v5528 = vmul.f32 %v5336, %v5496
    %v5529 = vmul.f32 %v5337, %v5497
    %v5530 = vmul.f32 %v5338, %v5498
    %v5531 = vmul.f32 %v5339, %v5499
    %v5532 = vmul.f32 %v5340, %v5500
    %v5533 = vmul.f32 %v5341, %v5501
    %v5534 = vmul.f32 %v5342, %v5502
    %v5535 = vmul.f32 %v5343, %v5503
    %v5536 = vmul.f32 %v5344, %v5504
    %v5537 = vmul.f32 %v5345, %v5505
    %v5538 = vmul.f32 %v5346, %v5506
    %v5539 = vmul.f32 %v5347, %v5507
    %v5540 = vmul.f32 %v5348, %v5508
    %v5541 = vrot.slane %v5509, 7
    %v5542 = vrot.slane %v5510, 7
    %v5543 = vrot.slane %v5511, 7
    %v5544 = vrot.slane %v5512, 7
    %v5545 = vrot.slane %v5513, 7
    %v5546 = vrot.slane %v5514, 7
    %v5547 = vrot.slane %v5515, 7
    %v5548 = vrot.slane %v5516, 7
    %v5549 = vrot.slane %v5517, 7
    %v5550 = vrot.slane %v5518, 7
    %v5551 = vrot.slane %v5519, 7
    %v5552 = vrot.slane %v5520, 7
    %v5553 = vrot.slane %v5521, 7
    %v5554 = vrot.slane %v5522, 7
    %v5555 = vrot.slane %v5523, 7
    %v5556 = vrot.slane %v5524, 7
    %v5557 = vrot.slane %v5525, 7
    %v5558 = vrot.slane %v5526, 7
    %v5559 = vrot.slane %v5527, 7
    %v5560 = vrot.slane %v5528, 7
    %v5561 = vrot.slane %v5529, 7
    %v5562 = vrot.slane %v5530, 7
    %v5563 = vrot.slane %v5531, 7
    %v5564 = vrot.slane %v5532, 7
    %v5565 = vrot.slane %v5533, 7
    %v5566 = vrot.slane %v5534, 7
    %v5567 = vrot.slane %v5535, 7
    %v5568 = vrot.slane %v5536, 7
    %v5569 = vrot.slane %v5537, 7
    %v5570 = vrot.slane %v5538, 7
    %v5571 = vrot.slane %v5540, 7
    %v5572 = vsel %vm1169, %v5569, %v5570
    %v5573 = vsel %vm1169, %v5568, %v5569
    %v5574 = vsel %vm1169, %v5567, %v5568
    %v5575 = vsel %vm1169, %v5566, %v5567
    %v5576 = vsel %vm1169, %v5565, %v5566
    %v5577 = vsel %vm1169, %v5564, %v5565
    %v5578 = vsel %vm1169, %v5563, %v5564
    %v5579 = vsel %vm1169, %v5562, %v5563
    %v5580 = vsel %vm1169, %v5561, %v5562
    %v5581 = vsel %vm1169, %v5560, %v5561
    %v5582 = vsel %vm1169, %v5559, %v5560
    %v5583 = vsel %vm1169, %v5558, %v5559
    %v5584 = vsel %vm1169, %v5557, %v5558
    %v5585 = vsel %vm1169, %v5556, %v5557
    %v5586 = vsel %vm1169, %v5555, %v5556
    %v5587 = vsel %vm1169, %v5554, %v5555
    %v5588 = vsel %vm1169, %v5553, %v5554
    %v5589 = vsel %vm1169, %v5552, %v5553
    %v5590 = vsel %vm1169, %v5551, %v5552
    %v5591 = vsel %vm1169, %v5550, %v5551
    %v5592 = vsel %vm1169, %v5549, %v5550
    %v5593 = vsel %vm1169, %v5548, %v5549
    %v5594 = vsel %vm1169, %v5547, %v5548
    %v5595 = vsel %vm1169, %v5546, %v5547
    %v5596 = vsel %vm1169, %v5545, %v5546
    %v5597 = vsel %vm1169, %v5544, %v5545
    %v5598 = vsel %vm1169, %v5543, %v5544
    %v5599 = vsel %vm1169, %v5542, %v5543
    %v5600 = vsel %vm1169, %v5541, %v5542
    %v5601 = vsel %vm1169, %v5571, %v5541
    %v5602 = vsel %vm1200, %v5601, 0.0
    %v5603 = vsel %vm1201, %v5600, 0.0
    %v5604 = vsel %vm1200, %v5599, 0.0
    %v5605 = vsel %vm1201, %v5598, 0.0
    %v5606 = vsel %vm1200, %v5597, 0.0
    %v5607 = vsel %vm1201, %v5596, 0.0
    %v5608 = vsel %vm1200, %v5595, 0.0
    %v5609 = vsel %vm1201, %v5594, 0.0
    %v5610 = vsel %vm1200, %v5593, 0.0
    %v5611 = vsel %vm1201, %v5592, 0.0
    %v5612 = vsel %vm1200, %v5591, 0.0
    %v5613 = vsel %vm1201, %v5590, 0.0
    %v5614 = vsel %vm1200, %v5589, 0.0
    %v5615 = vsel %vm1201, %v5588, 0.0
    %v5616 = vsel %vm1200, %v5587, 0.0
    %v5617 = vsel %vm1201, %v5586, 0.0
    %v5618 = vsel %vm1200, %v5585, 0.0
    %v5619 = vsel %vm1201, %v5584, 0.0
    %v5620 = vsel %vm1200, %v5583, 0.0
    %v5621 = vsel %vm1201, %v5582, 0.0
    %v5622 = vsel %vm1200, %v5581, 0.0
    %v5623 = vsel %vm1201, %v5580, 0.0
    %v5624 = vsel %vm1200, %v5579, 0.0
    %v5625 = vsel %vm1201, %v5578, 0.0
    %v5626 = vsel %vm1200, %v5577, 0.0
    %v5627 = vsel %vm1201, %v5576, 0.0
    %v5628 = vsel %vm1200, %v5575, 0.0
    %v5629 = vsel %vm1201, %v5574, 0.0
    %v5630 = vsel %vm1200, %v5573, 0.0
    %v5631 = vsel %vm1201, %v5572, 0.0
    %v5632 = vpack.c.bf16 %v5603, %v5602
    %v5633 = vpack.c.bf16 %v5605, %v5604
    %v5634 = vpack.c.bf16 %v5607, %v5606
    %v5635 = vpack.c.bf16 %v5609, %v5608
    %v5636 = vpack.c.bf16 %v5611, %v5610
    %v5637 = vpack.c.bf16 %v5613, %v5612
    %v5638 = vpack.c.bf16 %v5615, %v5614
    %v5639 = vpack.c.bf16 %v5617, %v5616
    %v5640 = vpack.c.bf16 %v5619, %v5618
    %v5641 = vpack.c.bf16 %v5621, %v5620
    %v5642 = vpack.c.bf16 %v5623, %v5622
    %v5643 = vpack.c.bf16 %v5625, %v5624
    %v5644 = vpack.c.bf16 %v5627, %v5626
    %v5645 = vpack.c.bf16 %v5629, %v5628
    %v5646 = vpack.c.bf16 %v5631, %v5630
    %v5647 = vpack.c.bf16 %v5510, %v5509
    %v5648 = vpack.c.bf16 %v5512, %v5511
    %v5649 = vpack.c.bf16 %v5514, %v5513
    %v5650 = vpack.c.bf16 %v5516, %v5515
    %v5651 = vpack.c.bf16 %v5518, %v5517
    %v5652 = vpack.c.bf16 %v5520, %v5519
    %v5653 = vpack.c.bf16 %v5522, %v5521
    %v5654 = vpack.c.bf16 %v5524, %v5523
    %v5655 = vpack.c.bf16 %v5526, %v5525
    %v5656 = vpack.c.bf16 %v5528, %v5527
    %v5657 = vpack.c.bf16 %v5530, %v5529
    %v5658 = vpack.c.bf16 %v5532, %v5531
    %v5659 = vpack.c.bf16 %v5534, %v5533
    %v5660 = vpack.c.bf16 %v5536, %v5535
    %v5661 = vpack.c.bf16 %v5538, %v5537
    %v5662 = vrot.slane %v5509, 1
    %v5663 = vrot.slane %v5510, 1
    %v5664 = vrot.slane %v5511, 1
    %v5665 = vrot.slane %v5512, 1
    %v5666 = vrot.slane %v5513, 1
    %v5667 = vrot.slane %v5514, 1
    %v5668 = vrot.slane %v5515, 1
    %v5669 = vrot.slane %v5516, 1
    %v5670 = vrot.slane %v5517, 1
    %v5671 = vrot.slane %v5518, 1
    %v5672 = vrot.slane %v5519, 1
    %v5673 = vrot.slane %v5520, 1
    %v5674 = vrot.slane %v5521, 1
    %v5675 = vrot.slane %v5522, 1
    %v5676 = vrot.slane %v5523, 1
    %v5677 = vrot.slane %v5524, 1
    %v5678 = vrot.slane %v5525, 1
    %v5679 = vrot.slane %v5526, 1
    %v5680 = vrot.slane %v5527, 1
    %v5681 = vrot.slane %v5528, 1
    %v5682 = vrot.slane %v5529, 1
    %v5683 = vrot.slane %v5530, 1
    %v5684 = vrot.slane %v5531, 1
    %v5685 = vrot.slane %v5532, 1
    %v5686 = vrot.slane %v5533, 1
    %v5687 = vrot.slane %v5534, 1
    %v5688 = vrot.slane %v5535, 1
    %v5689 = vrot.slane %v5536, 1
    %v5690 = vrot.slane %v5537, 1
    %v5691 = vrot.slane %v5538, 1
    %v5692 = vrot.slane %v5539, 1
    %v5693 = vsel %vm1294, %v5691, %v5692
    %v5694 = vsel %vm1294, %v5690, %v5691
    %v5695 = vsel %vm1294, %v5689, %v5690
    %v5696 = vsel %vm1294, %v5688, %v5689
    %v5697 = vsel %vm1294, %v5687, %v5688
    %v5698 = vsel %vm1294, %v5686, %v5687
    %v5699 = vsel %vm1294, %v5685, %v5686
    %v5700 = vsel %vm1294, %v5684, %v5685
    %v5701 = vsel %vm1294, %v5683, %v5684
    %v5702 = vsel %vm1294, %v5682, %v5683
    %v5703 = vsel %vm1294, %v5681, %v5682
    %v5704 = vsel %vm1294, %v5680, %v5681
    %v5705 = vsel %vm1294, %v5679, %v5680
    %v5706 = vsel %vm1294, %v5678, %v5679
    %v5707 = vsel %vm1294, %v5677, %v5678
    %v5708 = vsel %vm1294, %v5676, %v5677
    %v5709 = vsel %vm1294, %v5675, %v5676
    %v5710 = vsel %vm1294, %v5674, %v5675
    %v5711 = vsel %vm1294, %v5673, %v5674
    %v5712 = vsel %vm1294, %v5672, %v5673
    %v5713 = vsel %vm1294, %v5671, %v5672
    %v5714 = vsel %vm1294, %v5670, %v5671
    %v5715 = vsel %vm1294, %v5669, %v5670
    %v5716 = vsel %vm1294, %v5668, %v5669
    %v5717 = vsel %vm1294, %v5667, %v5668
    %v5718 = vsel %vm1294, %v5666, %v5667
    %v5719 = vsel %vm1294, %v5665, %v5666
    %v5720 = vsel %vm1294, %v5664, %v5665
    %v5721 = vsel %vm1294, %v5663, %v5664
    %v5722 = vsel %vm1294, %v5662, %v5663
    %v5723 = vsel %vm1325, %v5722, 0.0
    %v5724 = vsel %vm1326, %v5721, 0.0
    %v5725 = vsel %vm1325, %v5720, 0.0
    %v5726 = vsel %vm1326, %v5719, 0.0
    %v5727 = vsel %vm1325, %v5718, 0.0
    %v5728 = vsel %vm1326, %v5717, 0.0
    %v5729 = vsel %vm1325, %v5716, 0.0
    %v5730 = vsel %vm1326, %v5715, 0.0
    %v5731 = vsel %vm1325, %v5714, 0.0
    %v5732 = vsel %vm1326, %v5713, 0.0
    %v5733 = vsel %vm1325, %v5712, 0.0
    %v5734 = vsel %vm1326, %v5711, 0.0
    %v5735 = vsel %vm1325, %v5710, 0.0
    %v5736 = vsel %vm1326, %v5709, 0.0
    %v5737 = vsel %vm1325, %v5708, 0.0
    %v5738 = vsel %vm1326, %v5707, 0.0
    %v5739 = vsel %vm1325, %v5706, 0.0
    %v5740 = vsel %vm1326, %v5705, 0.0
    %v5741 = vsel %vm1325, %v5704, 0.0
    %v5742 = vsel %vm1326, %v5703, 0.0
    %v5743 = vsel %vm1325, %v5702, 0.0
    %v5744 = vsel %vm1326, %v5701, 0.0
    %v5745 = vsel %vm1325, %v5700, 0.0
    %v5746 = vsel %vm1326, %v5699, 0.0
    %v5747 = vsel %vm1325, %v5698, 0.0
    %v5748 = vsel %vm1326, %v5697, 0.0
    %v5749 = vsel %vm1325, %v5696, 0.0
    %v5750 = vsel %vm1326, %v5695, 0.0
    %v5751 = vsel %vm1325, %v5694, 0.0
    %v5752 = vsel %vm1326, %v5693, 0.0
    %v5753 = vpack.c.bf16 %v5724, %v5723
    %v5754 = vpack.c.bf16 %v5726, %v5725
    %v5755 = vpack.c.bf16 %v5728, %v5727
    %v5756 = vpack.c.bf16 %v5730, %v5729
    %v5757 = vpack.c.bf16 %v5732, %v5731
    %v5758 = vpack.c.bf16 %v5734, %v5733
    %v5759 = vpack.c.bf16 %v5736, %v5735
    %v5760 = vpack.c.bf16 %v5738, %v5737
    %v5761 = vpack.c.bf16 %v5740, %v5739
    %v5762 = vpack.c.bf16 %v5742, %v5741
    %v5763 = vpack.c.bf16 %v5744, %v5743
    %v5764 = vpack.c.bf16 %v5746, %v5745
    %v5765 = vpack.c.bf16 %v5748, %v5747
    %v5766 = vpack.c.bf16 %v5750, %v5749
    %v5767 = vpack.c.bf16 %v5752, %v5751
    %v5768 = vrot.slane %v5539, 7
    %v5769 = vsel %vm1169, %v5768, %v5571
    %v5770 = vsel %vm1169, %v5570, %v5768
    %v5771 = vsel %vm1200, %v5770, 0.0
    %v5772 = vsel %vm1201, %v5769, 0.0
    %v5773 = vpack.c.bf16 %v5772, %v5771
    %v5774 = vpack.c.bf16 %v5540, %v5539
    %v5775 = vrot.slane %v5540, 1
    %v5776 = vsel %vm1294, %v5692, %v5775
    %v5777 = vsel %vm1294, %v5775, %v5662
    %v5778 = vsel %vm1325, %v5776, 0.0
    %v5779 = vsel %vm1326, %v5777, 0.0
    %v5780 = vpack.c.bf16 %v5779, %v5778
    %s5781 = scalar_lea.vmem [#allocation5], 1
    %v5782 = vld [vmem:[%s5781] sm:$0x1]
    %v5784 = vlaneseq
    %v5785 = vshrl.u32 %v5784, 7
    %v5786 = vsub.s32 0, %v5785
    %v5787 = vrot.slane %v5782, %v5786
    %5789 = vmatprep.subr.bf16.mxu0 0
    %5790 = vmatpush1.bf16.msra.mxu0 %v1687
    %5791 = vmatprep.subr.bf16.mxu0 0
    %5792 = vmatpush1.bf16.msra.mxu0 %v1686
    %5793 = vmatprep.subr.bf16.mxu0 0
    %5794 = vmatpush1.bf16.msra.mxu0 %v1685
    %5795 = vmatprep.subr.bf16.mxu0 0
    %5796 = vmatpush1.bf16.msra.mxu0 %v1684
    %5797 = vmatprep.subr.bf16.mxu0 0
    %5798 = vmatpush1.bf16.msra.mxu0 %v1683
    %5799 = vmatprep.subr.bf16.mxu0 0
    %5800 = vmatpush1.bf16.msra.mxu0 %v1682
    %5801 = vmatprep.subr.bf16.mxu0 0
    %5802 = vmatpush1.bf16.msra.mxu0 %v1681
    %5803 = vmatprep.subr.bf16.mxu0 0
    %5804 = vmatpush1.bf16.msra.mxu0 %v1680
    %5805 = vmatprep.subr.bf16.mxu0 0
    %5806 = vmatpush2.bf16.msra.mxu0 %v1695
    %5807 = vmatprep.subr.bf16.mxu0 0
    %5808 = vmatpush2.bf16.msra.mxu0 %v1694
    %5809 = vmatprep.subr.bf16.mxu0 0
    %5810 = vmatpush2.bf16.msra.mxu0 %v1693
    %5811 = vmatprep.subr.bf16.mxu0 0
    %5812 = vmatpush2.bf16.msra.mxu0 %v1692
    %5813 = vmatprep.subr.bf16.mxu0 0
    %5814 = vmatpush2.bf16.msra.mxu0 %v1691
    %5815 = vmatprep.subr.bf16.mxu0 0
    %5816 = vmatpush2.bf16.msra.mxu0 %v1690
    %5817 = vmatprep.subr.bf16.mxu0 0
    %5818 = vmatpush2.bf16.msra.mxu0 %v1689
    %5819 = vmatprep.subr.bf16.mxu0 0
    %5820 = vmatpush2.bf16.msra.mxu0 %v1688
    %5821 = vmatprep.mubr.bf16.mxu0 %v1232
    %5822 = vmatmul.mubr.bf16.gmra.mxu0 %v1232
    %v5823 = vpop.f32.mrf.mxu0
    %v5824 = vadd.f32 %v5787, %v5823
    %v5825 = vpop.f32.mrf.mxu0
    %v5826 = vpop.f32.mrf.mxu0
    %v5827 = vadd.f32 %v5787, %v5826
    %v5828 = vpop.f32.mrf.mxu0
    %5829 = vmatprep.mubr.bf16.mxu0 %v5647
    %5830 = vmatmul.mubr.bf16.gmra.mxu0 %v5632
    %v5831 = vpop.f32.mrf.mxu0
    %v5832 = vadd.f32 %v5787, %v5831
    %v5833 = vpop.f32.mrf.mxu0
    %v5834 = vpop.f32.mrf.mxu0
    %v5835 = vadd.f32 %v5787, %v5834
    %v5836 = vpop.f32.mrf.mxu0
    %5837 = vmatprep.mubr.bf16.mxu0 %v5648
    %5838 = vmatmul.mubr.bf16.gmra.mxu0 %v5633
    %v5839 = vpop.f32.mrf.mxu0
    %v5840 = vadd.f32 %v5787, %v5839
    %v5841 = vpop.f32.mrf.mxu0
    %v5842 = vpop.f32.mrf.mxu0
    %v5843 = vadd.f32 %v5787, %v5842
    %v5844 = vpop.f32.mrf.mxu0
    %5845 = vmatprep.mubr.bf16.mxu0 %v5649
    %5846 = vmatmul.mubr.bf16.gmra.mxu0 %v5634
    %v5847 = vpop.f32.mrf.mxu0
    %v5848 = vadd.f32 %v5787, %v5847
    %v5849 = vpop.f32.mrf.mxu0
    %v5850 = vpop.f32.mrf.mxu0
    %v5851 = vadd.f32 %v5787, %v5850
    %v5852 = vpop.f32.mrf.mxu0
    %5853 = vmatprep.mubr.bf16.mxu0 %v5650
    %5854 = vmatmul.mubr.bf16.gmra.mxu0 %v5635
    %v5855 = vpop.f32.mrf.mxu0
    %v5856 = vadd.f32 %v5787, %v5855
    %v5857 = vpop.f32.mrf.mxu0
    %v5858 = vpop.f32.mrf.mxu0
    %v5859 = vadd.f32 %v5787, %v5858
    %v5860 = vpop.f32.mrf.mxu0
    %5861 = vmatprep.mubr.bf16.mxu0 %v5651
    %5862 = vmatmul.mubr.bf16.gmra.mxu0 %v5636
    %v5863 = vpop.f32.mrf.mxu0
    %v5864 = vadd.f32 %v5787, %v5863
    %v5865 = vpop.f32.mrf.mxu0
    %v5866 = vpop.f32.mrf.mxu0
    %v5867 = vadd.f32 %v5787, %v5866
    %v5868 = vpop.f32.mrf.mxu0
    %5869 = vmatprep.mubr.bf16.mxu0 %v5652
    %5870 = vmatmul.mubr.bf16.gmra.mxu0 %v5637
    %v5871 = vpop.f32.mrf.mxu0
    %v5872 = vadd.f32 %v5787, %v5871
    %v5873 = vpop.f32.mrf.mxu0
    %v5874 = vpop.f32.mrf.mxu0
    %v5875 = vadd.f32 %v5787, %v5874
    %v5876 = vpop.f32.mrf.mxu0
    %5877 = vmatprep.mubr.bf16.mxu0 %v5653
    %5878 = vmatmul.mubr.bf16.gmra.mxu0 %v5638
    %v5879 = vpop.f32.mrf.mxu0
    %v5880 = vadd.f32 %v5787, %v5879
    %v5881 = vpop.f32.mrf.mxu0
    %v5882 = vpop.f32.mrf.mxu0
    %v5883 = vadd.f32 %v5787, %v5882
    %v5884 = vpop.f32.mrf.mxu0
    %5885 = vmatprep.mubr.bf16.mxu0 %v5654
    %5886 = vmatmul.mubr.bf16.gmra.mxu0 %v5639
    %v5887 = vpop.f32.mrf.mxu0
    %v5888 = vadd.f32 %v5787, %v5887
    %v5889 = vpop.f32.mrf.mxu0
    %v5890 = vpop.f32.mrf.mxu0
    %v5891 = vadd.f32 %v5787, %v5890
    %v5892 = vpop.f32.mrf.mxu0
    %5893 = vmatprep.mubr.bf16.mxu0 %v5655
    %5894 = vmatmul.mubr.bf16.gmra.mxu0 %v5640
    %v5895 = vpop.f32.mrf.mxu0
    %v5896 = vadd.f32 %v5787, %v5895
    %v5897 = vpop.f32.mrf.mxu0
    %v5898 = vpop.f32.mrf.mxu0
    %v5899 = vadd.f32 %v5787, %v5898
    %v5900 = vpop.f32.mrf.mxu0
    %5901 = vmatprep.mubr.bf16.mxu0 %v5656
    %5902 = vmatmul.mubr.bf16.gmra.mxu0 %v5641
    %v5903 = vpop.f32.mrf.mxu0
    %v5904 = vadd.f32 %v5787, %v5903
    %v5905 = vpop.f32.mrf.mxu0
    %v5906 = vpop.f32.mrf.mxu0
    %v5907 = vadd.f32 %v5787, %v5906
    %v5908 = vpop.f32.mrf.mxu0
    %5909 = vmatprep.mubr.bf16.mxu0 %v5657
    %5910 = vmatmul.mubr.bf16.gmra.mxu0 %v5642
    %v5911 = vpop.f32.mrf.mxu0
    %v5912 = vadd.f32 %v5787, %v5911
    %v5913 = vpop.f32.mrf.mxu0
    %v5914 = vpop.f32.mrf.mxu0
    %v5915 = vadd.f32 %v5787, %v5914
    %v5916 = vpop.f32.mrf.mxu0
    %5917 = vmatprep.mubr.bf16.mxu0 %v5658
    %5918 = vmatmul.mubr.bf16.gmra.mxu0 %v5643
    %v5919 = vpop.f32.mrf.mxu0
    %v5920 = vadd.f32 %v5787, %v5919
    %v5921 = vpop.f32.mrf.mxu0
    %v5922 = vpop.f32.mrf.mxu0
    %v5923 = vadd.f32 %v5787, %v5922
    %v5924 = vpop.f32.mrf.mxu0
    %5925 = vmatprep.mubr.bf16.mxu0 %v5659
    %5926 = vmatmul.mubr.bf16.gmra.mxu0 %v5644
    %v5927 = vpop.f32.mrf.mxu0
    %v5928 = vadd.f32 %v5787, %v5927
    %v5929 = vpop.f32.mrf.mxu0
    %v5930 = vpop.f32.mrf.mxu0
    %v5931 = vadd.f32 %v5787, %v5930
    %v5932 = vpop.f32.mrf.mxu0
    %5933 = vmatprep.mubr.bf16.mxu0 %v5660
    %5934 = vmatmul.mubr.bf16.gmra.mxu0 %v5645
    %v5935 = vpop.f32.mrf.mxu0
    %v5936 = vadd.f32 %v5787, %v5935
    %v5937 = vpop.f32.mrf.mxu0
    %v5938 = vpop.f32.mrf.mxu0
    %v5939 = vadd.f32 %v5787, %v5938
    %v5940 = vpop.f32.mrf.mxu0
    %5941 = vmatprep.mubr.bf16.mxu0 %v5661
    %5942 = vmatmul.mubr.bf16.gmra.mxu0 %v5646
    %v5943 = vpop.f32.mrf.mxu0
    %v5944 = vadd.f32 %v5787, %v5943
    %v5945 = vpop.f32.mrf.mxu0
    %v5946 = vpop.f32.mrf.mxu0
    %v5947 = vadd.f32 %v5787, %v5946
    %v5948 = vpop.f32.mrf.mxu0
    %5949 = vdwg.mxu0
    %5950 = vmatprep.subr.bf16.mxu0 0
    %5951 = vmatpush1.bf16.msra.mxu0 %v1703
    %5952 = vmatprep.subr.bf16.mxu0 0
    %5953 = vmatpush1.bf16.msra.mxu0 %v1702
    %5954 = vmatprep.subr.bf16.mxu0 0
    %5955 = vmatpush1.bf16.msra.mxu0 %v1701
    %5956 = vmatprep.subr.bf16.mxu0 0
    %5957 = vmatpush1.bf16.msra.mxu0 %v1700
    %5958 = vmatprep.subr.bf16.mxu0 0
    %5959 = vmatpush1.bf16.msra.mxu0 %v1699
    %5960 = vmatprep.subr.bf16.mxu0 0
    %5961 = vmatpush1.bf16.msra.mxu0 %v1698
    %5962 = vmatprep.subr.bf16.mxu0 0
    %5963 = vmatpush1.bf16.msra.mxu0 %v1697
    %5964 = vmatprep.subr.bf16.mxu0 0
    %5965 = vmatpush1.bf16.msra.mxu0 %v1696
    %5966 = vmatprep.subr.bf16.mxu0 0
    %5967 = vmatpush2.bf16.msra.mxu0 %v1711
    %5968 = vmatprep.subr.bf16.mxu0 0
    %5969 = vmatpush2.bf16.msra.mxu0 %v1710
    %5970 = vmatprep.subr.bf16.mxu0 0
    %5971 = vmatpush2.bf16.msra.mxu0 %v1709
    %5972 = vmatprep.subr.bf16.mxu0 0
    %5973 = vmatpush2.bf16.msra.mxu0 %v1708
    %5974 = vmatprep.subr.bf16.mxu0 0
    %5975 = vmatpush2.bf16.msra.mxu0 %v1707
    %5976 = vmatprep.subr.bf16.mxu0 0
    %5977 = vmatpush2.bf16.msra.mxu0 %v1706
    %5978 = vmatprep.subr.bf16.mxu0 0
    %5979 = vmatpush2.bf16.msra.mxu0 %v1705
    %5980 = vmatprep.subr.bf16.mxu0 0
    %5981 = vmatpush2.bf16.msra.mxu0 %v1704
    %5982 = vmatprep.mubr.bf16.mxu0 %v5632
    %5983 = vmatmul.mubr.bf16.gmra.mxu0 %v1232
    %v5984 = vpop.f32.mrf.mxu0
    %v5985 = vadd.f32 %v5824, %v5984
    %v5986 = vpop.f32.mrf.mxu0
    %v5987 = vpop.f32.mrf.mxu0
    %v5988 = vadd.f32 %v5827, %v5987
    %v5989 = vpop.f32.mrf.mxu0
    %5990 = vmatprep.mubr.bf16.mxu0 %v5633
    %5991 = vmatmul.mubr.bf16.gmra.mxu0 %v5753
    %v5992 = vpop.f32.mrf.mxu0
    %v5993 = vadd.f32 %v5832, %v5992
    %v5994 = vpop.f32.mrf.mxu0
    %v5995 = vpop.f32.mrf.mxu0
    %v5996 = vadd.f32 %v5835, %v5995
    %v5997 = vpop.f32.mrf.mxu0
    %5998 = vmatprep.mubr.bf16.mxu0 %v5634
    %5999 = vmatmul.mubr.bf16.gmra.mxu0 %v5754
    %v6000 = vpop.f32.mrf.mxu0
    %v6001 = vadd.f32 %v5840, %v6000
    %v6002 = vpop.f32.mrf.mxu0
    %v6003 = vpop.f32.mrf.mxu0
    %v6004 = vadd.f32 %v5843, %v6003
    %v6005 = vpop.f32.mrf.mxu0
    %6006 = vmatprep.mubr.bf16.mxu0 %v5635
    %6007 = vmatmul.mubr.bf16.gmra.mxu0 %v5755
    %v6008 = vpop.f32.mrf.mxu0
    %v6009 = vadd.f32 %v5848, %v6008
    %v6010 = vpop.f32.mrf.mxu0
    %v6011 = vpop.f32.mrf.mxu0
    %v6012 = vadd.f32 %v5851, %v6011
    %v6013 = vpop.f32.mrf.mxu0
    %6014 = vmatprep.mubr.bf16.mxu0 %v5636
    %6015 = vmatmul.mubr.bf16.gmra.mxu0 %v5756
    %v6016 = vpop.f32.mrf.mxu0
    %v6017 = vadd.f32 %v5856, %v6016
    %v6018 = vpop.f32.mrf.mxu0
    %v6019 = vpop.f32.mrf.mxu0
    %v6020 = vadd.f32 %v5859, %v6019
    %v6021 = vpop.f32.mrf.mxu0
    %6022 = vmatprep.mubr.bf16.mxu0 %v5637
    %6023 = vmatmul.mubr.bf16.gmra.mxu0 %v5757
    %v6024 = vpop.f32.mrf.mxu0
    %v6025 = vadd.f32 %v5864, %v6024
    %v6026 = vpop.f32.mrf.mxu0
    %v6027 = vpop.f32.mrf.mxu0
    %v6028 = vadd.f32 %v5867, %v6027
    %v6029 = vpop.f32.mrf.mxu0
    %6030 = vmatprep.mubr.bf16.mxu0 %v5638
    %6031 = vmatmul.mubr.bf16.gmra.mxu0 %v5758
    %v6032 = vpop.f32.mrf.mxu0
    %v6033 = vadd.f32 %v5872, %v6032
    %v6034 = vpop.f32.mrf.mxu0
    %v6035 = vpop.f32.mrf.mxu0
    %v6036 = vadd.f32 %v5875, %v6035
    %v6037 = vpop.f32.mrf.mxu0
    %6038 = vmatprep.mubr.bf16.mxu0 %v5639
    %6039 = vmatmul.mubr.bf16.gmra.mxu0 %v5759
    %v6040 = vpop.f32.mrf.mxu0
    %v6041 = vadd.f32 %v5880, %v6040
    %v6042 = vpop.f32.mrf.mxu0
    %v6043 = vpop.f32.mrf.mxu0
    %v6044 = vadd.f32 %v5883, %v6043
    %v6045 = vpop.f32.mrf.mxu0
    %6046 = vmatprep.mubr.bf16.mxu0 %v5640
    %6047 = vmatmul.mubr.bf16.gmra.mxu0 %v5760
    %v6048 = vpop.f32.mrf.mxu0
    %v6049 = vadd.f32 %v5888, %v6048
    %v6050 = vpop.f32.mrf.mxu0
    %v6051 = vpop.f32.mrf.mxu0
    %v6052 = vadd.f32 %v5891, %v6051
    %v6053 = vpop.f32.mrf.mxu0
    %6054 = vmatprep.mubr.bf16.mxu0 %v5641
    %6055 = vmatmul.mubr.bf16.gmra.mxu0 %v5761
    %v6056 = vpop.f32.mrf.mxu0
    %v6057 = vadd.f32 %v5896, %v6056
    %v6058 = vpop.f32.mrf.mxu0
    %v6059 = vpop.f32.mrf.mxu0
    %v6060 = vadd.f32 %v5899, %v6059
    %v6061 = vpop.f32.mrf.mxu0
    %6062 = vmatprep.mubr.bf16.mxu0 %v5642
    %6063 = vmatmul.mubr.bf16.gmra.mxu0 %v5762
    %v6064 = vpop.f32.mrf.mxu0
    %v6065 = vadd.f32 %v5904, %v6064
    %v6066 = vpop.f32.mrf.mxu0
    %v6067 = vpop.f32.mrf.mxu0
    %v6068 = vadd.f32 %v5907, %v6067
    %v6069 = vpop.f32.mrf.mxu0
    %6070 = vmatprep.mubr.bf16.mxu0 %v5643
    %6071 = vmatmul.mubr.bf16.gmra.mxu0 %v5763
    %v6072 = vpop.f32.mrf.mxu0
    %v6073 = vadd.f32 %v5912, %v6072
    %v6074 = vpop.f32.mrf.mxu0
    %v6075 = vpop.f32.mrf.mxu0
    %v6076 = vadd.f32 %v5915, %v6075
    %v6077 = vpop.f32.mrf.mxu0
    %6078 = vmatprep.mubr.bf16.mxu0 %v5644
    %6079 = vmatmul.mubr.bf16.gmra.mxu0 %v5764
    %v6080 = vpop.f32.mrf.mxu0
    %v6081 = vadd.f32 %v5920, %v6080
    %v6082 = vpop.f32.mrf.mxu0
    %v6083 = vpop.f32.mrf.mxu0
    %v6084 = vadd.f32 %v5923, %v6083
    %v6085 = vpop.f32.mrf.mxu0
    %6086 = vmatprep.mubr.bf16.mxu0 %v5645
    %6087 = vmatmul.mubr.bf16.gmra.mxu0 %v5765
    %v6088 = vpop.f32.mrf.mxu0
    %v6089 = vadd.f32 %v5928, %v6088
    %v6090 = vpop.f32.mrf.mxu0
    %v6091 = vpop.f32.mrf.mxu0
    %v6092 = vadd.f32 %v5931, %v6091
    %v6093 = vpop.f32.mrf.mxu0
    %6094 = vmatprep.mubr.bf16.mxu0 %v5646
    %6095 = vmatmul.mubr.bf16.gmra.mxu0 %v5766
    %v6096 = vpop.f32.mrf.mxu0
    %v6097 = vadd.f32 %v5936, %v6096
    %v6098 = vpop.f32.mrf.mxu0
    %v6099 = vpop.f32.mrf.mxu0
    %v6100 = vadd.f32 %v5939, %v6099
    %v6101 = vpop.f32.mrf.mxu0
    %6102 = vmatprep.mubr.bf16.mxu0 %v5773
    %6103 = vmatmul.mubr.bf16.gmra.mxu0 %v5767
    %v6104 = vpop.f32.mrf.mxu0
    %v6105 = vadd.f32 %v5944, %v6104
    %v6106 = vpop.f32.mrf.mxu0
    %v6107 = vpop.f32.mrf.mxu0
    %v6108 = vadd.f32 %v5947, %v6107
    %v6109 = vpop.f32.mrf.mxu0
    %6110 = vdwg.mxu0
    %6111 = vmatprep.subr.bf16.mxu0 0
    %6112 = vmatpush1.bf16.msra.mxu0 %v1719
    %6113 = vmatprep.subr.bf16.mxu0 0
    %6114 = vmatpush1.bf16.msra.mxu0 %v1718
    %6115 = vmatprep.subr.bf16.mxu0 0
    %6116 = vmatpush1.bf16.msra.mxu0 %v1717
    %6117 = vmatprep.subr.bf16.mxu0 0
    %6118 = vmatpush1.bf16.msra.mxu0 %v1716
    %6119 = vmatprep.subr.bf16.mxu0 0
    %6120 = vmatpush1.bf16.msra.mxu0 %v1715
    %6121 = vmatprep.subr.bf16.mxu0 0
    %6122 = vmatpush1.bf16.msra.mxu0 %v1714
    %6123 = vmatprep.subr.bf16.mxu0 0
    %6124 = vmatpush1.bf16.msra.mxu0 %v1713
    %6125 = vmatprep.subr.bf16.mxu0 0
    %6126 = vmatpush1.bf16.msra.mxu0 %v1712
    %6127 = vmatprep.subr.bf16.mxu0 0
    %6128 = vmatpush2.bf16.msra.mxu0 %v1727
    %6129 = vmatprep.subr.bf16.mxu0 0
    %6130 = vmatpush2.bf16.msra.mxu0 %v1726
    %6131 = vmatprep.subr.bf16.mxu0 0
    %6132 = vmatpush2.bf16.msra.mxu0 %v1725
    %6133 = vmatprep.subr.bf16.mxu0 0
    %6134 = vmatpush2.bf16.msra.mxu0 %v1724
    %6135 = vmatprep.subr.bf16.mxu0 0
    %6136 = vmatpush2.bf16.msra.mxu0 %v1723
    %6137 = vmatprep.subr.bf16.mxu0 0
    %6138 = vmatpush2.bf16.msra.mxu0 %v1722
    %6139 = vmatprep.subr.bf16.mxu0 0
    %6140 = vmatpush2.bf16.msra.mxu0 %v1721
    %6141 = vmatprep.subr.bf16.mxu0 0
    %6142 = vmatpush2.bf16.msra.mxu0 %v1720
    %6143 = vmatprep.mubr.bf16.mxu0 %v5753
    %6144 = vmatmul.mubr.bf16.gmra.mxu0 %v5647
    %v6145 = vpop.f32.mrf.mxu0
    %v6146 = vadd.f32 %v5985, %v6145
    %v6147 = vpop.f32.mrf.mxu0
    %v6148 = vpop.f32.mrf.mxu0
    %v6149 = vadd.f32 %v5988, %v6148
    %v6150 = vpop.f32.mrf.mxu0
    %6151 = vmatprep.mubr.bf16.mxu0 %v5754
    %6152 = vmatmul.mubr.bf16.gmra.mxu0 %v5648
    %v6153 = vpop.f32.mrf.mxu0
    %v6154 = vadd.f32 %v5993, %v6153
    %v6155 = vpop.f32.mrf.mxu0
    %v6156 = vpop.f32.mrf.mxu0
    %v6157 = vadd.f32 %v5996, %v6156
    %v6158 = vpop.f32.mrf.mxu0
    %6159 = vmatprep.mubr.bf16.mxu0 %v5755
    %6160 = vmatmul.mubr.bf16.gmra.mxu0 %v5649
    %v6161 = vpop.f32.mrf.mxu0
    %v6162 = vadd.f32 %v6001, %v6161
    %v6163 = vpop.f32.mrf.mxu0
    %v6164 = vpop.f32.mrf.mxu0
    %v6165 = vadd.f32 %v6004, %v6164
    %v6166 = vpop.f32.mrf.mxu0
    %6167 = vmatprep.mubr.bf16.mxu0 %v5756
    %6168 = vmatmul.mubr.bf16.gmra.mxu0 %v5650
    %v6169 = vpop.f32.mrf.mxu0
    %v6170 = vadd.f32 %v6009, %v6169
    %v6171 = vpop.f32.mrf.mxu0
    %v6172 = vpop.f32.mrf.mxu0
    %v6173 = vadd.f32 %v6012, %v6172
    %v6174 = vpop.f32.mrf.mxu0
    %6175 = vmatprep.mubr.bf16.mxu0 %v5757
    %6176 = vmatmul.mubr.bf16.gmra.mxu0 %v5651
    %v6177 = vpop.f32.mrf.mxu0
    %v6178 = vadd.f32 %v6017, %v6177
    %v6179 = vpop.f32.mrf.mxu0
    %v6180 = vpop.f32.mrf.mxu0
    %v6181 = vadd.f32 %v6020, %v6180
    %v6182 = vpop.f32.mrf.mxu0
    %6183 = vmatprep.mubr.bf16.mxu0 %v5758
    %6184 = vmatmul.mubr.bf16.gmra.mxu0 %v5652
    %v6185 = vpop.f32.mrf.mxu0
    %v6186 = vadd.f32 %v6025, %v6185
    %v6187 = vpop.f32.mrf.mxu0
    %v6188 = vpop.f32.mrf.mxu0
    %v6189 = vadd.f32 %v6028, %v6188
    %v6190 = vpop.f32.mrf.mxu0
    %6191 = vmatprep.mubr.bf16.mxu0 %v5759
    %6192 = vmatmul.mubr.bf16.gmra.mxu0 %v5653
    %v6193 = vpop.f32.mrf.mxu0
    %v6194 = vadd.f32 %v6033, %v6193
    %v6195 = vpop.f32.mrf.mxu0
    %v6196 = vpop.f32.mrf.mxu0
    %v6197 = vadd.f32 %v6036, %v6196
    %v6198 = vpop.f32.mrf.mxu0
    %6199 = vmatprep.mubr.bf16.mxu0 %v5760
    %6200 = vmatmul.mubr.bf16.gmra.mxu0 %v5654
    %v6201 = vpop.f32.mrf.mxu0
    %v6202 = vadd.f32 %v6041, %v6201
    %v6203 = vpop.f32.mrf.mxu0
    %v6204 = vpop.f32.mrf.mxu0
    %v6205 = vadd.f32 %v6044, %v6204
    %v6206 = vpop.f32.mrf.mxu0
    %6207 = vmatprep.mubr.bf16.mxu0 %v5761
    %6208 = vmatmul.mubr.bf16.gmra.mxu0 %v5655
    %v6209 = vpop.f32.mrf.mxu0
    %v6210 = vadd.f32 %v6049, %v6209
    %v6211 = vpop.f32.mrf.mxu0
    %v6212 = vpop.f32.mrf.mxu0
    %v6213 = vadd.f32 %v6052, %v6212
    %v6214 = vpop.f32.mrf.mxu0
    %6215 = vmatprep.mubr.bf16.mxu0 %v5762
    %6216 = vmatmul.mubr.bf16.gmra.mxu0 %v5656
    %v6217 = vpop.f32.mrf.mxu0
    %v6218 = vadd.f32 %v6057, %v6217
    %v6219 = vpop.f32.mrf.mxu0
    %v6220 = vpop.f32.mrf.mxu0
    %v6221 = vadd.f32 %v6060, %v6220
    %v6222 = vpop.f32.mrf.mxu0
    %6223 = vmatprep.mubr.bf16.mxu0 %v5763
    %6224 = vmatmul.mubr.bf16.gmra.mxu0 %v5657
    %v6225 = vpop.f32.mrf.mxu0
    %v6226 = vadd.f32 %v6065, %v6225
    %v6227 = vpop.f32.mrf.mxu0
    %v6228 = vpop.f32.mrf.mxu0
    %v6229 = vadd.f32 %v6068, %v6228
    %v6230 = vpop.f32.mrf.mxu0
    %6231 = vmatprep.mubr.bf16.mxu0 %v5764
    %6232 = vmatmul.mubr.bf16.gmra.mxu0 %v5658
    %v6233 = vpop.f32.mrf.mxu0
    %v6234 = vadd.f32 %v6073, %v6233
    %v6235 = vpop.f32.mrf.mxu0
    %v6236 = vpop.f32.mrf.mxu0
    %v6237 = vadd.f32 %v6076, %v6236
    %v6238 = vpop.f32.mrf.mxu0
    %6239 = vmatprep.mubr.bf16.mxu0 %v5765
    %6240 = vmatmul.mubr.bf16.gmra.mxu0 %v5659
    %v6241 = vpop.f32.mrf.mxu0
    %v6242 = vadd.f32 %v6081, %v6241
    %v6243 = vpop.f32.mrf.mxu0
    %v6244 = vpop.f32.mrf.mxu0
    %v6245 = vadd.f32 %v6084, %v6244
    %v6246 = vpop.f32.mrf.mxu0
    %6247 = vmatprep.mubr.bf16.mxu0 %v5766
    %6248 = vmatmul.mubr.bf16.gmra.mxu0 %v5660
    %v6249 = vpop.f32.mrf.mxu0
    %v6250 = vadd.f32 %v6089, %v6249
    %v6251 = vpop.f32.mrf.mxu0
    %v6252 = vpop.f32.mrf.mxu0
    %v6253 = vadd.f32 %v6092, %v6252
    %v6254 = vpop.f32.mrf.mxu0
    %6255 = vmatprep.mubr.bf16.mxu0 %v5767
    %6256 = vmatmul.mubr.bf16.gmra.mxu0 %v5661
    %v6257 = vpop.f32.mrf.mxu0
    %v6258 = vadd.f32 %v6097, %v6257
    %v6259 = vpop.f32.mrf.mxu0
    %v6260 = vpop.f32.mrf.mxu0
    %v6261 = vadd.f32 %v6100, %v6260
    %v6262 = vpop.f32.mrf.mxu0
    %6263 = vmatprep.mubr.bf16.mxu0 %v5780
    %6264 = vmatmul.mubr.bf16.gmra.mxu0 %v5774
    %v6265 = vpop.f32.mrf.mxu0
    %v6266 = vadd.f32 %v6105, %v6265
    %v6267 = vpop.f32.mrf.mxu0
    %v6268 = vpop.f32.mrf.mxu0
    %v6269 = vadd.f32 %v6108, %v6268
    %v6270 = vpop.f32.mrf.mxu0
    %6271 = vdwg.mxu0
    %6272 = vmatprep.subr.bf16.mxu0 0
    %6273 = vmatpush1.bf16.msra.mxu0 %v1735
    %6274 = vmatprep.subr.bf16.mxu0 0
    %6275 = vmatpush1.bf16.msra.mxu0 %v1734
    %6276 = vmatprep.subr.bf16.mxu0 0
    %6277 = vmatpush1.bf16.msra.mxu0 %v1733
    %6278 = vmatprep.subr.bf16.mxu0 0
    %6279 = vmatpush1.bf16.msra.mxu0 %v1732
    %6280 = vmatprep.subr.bf16.mxu0 0
    %6281 = vmatpush1.bf16.msra.mxu0 %v1731
    %6282 = vmatprep.subr.bf16.mxu0 0
    %6283 = vmatpush1.bf16.msra.mxu0 %v1730
    %6284 = vmatprep.subr.bf16.mxu0 0
    %6285 = vmatpush1.bf16.msra.mxu0 %v1729
    %6286 = vmatprep.subr.bf16.mxu0 0
    %6287 = vmatpush1.bf16.msra.mxu0 %v1728
    %6288 = vmatprep.subr.bf16.mxu0 0
    %6289 = vmatpush2.bf16.msra.mxu0 %v1743
    %6290 = vmatprep.subr.bf16.mxu0 0
    %6291 = vmatpush2.bf16.msra.mxu0 %v1742
    %6292 = vmatprep.subr.bf16.mxu0 0
    %6293 = vmatpush2.bf16.msra.mxu0 %v1741
    %6294 = vmatprep.subr.bf16.mxu0 0
    %6295 = vmatpush2.bf16.msra.mxu0 %v1740
    %6296 = vmatprep.subr.bf16.mxu0 0
    %6297 = vmatpush2.bf16.msra.mxu0 %v1739
    %6298 = vmatprep.subr.bf16.mxu0 0
    %6299 = vmatpush2.bf16.msra.mxu0 %v1738
    %6300 = vmatprep.subr.bf16.mxu0 0
    %6301 = vmatpush2.bf16.msra.mxu0 %v1737
    %6302 = vmatprep.subr.bf16.mxu0 0
    %6303 = vmatpush2.bf16.msra.mxu0 %v1736
    %6304 = vmatprep.mubr.bf16.mxu0 %v5648
    %6305 = vmatmul.mubr.bf16.gmra.mxu0 %v5633
    %v6306 = vpop.f32.mrf.mxu0
    %v6307 = vadd.f32 %v6146, %v6306
    %v6308 = vpop.f32.mrf.mxu0
    %v6309 = vpop.f32.mrf.mxu0
    %v6310 = vadd.f32 %v6149, %v6309
    %v6311 = vpop.f32.mrf.mxu0
    %6312 = vmatprep.mubr.bf16.mxu0 %v5649
    %6313 = vmatmul.mubr.bf16.gmra.mxu0 %v5634
    %v6314 = vpop.f32.mrf.mxu0
    %v6315 = vadd.f32 %v6154, %v6314
    %v6316 = vpop.f32.mrf.mxu0
    %v6317 = vpop.f32.mrf.mxu0
    %v6318 = vadd.f32 %v6157, %v6317
    %v6319 = vpop.f32.mrf.mxu0
    %6320 = vmatprep.mubr.bf16.mxu0 %v5650
    %6321 = vmatmul.mubr.bf16.gmra.mxu0 %v5635
    %v6322 = vpop.f32.mrf.mxu0
    %v6323 = vadd.f32 %v6162, %v6322
    %v6324 = vpop.f32.mrf.mxu0
    %v6325 = vpop.f32.mrf.mxu0
    %v6326 = vadd.f32 %v6165, %v6325
    %v6327 = vpop.f32.mrf.mxu0
    %6328 = vmatprep.mubr.bf16.mxu0 %v5651
    %6329 = vmatmul.mubr.bf16.gmra.mxu0 %v5636
    %v6330 = vpop.f32.mrf.mxu0
    %v6331 = vadd.f32 %v6170, %v6330
    %v6332 = vpop.f32.mrf.mxu0
    %v6333 = vpop.f32.mrf.mxu0
    %v6334 = vadd.f32 %v6173, %v6333
    %v6335 = vpop.f32.mrf.mxu0
    %6336 = vmatprep.mubr.bf16.mxu0 %v5652
    %6337 = vmatmul.mubr.bf16.gmra.mxu0 %v5637
    %v6338 = vpop.f32.mrf.mxu0
    %v6339 = vadd.f32 %v6178, %v6338
    %v6340 = vpop.f32.mrf.mxu0
    %v6341 = vpop.f32.mrf.mxu0
    %v6342 = vadd.f32 %v6181, %v6341
    %v6343 = vpop.f32.mrf.mxu0
    %6344 = vmatprep.mubr.bf16.mxu0 %v5653
    %6345 = vmatmul.mubr.bf16.gmra.mxu0 %v5638
    %v6346 = vpop.f32.mrf.mxu0
    %v6347 = vadd.f32 %v6186, %v6346
    %v6348 = vpop.f32.mrf.mxu0
    %v6349 = vpop.f32.mrf.mxu0
    %v6350 = vadd.f32 %v6189, %v6349
    %v6351 = vpop.f32.mrf.mxu0
    %6352 = vmatprep.mubr.bf16.mxu0 %v5654
    %6353 = vmatmul.mubr.bf16.gmra.mxu0 %v5639
    %v6354 = vpop.f32.mrf.mxu0
    %v6355 = vadd.f32 %v6194, %v6354
    %v6356 = vpop.f32.mrf.mxu0
    %v6357 = vpop.f32.mrf.mxu0
    %v6358 = vadd.f32 %v6197, %v6357
    %v6359 = vpop.f32.mrf.mxu0
    %6360 = vmatprep.mubr.bf16.mxu0 %v5655
    %6361 = vmatmul.mubr.bf16.gmra.mxu0 %v5640
    %v6362 = vpop.f32.mrf.mxu0
    %v6363 = vadd.f32 %v6202, %v6362
    %v6364 = vpop.f32.mrf.mxu0
    %v6365 = vpop.f32.mrf.mxu0
    %v6366 = vadd.f32 %v6205, %v6365
    %v6367 = vpop.f32.mrf.mxu0
    %6368 = vmatprep.mubr.bf16.mxu0 %v5656
    %6369 = vmatmul.mubr.bf16.gmra.mxu0 %v5641
    %v6370 = vpop.f32.mrf.mxu0
    %v6371 = vadd.f32 %v6210, %v6370
    %v6372 = vpop.f32.mrf.mxu0
    %v6373 = vpop.f32.mrf.mxu0
    %v6374 = vadd.f32 %v6213, %v6373
    %v6375 = vpop.f32.mrf.mxu0
    %6376 = vmatprep.mubr.bf16.mxu0 %v5657
    %6377 = vmatmul.mubr.bf16.gmra.mxu0 %v5642
    %v6378 = vpop.f32.mrf.mxu0
    %v6379 = vadd.f32 %v6218, %v6378
    %v6380 = vpop.f32.mrf.mxu0
    %v6381 = vpop.f32.mrf.mxu0
    %v6382 = vadd.f32 %v6221, %v6381
    %v6383 = vpop.f32.mrf.mxu0
    %6384 = vmatprep.mubr.bf16.mxu0 %v5658
    %6385 = vmatmul.mubr.bf16.gmra.mxu0 %v5643
    %v6386 = vpop.f32.mrf.mxu0
    %v6387 = vadd.f32 %v6226, %v6386
    %v6388 = vpop.f32.mrf.mxu0
    %v6389 = vpop.f32.mrf.mxu0
    %v6390 = vadd.f32 %v6229, %v6389
    %v6391 = vpop.f32.mrf.mxu0
    %6392 = vmatprep.mubr.bf16.mxu0 %v5659
    %6393 = vmatmul.mubr.bf16.gmra.mxu0 %v5644
    %v6394 = vpop.f32.mrf.mxu0
    %v6395 = vadd.f32 %v6234, %v6394
    %v6396 = vpop.f32.mrf.mxu0
    %v6397 = vpop.f32.mrf.mxu0
    %v6398 = vadd.f32 %v6237, %v6397
    %v6399 = vpop.f32.mrf.mxu0
    %6400 = vmatprep.mubr.bf16.mxu0 %v5660
    %6401 = vmatmul.mubr.bf16.gmra.mxu0 %v5645
    %v6402 = vpop.f32.mrf.mxu0
    %v6403 = vadd.f32 %v6242, %v6402
    %v6404 = vpop.f32.mrf.mxu0
    %v6405 = vpop.f32.mrf.mxu0
    %v6406 = vadd.f32 %v6245, %v6405
    %v6407 = vpop.f32.mrf.mxu0
    %6408 = vmatprep.mubr.bf16.mxu0 %v5661
    %6409 = vmatmul.mubr.bf16.gmra.mxu0 %v5646
    %v6410 = vpop.f32.mrf.mxu0
    %v6411 = vadd.f32 %v6250, %v6410
    %v6412 = vpop.f32.mrf.mxu0
    %v6413 = vpop.f32.mrf.mxu0
    %v6414 = vadd.f32 %v6253, %v6413
    %v6415 = vpop.f32.mrf.mxu0
    %6416 = vmatprep.mubr.bf16.mxu0 %v5774
    %6417 = vmatmul.mubr.bf16.gmra.mxu0 %v5773
    %v6418 = vpop.f32.mrf.mxu0
    %v6419 = vadd.f32 %v6258, %v6418
    %v6420 = vpop.f32.mrf.mxu0
    %v6421 = vpop.f32.mrf.mxu0
    %v6422 = vadd.f32 %v6261, %v6421
    %v6423 = vpop.f32.mrf.mxu0
    %6424 = vmatprep.mubr.bf16.mxu0 %v1232
    %6425 = vmatmul.mubr.bf16.gmra.mxu0 %v1232
    %v6426 = vpop.f32.mrf.mxu0
    %v6427 = vadd.f32 %v6266, %v6426
    %v6428 = vpop.f32.mrf.mxu0
    %v6429 = vpop.f32.mrf.mxu0
    %v6430 = vadd.f32 %v6269, %v6429
    %v6431 = vpop.f32.mrf.mxu0
    %6432 = vdwg.mxu0
    %6433 = vmatprep.subr.bf16.mxu0 0
    %6434 = vmatpush1.bf16.msra.mxu0 %v1751
    %6435 = vmatprep.subr.bf16.mxu0 0
    %6436 = vmatpush1.bf16.msra.mxu0 %v1750
    %6437 = vmatprep.subr.bf16.mxu0 0
    %6438 = vmatpush1.bf16.msra.mxu0 %v1749
    %6439 = vmatprep.subr.bf16.mxu0 0
    %6440 = vmatpush1.bf16.msra.mxu0 %v1748
    %6441 = vmatprep.subr.bf16.mxu0 0
    %6442 = vmatpush1.bf16.msra.mxu0 %v1747
    %6443 = vmatprep.subr.bf16.mxu0 0
    %6444 = vmatpush1.bf16.msra.mxu0 %v1746
    %6445 = vmatprep.subr.bf16.mxu0 0
    %6446 = vmatpush1.bf16.msra.mxu0 %v1745
    %6447 = vmatprep.subr.bf16.mxu0 0
    %6448 = vmatpush1.bf16.msra.mxu0 %v1744
    %6449 = vmatprep.subr.bf16.mxu0 0
    %6450 = vmatpush2.bf16.msra.mxu0 0
    %6451 = vmatprep.subr.bf16.mxu0 0
    %6452 = vmatpush2.bf16.msra.mxu0 0
    %6453 = vmatprep.subr.bf16.mxu0 0
    %6454 = vmatpush2.bf16.msra.mxu0 0
    %6455 = vmatprep.subr.bf16.mxu0 0
    %6456 = vmatpush2.bf16.msra.mxu0 0
    %6457 = vmatprep.subr.bf16.mxu0 0
    %6458 = vmatpush2.bf16.msra.mxu0 0
    %6459 = vmatprep.subr.bf16.mxu0 0
    %6460 = vmatpush2.bf16.msra.mxu0 0
    %6461 = vmatprep.subr.bf16.mxu0 0
    %6462 = vmatpush2.bf16.msra.mxu0 0
    %6463 = vmatprep.subr.bf16.mxu0 0
    %6464 = vmatpush2.bf16.msra.mxu0 0
    %6465 = vmatprep.mubr.bf16.mxu0 0
    %6466 = vmatmul.mubr.bf16.gmra.mxu0 %v5754
    %v6467 = vpop.f32.mrf.mxu0
    %v6468 = vadd.f32 %v6307, %v6467
    %v6469 = vpop.f32.mrf.mxu0
    %v6470 = vpop.f32.mrf.mxu0
    %v6471 = vadd.f32 %v6310, %v6470
    %v6472 = vpop.f32.mrf.mxu0
    %6473 = vmatprep.mubr.bf16.mxu0 0
    %6474 = vmatmul.mubr.bf16.gmra.mxu0 %v5755
    %v6475 = vpop.f32.mrf.mxu0
    %v6476 = vadd.f32 %v6315, %v6475
    %v6477 = vpop.f32.mrf.mxu0
    %v6478 = vpop.f32.mrf.mxu0
    %v6479 = vadd.f32 %v6318, %v6478
    %v6480 = vpop.f32.mrf.mxu0
    %6481 = vmatprep.mubr.bf16.mxu0 0
    %6482 = vmatmul.mubr.bf16.gmra.mxu0 %v5756
    %v6483 = vpop.f32.mrf.mxu0
    %v6484 = vadd.f32 %v6323, %v6483
    %v6485 = vpop.f32.mrf.mxu0
    %v6486 = vpop.f32.mrf.mxu0
    %v6487 = vadd.f32 %v6326, %v6486
    %v6488 = vpop.f32.mrf.mxu0
    %6489 = vmatprep.mubr.bf16.mxu0 0
    %6490 = vmatmul.mubr.bf16.gmra.mxu0 %v5757
    %v6491 = vpop.f32.mrf.mxu0
    %v6492 = vadd.f32 %v6331, %v6491
    %v6493 = vpop.f32.mrf.mxu0
    %v6494 = vpop.f32.mrf.mxu0
    %v6495 = vadd.f32 %v6334, %v6494
    %v6496 = vpop.f32.mrf.mxu0
    %6497 = vmatprep.mubr.bf16.mxu0 0
    %6498 = vmatmul.mubr.bf16.gmra.mxu0 %v5758
    %v6499 = vpop.f32.mrf.mxu0
    %v6500 = vadd.f32 %v6339, %v6499
    %v6501 = vpop.f32.mrf.mxu0
    %v6502 = vpop.f32.mrf.mxu0
    %v6503 = vadd.f32 %v6342, %v6502
    %v6504 = vpop.f32.mrf.mxu0
    %6505 = vmatprep.mubr.bf16.mxu0 0
    %6506 = vmatmul.mubr.bf16.gmra.mxu0 %v5759
    %v6507 = vpop.f32.mrf.mxu0
    %v6508 = vadd.f32 %v6347, %v6507
    %v6509 = vpop.f32.mrf.mxu0
    %v6510 = vpop.f32.mrf.mxu0
    %v6511 = vadd.f32 %v6350, %v6510
    %v6512 = vpop.f32.mrf.mxu0
    %6513 = vmatprep.mubr.bf16.mxu0 0
    %6514 = vmatmul.mubr.bf16.gmra.mxu0 %v5760
    %v6515 = vpop.f32.mrf.mxu0
    %v6516 = vadd.f32 %v6355, %v6515
    %v6517 = vpop.f32.mrf.mxu0
    %v6518 = vpop.f32.mrf.mxu0
    %v6519 = vadd.f32 %v6358, %v6518
    %v6520 = vpop.f32.mrf.mxu0
    %6521 = vmatprep.mubr.bf16.mxu0 0
    %6522 = vmatmul.mubr.bf16.gmra.mxu0 %v5761
    %v6523 = vpop.f32.mrf.mxu0
    %v6524 = vadd.f32 %v6363, %v6523
    %v6525 = vpop.f32.mrf.mxu0
    %v6526 = vpop.f32.mrf.mxu0
    %v6527 = vadd.f32 %v6366, %v6526
    %v6528 = vpop.f32.mrf.mxu0
    %6529 = vmatprep.mubr.bf16.mxu0 0
    %6530 = vmatmul.mubr.bf16.gmra.mxu0 %v5762
    %v6531 = vpop.f32.mrf.mxu0
    %v6532 = vadd.f32 %v6371, %v6531
    %v6533 = vpop.f32.mrf.mxu0
    %v6534 = vpop.f32.mrf.mxu0
    %v6535 = vadd.f32 %v6374, %v6534
    %v6536 = vpop.f32.mrf.mxu0
    %6537 = vmatprep.mubr.bf16.mxu0 0
    %6538 = vmatmul.mubr.bf16.gmra.mxu0 %v5763
    %v6539 = vpop.f32.mrf.mxu0
    %v6540 = vadd.f32 %v6379, %v6539
    %v6541 = vpop.f32.mrf.mxu0
    %v6542 = vpop.f32.mrf.mxu0
    %v6543 = vadd.f32 %v6382, %v6542
    %v6544 = vpop.f32.mrf.mxu0
    %6545 = vmatprep.mubr.bf16.mxu0 0
    %6546 = vmatmul.mubr.bf16.gmra.mxu0 %v5764
    %v6547 = vpop.f32.mrf.mxu0
    %v6548 = vadd.f32 %v6387, %v6547
    %v6549 = vpop.f32.mrf.mxu0
    %v6550 = vpop.f32.mrf.mxu0
    %v6551 = vadd.f32 %v6390, %v6550
    %v6552 = vpop.f32.mrf.mxu0
    %6553 = vmatprep.mubr.bf16.mxu0 0
    %6554 = vmatmul.mubr.bf16.gmra.mxu0 %v5765
    %v6555 = vpop.f32.mrf.mxu0
    %v6556 = vadd.f32 %v6395, %v6555
    %v6557 = vpop.f32.mrf.mxu0
    %v6558 = vpop.f32.mrf.mxu0
    %v6559 = vadd.f32 %v6398, %v6558
    %v6560 = vpop.f32.mrf.mxu0
    %6561 = vmatprep.mubr.bf16.mxu0 0
    %6562 = vmatmul.mubr.bf16.gmra.mxu0 %v5766
    %v6563 = vpop.f32.mrf.mxu0
    %v6564 = vadd.f32 %v6403, %v6563
    %v6565 = vpop.f32.mrf.mxu0
    %v6566 = vpop.f32.mrf.mxu0
    %v6567 = vadd.f32 %v6406, %v6566
    %v6568 = vpop.f32.mrf.mxu0
    %6569 = vmatprep.mubr.bf16.mxu0 0
    %6570 = vmatmul.mubr.bf16.gmra.mxu0 %v5767
    %v6571 = vpop.f32.mrf.mxu0
    %v6572 = vadd.f32 %v6411, %v6571
    %v6573 = vpop.f32.mrf.mxu0
    %v6574 = vpop.f32.mrf.mxu0
    %v6575 = vadd.f32 %v6414, %v6574
    %v6576 = vpop.f32.mrf.mxu0
    %6577 = vmatprep.mubr.bf16.mxu0 0
    %6578 = vmatmul.mubr.bf16.gmra.mxu0 %v5780
    %v6579 = vpop.f32.mrf.mxu0
    %v6580 = vadd.f32 %v6419, %v6579
    %v6581 = vpop.f32.mrf.mxu0
    %v6582 = vpop.f32.mrf.mxu0
    %v6583 = vadd.f32 %v6422, %v6582
    %v6584 = vpop.f32.mrf.mxu0
    %6585 = vmatprep.mubr.bf16.mxu0 0
    %6586 = vmatmul.mubr.bf16.gmra.mxu0 %v1232
    %v6587 = vpop.f32.mrf.mxu0
    %v6588 = vadd.f32 %v6427, %v6587
    %v6589 = vpop.f32.mrf.mxu0
    %v6590 = vpop.f32.mrf.mxu0
    %v6591 = vadd.f32 %v6430, %v6590
    %v6592 = vpop.f32.mrf.mxu0
    %6593 = vdwg.mxu0
    %6594 = vmatprep.subr.mxu0 0.0
    %6595 = vmatpush1.msra.mxu0 %v6527
    %6596 = vmatprep.subr.mxu0 0.0
    %6597 = vmatpush1.msra.mxu0 %v6524
    %6598 = vmatprep.subr.mxu0 0.0
    %6599 = vmatpush1.msra.mxu0 %v6519
    %6600 = vmatprep.subr.mxu0 0.0
    %6601 = vmatpush1.msra.mxu0 %v6516
    %6602 = vmatprep.subr.mxu0 0.0
    %6603 = vmatpush1.msra.mxu0 %v6511
    %6604 = vmatprep.subr.mxu0 0.0
    %6605 = vmatpush1.msra.mxu0 %v6508
    %6606 = vmatprep.subr.mxu0 0.0
    %6607 = vmatpush1.msra.mxu0 %v6503
    %6608 = vmatprep.subr.mxu0 0.0
    %6609 = vmatpush1.msra.mxu0 %v6500
    %6610 = vmatprep.subr.mxu0 0.0
    %6611 = vmatpush1.msra.mxu0 %v6495
    %6612 = vmatprep.subr.mxu0 0.0
    %6613 = vmatpush1.msra.mxu0 %v6492
    %6614 = vmatprep.subr.mxu0 0.0
    %6615 = vmatpush1.msra.mxu0 %v6487
    %6616 = vmatprep.subr.mxu0 0.0
    %6617 = vmatpush1.msra.mxu0 %v6484
    %6618 = vmatprep.subr.mxu0 0.0
    %6619 = vmatpush1.msra.mxu0 %v6479
    %6620 = vmatprep.subr.mxu0 0.0
    %6621 = vmatpush1.msra.mxu0 %v6476
    %6622 = vmatprep.subr.mxu0 0.0
    %6623 = vmatpush1.msra.mxu0 %v6471
    %6624 = vmatprep.subr.mxu0 0.0
    %6625 = vmatpush1.msra.mxu0 %v6468
    %6626 = vmatprep.subr.mxu0 0.0
    %6627 = vmatpush2.msra.mxu0 %v6591
    %6628 = vmatprep.subr.mxu0 0.0
    %6629 = vmatpush2.msra.mxu0 %v6588
    %6630 = vmatprep.subr.mxu0 0.0
    %6631 = vmatpush2.msra.mxu0 %v6583
    %6632 = vmatprep.subr.mxu0 0.0
    %6633 = vmatpush2.msra.mxu0 %v6580
    %6634 = vmatprep.subr.mxu0 0.0
    %6635 = vmatpush2.msra.mxu0 %v6575
    %6636 = vmatprep.subr.mxu0 0.0
    %6637 = vmatpush2.msra.mxu0 %v6572
    %6638 = vmatprep.subr.mxu0 0.0
    %6639 = vmatpush2.msra.mxu0 %v6567
    %6640 = vmatprep.subr.mxu0 0.0
    %6641 = vmatpush2.msra.mxu0 %v6564
    %6642 = vmatprep.subr.mxu0 0.0
    %6643 = vmatpush2.msra.mxu0 %v6559
    %6644 = vmatprep.subr.mxu0 0.0
    %6645 = vmatpush2.msra.mxu0 %v6556
    %6646 = vmatprep.subr.mxu0 0.0
    %6647 = vmatpush2.msra.mxu0 %v6551
    %6648 = vmatprep.subr.mxu0 0.0
    %6649 = vmatpush2.msra.mxu0 %v6548
    %6650 = vmatprep.subr.mxu0 0.0
    %6651 = vmatpush2.msra.mxu0 %v6543
    %6652 = vmatprep.subr.mxu0 0.0
    %6653 = vmatpush2.msra.mxu0 %v6540
    %6654 = vmatprep.subr.mxu0 0.0
    %6655 = vmatpush2.msra.mxu0 %v6535
    %6656 = vmatprep.subr.mxu0 0.0
    %6657 = vmatpush2.msra.mxu0 %v6532
    %6658 = vmatprep.mubr.f32.mxu0 0.00390625
    %6659 = vmatmul.mubr.f32.gmra.mxu0 0.00390625
    %v6660 = vpop.f32.mrf.mxu0
    %v6661 = vadd.f32 0.0, %v6660
    %v6662 = vpop.f32.mrf.mxu0
    %6663 = vdwg.mxu0
    %v6664 = vmul.f32 %v6468, %v6468
    %v6665 = vmul.f32 %v6471, %v6471
    %v6666 = vmul.f32 %v6476, %v6476
    %v6667 = vmul.f32 %v6479, %v6479
    %v6668 = vmul.f32 %v6484, %v6484
    %v6669 = vmul.f32 %v6487, %v6487
    %v6670 = vmul.f32 %v6492, %v6492
    %v6671 = vmul.f32 %v6495, %v6495
    %v6672 = vmul.f32 %v6500, %v6500
    %v6673 = vmul.f32 %v6503, %v6503
    %v6674 = vmul.f32 %v6508, %v6508
    %v6675 = vmul.f32 %v6511, %v6511
    %v6676 = vmul.f32 %v6516, %v6516
    %v6677 = vmul.f32 %v6519, %v6519
    %v6678 = vmul.f32 %v6524, %v6524
    %v6679 = vmul.f32 %v6527, %v6527
    %v6680 = vmul.f32 %v6532, %v6532
    %v6681 = vmul.f32 %v6535, %v6535
    %v6682 = vmul.f32 %v6540, %v6540
    %v6683 = vmul.f32 %v6543, %v6543
    %v6684 = vmul.f32 %v6548, %v6548
    %v6685 = vmul.f32 %v6551, %v6551
    %v6686 = vmul.f32 %v6556, %v6556
    %v6687 = vmul.f32 %v6559, %v6559
    %v6688 = vmul.f32 %v6564, %v6564
    %v6689 = vmul.f32 %v6567, %v6567
    %v6690 = vmul.f32 %v6572, %v6572
    %v6691 = vmul.f32 %v6575, %v6575
    %v6692 = vmul.f32 %v6580, %v6580
    %v6693 = vmul.f32 %v6583, %v6583
    %v6694 = vmul.f32 %v6588, %v6588
    %v6695 = vmul.f32 %v6591, %v6591
    %6696 = vmatprep.subr.mxu0 0.0
    %6697 = vmatpush1.msra.mxu0 %v6679
    %6698 = vmatprep.subr.mxu0 0.0
    %6699 = vmatpush1.msra.mxu0 %v6678
    %6700 = vmatprep.subr.mxu0 0.0
    %6701 = vmatpush1.msra.mxu0 %v6677
    %6702 = vmatprep.subr.mxu0 0.0
    %6703 = vmatpush1.msra.mxu0 %v6676
    %6704 = vmatprep.subr.mxu0 0.0
    %6705 = vmatpush1.msra.mxu0 %v6675
    %6706 = vmatprep.subr.mxu0 0.0
    %6707 = vmatpush1.msra.mxu0 %v6674
    %6708 = vmatprep.subr.mxu0 0.0
    %6709 = vmatpush1.msra.mxu0 %v6673
    %6710 = vmatprep.subr.mxu0 0.0
    %6711 = vmatpush1.msra.mxu0 %v6672
    %6712 = vmatprep.subr.mxu0 0.0
    %6713 = vmatpush1.msra.mxu0 %v6671
    %6714 = vmatprep.subr.mxu0 0.0
    %6715 = vmatpush1.msra.mxu0 %v6670
    %6716 = vmatprep.subr.mxu0 0.0
    %6717 = vmatpush1.msra.mxu0 %v6669
    %6718 = vmatprep.subr.mxu0 0.0
    %6719 = vmatpush1.msra.mxu0 %v6668
    %6720 = vmatprep.subr.mxu0 0.0
    %6721 = vmatpush1.msra.mxu0 %v6667
    %6722 = vmatprep.subr.mxu0 0.0
    %6723 = vmatpush1.msra.mxu0 %v6666
    %6724 = vmatprep.subr.mxu0 0.0
    %6725 = vmatpush1.msra.mxu0 %v6665
    %6726 = vmatprep.subr.mxu0 0.0
    %6727 = vmatpush1.msra.mxu0 %v6664
    %6728 = vmatprep.subr.mxu0 0.0
    %6729 = vmatpush2.msra.mxu0 %v6695
    %6730 = vmatprep.subr.mxu0 0.0
    %6731 = vmatpush2.msra.mxu0 %v6694
    %6732 = vmatprep.subr.mxu0 0.0
    %6733 = vmatpush2.msra.mxu0 %v6693
    %6734 = vmatprep.subr.mxu0 0.0
    %6735 = vmatpush2.msra.mxu0 %v6692
    %6736 = vmatprep.subr.mxu0 0.0
    %6737 = vmatpush2.msra.mxu0 %v6691
    %6738 = vmatprep.subr.mxu0 0.0
    %6739 = vmatpush2.msra.mxu0 %v6690
    %6740 = vmatprep.subr.mxu0 0.0
    %6741 = vmatpush2.msra.mxu0 %v6689
    %6742 = vmatprep.subr.mxu0 0.0
    %6743 = vmatpush2.msra.mxu0 %v6688
    %6744 = vmatprep.subr.mxu0 0.0
    %6745 = vmatpush2.msra.mxu0 %v6687
    %6746 = vmatprep.subr.mxu0 0.0
    %6747 = vmatpush2.msra.mxu0 %v6686
    %6748 = vmatprep.subr.mxu0 0.0
    %6749 = vmatpush2.msra.mxu0 %v6685
    %6750 = vmatprep.subr.mxu0 0.0
    %6751 = vmatpush2.msra.mxu0 %v6684
    %6752 = vmatprep.subr.mxu0 0.0
    %6753 = vmatpush2.msra.mxu0 %v6683
    %6754 = vmatprep.subr.mxu0 0.0
    %6755 = vmatpush2.msra.mxu0 %v6682
    %6756 = vmatprep.subr.mxu0 0.0
    %6757 = vmatpush2.msra.mxu0 %v6681
    %6758 = vmatprep.subr.mxu0 0.0
    %6759 = vmatpush2.msra.mxu0 %v6680
    %6760 = vmatprep.mubr.f32.mxu0 0.00390625
    %6761 = vmatmul.mubr.f32.gmra.mxu0 0.00390625
    %v6762 = vpop.f32.mrf.mxu0
    %v6763 = vadd.f32 0.0, %v6762
    %v6764 = vpop.f32.mrf.mxu0
    %6765 = vdwg.mxu0
    %6766 = vmatprep.subr.mxu0 0.0
    %6767 = vmatpush1.msra.mxu0 %v160
    %6768 = vmatprep.subr.mxu0 0.0
    %6769 = vmatpush1.msra.mxu0 %v159
    %6770 = vmatprep.subr.mxu0 0.0
    %6771 = vmatpush1.msra.mxu0 %v158
    %6772 = vmatprep.subr.mxu0 0.0
    %6773 = vmatpush1.msra.mxu0 %v157
    %6774 = vmatprep.subr.mxu0 0.0
    %6775 = vmatpush1.msra.mxu0 %v156
    %6776 = vmatprep.subr.mxu0 0.0
    %6777 = vmatpush1.msra.mxu0 %v155
    %6778 = vmatprep.subr.mxu0 0.0
    %6779 = vmatpush1.msra.mxu0 %v154
    %6780 = vmatprep.subr.mxu0 0.0
    %6781 = vmatpush1.msra.mxu0 %v153
    %6782 = vmatprep.subr.mxu0 0.0
    %6783 = vmatpush1.msra.mxu0 %v152
    %6784 = vmatprep.subr.mxu0 0.0
    %6785 = vmatpush1.msra.mxu0 %v151
    %6786 = vmatprep.subr.mxu0 0.0
    %6787 = vmatpush1.msra.mxu0 %v150
    %6788 = vmatprep.subr.mxu0 0.0
    %6789 = vmatpush1.msra.mxu0 %v149
    %6790 = vmatprep.subr.mxu0 0.0
    %6791 = vmatpush1.msra.mxu0 %v148
    %6792 = vmatprep.subr.mxu0 0.0
    %6793 = vmatpush1.msra.mxu0 %v147
    %6794 = vmatprep.subr.mxu0 0.0
    %6795 = vmatpush1.msra.mxu0 %v146
    %6796 = vmatprep.subr.mxu0 0.0
    %6797 = vmatpush1.msra.mxu0 %v145
    %6798 = vmatprep.subr.mxu0 0.0
    %6799 = vmatpush2.msra.mxu0 0.0
    %6800 = vmatprep.subr.mxu0 0.0
    %6801 = vmatpush2.msra.mxu0 0.0
    %6802 = vmatprep.subr.mxu0 0.0
    %6803 = vmatpush2.msra.mxu0 0.0
    %6804 = vmatprep.subr.mxu0 0.0
    %6805 = vmatpush2.msra.mxu0 0.0
    %6806 = vmatprep.subr.mxu0 0.0
    %6807 = vmatpush2.msra.mxu0 0.0
    %6808 = vmatprep.subr.mxu0 0.0
    %6809 = vmatpush2.msra.mxu0 0.0
    %6810 = vmatprep.subr.mxu0 0.0
    %6811 = vmatpush2.msra.mxu0 0.0
    %6812 = vmatprep.subr.mxu0 0.0
    %6813 = vmatpush2.msra.mxu0 0.0
    %6814 = vmatprep.subr.mxu0 0.0
    %6815 = vmatpush2.msra.mxu0 0.0
    %6816 = vmatprep.subr.mxu0 0.0
    %6817 = vmatpush2.msra.mxu0 0.0
    %6818 = vmatprep.subr.mxu0 0.0
    %6819 = vmatpush2.msra.mxu0 0.0
    %6820 = vmatprep.subr.mxu0 0.0
    %6821 = vmatpush2.msra.mxu0 0.0
    %6822 = vmatprep.subr.mxu0 0.0
    %6823 = vmatpush2.msra.mxu0 0.0
    %6824 = vmatprep.subr.mxu0 0.0
    %6825 = vmatpush2.msra.mxu0 0.0
    %6826 = vmatprep.subr.mxu0 0.0
    %6827 = vmatpush2.msra.mxu0 0.0
    %6828 = vmatprep.subr.mxu0 0.0
    %6829 = vmatpush2.msra.mxu0 0.0
    %6830 = vmatprep.mubr.f32.mxu0 0.0
    %6831 = vmatmul.mubr.f32.gmra.mxu0 %v6661
    %v6832 = vpop.f32.mrf.mxu0
    %v6833 = vadd.f32 0.0, %v6832
    %v6834 = vpop.f32.mrf.mxu0
    %6835 = vdwg.mxu0
    %6836 = vmatprep.subr.mxu0 0.0
    %6837 = vmatpush1.msra.mxu0 %v160
    %6838 = vmatprep.subr.mxu0 0.0
    %6839 = vmatpush1.msra.mxu0 %v159
    %6840 = vmatprep.subr.mxu0 0.0
    %6841 = vmatpush1.msra.mxu0 %v158
    %6842 = vmatprep.subr.mxu0 0.0
    %6843 = vmatpush1.msra.mxu0 %v157
    %6844 = vmatprep.subr.mxu0 0.0
    %6845 = vmatpush1.msra.mxu0 %v156
    %6846 = vmatprep.subr.mxu0 0.0
    %6847 = vmatpush1.msra.mxu0 %v155
    %6848 = vmatprep.subr.mxu0 0.0
    %6849 = vmatpush1.msra.mxu0 %v154
    %6850 = vmatprep.subr.mxu0 0.0
    %6851 = vmatpush1.msra.mxu0 %v153
    %6852 = vmatprep.subr.mxu0 0.0
    %6853 = vmatpush1.msra.mxu0 %v152
    %6854 = vmatprep.subr.mxu0 0.0
    %6855 = vmatpush1.msra.mxu0 %v151
    %6856 = vmatprep.subr.mxu0 0.0
    %6857 = vmatpush1.msra.mxu0 %v150
    %6858 = vmatprep.subr.mxu0 0.0
    %6859 = vmatpush1.msra.mxu0 %v149
    %6860 = vmatprep.subr.mxu0 0.0
    %6861 = vmatpush1.msra.mxu0 %v148
    %6862 = vmatprep.subr.mxu0 0.0
    %6863 = vmatpush1.msra.mxu0 %v147
    %6864 = vmatprep.subr.mxu0 0.0
    %6865 = vmatpush1.msra.mxu0 %v146
    %6866 = vmatprep.subr.mxu0 0.0
    %6867 = vmatpush1.msra.mxu0 %v145
    %6868 = vmatprep.subr.mxu0 0.0
    %6869 = vmatpush2.msra.mxu0 0.0
    %6870 = vmatprep.subr.mxu0 0.0
    %6871 = vmatpush2.msra.mxu0 0.0
    %6872 = vmatprep.subr.mxu0 0.0
    %6873 = vmatpush2.msra.mxu0 0.0
    %6874 = vmatprep.subr.mxu0 0.0
    %6875 = vmatpush2.msra.mxu0 0.0
    %6876 = vmatprep.subr.mxu0 0.0
    %6877 = vmatpush2.msra.mxu0 0.0
    %6878 = vmatprep.subr.mxu0 0.0
    %6879 = vmatpush2.msra.mxu0 0.0
    %6880 = vmatprep.subr.mxu0 0.0
    %6881 = vmatpush2.msra.mxu0 0.0
    %6882 = vmatprep.subr.mxu0 0.0
    %6883 = vmatpush2.msra.mxu0 0.0
    %6884 = vmatprep.subr.mxu0 0.0
    %6885 = vmatpush2.msra.mxu0 0.0
    %6886 = vmatprep.subr.mxu0 0.0
    %6887 = vmatpush2.msra.mxu0 0.0
    %6888 = vmatprep.subr.mxu0 0.0
    %6889 = vmatpush2.msra.mxu0 0.0
    %6890 = vmatprep.subr.mxu0 0.0
    %6891 = vmatpush2.msra.mxu0 0.0
    %6892 = vmatprep.subr.mxu0 0.0
    %6893 = vmatpush2.msra.mxu0 0.0
    %6894 = vmatprep.subr.mxu0 0.0
    %6895 = vmatpush2.msra.mxu0 0.0
    %6896 = vmatprep.subr.mxu0 0.0
    %6897 = vmatpush2.msra.mxu0 0.0
    %6898 = vmatprep.subr.mxu0 0.0
    %6899 = vmatpush2.msra.mxu0 0.0
    %6900 = vmatprep.mubr.f32.mxu0 0.0
    %6901 = vmatmul.mubr.f32.gmra.mxu0 %v6763
    %v6902 = vpop.f32.mrf.mxu0
    %v6903 = vadd.f32 0.0, %v6902
    %v6904 = vpop.f32.mrf.mxu0
    %6905 = vdwg.mxu0
    %v6906 = vmul.f32 %v6833, %v6833
    %v6907 = vsub.f32 %v6903, %v6906
    %v6908 = vadd.f32 %v6907, 1e-05
    %v6909 = vrsqrt.pop %v6908
    %v6910 = vlaneseq
    %v6911 = vshrl.u32 %v6910, 7
    %v6912 = vsub.s32 0, %v6911
    %v6913 = vrot.slane %v6833, %v6912
    %v6914 = vsub.f32 %v6468, %v6913
    %v6915 = vsub.f32 %v6471, %v6913
    %v6916 = vsub.f32 %v6476, %v6913
    %v6917 = vsub.f32 %v6479, %v6913
    %v6918 = vsub.f32 %v6484, %v6913
    %v6919 = vsub.f32 %v6487, %v6913
    %v6920 = vsub.f32 %v6492, %v6913
    %v6921 = vsub.f32 %v6495, %v6913
    %v6922 = vsub.f32 %v6500, %v6913
    %v6923 = vsub.f32 %v6503, %v6913
    %v6924 = vsub.f32 %v6508, %v6913
    %v6925 = vsub.f32 %v6511, %v6913
    %v6926 = vsub.f32 %v6516, %v6913
    %v6927 = vsub.f32 %v6519, %v6913
    %v6928 = vsub.f32 %v6524, %v6913
    %v6929 = vsub.f32 %v6527, %v6913
    %v6930 = vsub.f32 %v6532, %v6913
    %v6931 = vsub.f32 %v6535, %v6913
    %v6932 = vsub.f32 %v6540, %v6913
    %v6933 = vsub.f32 %v6543, %v6913
    %v6934 = vsub.f32 %v6548, %v6913
    %v6935 = vsub.f32 %v6551, %v6913
    %v6936 = vsub.f32 %v6556, %v6913
    %v6937 = vsub.f32 %v6559, %v6913
    %v6938 = vsub.f32 %v6564, %v6913
    %v6939 = vsub.f32 %v6567, %v6913
    %v6940 = vsub.f32 %v6572, %v6913
    %v6941 = vsub.f32 %v6575, %v6913
    %v6942 = vsub.f32 %v6580, %v6913
    %v6943 = vsub.f32 %v6583, %v6913
    %v6944 = vsub.f32 %v6588, %v6913
    %v6945 = vsub.f32 %v6591, %v6913
    %v6946 = vlaneseq
    %v6947 = vshrl.u32 %v6946, 7
    %v6948 = vsub.s32 0, %v6947
    %v6949 = vrot.slane %v6909, %v6948
    %v6950 = vmul.f32 %v6914, %v6949
    %v6951 = vmul.f32 %v6915, %v6949
    %v6952 = vmul.f32 %v6916, %v6949
    %v6953 = vmul.f32 %v6917, %v6949
    %v6954 = vmul.f32 %v6918, %v6949
    %v6955 = vmul.f32 %v6919, %v6949
    %v6956 = vmul.f32 %v6920, %v6949
    %v6957 = vmul.f32 %v6921, %v6949
    %v6958 = vmul.f32 %v6922, %v6949
    %v6959 = vmul.f32 %v6923, %v6949
    %v6960 = vmul.f32 %v6924, %v6949
    %v6961 = vmul.f32 %v6925, %v6949
    %v6962 = vmul.f32 %v6926, %v6949
    %v6963 = vmul.f32 %v6927, %v6949
    %v6964 = vmul.f32 %v6928, %v6949
    %v6965 = vmul.f32 %v6929, %v6949
    %v6966 = vmul.f32 %v6930, %v6949
    %v6967 = vmul.f32 %v6931, %v6949
    %v6968 = vmul.f32 %v6932, %v6949
    %v6969 = vmul.f32 %v6933, %v6949
    %v6970 = vmul.f32 %v6934, %v6949
    %v6971 = vmul.f32 %v6935, %v6949
    %v6972 = vmul.f32 %v6936, %v6949
    %v6973 = vmul.f32 %v6937, %v6949
    %v6974 = vmul.f32 %v6938, %v6949
    %v6975 = vmul.f32 %v6939, %v6949
    %v6976 = vmul.f32 %v6940, %v6949
    %v6977 = vmul.f32 %v6941, %v6949
    %v6978 = vmul.f32 %v6942, %v6949
    %v6979 = vmul.f32 %v6943, %v6949
    %v6980 = vmul.f32 %v6944, %v6949
    %v6981 = vmul.f32 %v6945, %v6949
    %v6982 = vmul.f32 %v6950, %v3021
    %v6983 = vmul.f32 %v6951, %v3021
    %v6984 = vmul.f32 %v6952, %v3021
    %v6985 = vmul.f32 %v6953, %v3021
    %v6986 = vmul.f32 %v6954, %v3021
    %v6987 = vmul.f32 %v6955, %v3021
    %v6988 = vmul.f32 %v6956, %v3021
    %v6989 = vmul.f32 %v6957, %v3021
    %v6990 = vmul.f32 %v6958, %v3021
    %v6991 = vmul.f32 %v6959, %v3021
    %v6992 = vmul.f32 %v6960, %v3021
    %v6993 = vmul.f32 %v6961, %v3021
    %v6994 = vmul.f32 %v6962, %v3021
    %v6995 = vmul.f32 %v6963, %v3021
    %v6996 = vmul.f32 %v6964, %v3021
    %v6997 = vmul.f32 %v6965, %v3021
    %v6998 = vmul.f32 %v6966, %v3021
    %v6999 = vmul.f32 %v6967, %v3021
    %v7000 = vmul.f32 %v6968, %v3021
    %v7001 = vmul.f32 %v6969, %v3021
    %v7002 = vmul.f32 %v6970, %v3021
    %v7003 = vmul.f32 %v6971, %v3021
    %v7004 = vmul.f32 %v6972, %v3021
    %v7005 = vmul.f32 %v6973, %v3021
    %v7006 = vmul.f32 %v6974, %v3021
    %v7007 = vmul.f32 %v6975, %v3021
    %v7008 = vmul.f32 %v6976, %v3021
    %v7009 = vmul.f32 %v6977, %v3021
    %v7010 = vmul.f32 %v6978, %v3021
    %v7011 = vmul.f32 %v6979, %v3021
    %v7012 = vmul.f32 %v6980, %v3021
    %v7013 = vmul.f32 %v6981, %v3021
    %v7014 = vadd.f32 %v6982, %v3059
    %v7015 = vadd.f32 %v6983, %v3059
    %v7016 = vadd.f32 %v6984, %v3059
    %v7017 = vadd.f32 %v6985, %v3059
    %v7018 = vadd.f32 %v6986, %v3059
    %v7019 = vadd.f32 %v6987, %v3059
    %v7020 = vadd.f32 %v6988, %v3059
    %v7021 = vadd.f32 %v6989, %v3059
    %v7022 = vadd.f32 %v6990, %v3059
    %v7023 = vadd.f32 %v6991, %v3059
    %v7024 = vadd.f32 %v6992, %v3059
    %v7025 = vadd.f32 %v6993, %v3059
    %v7026 = vadd.f32 %v6994, %v3059
    %v7027 = vadd.f32 %v6995, %v3059
    %v7028 = vadd.f32 %v6996, %v3059
    %v7029 = vadd.f32 %v6997, %v3059
    %v7030 = vadd.f32 %v6998, %v3059
    %v7031 = vadd.f32 %v6999, %v3059
    %v7032 = vadd.f32 %v7000, %v3059
    %v7033 = vadd.f32 %v7001, %v3059
    %v7034 = vadd.f32 %v7002, %v3059
    %v7035 = vadd.f32 %v7003, %v3059
    %v7036 = vadd.f32 %v7004, %v3059
    %v7037 = vadd.f32 %v7005, %v3059
    %v7038 = vadd.f32 %v7006, %v3059
    %v7039 = vadd.f32 %v7007, %v3059
    %v7040 = vadd.f32 %v7008, %v3059
    %v7041 = vadd.f32 %v7009, %v3059
    %v7042 = vadd.f32 %v7010, %v3059
    %v7043 = vadd.f32 %v7011, %v3059
    %v7044 = vadd.f32 %v7012, %v3059
    %v7045 = vadd.f32 %v7013, %v3059
    %v7046 = vsub.f32 0.0, %v7014
    %v7047 = vsub.f32 0.0, %v7015
    %v7048 = vsub.f32 0.0, %v7016
    %v7049 = vsub.f32 0.0, %v7017
    %v7050 = vsub.f32 0.0, %v7018
    %v7051 = vsub.f32 0.0, %v7019
    %v7052 = vsub.f32 0.0, %v7020
    %v7053 = vsub.f32 0.0, %v7021
    %v7054 = vsub.f32 0.0, %v7022
    %v7055 = vsub.f32 0.0, %v7023
    %v7056 = vsub.f32 0.0, %v7024
    %v7057 = vsub.f32 0.0, %v7025
    %v7058 = vsub.f32 0.0, %v7026
    %v7059 = vsub.f32 0.0, %v7027
    %v7060 = vsub.f32 0.0, %v7028
    %v7061 = vsub.f32 0.0, %v7029
    %v7062 = vsub.f32 0.0, %v7030
    %v7063 = vsub.f32 0.0, %v7031
    %v7064 = vsub.f32 0.0, %v7032
    %v7065 = vsub.f32 0.0, %v7033
    %v7066 = vsub.f32 0.0, %v7034
    %v7067 = vsub.f32 0.0, %v7035
    %v7068 = vsub.f32 0.0, %v7036
    %v7069 = vsub.f32 0.0, %v7037
    %v7070 = vsub.f32 0.0, %v7038
    %v7071 = vsub.f32 0.0, %v7039
    %v7072 = vsub.f32 0.0, %v7040
    %v7073 = vsub.f32 0.0, %v7041
    %v7074 = vsub.f32 0.0, %v7042
    %v7075 = vsub.f32 0.0, %v7043
    %v7076 = vsub.f32 0.0, %v7044
    %v7077 = vsub.f32 0.0, %v7045
    %v7078 = vmul.f32 %v7046, 1.442695
    %v7079 = vpow.pop %v7078
    %v7080 = vmul.f32 %v7047, 1.442695
    %v7081 = vpow.pop %v7080
    %v7082 = vmul.f32 %v7048, 1.442695
    %v7083 = vpow.pop %v7082
    %v7084 = vmul.f32 %v7049, 1.442695
    %v7085 = vpow.pop %v7084
    %v7086 = vmul.f32 %v7050, 1.442695
    %v7087 = vpow.pop %v7086
    %v7088 = vmul.f32 %v7051, 1.442695
    %v7089 = vpow.pop %v7088
    %v7090 = vmul.f32 %v7052, 1.442695
    %v7091 = vpow.pop %v7090
    %v7092 = vmul.f32 %v7053, 1.442695
    %v7093 = vpow.pop %v7092
    %v7094 = vmul.f32 %v7054, 1.442695
    %v7095 = vpow.pop %v7094
    %v7096 = vmul.f32 %v7055, 1.442695
    %v7097 = vpow.pop %v7096
    %v7098 = vmul.f32 %v7056, 1.442695
    %v7099 = vpow.pop %v7098
    %v7100 = vmul.f32 %v7057, 1.442695
    %v7101 = vpow.pop %v7100
    %v7102 = vmul.f32 %v7058, 1.442695
    %v7103 = vpow.pop %v7102
    %v7104 = vmul.f32 %v7059, 1.442695
    %v7105 = vpow.pop %v7104
    %v7106 = vmul.f32 %v7060, 1.442695
    %v7107 = vpow.pop %v7106
    %v7108 = vmul.f32 %v7061, 1.442695
    %v7109 = vpow.pop %v7108
    %v7110 = vmul.f32 %v7062, 1.442695
    %v7111 = vpow.pop %v7110
    %v7112 = vmul.f32 %v7063, 1.442695
    %v7113 = vpow.pop %v7112
    %v7114 = vmul.f32 %v7064, 1.442695
    %v7115 = vpow.pop %v7114
    %v7116 = vmul.f32 %v7065, 1.442695
    %v7117 = vpow.pop %v7116
    %v7118 = vmul.f32 %v7066, 1.442695
    %v7119 = vpow.pop %v7118
    %v7120 = vmul.f32 %v7067, 1.442695
    %v7121 = vpow.pop %v7120
    %v7122 = vmul.f32 %v7068, 1.442695
    %v7123 = vpow.pop %v7122
    %v7124 = vmul.f32 %v7069, 1.442695
    %v7125 = vpow.pop %v7124
    %v7126 = vmul.f32 %v7070, 1.442695
    %v7127 = vpow.pop %v7126
    %v7128 = vmul.f32 %v7071, 1.442695
    %v7129 = vpow.pop %v7128
    %v7130 = vmul.f32 %v7072, 1.442695
    %v7131 = vpow.pop %v7130
    %v7132 = vmul.f32 %v7073, 1.442695
    %v7133 = vpow.pop %v7132
    %v7134 = vmul.f32 %v7074, 1.442695
    %v7135 = vpow.pop %v7134
    %v7136 = vmul.f32 %v7075, 1.442695
    %v7137 = vpow.pop %v7136
    %v7138 = vmul.f32 %v7076, 1.442695
    %v7139 = vpow.pop %v7138
    %v7140 = vmul.f32 %v7077, 1.442695
    %v7141 = vpow.pop %v7140
    %v7142 = vadd.f32 %v7079, 1.0
    %v7143 = vadd.f32 %v7081, 1.0
    %v7144 = vadd.f32 %v7083, 1.0
    %v7145 = vadd.f32 %v7085, 1.0
    %v7146 = vadd.f32 %v7087, 1.0
    %v7147 = vadd.f32 %v7089, 1.0
    %v7148 = vadd.f32 %v7091, 1.0
    %v7149 = vadd.f32 %v7093, 1.0
    %v7150 = vadd.f32 %v7095, 1.0
    %v7151 = vadd.f32 %v7097, 1.0
    %v7152 = vadd.f32 %v7099, 1.0
    %v7153 = vadd.f32 %v7101, 1.0
    %v7154 = vadd.f32 %v7103, 1.0
    %v7155 = vadd.f32 %v7105, 1.0
    %v7156 = vadd.f32 %v7107, 1.0
    %v7157 = vadd.f32 %v7109, 1.0
    %v7158 = vadd.f32 %v7111, 1.0
    %v7159 = vadd.f32 %v7113, 1.0
    %v7160 = vadd.f32 %v7115, 1.0
    %v7161 = vadd.f32 %v7117, 1.0
    %v7162 = vadd.f32 %v7119, 1.0
    %v7163 = vadd.f32 %v7121, 1.0
    %v7164 = vadd.f32 %v7123, 1.0
    %v7165 = vadd.f32 %v7125, 1.0
    %v7166 = vadd.f32 %v7127, 1.0
    %v7167 = vadd.f32 %v7129, 1.0
    %v7168 = vadd.f32 %v7131, 1.0
    %v7169 = vadd.f32 %v7133, 1.0
    %v7170 = vadd.f32 %v7135, 1.0
    %v7171 = vadd.f32 %v7137, 1.0
    %v7172 = vadd.f32 %v7139, 1.0
    %v7173 = vadd.f32 %v7141, 1.0
    %v7174 = vrcp.pop %v7142
    %v7175 = vrcp.pop %v7143
    %v7176 = vrcp.pop %v7144
    %v7177 = vrcp.pop %v7145
    %v7178 = vrcp.pop %v7146
    %v7179 = vrcp.pop %v7147
    %v7180 = vrcp.pop %v7148
    %v7181 = vrcp.pop %v7149
    %v7182 = vrcp.pop %v7150
    %v7183 = vrcp.pop %v7151
    %v7184 = vrcp.pop %v7152
    %v7185 = vrcp.pop %v7153
    %v7186 = vrcp.pop %v7154
    %v7187 = vrcp.pop %v7155
    %v7188 = vrcp.pop %v7156
    %v7189 = vrcp.pop %v7157
    %v7190 = vrcp.pop %v7158
    %v7191 = vrcp.pop %v7159
    %v7192 = vrcp.pop %v7160
    %v7193 = vrcp.pop %v7161
    %v7194 = vrcp.pop %v7162
    %v7195 = vrcp.pop %v7163
    %v7196 = vrcp.pop %v7164
    %v7197 = vrcp.pop %v7165
    %v7198 = vrcp.pop %v7166
    %v7199 = vrcp.pop %v7167
    %v7200 = vrcp.pop %v7168
    %v7201 = vrcp.pop %v7169
    %v7202 = vrcp.pop %v7170
    %v7203 = vrcp.pop %v7171
    %v7204 = vrcp.pop %v7172
    %v7205 = vrcp.pop %v7173
    %v7206 = vmul.f32 %v7014, %v7174
    %v7207 = vmul.f32 %v7015, %v7175
    %v7208 = vmul.f32 %v7016, %v7176
    %v7209 = vmul.f32 %v7017, %v7177
    %v7210 = vmul.f32 %v7018, %v7178
    %v7211 = vmul.f32 %v7019, %v7179
    %v7212 = vmul.f32 %v7020, %v7180
    %v7213 = vmul.f32 %v7021, %v7181
    %v7214 = vmul.f32 %v7022, %v7182
    %v7215 = vmul.f32 %v7023, %v7183
    %v7216 = vmul.f32 %v7024, %v7184
    %v7217 = vmul.f32 %v7025, %v7185
    %v7218 = vmul.f32 %v7026, %v7186
    %v7219 = vmul.f32 %v7027, %v7187
    %v7220 = vmul.f32 %v7028, %v7188
    %v7221 = vmul.f32 %v7029, %v7189
    %v7222 = vmul.f32 %v7030, %v7190
    %v7223 = vmul.f32 %v7031, %v7191
    %v7224 = vmul.f32 %v7032, %v7192
    %v7225 = vmul.f32 %v7033, %v7193
    %v7226 = vmul.f32 %v7034, %v7194
    %v7227 = vmul.f32 %v7035, %v7195
    %v7228 = vmul.f32 %v7036, %v7196
    %v7229 = vmul.f32 %v7037, %v7197
    %v7230 = vmul.f32 %v7038, %v7198
    %v7231 = vmul.f32 %v7039, %v7199
    %v7232 = vmul.f32 %v7040, %v7200
    %v7233 = vmul.f32 %v7041, %v7201
    %v7234 = vmul.f32 %v7042, %v7202
    %v7235 = vmul.f32 %v7043, %v7203
    %v7236 = vmul.f32 %v7044, %v7204
    %v7237 = vmul.f32 %v7045, %v7205
    %v7238 = vrot.slane %v7206, 7
    %v7239 = vrot.slane %v7207, 7
    %v7240 = vrot.slane %v7208, 7
    %v7241 = vrot.slane %v7209, 7
    %v7242 = vrot.slane %v7210, 7
    %v7243 = vrot.slane %v7211, 7
    %v7244 = vrot.slane %v7212, 7
    %v7245 = vrot.slane %v7213, 7
    %v7246 = vrot.slane %v7214, 7
    %v7247 = vrot.slane %v7215, 7
    %v7248 = vrot.slane %v7216, 7
    %v7249 = vrot.slane %v7217, 7
    %v7250 = vrot.slane %v7218, 7
    %v7251 = vrot.slane %v7219, 7
    %v7252 = vrot.slane %v7220, 7
    %v7253 = vrot.slane %v7221, 7
    %v7254 = vrot.slane %v7222, 7
    %v7255 = vrot.slane %v7223, 7
    %v7256 = vrot.slane %v7224, 7
    %v7257 = vrot.slane %v7225, 7
    %v7258 = vrot.slane %v7226, 7
    %v7259 = vrot.slane %v7227, 7
    %v7260 = vrot.slane %v7228, 7
    %v7261 = vrot.slane %v7229, 7
    %v7262 = vrot.slane %v7230, 7
    %v7263 = vrot.slane %v7231, 7
    %v7264 = vrot.slane %v7232, 7
    %v7265 = vrot.slane %v7233, 7
    %v7266 = vrot.slane %v7234, 7
    %v7267 = vrot.slane %v7235, 7
    %v7268 = vrot.slane %v7237, 7
    %v7269 = vsel %vm1169, %v7266, %v7267
    %v7270 = vsel %vm1169, %v7265, %v7266
    %v7271 = vsel %vm1169, %v7264, %v7265
    %v7272 = vsel %vm1169, %v7263, %v7264
    %v7273 = vsel %vm1169, %v7262, %v7263
    %v7274 = vsel %vm1169, %v7261, %v7262
    %v7275 = vsel %vm1169, %v7260, %v7261
    %v7276 = vsel %vm1169, %v7259, %v7260
    %v7277 = vsel %vm1169, %v7258, %v7259
    %v7278 = vsel %vm1169, %v7257, %v7258
    %v7279 = vsel %vm1169, %v7256, %v7257
    %v7280 = vsel %vm1169, %v7255, %v7256
    %v7281 = vsel %vm1169, %v7254, %v7255
    %v7282 = vsel %vm1169, %v7253, %v7254
    %v7283 = vsel %vm1169, %v7252, %v7253
    %v7284 = vsel %vm1169, %v7251, %v7252
    %v7285 = vsel %vm1169, %v7250, %v7251
    %v7286 = vsel %vm1169, %v7249, %v7250
    %v7287 = vsel %vm1169, %v7248, %v7249
    %v7288 = vsel %vm1169, %v7247, %v7248
    %v7289 = vsel %vm1169, %v7246, %v7247
    %v7290 = vsel %vm1169, %v7245, %v7246
    %v7291 = vsel %vm1169, %v7244, %v7245
    %v7292 = vsel %vm1169, %v7243, %v7244
    %v7293 = vsel %vm1169, %v7242, %v7243
    %v7294 = vsel %vm1169, %v7241, %v7242
    %v7295 = vsel %vm1169, %v7240, %v7241
    %v7296 = vsel %vm1169, %v7239, %v7240
    %v7297 = vsel %vm1169, %v7238, %v7239
    %v7298 = vsel %vm1169, %v7268, %v7238
    %v7299 = vsel %vm1200, %v7298, 0.0
    %v7300 = vsel %vm1201, %v7297, 0.0
    %v7301 = vsel %vm1200, %v7296, 0.0
    %v7302 = vsel %vm1201, %v7295, 0.0
    %v7303 = vsel %vm1200, %v7294, 0.0
    %v7304 = vsel %vm1201, %v7293, 0.0
    %v7305 = vsel %vm1200, %v7292, 0.0
    %v7306 = vsel %vm1201, %v7291, 0.0
    %v7307 = vsel %vm1200, %v7290, 0.0
    %v7308 = vsel %vm1201, %v7289, 0.0
    %v7309 = vsel %vm1200, %v7288, 0.0
    %v7310 = vsel %vm1201, %v7287, 0.0
    %v7311 = vsel %vm1200, %v7286, 0.0
    %v7312 = vsel %vm1201, %v7285, 0.0
    %v7313 = vsel %vm1200, %v7284, 0.0
    %v7314 = vsel %vm1201, %v7283, 0.0
    %v7315 = vsel %vm1200, %v7282, 0.0
    %v7316 = vsel %vm1201, %v7281, 0.0
    %v7317 = vsel %vm1200, %v7280, 0.0
    %v7318 = vsel %vm1201, %v7279, 0.0
    %v7319 = vsel %vm1200, %v7278, 0.0
    %v7320 = vsel %vm1201, %v7277, 0.0
    %v7321 = vsel %vm1200, %v7276, 0.0
    %v7322 = vsel %vm1201, %v7275, 0.0
    %v7323 = vsel %vm1200, %v7274, 0.0
    %v7324 = vsel %vm1201, %v7273, 0.0
    %v7325 = vsel %vm1200, %v7272, 0.0
    %v7326 = vsel %vm1201, %v7271, 0.0
    %v7327 = vsel %vm1200, %v7270, 0.0
    %v7328 = vsel %vm1201, %v7269, 0.0
    %v7329 = vpack.c.bf16 %v7300, %v7299
    %v7330 = vpack.c.bf16 %v7302, %v7301
    %v7331 = vpack.c.bf16 %v7304, %v7303
    %v7332 = vpack.c.bf16 %v7306, %v7305
    %v7333 = vpack.c.bf16 %v7308, %v7307
    %v7334 = vpack.c.bf16 %v7310, %v7309
    %v7335 = vpack.c.bf16 %v7312, %v7311
    %v7336 = vpack.c.bf16 %v7314, %v7313
    %v7337 = vpack.c.bf16 %v7316, %v7315
    %v7338 = vpack.c.bf16 %v7318, %v7317
    %v7339 = vpack.c.bf16 %v7320, %v7319
    %v7340 = vpack.c.bf16 %v7322, %v7321
    %v7341 = vpack.c.bf16 %v7324, %v7323
    %v7342 = vpack.c.bf16 %v7326, %v7325
    %v7343 = vpack.c.bf16 %v7328, %v7327
    %v7344 = vpack.c.bf16 %v7207, %v7206
    %v7345 = vpack.c.bf16 %v7209, %v7208
    %v7346 = vpack.c.bf16 %v7211, %v7210
    %v7347 = vpack.c.bf16 %v7213, %v7212
    %v7348 = vpack.c.bf16 %v7215, %v7214
    %v7349 = vpack.c.bf16 %v7217, %v7216
    %v7350 = vpack.c.bf16 %v7219, %v7218
    %v7351 = vpack.c.bf16 %v7221, %v7220
    %v7352 = vpack.c.bf16 %v7223, %v7222
    %v7353 = vpack.c.bf16 %v7225, %v7224
    %v7354 = vpack.c.bf16 %v7227, %v7226
    %v7355 = vpack.c.bf16 %v7229, %v7228
    %v7356 = vpack.c.bf16 %v7231, %v7230
    %v7357 = vpack.c.bf16 %v7233, %v7232
    %v7358 = vpack.c.bf16 %v7235, %v7234
    %v7359 = vrot.slane %v7206, 1
    %v7360 = vrot.slane %v7207, 1
    %v7361 = vrot.slane %v7208, 1
    %v7362 = vrot.slane %v7209, 1
    %v7363 = vrot.slane %v7210, 1
    %v7364 = vrot.slane %v7211, 1
    %v7365 = vrot.slane %v7212, 1
    %v7366 = vrot.slane %v7213, 1
    %v7367 = vrot.slane %v7214, 1
    %v7368 = vrot.slane %v7215, 1
    %v7369 = vrot.slane %v7216, 1
    %v7370 = vrot.slane %v7217, 1
    %v7371 = vrot.slane %v7218, 1
    %v7372 = vrot.slane %v7219, 1
    %v7373 = vrot.slane %v7220, 1
    %v7374 = vrot.slane %v7221, 1
    %v7375 = vrot.slane %v7222, 1
    %v7376 = vrot.slane %v7223, 1
    %v7377 = vrot.slane %v7224, 1
    %v7378 = vrot.slane %v7225, 1
    %v7379 = vrot.slane %v7226, 1
    %v7380 = vrot.slane %v7227, 1
    %v7381 = vrot.slane %v7228, 1
    %v7382 = vrot.slane %v7229, 1
    %v7383 = vrot.slane %v7230, 1
    %v7384 = vrot.slane %v7231, 1
    %v7385 = vrot.slane %v7232, 1
    %v7386 = vrot.slane %v7233, 1
    %v7387 = vrot.slane %v7234, 1
    %v7388 = vrot.slane %v7235, 1
    %v7389 = vrot.slane %v7236, 1
    %v7390 = vsel %vm1294, %v7388, %v7389
    %v7391 = vsel %vm1294, %v7387, %v7388
    %v7392 = vsel %vm1294, %v7386, %v7387
    %v7393 = vsel %vm1294, %v7385, %v7386
    %v7394 = vsel %vm1294, %v7384, %v7385
    %v7395 = vsel %vm1294, %v7383, %v7384
    %v7396 = vsel %vm1294, %v7382, %v7383
    %v7397 = vsel %vm1294, %v7381, %v7382
    %v7398 = vsel %vm1294, %v7380, %v7381
    %v7399 = vsel %vm1294, %v7379, %v7380
    %v7400 = vsel %vm1294, %v7378, %v7379
    %v7401 = vsel %vm1294, %v7377, %v7378
    %v7402 = vsel %vm1294, %v7376, %v7377
    %v7403 = vsel %vm1294, %v7375, %v7376
    %v7404 = vsel %vm1294, %v7374, %v7375
    %v7405 = vsel %vm1294, %v7373, %v7374
    %v7406 = vsel %vm1294, %v7372, %v7373
    %v7407 = vsel %vm1294, %v7371, %v7372
    %v7408 = vsel %vm1294, %v7370, %v7371
    %v7409 = vsel %vm1294, %v7369, %v7370
    %v7410 = vsel %vm1294, %v7368, %v7369
    %v7411 = vsel %vm1294, %v7367, %v7368
    %v7412 = vsel %vm1294, %v7366, %v7367
    %v7413 = vsel %vm1294, %v7365, %v7366
    %v7414 = vsel %vm1294, %v7364, %v7365
    %v7415 = vsel %vm1294, %v7363, %v7364
    %v7416 = vsel %vm1294, %v7362, %v7363
    %v7417 = vsel %vm1294, %v7361, %v7362
    %v7418 = vsel %vm1294, %v7360, %v7361
    %v7419 = vsel %vm1294, %v7359, %v7360
    %v7420 = vsel %vm1325, %v7419, 0.0
    %v7421 = vsel %vm1326, %v7418, 0.0
    %v7422 = vsel %vm1325, %v7417, 0.0
    %v7423 = vsel %vm1326, %v7416, 0.0
    %v7424 = vsel %vm1325, %v7415, 0.0
    %v7425 = vsel %vm1326, %v7414, 0.0
    %v7426 = vsel %vm1325, %v7413, 0.0
    %v7427 = vsel %vm1326, %v7412, 0.0
    %v7428 = vsel %vm1325, %v7411, 0.0
    %v7429 = vsel %vm1326, %v7410, 0.0
    %v7430 = vsel %vm1325, %v7409, 0.0
    %v7431 = vsel %vm1326, %v7408, 0.0
    %v7432 = vsel %vm1325, %v7407, 0.0
    %v7433 = vsel %vm1326, %v7406, 0.0
    %v7434 = vsel %vm1325, %v7405, 0.0
    %v7435 = vsel %vm1326, %v7404, 0.0
    %v7436 = vsel %vm1325, %v7403, 0.0
    %v7437 = vsel %vm1326, %v7402, 0.0
    %v7438 = vsel %vm1325, %v7401, 0.0
    %v7439 = vsel %vm1326, %v7400, 0.0
    %v7440 = vsel %vm1325, %v7399, 0.0
    %v7441 = vsel %vm1326, %v7398, 0.0
    %v7442 = vsel %vm1325, %v7397, 0.0
    %v7443 = vsel %vm1326, %v7396, 0.0
    %v7444 = vsel %vm1325, %v7395, 0.0
    %v7445 = vsel %vm1326, %v7394, 0.0
    %v7446 = vsel %vm1325, %v7393, 0.0
    %v7447 = vsel %vm1326, %v7392, 0.0
    %v7448 = vsel %vm1325, %v7391, 0.0
    %v7449 = vsel %vm1326, %v7390, 0.0
    %v7450 = vpack.c.bf16 %v7421, %v7420
    %v7451 = vpack.c.bf16 %v7423, %v7422
    %v7452 = vpack.c.bf16 %v7425, %v7424
    %v7453 = vpack.c.bf16 %v7427, %v7426
    %v7454 = vpack.c.bf16 %v7429, %v7428
    %v7455 = vpack.c.bf16 %v7431, %v7430
    %v7456 = vpack.c.bf16 %v7433, %v7432
    %v7457 = vpack.c.bf16 %v7435, %v7434
    %v7458 = vpack.c.bf16 %v7437, %v7436
    %v7459 = vpack.c.bf16 %v7439, %v7438
    %v7460 = vpack.c.bf16 %v7441, %v7440
    %v7461 = vpack.c.bf16 %v7443, %v7442
    %v7462 = vpack.c.bf16 %v7445, %v7444
    %v7463 = vpack.c.bf16 %v7447, %v7446
    %v7464 = vpack.c.bf16 %v7449, %v7448
    %v7465 = vrot.slane %v7236, 7
    %v7466 = vsel %vm1169, %v7465, %v7268
    %v7467 = vsel %vm1169, %v7267, %v7465
    %v7468 = vsel %vm1200, %v7467, 0.0
    %v7469 = vsel %vm1201, %v7466, 0.0
    %v7470 = vpack.c.bf16 %v7469, %v7468
    %v7471 = vpack.c.bf16 %v7237, %v7236
    %v7472 = vrot.slane %v7237, 1
    %v7473 = vsel %vm1294, %v7389, %v7472
    %v7474 = vsel %vm1294, %v7472, %v7359
    %v7475 = vsel %vm1325, %v7473, 0.0
    %v7476 = vsel %vm1326, %v7474, 0.0
    %v7477 = vpack.c.bf16 %v7476, %v7475
    %7478 = vmatprep.subr.bf16.mxu0 0
    %7479 = vmatpush1.bf16.msra.mxu0 %v3820
    %7480 = vmatprep.subr.bf16.mxu0 0
    %7481 = vmatpush1.bf16.msra.mxu0 %v3819
    %7482 = vmatprep.subr.bf16.mxu0 0
    %7483 = vmatpush1.bf16.msra.mxu0 %v3818
    %7484 = vmatprep.subr.bf16.mxu0 0
    %7485 = vmatpush1.bf16.msra.mxu0 %v3817
    %7486 = vmatprep.subr.bf16.mxu0 0
    %7487 = vmatpush1.bf16.msra.mxu0 %v3816
    %7488 = vmatprep.subr.bf16.mxu0 0
    %7489 = vmatpush1.bf16.msra.mxu0 %v3815
    %7490 = vmatprep.subr.bf16.mxu0 0
    %7491 = vmatpush1.bf16.msra.mxu0 %v3814
    %7492 = vmatprep.subr.bf16.mxu0 0
    %7493 = vmatpush1.bf16.msra.mxu0 %v3813
    %7494 = vmatprep.subr.bf16.mxu0 0
    %7495 = vmatpush2.bf16.msra.mxu0 %v3828
    %7496 = vmatprep.subr.bf16.mxu0 0
    %7497 = vmatpush2.bf16.msra.mxu0 %v3827
    %7498 = vmatprep.subr.bf16.mxu0 0
    %7499 = vmatpush2.bf16.msra.mxu0 %v3826
    %7500 = vmatprep.subr.bf16.mxu0 0
    %7501 = vmatpush2.bf16.msra.mxu0 %v3825
    %7502 = vmatprep.subr.bf16.mxu0 0
    %7503 = vmatpush2.bf16.msra.mxu0 %v3824
    %7504 = vmatprep.subr.bf16.mxu0 0
    %7505 = vmatpush2.bf16.msra.mxu0 %v3823
    %7506 = vmatprep.subr.bf16.mxu0 0
    %7507 = vmatpush2.bf16.msra.mxu0 %v3822
    %7508 = vmatprep.subr.bf16.mxu0 0
    %7509 = vmatpush2.bf16.msra.mxu0 %v3821
    %7510 = vmatprep.mubr.bf16.mxu0 %v1232
    %7511 = vmatmul.mubr.bf16.gmra.mxu0 %v1232
    %v7512 = vpop.f32.mrf.mxu0
    %v7513 = vadd.f32 0.0, %v7512
    %v7514 = vpop.f32.mrf.mxu0
    %v7515 = vpop.f32.mrf.mxu0
    %v7516 = vadd.f32 0.0, %v7515
    %v7517 = vpop.f32.mrf.mxu0
    %7518 = vmatprep.mubr.bf16.mxu0 %v7344
    %7519 = vmatmul.mubr.bf16.gmra.mxu0 %v7329
    %v7520 = vpop.f32.mrf.mxu0
    %v7521 = vadd.f32 0.0, %v7520
    %v7522 = vpop.f32.mrf.mxu0
    %v7523 = vpop.f32.mrf.mxu0
    %v7524 = vadd.f32 0.0, %v7523
    %v7525 = vpop.f32.mrf.mxu0
    %7526 = vmatprep.mubr.bf16.mxu0 %v7345
    %7527 = vmatmul.mubr.bf16.gmra.mxu0 %v7330
    %v7528 = vpop.f32.mrf.mxu0
    %v7529 = vadd.f32 0.0, %v7528
    %v7530 = vpop.f32.mrf.mxu0
    %v7531 = vpop.f32.mrf.mxu0
    %v7532 = vadd.f32 0.0, %v7531
    %v7533 = vpop.f32.mrf.mxu0
    %7534 = vmatprep.mubr.bf16.mxu0 %v7346
    %7535 = vmatmul.mubr.bf16.gmra.mxu0 %v7331
    %v7536 = vpop.f32.mrf.mxu0
    %v7537 = vadd.f32 0.0, %v7536
    %v7538 = vpop.f32.mrf.mxu0
    %v7539 = vpop.f32.mrf.mxu0
    %v7540 = vadd.f32 0.0, %v7539
    %v7541 = vpop.f32.mrf.mxu0
    %7542 = vmatprep.mubr.bf16.mxu0 %v7347
    %7543 = vmatmul.mubr.bf16.gmra.mxu0 %v7332
    %v7544 = vpop.f32.mrf.mxu0
    %v7545 = vadd.f32 0.0, %v7544
    %v7546 = vpop.f32.mrf.mxu0
    %v7547 = vpop.f32.mrf.mxu0
    %v7548 = vadd.f32 0.0, %v7547
    %v7549 = vpop.f32.mrf.mxu0
    %7550 = vmatprep.mubr.bf16.mxu0 %v7348
    %7551 = vmatmul.mubr.bf16.gmra.mxu0 %v7333
    %v7552 = vpop.f32.mrf.mxu0
    %v7553 = vadd.f32 0.0, %v7552
    %v7554 = vpop.f32.mrf.mxu0
    %v7555 = vpop.f32.mrf.mxu0
    %v7556 = vadd.f32 0.0, %v7555
    %v7557 = vpop.f32.mrf.mxu0
    %7558 = vmatprep.mubr.bf16.mxu0 %v7349
    %7559 = vmatmul.mubr.bf16.gmra.mxu0 %v7334
    %v7560 = vpop.f32.mrf.mxu0
    %v7561 = vadd.f32 0.0, %v7560
    %v7562 = vpop.f32.mrf.mxu0
    %v7563 = vpop.f32.mrf.mxu0
    %v7564 = vadd.f32 0.0, %v7563
    %v7565 = vpop.f32.mrf.mxu0
    %7566 = vmatprep.mubr.bf16.mxu0 %v7350
    %7567 = vmatmul.mubr.bf16.gmra.mxu0 %v7335
    %v7568 = vpop.f32.mrf.mxu0
    %v7569 = vadd.f32 0.0, %v7568
    %v7570 = vpop.f32.mrf.mxu0
    %v7571 = vpop.f32.mrf.mxu0
    %v7572 = vadd.f32 0.0, %v7571
    %v7573 = vpop.f32.mrf.mxu0
    %7574 = vmatprep.mubr.bf16.mxu0 %v7351
    %7575 = vmatmul.mubr.bf16.gmra.mxu0 %v7336
    %v7576 = vpop.f32.mrf.mxu0
    %v7577 = vadd.f32 0.0, %v7576
    %v7578 = vpop.f32.mrf.mxu0
    %v7579 = vpop.f32.mrf.mxu0
    %v7580 = vadd.f32 0.0, %v7579
    %v7581 = vpop.f32.mrf.mxu0
    %7582 = vmatprep.mubr.bf16.mxu0 %v7352
    %7583 = vmatmul.mubr.bf16.gmra.mxu0 %v7337
    %v7584 = vpop.f32.mrf.mxu0
    %v7585 = vadd.f32 0.0, %v7584
    %v7586 = vpop.f32.mrf.mxu0
    %v7587 = vpop.f32.mrf.mxu0
    %v7588 = vadd.f32 0.0, %v7587
    %v7589 = vpop.f32.mrf.mxu0
    %7590 = vmatprep.mubr.bf16.mxu0 %v7353
    %7591 = vmatmul.mubr.bf16.gmra.mxu0 %v7338
    %v7592 = vpop.f32.mrf.mxu0
    %v7593 = vadd.f32 0.0, %v7592
    %v7594 = vpop.f32.mrf.mxu0
    %v7595 = vpop.f32.mrf.mxu0
    %v7596 = vadd.f32 0.0, %v7595
    %v7597 = vpop.f32.mrf.mxu0
    %7598 = vmatprep.mubr.bf16.mxu0 %v7354
    %7599 = vmatmul.mubr.bf16.gmra.mxu0 %v7339
    %v7600 = vpop.f32.mrf.mxu0
    %v7601 = vadd.f32 0.0, %v7600
    %v7602 = vpop.f32.mrf.mxu0
    %v7603 = vpop.f32.mrf.mxu0
    %v7604 = vadd.f32 0.0, %v7603
    %v7605 = vpop.f32.mrf.mxu0
    %7606 = vmatprep.mubr.bf16.mxu0 %v7355
    %7607 = vmatmul.mubr.bf16.gmra.mxu0 %v7340
    %v7608 = vpop.f32.mrf.mxu0
    %v7609 = vadd.f32 0.0, %v7608
    %v7610 = vpop.f32.mrf.mxu0
    %v7611 = vpop.f32.mrf.mxu0
    %v7612 = vadd.f32 0.0, %v7611
    %v7613 = vpop.f32.mrf.mxu0
    %7614 = vmatprep.mubr.bf16.mxu0 %v7356
    %7615 = vmatmul.mubr.bf16.gmra.mxu0 %v7341
    %v7616 = vpop.f32.mrf.mxu0
    %v7617 = vadd.f32 0.0, %v7616
    %v7618 = vpop.f32.mrf.mxu0
    %v7619 = vpop.f32.mrf.mxu0
    %v7620 = vadd.f32 0.0, %v7619
    %v7621 = vpop.f32.mrf.mxu0
    %7622 = vmatprep.mubr.bf16.mxu0 %v7357
    %7623 = vmatmul.mubr.bf16.gmra.mxu0 %v7342
    %v7624 = vpop.f32.mrf.mxu0
    %v7625 = vadd.f32 0.0, %v7624
    %v7626 = vpop.f32.mrf.mxu0
    %v7627 = vpop.f32.mrf.mxu0
    %v7628 = vadd.f32 0.0, %v7627
    %v7629 = vpop.f32.mrf.mxu0
    %7630 = vmatprep.mubr.bf16.mxu0 %v7358
    %7631 = vmatmul.mubr.bf16.gmra.mxu0 %v7343
    %v7632 = vpop.f32.mrf.mxu0
    %v7633 = vadd.f32 0.0, %v7632
    %v7634 = vpop.f32.mrf.mxu0
    %v7635 = vpop.f32.mrf.mxu0
    %v7636 = vadd.f32 0.0, %v7635
    %v7637 = vpop.f32.mrf.mxu0
    %7638 = vdwg.mxu0
    %7639 = vmatprep.subr.bf16.mxu0 0
    %7640 = vmatpush1.bf16.msra.mxu0 %v3836
    %7641 = vmatprep.subr.bf16.mxu0 0
    %7642 = vmatpush1.bf16.msra.mxu0 %v3835
    %7643 = vmatprep.subr.bf16.mxu0 0
    %7644 = vmatpush1.bf16.msra.mxu0 %v3834
    %7645 = vmatprep.subr.bf16.mxu0 0
    %7646 = vmatpush1.bf16.msra.mxu0 %v3833
    %7647 = vmatprep.subr.bf16.mxu0 0
    %7648 = vmatpush1.bf16.msra.mxu0 %v3832
    %7649 = vmatprep.subr.bf16.mxu0 0
    %7650 = vmatpush1.bf16.msra.mxu0 %v3831
    %7651 = vmatprep.subr.bf16.mxu0 0
    %7652 = vmatpush1.bf16.msra.mxu0 %v3830
    %7653 = vmatprep.subr.bf16.mxu0 0
    %7654 = vmatpush1.bf16.msra.mxu0 %v3829
    %7655 = vmatprep.subr.bf16.mxu0 0
    %7656 = vmatpush2.bf16.msra.mxu0 %v3844
    %7657 = vmatprep.subr.bf16.mxu0 0
    %7658 = vmatpush2.bf16.msra.mxu0 %v3843
    %7659 = vmatprep.subr.bf16.mxu0 0
    %7660 = vmatpush2.bf16.msra.mxu0 %v3842
    %7661 = vmatprep.subr.bf16.mxu0 0
    %7662 = vmatpush2.bf16.msra.mxu0 %v3841
    %7663 = vmatprep.subr.bf16.mxu0 0
    %7664 = vmatpush2.bf16.msra.mxu0 %v3840
    %7665 = vmatprep.subr.bf16.mxu0 0
    %7666 = vmatpush2.bf16.msra.mxu0 %v3839
    %7667 = vmatprep.subr.bf16.mxu0 0
    %7668 = vmatpush2.bf16.msra.mxu0 %v3838
    %7669 = vmatprep.subr.bf16.mxu0 0
    %7670 = vmatpush2.bf16.msra.mxu0 %v3837
    %7671 = vmatprep.mubr.bf16.mxu0 %v7329
    %7672 = vmatmul.mubr.bf16.gmra.mxu0 %v1232
    %v7673 = vpop.f32.mrf.mxu0
    %v7674 = vadd.f32 %v7513, %v7673
    %v7675 = vpop.f32.mrf.mxu0
    %v7676 = vpop.f32.mrf.mxu0
    %v7677 = vadd.f32 %v7516, %v7676
    %v7678 = vpop.f32.mrf.mxu0
    %7679 = vmatprep.mubr.bf16.mxu0 %v7330
    %7680 = vmatmul.mubr.bf16.gmra.mxu0 %v7450
    %v7681 = vpop.f32.mrf.mxu0
    %v7682 = vadd.f32 %v7521, %v7681
    %v7683 = vpop.f32.mrf.mxu0
    %v7684 = vpop.f32.mrf.mxu0
    %v7685 = vadd.f32 %v7524, %v7684
    %v7686 = vpop.f32.mrf.mxu0
    %7687 = vmatprep.mubr.bf16.mxu0 %v7331
    %7688 = vmatmul.mubr.bf16.gmra.mxu0 %v7451
    %v7689 = vpop.f32.mrf.mxu0
    %v7690 = vadd.f32 %v7529, %v7689
    %v7691 = vpop.f32.mrf.mxu0
    %v7692 = vpop.f32.mrf.mxu0
    %v7693 = vadd.f32 %v7532, %v7692
    %v7694 = vpop.f32.mrf.mxu0
    %7695 = vmatprep.mubr.bf16.mxu0 %v7332
    %7696 = vmatmul.mubr.bf16.gmra.mxu0 %v7452
    %v7697 = vpop.f32.mrf.mxu0
    %v7698 = vadd.f32 %v7537, %v7697
    %v7699 = vpop.f32.mrf.mxu0
    %v7700 = vpop.f32.mrf.mxu0
    %v7701 = vadd.f32 %v7540, %v7700
    %v7702 = vpop.f32.mrf.mxu0
    %7703 = vmatprep.mubr.bf16.mxu0 %v7333
    %7704 = vmatmul.mubr.bf16.gmra.mxu0 %v7453
    %v7705 = vpop.f32.mrf.mxu0
    %v7706 = vadd.f32 %v7545, %v7705
    %v7707 = vpop.f32.mrf.mxu0
    %v7708 = vpop.f32.mrf.mxu0
    %v7709 = vadd.f32 %v7548, %v7708
    %v7710 = vpop.f32.mrf.mxu0
    %7711 = vmatprep.mubr.bf16.mxu0 %v7334
    %7712 = vmatmul.mubr.bf16.gmra.mxu0 %v7454
    %v7713 = vpop.f32.mrf.mxu0
    %v7714 = vadd.f32 %v7553, %v7713
    %v7715 = vpop.f32.mrf.mxu0
    %v7716 = vpop.f32.mrf.mxu0
    %v7717 = vadd.f32 %v7556, %v7716
    %v7718 = vpop.f32.mrf.mxu0
    %7719 = vmatprep.mubr.bf16.mxu0 %v7335
    %7720 = vmatmul.mubr.bf16.gmra.mxu0 %v7455
    %v7721 = vpop.f32.mrf.mxu0
    %v7722 = vadd.f32 %v7561, %v7721
    %v7723 = vpop.f32.mrf.mxu0
    %v7724 = vpop.f32.mrf.mxu0
    %v7725 = vadd.f32 %v7564, %v7724
    %v7726 = vpop.f32.mrf.mxu0
    %7727 = vmatprep.mubr.bf16.mxu0 %v7336
    %7728 = vmatmul.mubr.bf16.gmra.mxu0 %v7456
    %v7729 = vpop.f32.mrf.mxu0
    %v7730 = vadd.f32 %v7569, %v7729
    %v7731 = vpop.f32.mrf.mxu0
    %v7732 = vpop.f32.mrf.mxu0
    %v7733 = vadd.f32 %v7572, %v7732
    %v7734 = vpop.f32.mrf.mxu0
    %7735 = vmatprep.mubr.bf16.mxu0 %v7337
    %7736 = vmatmul.mubr.bf16.gmra.mxu0 %v7457
    %v7737 = vpop.f32.mrf.mxu0
    %v7738 = vadd.f32 %v7577, %v7737
    %v7739 = vpop.f32.mrf.mxu0
    %v7740 = vpop.f32.mrf.mxu0
    %v7741 = vadd.f32 %v7580, %v7740
    %v7742 = vpop.f32.mrf.mxu0
    %7743 = vmatprep.mubr.bf16.mxu0 %v7338
    %7744 = vmatmul.mubr.bf16.gmra.mxu0 %v7458
    %v7745 = vpop.f32.mrf.mxu0
    %v7746 = vadd.f32 %v7585, %v7745
    %v7747 = vpop.f32.mrf.mxu0
    %v7748 = vpop.f32.mrf.mxu0
    %v7749 = vadd.f32 %v7588, %v7748
    %v7750 = vpop.f32.mrf.mxu0
    %7751 = vmatprep.mubr.bf16.mxu0 %v7339
    %7752 = vmatmul.mubr.bf16.gmra.mxu0 %v7459
    %v7753 = vpop.f32.mrf.mxu0
    %v7754 = vadd.f32 %v7593, %v7753
    %v7755 = vpop.f32.mrf.mxu0
    %v7756 = vpop.f32.mrf.mxu0
    %v7757 = vadd.f32 %v7596, %v7756
    %v7758 = vpop.f32.mrf.mxu0
    %7759 = vmatprep.mubr.bf16.mxu0 %v7340
    %7760 = vmatmul.mubr.bf16.gmra.mxu0 %v7460
    %v7761 = vpop.f32.mrf.mxu0
    %v7762 = vadd.f32 %v7601, %v7761
    %v7763 = vpop.f32.mrf.mxu0
    %v7764 = vpop.f32.mrf.mxu0
    %v7765 = vadd.f32 %v7604, %v7764
    %v7766 = vpop.f32.mrf.mxu0
    %7767 = vmatprep.mubr.bf16.mxu0 %v7341
    %7768 = vmatmul.mubr.bf16.gmra.mxu0 %v7461
    %v7769 = vpop.f32.mrf.mxu0
    %v7770 = vadd.f32 %v7609, %v7769
    %v7771 = vpop.f32.mrf.mxu0
    %v7772 = vpop.f32.mrf.mxu0
    %v7773 = vadd.f32 %v7612, %v7772
    %v7774 = vpop.f32.mrf.mxu0
    %7775 = vmatprep.mubr.bf16.mxu0 %v7342
    %7776 = vmatmul.mubr.bf16.gmra.mxu0 %v7462
    %v7777 = vpop.f32.mrf.mxu0
    %v7778 = vadd.f32 %v7617, %v7777
    %v7779 = vpop.f32.mrf.mxu0
    %v7780 = vpop.f32.mrf.mxu0
    %v7781 = vadd.f32 %v7620, %v7780
    %v7782 = vpop.f32.mrf.mxu0
    %7783 = vmatprep.mubr.bf16.mxu0 %v7343
    %7784 = vmatmul.mubr.bf16.gmra.mxu0 %v7463
    %v7785 = vpop.f32.mrf.mxu0
    %v7786 = vadd.f32 %v7625, %v7785
    %v7787 = vpop.f32.mrf.mxu0
    %v7788 = vpop.f32.mrf.mxu0
    %v7789 = vadd.f32 %v7628, %v7788
    %v7790 = vpop.f32.mrf.mxu0
    %7791 = vmatprep.mubr.bf16.mxu0 %v7470
    %7792 = vmatmul.mubr.bf16.gmra.mxu0 %v7464
    %v7793 = vpop.f32.mrf.mxu0
    %v7794 = vadd.f32 %v7633, %v7793
    %v7795 = vpop.f32.mrf.mxu0
    %v7796 = vpop.f32.mrf.mxu0
    %v7797 = vadd.f32 %v7636, %v7796
    %v7798 = vpop.f32.mrf.mxu0
    %7799 = vdwg.mxu0
    %7800 = vmatprep.subr.bf16.mxu0 0
    %7801 = vmatpush1.bf16.msra.mxu0 %v3852
    %7802 = vmatprep.subr.bf16.mxu0 0
    %7803 = vmatpush1.bf16.msra.mxu0 %v3851
    %7804 = vmatprep.subr.bf16.mxu0 0
    %7805 = vmatpush1.bf16.msra.mxu0 %v3850
    %7806 = vmatprep.subr.bf16.mxu0 0
    %7807 = vmatpush1.bf16.msra.mxu0 %v3849
    %7808 = vmatprep.subr.bf16.mxu0 0
    %7809 = vmatpush1.bf16.msra.mxu0 %v3848
    %7810 = vmatprep.subr.bf16.mxu0 0
    %7811 = vmatpush1.bf16.msra.mxu0 %v3847
    %7812 = vmatprep.subr.bf16.mxu0 0
    %7813 = vmatpush1.bf16.msra.mxu0 %v3846
    %7814 = vmatprep.subr.bf16.mxu0 0
    %7815 = vmatpush1.bf16.msra.mxu0 %v3845
    %7816 = vmatprep.subr.bf16.mxu0 0
    %7817 = vmatpush2.bf16.msra.mxu0 %v3860
    %7818 = vmatprep.subr.bf16.mxu0 0
    %7819 = vmatpush2.bf16.msra.mxu0 %v3859
    %7820 = vmatprep.subr.bf16.mxu0 0
    %7821 = vmatpush2.bf16.msra.mxu0 %v3858
    %7822 = vmatprep.subr.bf16.mxu0 0
    %7823 = vmatpush2.bf16.msra.mxu0 %v3857
    %7824 = vmatprep.subr.bf16.mxu0 0
    %7825 = vmatpush2.bf16.msra.mxu0 %v3856
    %7826 = vmatprep.subr.bf16.mxu0 0
    %7827 = vmatpush2.bf16.msra.mxu0 %v3855
    %7828 = vmatprep.subr.bf16.mxu0 0
    %7829 = vmatpush2.bf16.msra.mxu0 %v3854
    %7830 = vmatprep.subr.bf16.mxu0 0
    %7831 = vmatpush2.bf16.msra.mxu0 %v3853
    %7832 = vmatprep.mubr.bf16.mxu0 %v7450
    %7833 = vmatmul.mubr.bf16.gmra.mxu0 %v7344
    %v7834 = vpop.f32.mrf.mxu0
    %v7835 = vadd.f32 %v7674, %v7834
    %v7836 = vpop.f32.mrf.mxu0
    %v7837 = vpop.f32.mrf.mxu0
    %v7838 = vadd.f32 %v7677, %v7837
    %v7839 = vpop.f32.mrf.mxu0
    %7840 = vmatprep.mubr.bf16.mxu0 %v7451
    %7841 = vmatmul.mubr.bf16.gmra.mxu0 %v7345
    %v7842 = vpop.f32.mrf.mxu0
    %v7843 = vadd.f32 %v7682, %v7842
    %v7844 = vpop.f32.mrf.mxu0
    %v7845 = vpop.f32.mrf.mxu0
    %v7846 = vadd.f32 %v7685, %v7845
    %v7847 = vpop.f32.mrf.mxu0
    %7848 = vmatprep.mubr.bf16.mxu0 %v7452
    %7849 = vmatmul.mubr.bf16.gmra.mxu0 %v7346
    %v7850 = vpop.f32.mrf.mxu0
    %v7851 = vadd.f32 %v7690, %v7850
    %v7852 = vpop.f32.mrf.mxu0
    %v7853 = vpop.f32.mrf.mxu0
    %v7854 = vadd.f32 %v7693, %v7853
    %v7855 = vpop.f32.mrf.mxu0
    %7856 = vmatprep.mubr.bf16.mxu0 %v7453
    %7857 = vmatmul.mubr.bf16.gmra.mxu0 %v7347
    %v7858 = vpop.f32.mrf.mxu0
    %v7859 = vadd.f32 %v7698, %v7858
    %v7860 = vpop.f32.mrf.mxu0
    %v7861 = vpop.f32.mrf.mxu0
    %v7862 = vadd.f32 %v7701, %v7861
    %v7863 = vpop.f32.mrf.mxu0
    %7864 = vmatprep.mubr.bf16.mxu0 %v7454
    %7865 = vmatmul.mubr.bf16.gmra.mxu0 %v7348
    %v7866 = vpop.f32.mrf.mxu0
    %v7867 = vadd.f32 %v7706, %v7866
    %v7868 = vpop.f32.mrf.mxu0
    %v7869 = vpop.f32.mrf.mxu0
    %v7870 = vadd.f32 %v7709, %v7869
    %v7871 = vpop.f32.mrf.mxu0
    %7872 = vmatprep.mubr.bf16.mxu0 %v7455
    %7873 = vmatmul.mubr.bf16.gmra.mxu0 %v7349
    %v7874 = vpop.f32.mrf.mxu0
    %v7875 = vadd.f32 %v7714, %v7874
    %v7876 = vpop.f32.mrf.mxu0
    %v7877 = vpop.f32.mrf.mxu0
    %v7878 = vadd.f32 %v7717, %v7877
    %v7879 = vpop.f32.mrf.mxu0
    %7880 = vmatprep.mubr.bf16.mxu0 %v7456
    %7881 = vmatmul.mubr.bf16.gmra.mxu0 %v7350
    %v7882 = vpop.f32.mrf.mxu0
    %v7883 = vadd.f32 %v7722, %v7882
    %v7884 = vpop.f32.mrf.mxu0
    %v7885 = vpop.f32.mrf.mxu0
    %v7886 = vadd.f32 %v7725, %v7885
    %v7887 = vpop.f32.mrf.mxu0
    %7888 = vmatprep.mubr.bf16.mxu0 %v7457
    %7889 = vmatmul.mubr.bf16.gmra.mxu0 %v7351
    %v7890 = vpop.f32.mrf.mxu0
    %v7891 = vadd.f32 %v7730, %v7890
    %v7892 = vpop.f32.mrf.mxu0
    %v7893 = vpop.f32.mrf.mxu0
    %v7894 = vadd.f32 %v7733, %v7893
    %v7895 = vpop.f32.mrf.mxu0
    %7896 = vmatprep.mubr.bf16.mxu0 %v7458
    %7897 = vmatmul.mubr.bf16.gmra.mxu0 %v7352
    %v7898 = vpop.f32.mrf.mxu0
    %v7899 = vadd.f32 %v7738, %v7898
    %v7900 = vpop.f32.mrf.mxu0
    %v7901 = vpop.f32.mrf.mxu0
    %v7902 = vadd.f32 %v7741, %v7901
    %v7903 = vpop.f32.mrf.mxu0
    %7904 = vmatprep.mubr.bf16.mxu0 %v7459
    %7905 = vmatmul.mubr.bf16.gmra.mxu0 %v7353
    %v7906 = vpop.f32.mrf.mxu0
    %v7907 = vadd.f32 %v7746, %v7906
    %v7908 = vpop.f32.mrf.mxu0
    %v7909 = vpop.f32.mrf.mxu0
    %v7910 = vadd.f32 %v7749, %v7909
    %v7911 = vpop.f32.mrf.mxu0
    %7912 = vmatprep.mubr.bf16.mxu0 %v7460
    %7913 = vmatmul.mubr.bf16.gmra.mxu0 %v7354
    %v7914 = vpop.f32.mrf.mxu0
    %v7915 = vadd.f32 %v7754, %v7914
    %v7916 = vpop.f32.mrf.mxu0
    %v7917 = vpop.f32.mrf.mxu0
    %v7918 = vadd.f32 %v7757, %v7917
    %v7919 = vpop.f32.mrf.mxu0
    %7920 = vmatprep.mubr.bf16.mxu0 %v7461
    %7921 = vmatmul.mubr.bf16.gmra.mxu0 %v7355
    %v7922 = vpop.f32.mrf.mxu0
    %v7923 = vadd.f32 %v7762, %v7922
    %v7924 = vpop.f32.mrf.mxu0
    %v7925 = vpop.f32.mrf.mxu0
    %v7926 = vadd.f32 %v7765, %v7925
    %v7927 = vpop.f32.mrf.mxu0
    %7928 = vmatprep.mubr.bf16.mxu0 %v7462
    %7929 = vmatmul.mubr.bf16.gmra.mxu0 %v7356
    %v7930 = vpop.f32.mrf.mxu0
    %v7931 = vadd.f32 %v7770, %v7930
    %v7932 = vpop.f32.mrf.mxu0
    %v7933 = vpop.f32.mrf.mxu0
    %v7934 = vadd.f32 %v7773, %v7933
    %v7935 = vpop.f32.mrf.mxu0
    %7936 = vmatprep.mubr.bf16.mxu0 %v7463
    %7937 = vmatmul.mubr.bf16.gmra.mxu0 %v7357
    %v7938 = vpop.f32.mrf.mxu0
    %v7939 = vadd.f32 %v7778, %v7938
    %v7940 = vpop.f32.mrf.mxu0
    %v7941 = vpop.f32.mrf.mxu0
    %v7942 = vadd.f32 %v7781, %v7941
    %v7943 = vpop.f32.mrf.mxu0
    %7944 = vmatprep.mubr.bf16.mxu0 %v7464
    %7945 = vmatmul.mubr.bf16.gmra.mxu0 %v7358
    %v7946 = vpop.f32.mrf.mxu0
    %v7947 = vadd.f32 %v7786, %v7946
    %v7948 = vpop.f32.mrf.mxu0
    %v7949 = vpop.f32.mrf.mxu0
    %v7950 = vadd.f32 %v7789, %v7949
    %v7951 = vpop.f32.mrf.mxu0
    %7952 = vmatprep.mubr.bf16.mxu0 %v7477
    %7953 = vmatmul.mubr.bf16.gmra.mxu0 %v7471
    %v7954 = vpop.f32.mrf.mxu0
    %v7955 = vadd.f32 %v7794, %v7954
    %v7956 = vpop.f32.mrf.mxu0
    %v7957 = vpop.f32.mrf.mxu0
    %v7958 = vadd.f32 %v7797, %v7957
    %v7959 = vpop.f32.mrf.mxu0
    %7960 = vdwg.mxu0
    %7961 = vmatprep.subr.bf16.mxu0 0
    %7962 = vmatpush1.bf16.msra.mxu0 %v3868
    %7963 = vmatprep.subr.bf16.mxu0 0
    %7964 = vmatpush1.bf16.msra.mxu0 %v3867
    %7965 = vmatprep.subr.bf16.mxu0 0
    %7966 = vmatpush1.bf16.msra.mxu0 %v3866
    %7967 = vmatprep.subr.bf16.mxu0 0
    %7968 = vmatpush1.bf16.msra.mxu0 %v3865
    %7969 = vmatprep.subr.bf16.mxu0 0
    %7970 = vmatpush1.bf16.msra.mxu0 %v3864
    %7971 = vmatprep.subr.bf16.mxu0 0
    %7972 = vmatpush1.bf16.msra.mxu0 %v3863
    %7973 = vmatprep.subr.bf16.mxu0 0
    %7974 = vmatpush1.bf16.msra.mxu0 %v3862
    %7975 = vmatprep.subr.bf16.mxu0 0
    %7976 = vmatpush1.bf16.msra.mxu0 %v3861
    %7977 = vmatprep.subr.bf16.mxu0 0
    %7978 = vmatpush2.bf16.msra.mxu0 %v3876
    %7979 = vmatprep.subr.bf16.mxu0 0
    %7980 = vmatpush2.bf16.msra.mxu0 %v3875
    %7981 = vmatprep.subr.bf16.mxu0 0
    %7982 = vmatpush2.bf16.msra.mxu0 %v3874
    %7983 = vmatprep.subr.bf16.mxu0 0
    %7984 = vmatpush2.bf16.msra.mxu0 %v3873
    %7985 = vmatprep.subr.bf16.mxu0 0
    %7986 = vmatpush2.bf16.msra.mxu0 %v3872
    %7987 = vmatprep.subr.bf16.mxu0 0
    %7988 = vmatpush2.bf16.msra.mxu0 %v3871
    %7989 = vmatprep.subr.bf16.mxu0 0
    %7990 = vmatpush2.bf16.msra.mxu0 %v3870
    %7991 = vmatprep.subr.bf16.mxu0 0
    %7992 = vmatpush2.bf16.msra.mxu0 %v3869
    %7993 = vmatprep.mubr.bf16.mxu0 %v7345
    %7994 = vmatmul.mubr.bf16.gmra.mxu0 %v7330
    %v7995 = vpop.f32.mrf.mxu0
    %v7996 = vadd.f32 %v7835, %v7995
    %v7997 = vpop.f32.mrf.mxu0
    %v7998 = vpop.f32.mrf.mxu0
    %v7999 = vadd.f32 %v7838, %v7998
    %v8000 = vpop.f32.mrf.mxu0
    %8001 = vmatprep.mubr.bf16.mxu0 %v7346
    %8002 = vmatmul.mubr.bf16.gmra.mxu0 %v7331
    %v8003 = vpop.f32.mrf.mxu0
    %v8004 = vadd.f32 %v7843, %v8003
    %v8005 = vpop.f32.mrf.mxu0
    %v8006 = vpop.f32.mrf.mxu0
    %v8007 = vadd.f32 %v7846, %v8006
    %v8008 = vpop.f32.mrf.mxu0
    %8009 = vmatprep.mubr.bf16.mxu0 %v7347
    %8010 = vmatmul.mubr.bf16.gmra.mxu0 %v7332
    %v8011 = vpop.f32.mrf.mxu0
    %v8012 = vadd.f32 %v7851, %v8011
    %v8013 = vpop.f32.mrf.mxu0
    %v8014 = vpop.f32.mrf.mxu0
    %v8015 = vadd.f32 %v7854, %v8014
    %v8016 = vpop.f32.mrf.mxu0
    %8017 = vmatprep.mubr.bf16.mxu0 %v7348
    %8018 = vmatmul.mubr.bf16.gmra.mxu0 %v7333
    %v8019 = vpop.f32.mrf.mxu0
    %v8020 = vadd.f32 %v7859, %v8019
    %v8021 = vpop.f32.mrf.mxu0
    %v8022 = vpop.f32.mrf.mxu0
    %v8023 = vadd.f32 %v7862, %v8022
    %v8024 = vpop.f32.mrf.mxu0
    %8025 = vmatprep.mubr.bf16.mxu0 %v7349
    %8026 = vmatmul.mubr.bf16.gmra.mxu0 %v7334
    %v8027 = vpop.f32.mrf.mxu0
    %v8028 = vadd.f32 %v7867, %v8027
    %v8029 = vpop.f32.mrf.mxu0
    %v8030 = vpop.f32.mrf.mxu0
    %v8031 = vadd.f32 %v7870, %v8030
    %v8032 = vpop.f32.mrf.mxu0
    %8033 = vmatprep.mubr.bf16.mxu0 %v7350
    %8034 = vmatmul.mubr.bf16.gmra.mxu0 %v7335
    %v8035 = vpop.f32.mrf.mxu0
    %v8036 = vadd.f32 %v7875, %v8035
    %v8037 = vpop.f32.mrf.mxu0
    %v8038 = vpop.f32.mrf.mxu0
    %v8039 = vadd.f32 %v7878, %v8038
    %v8040 = vpop.f32.mrf.mxu0
    %8041 = vmatprep.mubr.bf16.mxu0 %v7351
    %8042 = vmatmul.mubr.bf16.gmra.mxu0 %v7336
    %v8043 = vpop.f32.mrf.mxu0
    %v8044 = vadd.f32 %v7883, %v8043
    %v8045 = vpop.f32.mrf.mxu0
    %v8046 = vpop.f32.mrf.mxu0
    %v8047 = vadd.f32 %v7886, %v8046
    %v8048 = vpop.f32.mrf.mxu0
    %8049 = vmatprep.mubr.bf16.mxu0 %v7352
    %8050 = vmatmul.mubr.bf16.gmra.mxu0 %v7337
    %v8051 = vpop.f32.mrf.mxu0
    %v8052 = vadd.f32 %v7891, %v8051
    %v8053 = vpop.f32.mrf.mxu0
    %v8054 = vpop.f32.mrf.mxu0
    %v8055 = vadd.f32 %v7894, %v8054
    %v8056 = vpop.f32.mrf.mxu0
    %8057 = vmatprep.mubr.bf16.mxu0 %v7353
    %8058 = vmatmul.mubr.bf16.gmra.mxu0 %v7338
    %v8059 = vpop.f32.mrf.mxu0
    %v8060 = vadd.f32 %v7899, %v8059
    %v8061 = vpop.f32.mrf.mxu0
    %v8062 = vpop.f32.mrf.mxu0
    %v8063 = vadd.f32 %v7902, %v8062
    %v8064 = vpop.f32.mrf.mxu0
    %8065 = vmatprep.mubr.bf16.mxu0 %v7354
    %8066 = vmatmul.mubr.bf16.gmra.mxu0 %v7339
    %v8067 = vpop.f32.mrf.mxu0
    %v8068 = vadd.f32 %v7907, %v8067
    %v8069 = vpop.f32.mrf.mxu0
    %v8070 = vpop.f32.mrf.mxu0
    %v8071 = vadd.f32 %v7910, %v8070
    %v8072 = vpop.f32.mrf.mxu0
    %8073 = vmatprep.mubr.bf16.mxu0 %v7355
    %8074 = vmatmul.mubr.bf16.gmra.mxu0 %v7340
    %v8075 = vpop.f32.mrf.mxu0
    %v8076 = vadd.f32 %v7915, %v8075
    %v8077 = vpop.f32.mrf.mxu0
    %v8078 = vpop.f32.mrf.mxu0
    %v8079 = vadd.f32 %v7918, %v8078
    %v8080 = vpop.f32.mrf.mxu0
    %8081 = vmatprep.mubr.bf16.mxu0 %v7356
    %8082 = vmatmul.mubr.bf16.gmra.mxu0 %v7341
    %v8083 = vpop.f32.mrf.mxu0
    %v8084 = vadd.f32 %v7923, %v8083
    %v8085 = vpop.f32.mrf.mxu0
    %v8086 = vpop.f32.mrf.mxu0
    %v8087 = vadd.f32 %v7926, %v8086
    %v8088 = vpop.f32.mrf.mxu0
    %8089 = vmatprep.mubr.bf16.mxu0 %v7357
    %8090 = vmatmul.mubr.bf16.gmra.mxu0 %v7342
    %v8091 = vpop.f32.mrf.mxu0
    %v8092 = vadd.f32 %v7931, %v8091
    %v8093 = vpop.f32.mrf.mxu0
    %v8094 = vpop.f32.mrf.mxu0
    %v8095 = vadd.f32 %v7934, %v8094
    %v8096 = vpop.f32.mrf.mxu0
    %8097 = vmatprep.mubr.bf16.mxu0 %v7358
    %8098 = vmatmul.mubr.bf16.gmra.mxu0 %v7343
    %v8099 = vpop.f32.mrf.mxu0
    %v8100 = vadd.f32 %v7939, %v8099
    %v8101 = vpop.f32.mrf.mxu0
    %v8102 = vpop.f32.mrf.mxu0
    %v8103 = vadd.f32 %v7942, %v8102
    %v8104 = vpop.f32.mrf.mxu0
    %8105 = vmatprep.mubr.bf16.mxu0 %v7471
    %8106 = vmatmul.mubr.bf16.gmra.mxu0 %v7470
    %v8107 = vpop.f32.mrf.mxu0
    %v8108 = vadd.f32 %v7947, %v8107
    %v8109 = vpop.f32.mrf.mxu0
    %v8110 = vpop.f32.mrf.mxu0
    %v8111 = vadd.f32 %v7950, %v8110
    %v8112 = vpop.f32.mrf.mxu0
    %8113 = vmatprep.mubr.bf16.mxu0 %v1232
    %8114 = vmatmul.mubr.bf16.gmra.mxu0 %v1232
    %v8115 = vpop.f32.mrf.mxu0
    %v8116 = vadd.f32 %v7955, %v8115
    %v8117 = vpop.f32.mrf.mxu0
    %v8118 = vpop.f32.mrf.mxu0
    %v8119 = vadd.f32 %v7958, %v8118
    %v8120 = vpop.f32.mrf.mxu0
    %8121 = vdwg.mxu0
    %8122 = vmatprep.subr.bf16.mxu0 0
    %8123 = vmatpush1.bf16.msra.mxu0 %v3884
    %8124 = vmatprep.subr.bf16.mxu0 0
    %8125 = vmatpush1.bf16.msra.mxu0 %v3883
    %8126 = vmatprep.subr.bf16.mxu0 0
    %8127 = vmatpush1.bf16.msra.mxu0 %v3882
    %8128 = vmatprep.subr.bf16.mxu0 0
    %8129 = vmatpush1.bf16.msra.mxu0 %v3881
    %8130 = vmatprep.subr.bf16.mxu0 0
    %8131 = vmatpush1.bf16.msra.mxu0 %v3880
    %8132 = vmatprep.subr.bf16.mxu0 0
    %8133 = vmatpush1.bf16.msra.mxu0 %v3879
    %8134 = vmatprep.subr.bf16.mxu0 0
    %8135 = vmatpush1.bf16.msra.mxu0 %v3878
    %8136 = vmatprep.subr.bf16.mxu0 0
    %8137 = vmatpush1.bf16.msra.mxu0 %v3877
    %8138 = vmatprep.subr.bf16.mxu0 0
    %8139 = vmatpush2.bf16.msra.mxu0 0
    %8140 = vmatprep.subr.bf16.mxu0 0
    %8141 = vmatpush2.bf16.msra.mxu0 0
    %8142 = vmatprep.subr.bf16.mxu0 0
    %8143 = vmatpush2.bf16.msra.mxu0 0
    %8144 = vmatprep.subr.bf16.mxu0 0
    %8145 = vmatpush2.bf16.msra.mxu0 0
    %8146 = vmatprep.subr.bf16.mxu0 0
    %8147 = vmatpush2.bf16.msra.mxu0 0
    %8148 = vmatprep.subr.bf16.mxu0 0
    %8149 = vmatpush2.bf16.msra.mxu0 0
    %8150 = vmatprep.subr.bf16.mxu0 0
    %8151 = vmatpush2.bf16.msra.mxu0 0
    %8152 = vmatprep.subr.bf16.mxu0 0
    %8153 = vmatpush2.bf16.msra.mxu0 0
    %8154 = vmatprep.mubr.bf16.mxu0 0
    %8155 = vmatmul.mubr.bf16.gmra.mxu0 %v7451
    %v8156 = vpop.f32.mrf.mxu0
    %v8157 = vadd.f32 %v7996, %v8156
    %v8158 = vpop.f32.mrf.mxu0
    %v8159 = vpop.f32.mrf.mxu0
    %v8160 = vadd.f32 %v7999, %v8159
    %v8161 = vpop.f32.mrf.mxu0
    %8162 = vmatprep.mubr.bf16.mxu0 0
    %8163 = vmatmul.mubr.bf16.gmra.mxu0 %v7452
    %v8164 = vpop.f32.mrf.mxu0
    %v8165 = vadd.f32 %v8004, %v8164
    %v8166 = vpop.f32.mrf.mxu0
    %v8167 = vpop.f32.mrf.mxu0
    %v8168 = vadd.f32 %v8007, %v8167
    %v8169 = vpop.f32.mrf.mxu0
    %8170 = vmatprep.mubr.bf16.mxu0 0
    %8171 = vmatmul.mubr.bf16.gmra.mxu0 %v7453
    %v8172 = vpop.f32.mrf.mxu0
    %v8173 = vadd.f32 %v8012, %v8172
    %v8174 = vpop.f32.mrf.mxu0
    %v8175 = vpop.f32.mrf.mxu0
    %v8176 = vadd.f32 %v8015, %v8175
    %v8177 = vpop.f32.mrf.mxu0
    %8178 = vmatprep.mubr.bf16.mxu0 0
    %8179 = vmatmul.mubr.bf16.gmra.mxu0 %v7454
    %v8180 = vpop.f32.mrf.mxu0
    %v8181 = vadd.f32 %v8020, %v8180
    %v8182 = vpop.f32.mrf.mxu0
    %v8183 = vpop.f32.mrf.mxu0
    %v8184 = vadd.f32 %v8023, %v8183
    %v8185 = vpop.f32.mrf.mxu0
    %8186 = vmatprep.mubr.bf16.mxu0 0
    %8187 = vmatmul.mubr.bf16.gmra.mxu0 %v7455
    %v8188 = vpop.f32.mrf.mxu0
    %v8189 = vadd.f32 %v8028, %v8188
    %v8190 = vpop.f32.mrf.mxu0
    %v8191 = vpop.f32.mrf.mxu0
    %v8192 = vadd.f32 %v8031, %v8191
    %v8193 = vpop.f32.mrf.mxu0
    %8194 = vmatprep.mubr.bf16.mxu0 0
    %8195 = vmatmul.mubr.bf16.gmra.mxu0 %v7456
    %v8196 = vpop.f32.mrf.mxu0
    %v8197 = vadd.f32 %v8036, %v8196
    %v8198 = vpop.f32.mrf.mxu0
    %v8199 = vpop.f32.mrf.mxu0
    %v8200 = vadd.f32 %v8039, %v8199
    %v8201 = vpop.f32.mrf.mxu0
    %8202 = vmatprep.mubr.bf16.mxu0 0
    %8203 = vmatmul.mubr.bf16.gmra.mxu0 %v7457
    %v8204 = vpop.f32.mrf.mxu0
    %v8205 = vadd.f32 %v8044, %v8204
    %v8206 = vpop.f32.mrf.mxu0
    %v8207 = vpop.f32.mrf.mxu0
    %v8208 = vadd.f32 %v8047, %v8207
    %v8209 = vpop.f32.mrf.mxu0
    %8210 = vmatprep.mubr.bf16.mxu0 0
    %8211 = vmatmul.mubr.bf16.gmra.mxu0 %v7458
    %v8212 = vpop.f32.mrf.mxu0
    %v8213 = vadd.f32 %v8052, %v8212
    %v8214 = vpop.f32.mrf.mxu0
    %v8215 = vpop.f32.mrf.mxu0
    %v8216 = vadd.f32 %v8055, %v8215
    %v8217 = vpop.f32.mrf.mxu0
    %8218 = vmatprep.mubr.bf16.mxu0 0
    %8219 = vmatmul.mubr.bf16.gmra.mxu0 %v7459
    %v8220 = vpop.f32.mrf.mxu0
    %v8221 = vadd.f32 %v8060, %v8220
    %v8222 = vpop.f32.mrf.mxu0
    %v8223 = vpop.f32.mrf.mxu0
    %v8224 = vadd.f32 %v8063, %v8223
    %v8225 = vpop.f32.mrf.mxu0
    %8226 = vmatprep.mubr.bf16.mxu0 0
    %8227 = vmatmul.mubr.bf16.gmra.mxu0 %v7460
    %v8228 = vpop.f32.mrf.mxu0
    %v8229 = vadd.f32 %v8068, %v8228
    %v8230 = vpop.f32.mrf.mxu0
    %v8231 = vpop.f32.mrf.mxu0
    %v8232 = vadd.f32 %v8071, %v8231
    %v8233 = vpop.f32.mrf.mxu0
    %8234 = vmatprep.mubr.bf16.mxu0 0
    %8235 = vmatmul.mubr.bf16.gmra.mxu0 %v7461
    %v8236 = vpop.f32.mrf.mxu0
    %v8237 = vadd.f32 %v8076, %v8236
    %v8238 = vpop.f32.mrf.mxu0
    %v8239 = vpop.f32.mrf.mxu0
    %v8240 = vadd.f32 %v8079, %v8239
    %v8241 = vpop.f32.mrf.mxu0
    %8242 = vmatprep.mubr.bf16.mxu0 0
    %8243 = vmatmul.mubr.bf16.gmra.mxu0 %v7462
    %v8244 = vpop.f32.mrf.mxu0
    %v8245 = vadd.f32 %v8084, %v8244
    %v8246 = vpop.f32.mrf.mxu0
    %v8247 = vpop.f32.mrf.mxu0
    %v8248 = vadd.f32 %v8087, %v8247
    %v8249 = vpop.f32.mrf.mxu0
    %8250 = vmatprep.mubr.bf16.mxu0 0
    %8251 = vmatmul.mubr.bf16.gmra.mxu0 %v7463
    %v8252 = vpop.f32.mrf.mxu0
    %v8253 = vadd.f32 %v8092, %v8252
    %v8254 = vpop.f32.mrf.mxu0
    %v8255 = vpop.f32.mrf.mxu0
    %v8256 = vadd.f32 %v8095, %v8255
    %v8257 = vpop.f32.mrf.mxu0
    %8258 = vmatprep.mubr.bf16.mxu0 0
    %8259 = vmatmul.mubr.bf16.gmra.mxu0 %v7464
    %v8260 = vpop.f32.mrf.mxu0
    %v8261 = vadd.f32 %v8100, %v8260
    %v8262 = vpop.f32.mrf.mxu0
    %v8263 = vpop.f32.mrf.mxu0
    %v8264 = vadd.f32 %v8103, %v8263
    %v8265 = vpop.f32.mrf.mxu0
    %8266 = vmatprep.mubr.bf16.mxu0 0
    %8267 = vmatmul.mubr.bf16.gmra.mxu0 %v7477
    %v8268 = vpop.f32.mrf.mxu0
    %v8269 = vadd.f32 %v8108, %v8268
    %v8270 = vpop.f32.mrf.mxu0
    %v8271 = vpop.f32.mrf.mxu0
    %v8272 = vadd.f32 %v8111, %v8271
    %v8273 = vpop.f32.mrf.mxu0
    %8274 = vmatprep.mubr.bf16.mxu0 0
    %8275 = vmatmul.mubr.bf16.gmra.mxu0 %v1232
    %v8276 = vpop.f32.mrf.mxu0
    %v8277 = vadd.f32 %v8116, %v8276
    %v8278 = vpop.f32.mrf.mxu0
    %v8279 = vpop.f32.mrf.mxu0
    %v8280 = vadd.f32 %v8119, %v8279
    %v8281 = vpop.f32.mrf.mxu0
    %8282 = vdwg.mxu0
    %v8283 = vadd.f32 %v4865, %v8157
    %v8284 = vadd.f32 %v4866, %v8160
    %v8285 = vadd.f32 %v4867, %v8165
    %v8286 = vadd.f32 %v4868, %v8168
    %v8287 = vadd.f32 %v4869, %v8173
    %v8288 = vadd.f32 %v4870, %v8176
    %v8289 = vadd.f32 %v4871, %v8181
    %v8290 = vadd.f32 %v4872, %v8184
    %v8291 = vadd.f32 %v4873, %v8189
    %v8292 = vadd.f32 %v4874, %v8192
    %v8293 = vadd.f32 %v4875, %v8197
    %v8294 = vadd.f32 %v4876, %v8200
    %v8295 = vadd.f32 %v4877, %v8205
    %v8296 = vadd.f32 %v4878, %v8208
    %v8297 = vadd.f32 %v4879, %v8213
    %v8298 = vadd.f32 %v4880, %v8216
    %v8299 = vadd.f32 %v4881, %v8221
    %v8300 = vadd.f32 %v4882, %v8224
    %v8301 = vadd.f32 %v4883, %v8229
    %v8302 = vadd.f32 %v4884, %v8232
    %v8303 = vadd.f32 %v4885, %v8237
    %v8304 = vadd.f32 %v4886, %v8240
    %v8305 = vadd.f32 %v4887, %v8245
    %v8306 = vadd.f32 %v4888, %v8248
    %v8307 = vadd.f32 %v4889, %v8253
    %v8308 = vadd.f32 %v4890, %v8256
    %v8309 = vadd.f32 %v4891, %v8261
    %v8310 = vadd.f32 %v4892, %v8264
    %v8311 = vadd.f32 %v4893, %v8269
    %v8312 = vadd.f32 %v4894, %v8272
    %v8313 = vadd.f32 %v4895, %v8277
    %v8314 = vadd.f32 %v4896, %v8280
    %v8315 = vadd.f32 %v8283, %v4798
    %v8316 = vadd.f32 %v8284, %v4798
    %v8317 = vadd.f32 %v8285, %v4798
    %v8318 = vadd.f32 %v8286, %v4798
    %v8319 = vadd.f32 %v8287, %v4798
    %v8320 = vadd.f32 %v8288, %v4798
    %v8321 = vadd.f32 %v8289, %v4798
    %v8322 = vadd.f32 %v8290, %v4798
    %v8323 = vadd.f32 %v8291, %v4798
    %v8324 = vadd.f32 %v8292, %v4798
    %v8325 = vadd.f32 %v8293, %v4798
    %v8326 = vadd.f32 %v8294, %v4798
    %v8327 = vadd.f32 %v8295, %v4798
    %v8328 = vadd.f32 %v8296, %v4798
    %v8329 = vadd.f32 %v8297, %v4798
    %v8330 = vadd.f32 %v8298, %v4798
    %v8331 = vadd.f32 %v8299, %v4798
    %v8332 = vadd.f32 %v8300, %v4798
    %v8333 = vadd.f32 %v8301, %v4798
    %v8334 = vadd.f32 %v8302, %v4798
    %v8335 = vadd.f32 %v8303, %v4798
    %v8336 = vadd.f32 %v8304, %v4798
    %v8337 = vadd.f32 %v8305, %v4798
    %v8338 = vadd.f32 %v8306, %v4798
    %v8339 = vadd.f32 %v8307, %v4798
    %v8340 = vadd.f32 %v8308, %v4798
    %v8341 = vadd.f32 %v8309, %v4798
    %v8342 = vadd.f32 %v8310, %v4798
    %v8343 = vadd.f32 %v8311, %v4798
    %v8344 = vadd.f32 %v8312, %v4798
    %v8345 = vadd.f32 %v8313, %v4798
    %v8346 = vadd.f32 %v8314, %v4798
    %s8347 = scalar_lea.vmem [#allocation13], 256
    %8348 = vst [vmem:[%s8347] sm:$0xff] %v8315
    %8349 = vst [vmem:[%s8347 + $0x8] sm:$0xff] %v8316
    %8350 = vst [vmem:[%s8347 + $0x10] sm:$0xff] %v8317
    %8351 = vst [vmem:[%s8347 + $0x18] sm:$0xff] %v8318
    %8352 = vst [vmem:[%s8347 + $0x20] sm:$0xff] %v8319
    %8353 = vst [vmem:[%s8347 + $0x28] sm:$0xff] %v8320
    %8354 = vst [vmem:[%s8347 + $0x30] sm:$0xff] %v8321
    %8355 = vst [vmem:[%s8347 + $0x38] sm:$0xff] %v8322
    %8356 = vst [vmem:[%s8347 + $0x40] sm:$0xff] %v8323
    %8357 = vst [vmem:[%s8347 + $0x48] sm:$0xff] %v8324
    %8358 = vst [vmem:[%s8347 + $0x50] sm:$0xff] %v8325
    %8359 = vst [vmem:[%s8347 + $0x58] sm:$0xff] %v8326
    %8360 = vst [vmem:[%s8347 + $0x60] sm:$0xff] %v8327
    %8361 = vst [vmem:[%s8347 + $0x68] sm:$0xff] %v8328
    %8362 = vst [vmem:[%s8347 + $0x70] sm:$0xff] %v8329
    %8363 = vst [vmem:[%s8347 + $0x78] sm:$0xff] %v8330
    %8364 = vst [vmem:[%s8347 + $0x80] sm:$0xff] %v8331
    %8365 = vst [vmem:[%s8347 + $0x88] sm:$0xff] %v8332
    %8366 = vst [vmem:[%s8347 + $0x90] sm:$0xff] %v8333
    %8367 = vst [vmem:[%s8347 + $0x98] sm:$0xff] %v8334
    %8368 = vst [vmem:[%s8347 + $0xa0] sm:$0xff] %v8335
    %8369 = vst [vmem:[%s8347 + $0xa8] sm:$0xff] %v8336
    %8370 = vst [vmem:[%s8347 + $0xb0] sm:$0xff] %v8337
    %8371 = vst [vmem:[%s8347 + $0xb8] sm:$0xff] %v8338
    %8372 = vst [vmem:[%s8347 + $0xc0] sm:$0xff] %v8339
    %8373 = vst [vmem:[%s8347 + $0xc8] sm:$0xff] %v8340
    %8374 = vst [vmem:[%s8347 + $0xd0] sm:$0xff] %v8341
    %8375 = vst [vmem:[%s8347 + $0xd8] sm:$0xff] %v8342
    %8376 = vst [vmem:[%s8347 + $0xe0] sm:$0xff] %v8343
    %8377 = vst [vmem:[%s8347 + $0xe8] sm:$0xff] %v8344
    %8378 = vst [vmem:[%s8347 + $0xf0] sm:$0xff] %v8345
    %8379 = vst [vmem:[%s8347 + $0xf8] sm:$0xff] %v8346
    // Predicated region
    $region70: #{tpu_custom_call.1} parent=1 // pred_check
      _
    $region71: #{tpu_custom_call.1} parent=1 // pred_check_branch
      %8381 = sbr.rel (0) target = $region73
    $region72: #{tpu_custom_call.1} parent=1 // pred_region
      %s8383 = ssub.s32 8192, 8192
      %8384 = vsyncadd [#allocation4], %s8383
      %s8385 = sshll.u32 [#allocation13], 4
      %s8386 = int_to_ptr.vmem [resolvable:$true] %s8385
      %8391 = dma.vmem_to_hbm [thread:$0]  %s8386, 8192, %s11, [#allocation4], 128, 128, 8
    $region73: #{tpu_custom_call.1} parent=1 // pred_fallthru
      _
    // Predicated region
    $region74: #{tpu_custom_call.1} parent=1 // pred_check
      _
    $region75: #{tpu_custom_call.1} parent=1 // pred_check_branch
      %8393 = sbr.rel (0) target = $region77
    $region76: #{tpu_custom_call.1} parent=1 // pred_region
      %8394 = dma.done [#allocation4], 8192
    $region77: #{tpu_custom_call.1} parent=1 // pred_fallthru
      _
    %8395 = vsyncpa [#allocation3], 1
    %8396 = vsyncpa [#allocation6], 1
    %8397 = vsyncpa [#allocation9], 1
    %8398 = vsyncpa [#allocation12], 1
    %8399 = vsyncpa [#allocation4], 1

</llo_original>
